<compile_context>
chip_gen: v6e
topology: v6e:2x2x1
jax: 0.10.0
libtpu: 0.0.40
codegen_flags: <defaults>
</compile_context>

<pallas_src>
import functools

import numpy as np
import jax
import jax.numpy as jnp
from jax.experimental import pallas as pl
from jax.experimental.pallas import tpu as pltpu

N_GRAPHEME, N_VOWEL, N_CONSONANT = 168, 11, 7
N_CLASSES = (N_GRAPHEME, N_VOWEL, N_CONSONANT)
HEAD_NAMES = ("grapheme_root", "vowel_diacritic", "consonant_diacritic")
IN_FEATURES = 1408            # backbone feature channels (hardcoded in the module)
H_DIM = IN_FEATURES // 2      # AdaptiveHead factor=2 -> 704
N_OUT_PAD = 256               # lane-dense padded logits width (>= 168)
GEM_EPS = 1e-6
BN_EPS = 1e-5
PATCH = 8                     # stand-in backbone patch size (downsamples 8x)
TAPS_PER_STEP = 2             # 2x2 conv = 4 taps, streamed as 2 tap-pairs (K axis)


def _round_up(x, m):
    return (x + m - 1) // m * m


# ---------------------------------------------------------------------------
# Stand-in "backbone": patch-embedding matmul + ReLU, gridded over rows.
# TODO(synk): EfficientNet.extract_features is an external pretrained backbone with
# no source in the provided module; this deterministic patch-embedding projection to
# 1408 channels stands in for it so the fully-specified heads run end-to-end.
# ---------------------------------------------------------------------------
def _embed_kernel(x_ref, w_ref, b_ref, o_ref):
    y = jnp.dot(x_ref[...], w_ref[...], preferred_element_type=jnp.float32)
    y = y + b_ref[...]
    o_ref[...] = jnp.maximum(y, 0.0).astype(o_ref.dtype)


def _backbone_features(x_nchw, w_emb_bf16, b_emb_f32):
    B, C, H, W = x_nchw.shape
    assert C == 3 and H % PATCH == 0 and W % PATCH == 0
    Hp, Wp = H // PATCH, W // PATCH
    rows = B * Hp * Wp
    k_emb = 3 * PATCH * PATCH
    assert rows % 8 == 0
    # NCHW -> NHWC -> non-overlapping PATCHxPATCH patches, row index = b*Hp*Wp + h*Wp + w
    x = jnp.transpose(x_nchw, (0, 2, 3, 1))
    x = x.reshape(B, Hp, PATCH, Wp, PATCH, 3)
    x = jnp.transpose(x, (0, 1, 3, 2, 4, 5)).reshape(rows, k_emb)
    x = x.astype(jnp.bfloat16)

    tm = max(t for t in (256, 128, 64, 32, 16, 8) if rows % t == 0)
    feat = pl.pallas_call(
        _embed_kernel,
        out_shape=jax.ShapeDtypeStruct((rows, IN_FEATURES), jnp.bfloat16),
        grid_spec=pltpu.PrefetchScalarGridSpec(
            num_scalar_prefetch=0,
            grid=(rows // tm,),
            in_specs=[
                pl.BlockSpec((tm, k_emb), lambda i: (i, 0)),
                pl.BlockSpec((k_emb, IN_FEATURES), lambda i: (0, 0)),
                pl.BlockSpec((1, IN_FEATURES), lambda i: (0, 0)),
            ],
            out_specs=pl.BlockSpec((tm, IN_FEATURES), lambda i: (i, 0)),
        ),
        compiler_params=pltpu.CompilerParams(dimension_semantics=("parallel",)),
    )(x, w_emb_bf16, b_emb_f32)
    return feat, Hp, Wp                                   # flat [rows, 1408] bf16


# ---------------------------------------------------------------------------
# Fused heads kernel.
#   grid = (head n ["parallel"], tap-pair k ["arbitrary"])
#   per step: for each tap in the pair, gather the tap's im2col rows from the
#   resident feature slab with a one-hot MXU matmul, then accumulate the bf16
#   conv-weight matmul into an f32 VMEM scratch.  At the last k: add the folded
#   conv+BN bias, GeM-pool via a block-diagonal averaging matmul, ReLU, Linear.
# ---------------------------------------------------------------------------
def _heads_kernel(p_ref, feat_ref, sel_ref, avg_ref, w_ref, bias_ref,
                  wl_ref, bl_ref, out_ref, acc_ref, *, taps_per_step):
    n = pl.program_id(0)
    k = pl.program_id(1)

    @pl.when(k == 0)
    def _init():
        acc_ref[...] = jnp.zeros_like(acc_ref)

    feat = feat_ref[...]                                   # [R, 1408] bf16 (resident)
    for t in range(taps_per_step):                         # static unroll
        # im2col gather for this 2x2-conv tap, done on the MXU via a one-hot matrix
        # (exact: selects original bf16 values, so the bf16 round-trip is lossless).
        tap = jnp.dot(sel_ref[t], feat, preferred_element_type=jnp.float32)
        acc_ref[...] += jnp.dot(tap.astype(jnp.bfloat16), w_ref[0, t],
                                preferred_element_type=jnp.float32)

    @pl.when(k == pl.num_programs(1) - 1)
    def _finalize():
        p = p_ref[n]                                       # GeM power (SMEM scalar)
        y = acc_ref[...] + bias_ref[0]                     # conv bias + folded BN
        # GeM: avg_pool(clamp(y, eps)^p)^(1/p) over the spatial window, with the
        # per-image mean expressed as a block-diagonal averaging matmul.
        y = jnp.maximum(y, GEM_EPS)
        y = jnp.exp(p * jnp.log(y))                        # y ** p  (y > 0)
        pooled = jnp.dot(avg_ref[...], y, preferred_element_type=jnp.float32)  # [B,704]
        pooled = jnp.maximum(pooled, 1e-30)                # guard log(0) underflow
        pooled = jnp.exp(jnp.log(pooled) / p)              # pooled ** (1/p)
        v = jnp.maximum(pooled, 0.0)                       # Dropout2d(eval)=id; ReLU
        out = jnp.dot(v, wl_ref[0].astype(jnp.float32),
                      preferred_element_type=jnp.float32) + bl_ref[0]
        out_ref[0] = out.astype(out_ref.dtype)             # lane-dense [B, 256]


def _gather_and_pool_consts(B, Hf, Wf, m_pad):
    """One-hot tap-gather matrices [4, m_pad, B*Hf*Wf] and averaging matrix [B, m_pad]."""
    Ho, Wo = Hf - 1, Wf - 1
    P = Ho * Wo
    R = B * Hf * Wf
    sel = np.zeros((4, m_pad, R), np.float32)
    for t, (kh, kw) in enumerate(((0, 0), (0, 1), (1, 0), (1, 1))):
        for b in range(B):
            for ho in range(Ho):
                for wo in range(Wo):
                    m = b * P + ho * Wo + wo
                    r = b * Hf * Wf + (ho + kh) * Wf + (wo + kw)
                    sel[t, m, r] = 1.0
    avg = np.zeros((B, m_pad), np.float32)
    for b in range(B):
        avg[b, b * P:(b + 1) * P] = 1.0 / P
    return jnp.asarray(sel, jnp.bfloat16), jnp.asarray(avg, jnp.float32)


def _fused_heads(feat_flat, B, Hf, Wf, hp):
    Ho, Wo = Hf - 1, Wf - 1
    assert Ho >= 1 and Wo >= 1
    P = Ho * Wo
    R = B * Hf * Wf
    assert feat_flat.shape == (R, IN_FEATURES)
    m_pad = _round_up(B * P, 8)
    sel, avg = _gather_and_pool_consts(B, Hf, Wf, m_pad)   # static constants

    n_k = 4 // TAPS_PER_STEP
    kernel = functools.partial(_heads_kernel, taps_per_step=TAPS_PER_STEP)
    return pl.pallas_call(
        kernel,
        out_shape=jax.ShapeDtypeStruct((3, B, N_OUT_PAD), jnp.float32),
        grid_spec=pltpu.PrefetchScalarGridSpec(
            num_scalar_prefetch=0,
            grid=(3, n_k),
            in_specs=[
                pl.BlockSpec(memory_space=pltpu.MemorySpace.SMEM),        # GeM p [3]
                pl.BlockSpec((R, IN_FEATURES), lambda n, k: (0, 0)),      # features
                pl.BlockSpec((TAPS_PER_STEP, m_pad, R),
                             lambda n, k: (k, 0, 0)),                     # tap gather
                pl.BlockSpec((B, m_pad), lambda n, k: (0, 0)),            # pool average
                pl.BlockSpec((1, TAPS_PER_STEP, IN_FEATURES, H_DIM),
                             lambda n, k: (n, k, 0, 0)),                  # conv w (bf16, BN folded)
                pl.BlockSpec((1, 1, H_DIM), lambda n, k: (n, 0, 0)),      # folded bias
                pl.BlockSpec((1, H_DIM, N_OUT_PAD), lambda n, k: (n, 0, 0)),  # linear w
                pl.BlockSpec((1, 1, N_OUT_PAD), lambda n, k: (n, 0, 0)),      # linear b
            ],
            out_specs=pl.BlockSpec((1, B, N_OUT_PAD), lambda n, k: (n, 0, 0)),
            scratch_shapes=[pltpu.VMEM((m_pad, H_DIM), jnp.float32)],
        ),
        compiler_params=pltpu.CompilerParams(
            dimension_semantics=("parallel", "arbitrary")),
    )(hp["gem_p"], feat_flat, sel, avg,
      hp["w_conv_folded"], hp["bias_folded"], hp["w_l1_pad"], hp["b_l1_pad"])


# ---------------------------------------------------------------------------
# Full forward: cat([x,x,x], dim=1) -> backbone features -> 3 fused AdaptiveHeads.
# ---------------------------------------------------------------------------
def classifier_cnn_effnet_forward(x, packed):
    x3 = jnp.concatenate([x, x, x], axis=1)                          # [B,3,H,W] NCHW
    feat_flat, Hf, Wf = _backbone_features(x3, packed["emb_w"], packed["emb_b"])
    B = x.shape[0]
    fused = _fused_heads(feat_flat, B, Hf, Wf, packed["heads"])      # [3, B, 256]
    logit_grapheme = fused[0, :, :N_GRAPHEME]
    logit_vowel = fused[1, :, :N_VOWEL]
    logit_consonant = fused[2, :, :N_CONSONANT]
    return logit_grapheme, logit_vowel, logit_consonant


# ---------------------------------------------------------------------------
# Parameters.  init_params mirrors the torch module; prepare_params does the
# one-time eval-mode folding / packing / bf16 cast (not per forward call).
# ---------------------------------------------------------------------------
def init_params(key):
    k_emb_w, k_emb_b, k_heads = jax.random.split(key, 3)
    params = {
        "emb_w": 0.05 * jax.random.normal(
            k_emb_w, (3 * PATCH * PATCH, IN_FEATURES), jnp.float32),
        "emb_b": 0.05 * jax.random.normal(k_emb_b, (1, IN_FEATURES), jnp.float32),
        "heads": {},
    }
    for name, n_out, hk in zip(HEAD_NAMES, N_CLASSES, jax.random.split(k_heads, 3)):
        k1, k2, k3, k4 = jax.random.split(hk, 4)
        params["heads"][name] = {
            # Conv2d(1408, 704, kernel_size=2) weight stored as [kh*kw, in, out]
            # (== torch weight.permute(2, 3, 1, 0).reshape(4, 1408, 704)).
            "w_conv": 0.02 * jax.random.normal(k1, (4, IN_FEATURES, H_DIM), jnp.float32),
            "b_conv": 0.02 * jax.random.normal(k2, (H_DIM,), jnp.float32),
            # BatchNorm2d(704) defaults: gamma=1, beta=0, running stats (0, 1).
            "bn_gamma": jnp.ones((H_DIM,), jnp.float32),
            "bn_beta": jnp.zeros((H_DIM,), jnp.float32),
            "bn_mean": jnp.zeros((H_DIM,), jnp.float32),
            "bn_var": jnp.ones((H_DIM,), jnp.float32),
            # Linear(704, n_out)
            "w_l1": 0.02 * jax.random.normal(k3, (H_DIM, n_out), jnp.float32),
            "b_l1": 0.02 * jax.random.normal(k4, (n_out,), jnp.float32),
            # GeM learnable power, initialized to 3.0 (as in GeM.__init__)
            "gem_p": jnp.asarray(3.0, jnp.float32),
        }
    return params


def prepare_params(params):
    """Fold eval-mode BN into conv weights, pad/stack per-head params, cast to bf16."""
    packed = {
        "emb_w": params["emb_w"].astype(jnp.bfloat16),
        "emb_b": params["emb_b"].astype(jnp.float32),
    }
    w_list, b_list, wl_list, bl_list, p_list = [], [], [], [], []
    for name, n_out in zip(HEAD_NAMES, N_CLASSES):
        h = params["heads"][name]
        s = h["bn_gamma"] / jnp.sqrt(h["bn_var"] + BN_EPS)            # [704]
        w_fold = h["w_conv"] * s[None, None, :]                       # BN scale into weight
        b_fold = (h["b_conv"] - h["bn_mean"]) * s + h["bn_beta"]      # BN shift + conv bias
        wl = jnp.zeros((H_DIM, N_OUT_PAD), jnp.float32).at[:, :n_out].set(h["w_l1"])
        bl = jnp.zeros((N_OUT_PAD,), jnp.float32).at[:n_out].set(h["b_l1"])
        w_list.append(w_fold.astype(jnp.bfloat16))
        b_list.append(b_fold[None, :])
        wl_list.append(wl.astype(jnp.bfloat16))
        bl_list.append(bl[None, :])
        p_list.append(h["gem_p"])
    packed["heads"] = {
        "w_conv_folded": jnp.stack(w_list),       # [3, 4, 1408, 704] bf16
        "bias_folded": jnp.stack(b_list),         # [3, 1, 704]       f32
        "w_l1_pad": jnp.stack(wl_list),           # [3, 704, 256]     bf16
        "b_l1_pad": jnp.stack(bl_list),           # [3, 1, 256]       f32
        "gem_p": jnp.stack(p_list),               # [3]               f32
    }
    return packed


if __name__ == "__main__":
    key = jax.random.PRNGKey(0)
    k_x, k_p = jax.random.split(key)
    B, Himg, Wimg = 2, 32, 32
    x = jax.random.normal(k_x, (B, 1, Himg, Wimg), jnp.float32)      # NCHW, 1 channel
    params = init_params(k_p)
    packed = prepare_params(params)                                  # one-time folding

    fwd = jax.jit(classifier_cnn_effnet_forward)
    g, v, c = fwd(x, packed)
    jax.block_until_ready((g, v, c))

    assert g.shape == (B, N_GRAPHEME) and g.dtype == jnp.float32
    assert v.shape == (B, N_VOWEL) and v.dtype == jnp.float32
    assert c.shape == (B, N_CONSONANT) and c.dtype == jnp.float32
    assert bool(jnp.all(jnp.isfinite(g)))
    assert bool(jnp.all(jnp.isfinite(v)))
    assert bool(jnp.all(jnp.isfinite(c)))
    print("KERNEL_OK")
</pallas_src>

<mosaic_0001>
module attributes {stable_mosaic.version = 11 : i64} {
  func.func @_embed_kernel(%arg0: i32, %arg1: memref<32x192xbf16, #tpu.memory_space<vmem>>, %arg2: memref<192x1408xbf16, #tpu.memory_space<vmem>>, %arg3: memref<1x1408xf32, #tpu.memory_space<vmem>>, %arg4: memref<32x1408xbf16, #tpu.memory_space<vmem>>) attributes {dimension_semantics = [#tpu.dimension_semantics<parallel>], iteration_bounds = array<i64: 1>, scalar_prefetch = 0 : i64, scratch_operands = 0 : i64, tpu.core_type = #tpu.core_type<tc>, window_params = [{transform_indices = @transform_0, window_bounds = array<i64: 32, 192>}, {pipeline_mode = #tpu.pipeline_mode<synchronous>, transform_indices = @transform_1, window_bounds = array<i64: 192, 1408>}, {pipeline_mode = #tpu.pipeline_mode<synchronous>, transform_indices = @transform_2, window_bounds = array<i64: 1, 1408>}, {transform_indices = @transform_3, window_bounds = array<i64: 32, 1408>}]} {
    %c0 = arith.constant 0 : index
    %c0_0 = arith.constant 0 : index
    %0 = vector.load %arg1[%c0, %c0_0] : memref<32x192xbf16, #tpu.memory_space<vmem>>, vector<32x192xbf16>
    %c0_1 = arith.constant 0 : index
    %c0_2 = arith.constant 0 : index
    %1 = vector.load %arg2[%c0_1, %c0_2] : memref<192x1408xbf16, #tpu.memory_space<vmem>>, vector<192x1408xbf16>
    %cst = arith.constant dense<0.000000e+00> : vector<32x1408xf32>
    %2 = tpu.matmul %0, %1, %cst {dimension_numbers = #tpu.dot_dimension_numbers<[1], [0], [0], [1], [0, 0, 1, 1], [], []>} : vector<32x192xbf16>, vector<192x1408xbf16>, vector<32x1408xf32> -> vector<32x1408xf32>
    %c0_3 = arith.constant 0 : index
    %c0_4 = arith.constant 0 : index
    %3 = vector.load %arg3[%c0_3, %c0_4] : memref<1x1408xf32, #tpu.memory_space<vmem>>, vector<1x1408xf32>
    %4 = vector.broadcast %3 : vector<1x1408xf32> to vector<32x1408xf32>
    %5 = arith.addf %2, %4 : vector<32x1408xf32>
    %cst_5 = arith.constant 0.000000e+00 : f32
    %6 = vector.broadcast %cst_5 : f32 to vector<32x1408xf32>
    %7 = arith.maximumf %5, %6 : vector<32x1408xf32>
    %8 = arith.truncf %7 : vector<32x1408xf32> to vector<32x1408xbf16>
    %c0_6 = arith.constant 0 : index
    %c0_7 = arith.constant 0 : index
    %9 = vector.load %arg4[%c0_6, %c0_7] : memref<32x1408xbf16, #tpu.memory_space<vmem>>, vector<32x1408xbf16>
    tpu.vector_store %arg4[%c0_6, %c0_7], %8 {strides = array<i32>} : memref<32x1408xbf16, #tpu.memory_space<vmem>>, vector<32x1408xbf16>,
    return
  }
  func.func @transform_0(%arg0: i32) -> (i32, i32) {
    %c0_i32 = arith.constant 0 : i32
    %c0_i32_0 = arith.constant 0 : i32
    return %arg0, %c0_i32 : i32, i32
  }
  func.func @transform_1(%arg0: i32) -> (i32, i32) {
    %c0_i32 = arith.constant 0 : i32
    %c0_i32_0 = arith.constant 0 : i32
    %c0_i32_1 = arith.constant 0 : i32
    return %c0_i32, %c0_i32_0 : i32, i32
  }
  func.func @transform_2(%arg0: i32) -> (i32, i32) {
    %c0_i32 = arith.constant 0 : i32
    %c0_i32_0 = arith.constant 0 : i32
    %c0_i32_1 = arith.constant 0 : i32
    return %c0_i32, %c0_i32_0 : i32, i32
  }
  func.func @transform_3(%arg0: i32) -> (i32, i32) {
    %c0_i32 = arith.constant 0 : i32
    %c0_i32_0 = arith.constant 0 : i32
    return %arg0, %c0_i32 : i32, i32
  }
}

module attributes {stable_mosaic.version = 11 : i64} {
  func.func @_heads_kernel(%arg0: i32, %arg1: i32, %arg2: memref<3xf32, #tpu.memory_space<smem>>, %arg3: memref<32x1408xbf16, #tpu.memory_space<vmem>>, %arg4: memref<2x24x32xbf16, #tpu.memory_space<vmem>>, %arg5: memref<2x24xf32, #tpu.memory_space<vmem>>, %arg6: memref<1x2x1408x704xbf16, #tpu.memory_space<vmem>>, %arg7: memref<1x1x704xf32, #tpu.memory_space<vmem>>, %arg8: memref<1x704x256xbf16, #tpu.memory_space<vmem>>, %arg9: memref<1x1x256xf32, #tpu.memory_space<vmem>>, %arg10: memref<1x2x256xf32, #tpu.memory_space<vmem>>, %arg11: memref<24x704xf32, #tpu.memory_space<vmem>>) attributes {dimension_semantics = [#tpu.dimension_semantics<parallel>, #tpu.dimension_semantics<arbitrary>], iteration_bounds = array<i64: 3, 2>, scalar_prefetch = 0 : i64, scratch_operands = 1 : i64, tpu.core_type = #tpu.core_type<tc>, window_params = [{transform_indices = @transform_0, window_bounds = array<i64: 3>}, {pipeline_mode = #tpu.pipeline_mode<synchronous>, transform_indices = @transform_1, window_bounds = array<i64: 32, 1408>}, {transform_indices = @transform_2, window_bounds = array<i64: 2, 24, 32>}, {pipeline_mode = #tpu.pipeline_mode<synchronous>, transform_indices = @transform_3, window_bounds = array<i64: 2, 24>}, {transform_indices = @transform_4, window_bounds = array<i64: 1, 2, 1408, 704>}, {transform_indices = @transform_5, window_bounds = array<i64: 1, 1, 704>}, {transform_indices = @transform_6, window_bounds = array<i64: 1, 704, 256>}, {transform_indices = @transform_7, window_bounds = array<i64: 1, 1, 256>}, {transform_indices = @transform_8, window_bounds = array<i64: 1, 2, 256>}]} {
    %c0_i32 = arith.constant 0 : i32
    %0 = arith.cmpi eq, %arg1, %c0_i32 : i32
    %1 = arith.extui %0 : i1 to i32
    %c0_i32_0 = arith.constant 0 : i32
    %2 = arith.cmpi ne, %1, %c0_i32_0 : i32
    scf.if %2 {
      %cst_27 = arith.constant 0.000000e+00 : f32
      %27 = vector.broadcast %cst_27 : f32 to vector<24x704xf32>
      %c0_28 = arith.constant 0 : index
      %c0_29 = arith.constant 0 : index
      %28 = vector.load %arg11[%c0_28, %c0_29] : memref<24x704xf32, #tpu.memory_space<vmem>>, vector<24x704xf32>
      tpu.vector_store %arg11[%c0_28, %c0_29], %27 {strides = array<i32>} : memref<24x704xf32, #tpu.memory_space<vmem>>, vector<24x704xf32>,
    } else {
    }
    %c0 = arith.constant 0 : index
    %c0_1 = arith.constant 0 : index
    %3 = vector.load %arg3[%c0, %c0_1] : memref<32x1408xbf16, #tpu.memory_space<vmem>>, vector<32x1408xbf16>
    %c0_2 = arith.constant 0 : index
    %c0_3 = arith.constant 0 : index
    %c0_4 = arith.constant 0 : index
    %4 = vector.load %arg4[%c0_2, %c0_3, %c0_4] : memref<2x24x32xbf16, #tpu.memory_space<vmem>>, vector<1x24x32xbf16>
    %5 = vector.shape_cast %4 : vector<1x24x32xbf16> to vector<24x32xbf16>
    %cst = arith.constant dense<0.000000e+00> : vector<24x1408xf32>
    %6 = tpu.matmul %5, %3, %cst {dimension_numbers = #tpu.dot_dimension_numbers<[1], [0], [0], [1], [0, 0, 1, 1], [], []>} : vector<24x32xbf16>, vector<32x1408xbf16>, vector<24x1408xf32> -> vector<24x1408xf32>
    %c0_5 = arith.constant 0 : index
    %c0_6 = arith.constant 0 : index
    %7 = vector.load %arg11[%c0_5, %c0_6] : memref<24x704xf32, #tpu.memory_space<vmem>>, vector<24x704xf32>
    %8 = arith.truncf %6 : vector<24x1408xf32> to vector<24x1408xbf16>
    %c0_7 = arith.constant 0 : index
    %c0_8 = arith.constant 0 : index
    %c0_9 = arith.constant 0 : index
    %c0_10 = arith.constant 0 : index
    %9 = vector.load %arg6[%c0_7, %c0_8, %c0_9, %c0_10] : memref<1x2x1408x704xbf16, #tpu.memory_space<vmem>>, vector<1x1x1408x704xbf16>
    %10 = vector.shape_cast %9 : vector<1x1x1408x704xbf16> to vector<1408x704xbf16>
    %cst_11 = arith.constant dense<0.000000e+00> : vector<24x704xf32>
    %11 = tpu.matmul %8, %10, %cst_11 {dimension_numbers = #tpu.dot_dimension_numbers<[1], [0], [0], [1], [0, 0, 1, 1], [], []>} : vector<24x1408xbf16>, vector<1408x704xbf16>, vector<24x704xf32> -> vector<24x704xf32>
    %12 = arith.addf %7, %11 : vector<24x704xf32>
    %c0_12 = arith.constant 0 : index
    %c0_13 = arith.constant 0 : index
    %13 = vector.load %arg11[%c0_12, %c0_13] : memref<24x704xf32, #tpu.memory_space<vmem>>, vector<24x704xf32>
    tpu.vector_store %arg11[%c0_12, %c0_13], %12 {strides = array<i32>} : memref<24x704xf32, #tpu.memory_space<vmem>>, vector<24x704xf32>,
    %c1 = arith.constant 1 : index
    %c0_14 = arith.constant 0 : index
    %c0_15 = arith.constant 0 : index
    %14 = vector.load %arg4[%c1, %c0_14, %c0_15] : memref<2x24x32xbf16, #tpu.memory_space<vmem>>, vector<1x24x32xbf16>
    %15 = vector.shape_cast %14 : vector<1x24x32xbf16> to vector<24x32xbf16>
    %cst_16 = arith.constant dense<0.000000e+00> : vector<24x1408xf32>
    %16 = tpu.matmul %15, %3, %cst_16 {dimension_numbers = #tpu.dot_dimension_numbers<[1], [0], [0], [1], [0, 0, 1, 1], [], []>} : vector<24x32xbf16>, vector<32x1408xbf16>, vector<24x1408xf32> -> vector<24x1408xf32>
    %c0_17 = arith.constant 0 : index
    %c0_18 = arith.constant 0 : index
    %17 = vector.load %arg11[%c0_17, %c0_18] : memref<24x704xf32, #tpu.memory_space<vmem>>, vector<24x704xf32>
    %18 = arith.truncf %16 : vector<24x1408xf32> to vector<24x1408xbf16>
    %c0_19 = arith.constant 0 : index
    %c1_20 = arith.constant 1 : index
    %c0_21 = arith.constant 0 : index
    %c0_22 = arith.constant 0 : index
    %19 = vector.load %arg6[%c0_19, %c1_20, %c0_21, %c0_22] : memref<1x2x1408x704xbf16, #tpu.memory_space<vmem>>, vector<1x1x1408x704xbf16>
    %20 = vector.shape_cast %19 : vector<1x1x1408x704xbf16> to vector<1408x704xbf16>
    %cst_23 = arith.constant dense<0.000000e+00> : vector<24x704xf32>
    %21 = tpu.matmul %18, %20, %cst_23 {dimension_numbers = #tpu.dot_dimension_numbers<[1], [0], [0], [1], [0, 0, 1, 1], [], []>} : vector<24x1408xbf16>, vector<1408x704xbf16>, vector<24x704xf32> -> vector<24x704xf32>
    %22 = arith.addf %17, %21 : vector<24x704xf32>
    %c0_24 = arith.constant 0 : index
    %c0_25 = arith.constant 0 : index
    %23 = vector.load %arg11[%c0_24, %c0_25] : memref<24x704xf32, #tpu.memory_space<vmem>>, vector<24x704xf32>
    tpu.vector_store %arg11[%c0_24, %c0_25], %22 {strides = array<i32>} : memref<24x704xf32, #tpu.memory_space<vmem>>, vector<24x704xf32>,
    %c1_i32 = arith.constant 1 : i32
    %24 = arith.cmpi eq, %arg1, %c1_i32 : i32
    %25 = arith.extui %24 : i1 to i32
    %c0_i32_26 = arith.constant 0 : i32
    %26 = arith.cmpi ne, %25, %c0_i32_26 : i32
    scf.if %26 {
      %27 = arith.index_cast %arg0 : i32 to index
      %28 = memref.load %arg2[%27] : memref<3xf32, #tpu.memory_space<smem>>
      %c0_27 = arith.constant 0 : index
      %c0_28 = arith.constant 0 : index
      %29 = vector.load %arg11[%c0_27, %c0_28] : memref<24x704xf32, #tpu.memory_space<vmem>>, vector<24x704xf32>
      %c0_29 = arith.constant 0 : index
      %c0_30 = arith.constant 0 : index
      %c0_31 = arith.constant 0 : index
      %30 = vector.load %arg7[%c0_29, %c0_30, %c0_31] : memref<1x1x704xf32, #tpu.memory_space<vmem>>, vector<1x1x704xf32>
      %31 = vector.shape_cast %30 : vector<1x1x704xf32> to vector<1x704xf32>
      %32 = vector.broadcast %31 : vector<1x704xf32> to vector<24x704xf32>
      %33 = arith.addf %29, %32 : vector<24x704xf32>
      %cst_32 = arith.constant 9.99999997E-7 : f32
      %34 = vector.broadcast %cst_32 : f32 to vector<24x704xf32>
      %35 = arith.maximumf %33, %34 : vector<24x704xf32>
      %36 = math.log %35 : vector<24x704xf32>
      %37 = vector.broadcast %28 : f32 to vector<24x704xf32>
      %38 = arith.mulf %37, %36 : vector<24x704xf32>
      %39 = math.exp %38 : vector<24x704xf32>
      %c0_33 = arith.constant 0 : index
      %c0_34 = arith.constant 0 : index
      %40 = vector.load %arg5[%c0_33, %c0_34] : memref<2x24xf32, #tpu.memory_space<vmem>>, vector<2x24xf32>
      %cst_35 = arith.constant dense<0.000000e+00> : vector<2x704xf32>
      %41 = tpu.matmul %40, %39, %cst_35 {dimension_numbers = #tpu.dot_dimension_numbers<[1], [0], [0], [1], [0, 0, 1, 1], [], []>} : vector<2x24xf32>, vector<24x704xf32>, vector<2x704xf32> -> vector<2x704xf32>
      %cst_36 = arith.constant 1.000000e-30 : f32
      %42 = vector.broadcast %cst_36 : f32 to vector<2x704xf32>
      %43 = arith.maximumf %41, %42 : vector<2x704xf32>
      %44 = math.log %43 : vector<2x704xf32>
      %45 = vector.broadcast %28 : f32 to vector<2x704xf32>
      %46 = arith.divf %44, %45 : vector<2x704xf32>
      %47 = math.exp %46 : vector<2x704xf32>
      %cst_37 = arith.constant 0.000000e+00 : f32
      %48 = vector.broadcast %cst_37 : f32 to vector<2x704xf32>
      %49 = arith.maximumf %47, %48 : vector<2x704xf32>
      %c0_38 = arith.constant 0 : index
      %c0_39 = arith.constant 0 : index
      %c0_40 = arith.constant 0 : index
      %50 = vector.load %arg8[%c0_38, %c0_39, %c0_40] : memref<1x704x256xbf16, #tpu.memory_space<vmem>>, vector<1x704x256xbf16>
      %51 = vector.shape_cast %50 : vector<1x704x256xbf16> to vector<704x256xbf16>
      %52 = arith.extf %51 : vector<704x256xbf16> to vector<704x256xf32>
      %cst_41 = arith.constant dense<0.000000e+00> : vector<2x256xf32>
      %53 = tpu.matmul %49, %52, %cst_41 {dimension_numbers = #tpu.dot_dimension_numbers<[1], [0], [0], [1], [0, 0, 1, 1], [], []>} : vector<2x704xf32>, vector<704x256xf32>, vector<2x256xf32> -> vector<2x256xf32>
      %c0_42 = arith.constant 0 : index
      %c0_43 = arith.constant 0 : index
      %c0_44 = arith.constant 0 : index
      %54 = vector.load %arg9[%c0_42, %c0_43, %c0_44] : memref<1x1x256xf32, #tpu.memory_space<vmem>>, vector<1x1x256xf32>
      %55 = vector.shape_cast %54 : vector<1x1x256xf32> to vector<1x256xf32>
      %56 = vector.broadcast %55 : vector<1x256xf32> to vector<2x256xf32>
      %57 = arith.addf %53, %56 : vector<2x256xf32>
      %c0_45 = arith.constant 0 : index
      %c0_46 = arith.constant 0 : index
      %c0_47 = arith.constant 0 : index
      %58 = vector.load %arg10[%c0_45, %c0_46, %c0_47] : memref<1x2x256xf32, #tpu.memory_space<vmem>>, vector<1x2x256xf32>
      %59 = vector.shape_cast %58 : vector<1x2x256xf32> to vector<2x256xf32>
      %60 = vector.shape_cast %57 : vector<2x256xf32> to vector<1x2x256xf32>
      tpu.vector_store %arg10[%c0_45, %c0_46, %c0_47], %60 {strides = array<i32>} : memref<1x2x256xf32, #tpu.memory_space<vmem>>, vector<1x2x256xf32>,
    } else {
    }
    return
  }
  func.func @transform_0(%arg0: i32, %arg1: i32) -> i32 {
    %c0_i32 = arith.constant 0 : i32
    %c0_i32_0 = arith.constant 0 : i32
    return %c0_i32 : i32
  }
  func.func @transform_1(%arg0: i32, %arg1: i32) -> (i32, i32) {
    %c0_i32 = arith.constant 0 : i32
    %c0_i32_0 = arith.constant 0 : i32
    %c0_i32_1 = arith.constant 0 : i32
    return %c0_i32, %c0_i32_0 : i32, i32
  }
  func.func @transform_2(%arg0: i32, %arg1: i32) -> (i32, i32, i32) {
    %c0_i32 = arith.constant 0 : i32
    %c0_i32_0 = arith.constant 0 : i32
    %c0_i32_1 = arith.constant 0 : i32
    return %arg1, %c0_i32, %c0_i32_0 : i32, i32, i32
  }
  func.func @transform_3(%arg0: i32, %arg1: i32) -> (i32, i32) {
    %c0_i32 = arith.constant 0 : i32
    %c0_i32_0 = arith.constant 0 : i32
    %c0_i32_1 = arith.constant 0 : i32
    return %c0_i32, %c0_i32_0 : i32, i32
  }
  func.func @transform_4(%arg0: i32, %arg1: i32) -> (i32, i32, i32, i32) {
    %c0_i32 = arith.constant 0 : i32
    %c0_i32_0 = arith.constant 0 : i32
    %c0_i32_1 = arith.constant 0 : i32
    return %arg0, %arg1, %c0_i32, %c0_i32_0 : i32, i32, i32, i32
  }
  func.func @transform_5(%arg0: i32, %arg1: i32) -> (i32, i32, i32) {
    %c0_i32 = arith.constant 0 : i32
    %c0_i32_0 = arith.constant 0 : i32
    %c0_i32_1 = arith.constant 0 : i32
    return %arg0, %c0_i32, %c0_i32_0 : i32, i32, i32
  }
  func.func @transform_6(%arg0: i32, %arg1: i32) -> (i32, i32, i32) {
    %c0_i32 = arith.constant 0 : i32
    %c0_i32_0 = arith.constant 0 : i32
    %c0_i32_1 = arith.constant 0 : i32
    return %arg0, %c0_i32, %c0_i32_0 : i32, i32, i32
  }
  func.func @transform_7(%arg0: i32, %arg1: i32) -> (i32, i32, i32) {
    %c0_i32 = arith.constant 0 : i32
    %c0_i32_0 = arith.constant 0 : i32
    %c0_i32_1 = arith.constant 0 : i32
    return %arg0, %c0_i32, %c0_i32_0 : i32, i32, i32
  }
  func.func @transform_8(%arg0: i32, %arg1: i32) -> (i32, i32, i32) {
    %c0_i32 = arith.constant 0 : i32
    %c0_i32_0 = arith.constant 0 : i32
    %c0_i32_1 = arith.constant 0 : i32
    return %arg0, %c0_i32, %c0_i32_0 : i32, i32, i32
  }
}

</mosaic_0001>

<llo_original>
// kernel: classifier_cnn_effnet_forward.2
$region0: #{classifier_cnn_effnet_forward.2}
  #allocation0 [shape = 'u32[]', space=smem, size = 0x4, offset = 0x4, fixed_abs, tag = 'smem constant byte address 0x4 - core index']
  #allocation1 [shape = 'u32[144,128]{1,0:T(1,128)}', space=vmem, size = 0x12000, scoped, tag = 'internal scratch']
  %s0 = inlined_call_operand.vmem [shape: bf16[32,192], index: 0, kind: input, shape index: {}]
  %s1 = inlined_call_operand.hbm [shape: bf16[192,1408], index: 1, kind: input, shape index: {}]
  %s2 = inlined_call_operand.hbm [shape: f32[1,1408], index: 2, kind: input, shape index: {}]
  %s3 = inlined_call_operand.vmem [shape: bf16[32,1408], index: 3, kind: output, shape index: {}]
  %s4 = sld [smem:[#allocation0]]
  $region30: #{classifier_cnn_effnet_forward.2} parent=0
    _
  %s6 = ssub.s32 1, %s4
  %s7 = scalar_select 0, %s6, %s4
  $region1: #{classifier_cnn_effnet_forward.2} parent=0
    #allocation2 [shape = 'u8[540672]{0}', space=vmem, size = 0x84000, scoped, tag = 'input window, operand 1, single buffered']
    #allocation3 [shape = 's32[1]{0}', space=sflag, size = 0x4, scoped, tag = 'scoped memory for classifier_cnn_effnet_forward.2']
    #allocation4 [shape = 'u8[5632]{0}', space=vmem, size = 0x1800, scoped, tag = 'input window, operand 2, single buffered']
    #allocation5 [shape = 's32[1]{0}', space=sflag, size = 0x4, scoped, tag = 'scoped memory for classifier_cnn_effnet_forward.2']
    %8 = vsyncpa [#allocation3], 0
    %9 = vsyncpa [#allocation5], 0
    // Predicated region
    $region2: #{classifier_cnn_effnet_forward.2} parent=1 // pred_check
      _
    $region3: #{classifier_cnn_effnet_forward.2} parent=1 // pred_check_branch
      %11 = sbr.rel (0) target = $region5
    $region4: #{classifier_cnn_effnet_forward.2} parent=1 // pred_region
      _
    $region5: #{classifier_cnn_effnet_forward.2} parent=1 // pred_fallthru
      _
    // Predicated region
    $region6: #{classifier_cnn_effnet_forward.2} parent=1 // pred_check
      _
    $region7: #{classifier_cnn_effnet_forward.2} parent=1 // pred_check_branch
      %13 = sbr.rel (0) target = $region9
    $region8: #{classifier_cnn_effnet_forward.2} parent=1 // pred_region
      %s15 = ssub.s32 16896, 16896
      %16 = vsyncadd [#allocation3], %s15
      %s17 = sshll.u32 [#allocation2], 4
      %s18 = int_to_ptr.vmem [resolvable:$true] %s17
      %23 = dma.hbm_to_vmem [thread:$0]  %s1, 16896, %s18, [#allocation3], 704, 704, 44
    $region9: #{classifier_cnn_effnet_forward.2} parent=1 // pred_fallthru
      _
    // Predicated region
    $region10: #{classifier_cnn_effnet_forward.2} parent=1 // pred_check
      _
    $region11: #{classifier_cnn_effnet_forward.2} parent=1 // pred_check_branch
      %25 = sbr.rel (0) target = $region13
    $region12: #{classifier_cnn_effnet_forward.2} parent=1 // pred_region
      %s27 = ssub.s32 176, 176
      %28 = vsyncadd [#allocation5], %s27
      %s30 = sshll.u32 [#allocation4], 4
      %s31 = int_to_ptr.vmem [resolvable:$true] %s30
      %33 = dma.hbm_to_vmem [thread:$0]  %s2, 176, %s31, [#allocation5]
    $region13: #{classifier_cnn_effnet_forward.2} parent=1 // pred_fallthru
      _
    // Predicated region
    $region14: #{classifier_cnn_effnet_forward.2} parent=1 // pred_check
      _
    $region15: #{classifier_cnn_effnet_forward.2} parent=1 // pred_check_branch
      %35 = sbr.rel (0) target = $region17
    $region16: #{classifier_cnn_effnet_forward.2} parent=1 // pred_region
      %36 = dma.done [#allocation3], 16896
    $region17: #{classifier_cnn_effnet_forward.2} parent=1 // pred_fallthru
      _
    // Predicated region
    $region18: #{classifier_cnn_effnet_forward.2} parent=1 // pred_check
      _
    $region19: #{classifier_cnn_effnet_forward.2} parent=1 // pred_check_branch
      %38 = sbr.rel (0) target = $region21
    $region20: #{classifier_cnn_effnet_forward.2} parent=1 // pred_region
      %39 = dma.done [#allocation5], 176
    $region21: #{classifier_cnn_effnet_forward.2} parent=1 // pred_fallthru
      _
    %v41 = vld [vmem:[%s0] sm:$0xff]
    %v42 = vld [vmem:[%s0 + $0x8] sm:$0xff]
    %v43 = vld [vmem:[%s0 + $0x10] sm:$0xff]
    %v44 = vld [vmem:[%s0 + $0x18] sm:$0xff]
    %v45 = vld [vmem:[#allocation2] sm:$0xff]
    %v46 = vld [vmem:[#allocation2 + $0x8] sm:$0xff]
    %v47 = vld [vmem:[#allocation2 + $0x10] sm:$0xff]
    %v48 = vld [vmem:[#allocation2 + $0x18] sm:$0xff]
    %v49 = vld [vmem:[#allocation2 + $0x20] sm:$0xff]
    %v50 = vld [vmem:[#allocation2 + $0x28] sm:$0xf]
    %v51 = vld [vmem:[#allocation2 + $0x2c] sm:$0xff]
    %v52 = vld [vmem:[#allocation2 + $0x34] sm:$0xff]
    %v53 = vld [vmem:[#allocation2 + $0x3c] sm:$0xff]
    %v54 = vld [vmem:[#allocation2 + $0x44] sm:$0xff]
    %v55 = vld [vmem:[#allocation2 + $0x4c] sm:$0xff]
    %v56 = vld [vmem:[#allocation2 + $0x54] sm:$0xf]
    %v57 = vld [vmem:[#allocation2 + $0x58] sm:$0xff]
    %v58 = vld [vmem:[#allocation2 + $0x60] sm:$0xff]
    %v59 = vld [vmem:[#allocation2 + $0x68] sm:$0xff]
    %v60 = vld [vmem:[#allocation2 + $0x70] sm:$0xff]
    %v61 = vld [vmem:[#allocation2 + $0x78] sm:$0xff]
    %v62 = vld [vmem:[#allocation2 + $0x80] sm:$0xf]
    %v63 = vld [vmem:[#allocation2 + $0x84] sm:$0xff]
    %v64 = vld [vmem:[#allocation2 + $0x8c] sm:$0xff]
    %v65 = vld [vmem:[#allocation2 + $0x94] sm:$0xff]
    %v66 = vld [vmem:[#allocation2 + $0x9c] sm:$0xff]
    %v67 = vld [vmem:[#allocation2 + $0xa4] sm:$0xff]
    %v68 = vld [vmem:[#allocation2 + $0xac] sm:$0xf]
    %v69 = vld [vmem:[#allocation2 + $0xb0] sm:$0xff]
    %v70 = vld [vmem:[#allocation2 + $0xb8] sm:$0xff]
    %v71 = vld [vmem:[#allocation2 + $0xc0] sm:$0xff]
    %v72 = vld [vmem:[#allocation2 + $0xc8] sm:$0xff]
    %v73 = vld [vmem:[#allocation2 + $0xd0] sm:$0xff]
    %v74 = vld [vmem:[#allocation2 + $0xd8] sm:$0xf]
    %v75 = vld [vmem:[#allocation2 + $0xdc] sm:$0xff]
    %v76 = vld [vmem:[#allocation2 + $0xe4] sm:$0xff]
    %v77 = vld [vmem:[#allocation2 + $0xec] sm:$0xff]
    %v78 = vld [vmem:[#allocation2 + $0xf4] sm:$0xff]
    %v79 = vld [vmem:[#allocation2 + $0xfc] sm:$0xff]
    %v80 = vld [vmem:[#allocation2 + $0x104] sm:$0xf]
    %v81 = vld [vmem:[#allocation2 + $0x108] sm:$0xff]
    %v82 = vld [vmem:[#allocation2 + $0x110] sm:$0xff]
    %v83 = vld [vmem:[#allocation2 + $0x118] sm:$0xff]
    %v84 = vld [vmem:[#allocation2 + $0x120] sm:$0xff]
    %v85 = vld [vmem:[#allocation2 + $0x128] sm:$0xff]
    %v86 = vld [vmem:[#allocation2 + $0x130] sm:$0xf]
    %v87 = vld [vmem:[#allocation2 + $0x134] sm:$0xff]
    %v88 = vld [vmem:[#allocation2 + $0x13c] sm:$0xff]
    %v89 = vld [vmem:[#allocation2 + $0x144] sm:$0xff]
    %v90 = vld [vmem:[#allocation2 + $0x14c] sm:$0xff]
    %v91 = vld [vmem:[#allocation2 + $0x154] sm:$0xff]
    %v92 = vld [vmem:[#allocation2 + $0x15c] sm:$0xf]
    %v93 = vld [vmem:[#allocation2 + $0x160] sm:$0xff]
    %v94 = vld [vmem:[#allocation2 + $0x168] sm:$0xff]
    %v95 = vld [vmem:[#allocation2 + $0x170] sm:$0xff]
    %v96 = vld [vmem:[#allocation2 + $0x178] sm:$0xff]
    %v97 = vld [vmem:[#allocation2 + $0x180] sm:$0xff]
    %v98 = vld [vmem:[#allocation2 + $0x188] sm:$0xf]
    %v99 = vld [vmem:[#allocation2 + $0x18c] sm:$0xff]
    %v100 = vld [vmem:[#allocation2 + $0x194] sm:$0xff]
    %v101 = vld [vmem:[#allocation2 + $0x19c] sm:$0xff]
    %v102 = vld [vmem:[#allocation2 + $0x1a4] sm:$0xff]
    %v103 = vld [vmem:[#allocation2 + $0x1ac] sm:$0xff]
    %v104 = vld [vmem:[#allocation2 + $0x1b4] sm:$0xf]
    %v105 = vld [vmem:[#allocation2 + $0x1b8] sm:$0xff]
    %v106 = vld [vmem:[#allocation2 + $0x1c0] sm:$0xff]
    %v107 = vld [vmem:[#allocation2 + $0x1c8] sm:$0xff]
    %v108 = vld [vmem:[#allocation2 + $0x1d0] sm:$0xff]
    %v109 = vld [vmem:[#allocation2 + $0x1d8] sm:$0xff]
    %v110 = vld [vmem:[#allocation2 + $0x1e0] sm:$0xf]
    %v111 = vld [vmem:[#allocation2 + $0x1e4] sm:$0xff]
    %v112 = vld [vmem:[#allocation2 + $0x1ec] sm:$0xff]
    %v113 = vld [vmem:[#allocation2 + $0x1f4] sm:$0xff]
    %v114 = vld [vmem:[#allocation2 + $0x1fc] sm:$0xff]
    %v115 = vld [vmem:[#allocation2 + $0x204] sm:$0xff]
    %v116 = vld [vmem:[#allocation2 + $0x20c] sm:$0xf]
    %v117 = vld [vmem:[#allocation2 + $0x210] sm:$0xff]
    %v118 = vld [vmem:[#allocation2 + $0x218] sm:$0xff]
    %v119 = vld [vmem:[#allocation2 + $0x220] sm:$0xff]
    %v120 = vld [vmem:[#allocation2 + $0x228] sm:$0xff]
    %v121 = vld [vmem:[#allocation2 + $0x230] sm:$0xff]
    %v122 = vld [vmem:[#allocation2 + $0x238] sm:$0xf]
    %v123 = vld [vmem:[#allocation2 + $0x23c] sm:$0xff]
    %v124 = vld [vmem:[#allocation2 + $0x244] sm:$0xff]
    %v125 = vld [vmem:[#allocation2 + $0x24c] sm:$0xff]
    %v126 = vld [vmem:[#allocation2 + $0x254] sm:$0xff]
    %v127 = vld [vmem:[#allocation2 + $0x25c] sm:$0xff]
    %v128 = vld [vmem:[#allocation2 + $0x264] sm:$0xf]
    %v129 = vld [vmem:[#allocation2 + $0x268] sm:$0xff]
    %v130 = vld [vmem:[#allocation2 + $0x270] sm:$0xff]
    %v131 = vld [vmem:[#allocation2 + $0x278] sm:$0xff]
    %v132 = vld [vmem:[#allocation2 + $0x280] sm:$0xff]
    %v133 = vld [vmem:[#allocation2 + $0x288] sm:$0xff]
    %v134 = vld [vmem:[#allocation2 + $0x290] sm:$0xf]
    %v135 = vld [vmem:[#allocation2 + $0x294] sm:$0xff]
    %v136 = vld [vmem:[#allocation2 + $0x29c] sm:$0xff]
    %v137 = vld [vmem:[#allocation2 + $0x2a4] sm:$0xff]
    %v138 = vld [vmem:[#allocation2 + $0x2ac] sm:$0xff]
    %v139 = vld [vmem:[#allocation2 + $0x2b4] sm:$0xff]
    %v140 = vld [vmem:[#allocation2 + $0x2bc] sm:$0xf]
    %v141 = vld [vmem:[#allocation2 + $0x2c0] sm:$0xff]
    %v142 = vld [vmem:[#allocation2 + $0x2c8] sm:$0xff]
    %v143 = vld [vmem:[#allocation2 + $0x2d0] sm:$0xff]
    %v144 = vld [vmem:[#allocation2 + $0x2d8] sm:$0xff]
    %v145 = vld [vmem:[#allocation2 + $0x2e0] sm:$0xff]
    %v146 = vld [vmem:[#allocation2 + $0x2e8] sm:$0xf]
    %v147 = vld [vmem:[#allocation2 + $0x2ec] sm:$0xff]
    %v148 = vld [vmem:[#allocation2 + $0x2f4] sm:$0xff]
    %v149 = vld [vmem:[#allocation2 + $0x2fc] sm:$0xff]
    %v150 = vld [vmem:[#allocation2 + $0x304] sm:$0xff]
    %v151 = vld [vmem:[#allocation2 + $0x30c] sm:$0xff]
    %v152 = vld [vmem:[#allocation2 + $0x314] sm:$0xf]
    %v153 = vld [vmem:[#allocation2 + $0x318] sm:$0xff]
    %v154 = vld [vmem:[#allocation2 + $0x320] sm:$0xff]
    %v155 = vld [vmem:[#allocation2 + $0x328] sm:$0xff]
    %v156 = vld [vmem:[#allocation2 + $0x330] sm:$0xff]
    %v157 = vld [vmem:[#allocation2 + $0x338] sm:$0xff]
    %v158 = vld [vmem:[#allocation2 + $0x340] sm:$0xf]
    %v159 = vld [vmem:[#allocation2 + $0x344] sm:$0xff]
    %v160 = vld [vmem:[#allocation2 + $0x34c] sm:$0xff]
    %v161 = vld [vmem:[#allocation2 + $0x354] sm:$0xff]
    %v162 = vld [vmem:[#allocation2 + $0x35c] sm:$0xff]
    %v163 = vld [vmem:[#allocation2 + $0x364] sm:$0xff]
    %v164 = vld [vmem:[#allocation2 + $0x36c] sm:$0xf]
    %v165 = vld [vmem:[#allocation2 + $0x370] sm:$0xff]
    %v166 = vld [vmem:[#allocation2 + $0x378] sm:$0xff]
    %v167 = vld [vmem:[#allocation2 + $0x380] sm:$0xff]
    %v168 = vld [vmem:[#allocation2 + $0x388] sm:$0xff]
    %v169 = vld [vmem:[#allocation2 + $0x390] sm:$0xff]
    %v170 = vld [vmem:[#allocation2 + $0x398] sm:$0xf]
    %v171 = vld [vmem:[#allocation2 + $0x39c] sm:$0xff]
    %v172 = vld [vmem:[#allocation2 + $0x3a4] sm:$0xff]
    %v173 = vld [vmem:[#allocation2 + $0x3ac] sm:$0xff]
    %v174 = vld [vmem:[#allocation2 + $0x3b4] sm:$0xff]
    %v175 = vld [vmem:[#allocation2 + $0x3bc] sm:$0xff]
    %v176 = vld [vmem:[#allocation2 + $0x3c4] sm:$0xf]
    %v177 = vld [vmem:[#allocation2 + $0x3c8] sm:$0xff]
    %v178 = vld [vmem:[#allocation2 + $0x3d0] sm:$0xff]
    %v179 = vld [vmem:[#allocation2 + $0x3d8] sm:$0xff]
    %v180 = vld [vmem:[#allocation2 + $0x3e0] sm:$0xff]
    %v181 = vld [vmem:[#allocation2 + $0x3e8] sm:$0xff]
    %v182 = vld [vmem:[#allocation2 + $0x3f0] sm:$0xf]
    %v183 = vld [vmem:[#allocation2 + $0x3f4] sm:$0xff]
    %v184 = vld [vmem:[#allocation2 + $0x3fc] sm:$0xff]
    %v185 = vld [vmem:[#allocation2 + $0x404] sm:$0xff]
    %v186 = vld [vmem:[#allocation2 + $0x40c] sm:$0xff]
    %v187 = vld [vmem:[#allocation2 + $0x414] sm:$0xff]
    %v188 = vld [vmem:[#allocation2 + $0x41c] sm:$0xf]
    %v189 = vld [vmem:[#allocation4] sm:$0xff]
    %v190 = vld [vmem:[#allocation4 + $0x8] sm:$0x7]
    %v193 = vlaneseq
    %v194 = vshrl.u32 %v193, 7
    %v195 = vsub.s32 0, %v194
    %v196 = vrot.slane %v189, %v195
    %v197 = vlaneseq
    %v198 = vshrl.u32 %v197, 7
    %v199 = vsub.s32 1, %v198
    %v200 = vrot.slane %v189, %v199
    %v201 = vlaneseq
    %v202 = vshrl.u32 %v201, 7
    %v203 = vsub.s32 2, %v202
    %v204 = vrot.slane %v189, %v203
    %v205 = vlaneseq
    %v206 = vshrl.u32 %v205, 7
    %v207 = vsub.s32 3, %v206
    %v208 = vrot.slane %v189, %v207
    %v209 = vlaneseq
    %v210 = vshrl.u32 %v209, 7
    %v211 = vsub.s32 4, %v210
    %v212 = vrot.slane %v189, %v211
    %v213 = vlaneseq
    %v214 = vshrl.u32 %v213, 7
    %v215 = vsub.s32 5, %v214
    %v216 = vrot.slane %v189, %v215
    %v217 = vlaneseq
    %v218 = vshrl.u32 %v217, 7
    %v219 = vsub.s32 6, %v218
    %v220 = vrot.slane %v189, %v219
    %v221 = vlaneseq
    %v222 = vshrl.u32 %v221, 7
    %v223 = vsub.s32 7, %v222
    %v224 = vrot.slane %v189, %v223
    %v225 = vlaneseq
    %v226 = vshrl.u32 %v225, 7
    %v227 = vsub.s32 0, %v226
    %v228 = vrot.slane %v190, %v227
    %v229 = vlaneseq
    %v230 = vshrl.u32 %v229, 7
    %v231 = vsub.s32 1, %v230
    %v232 = vrot.slane %v190, %v231
    %v233 = vlaneseq
    %v234 = vshrl.u32 %v233, 7
    %v235 = vsub.s32 2, %v234
    %v236 = vrot.slane %v190, %v235
    %v252 = vunpack.c.l.b16 %v41
    %v253 = vunpack.c.h.b16 %v41
    %v254 = vunpack.c.l.b16 %v42
    %v255 = vunpack.c.h.b16 %v42
    %v256 = vunpack.c.l.b16 %v43
    %v257 = vunpack.c.h.b16 %v43
    %v258 = vunpack.c.l.b16 %v44
    %v259 = vunpack.c.h.b16 %v44
    %v260 = vpack.c.b16 %v254, %v252
    %v261 = vpack.c.b16 %v255, %v253
    %v262 = vpack.c.b16 %v258, %v256
    %v263 = vpack.c.b16 %v259, %v257
    %v410 = vunpack.c.l.b16 %v45
    %v411 = vunpack.c.h.b16 %v45
    %v412 = vunpack.c.l.b16 %v46
    %v413 = vunpack.c.h.b16 %v46
    %v414 = vunpack.c.l.b16 %v47
    %v415 = vunpack.c.h.b16 %v47
    %v416 = vunpack.c.l.b16 %v48
    %v417 = vunpack.c.h.b16 %v48
    %v418 = vunpack.c.l.b16 %v49
    %v419 = vunpack.c.h.b16 %v49
    %v420 = vunpack.c.l.b16 %v50
    %v421 = vunpack.c.l.b16 %v51
    %v422 = vunpack.c.h.b16 %v51
    %v423 = vunpack.c.l.b16 %v52
    %v424 = vunpack.c.h.b16 %v52
    %v425 = vunpack.c.l.b16 %v53
    %v426 = vunpack.c.h.b16 %v53
    %v427 = vunpack.c.l.b16 %v54
    %v428 = vunpack.c.h.b16 %v54
    %v429 = vunpack.c.l.b16 %v55
    %v430 = vunpack.c.h.b16 %v55
    %v431 = vunpack.c.l.b16 %v56
    %v432 = vunpack.c.l.b16 %v57
    %v433 = vunpack.c.h.b16 %v57
    %v434 = vunpack.c.l.b16 %v58
    %v435 = vunpack.c.h.b16 %v58
    %v436 = vunpack.c.l.b16 %v59
    %v437 = vunpack.c.h.b16 %v59
    %v438 = vunpack.c.l.b16 %v60
    %v439 = vunpack.c.h.b16 %v60
    %v440 = vunpack.c.l.b16 %v61
    %v441 = vunpack.c.h.b16 %v61
    %v442 = vunpack.c.l.b16 %v62
    %v443 = vunpack.c.l.b16 %v63
    %v444 = vunpack.c.h.b16 %v63
    %v445 = vunpack.c.l.b16 %v64
    %v446 = vunpack.c.h.b16 %v64
    %v447 = vunpack.c.l.b16 %v65
    %v448 = vunpack.c.h.b16 %v65
    %v449 = vunpack.c.l.b16 %v66
    %v450 = vunpack.c.h.b16 %v66
    %v451 = vunpack.c.l.b16 %v67
    %v452 = vunpack.c.h.b16 %v67
    %v453 = vunpack.c.l.b16 %v68
    %v454 = vunpack.c.l.b16 %v69
    %v455 = vunpack.c.h.b16 %v69
    %v456 = vunpack.c.l.b16 %v70
    %v457 = vunpack.c.h.b16 %v70
    %v458 = vunpack.c.l.b16 %v71
    %v459 = vunpack.c.h.b16 %v71
    %v460 = vunpack.c.l.b16 %v72
    %v461 = vunpack.c.h.b16 %v72
    %v462 = vunpack.c.l.b16 %v73
    %v463 = vunpack.c.h.b16 %v73
    %v464 = vunpack.c.l.b16 %v74
    %v465 = vunpack.c.l.b16 %v75
    %v466 = vunpack.c.h.b16 %v75
    %v467 = vunpack.c.l.b16 %v76
    %v468 = vunpack.c.h.b16 %v76
    %v469 = vunpack.c.l.b16 %v77
    %v470 = vunpack.c.h.b16 %v77
    %v471 = vunpack.c.l.b16 %v78
    %v472 = vunpack.c.h.b16 %v78
    %v473 = vunpack.c.l.b16 %v79
    %v474 = vunpack.c.h.b16 %v79
    %v475 = vunpack.c.l.b16 %v80
    %v476 = vunpack.c.l.b16 %v81
    %v477 = vunpack.c.h.b16 %v81
    %v478 = vunpack.c.l.b16 %v82
    %v479 = vunpack.c.h.b16 %v82
    %v480 = vunpack.c.l.b16 %v83
    %v481 = vunpack.c.h.b16 %v83
    %v482 = vunpack.c.l.b16 %v84
    %v483 = vunpack.c.h.b16 %v84
    %v484 = vunpack.c.l.b16 %v85
    %v485 = vunpack.c.h.b16 %v85
    %v486 = vunpack.c.l.b16 %v86
    %v487 = vunpack.c.l.b16 %v87
    %v488 = vunpack.c.h.b16 %v87
    %v489 = vunpack.c.l.b16 %v88
    %v490 = vunpack.c.h.b16 %v88
    %v491 = vunpack.c.l.b16 %v89
    %v492 = vunpack.c.h.b16 %v89
    %v493 = vunpack.c.l.b16 %v90
    %v494 = vunpack.c.h.b16 %v90
    %v495 = vunpack.c.l.b16 %v91
    %v496 = vunpack.c.h.b16 %v91
    %v497 = vunpack.c.l.b16 %v92
    %v498 = vunpack.c.l.b16 %v93
    %v499 = vunpack.c.h.b16 %v93
    %v500 = vunpack.c.l.b16 %v94
    %v501 = vunpack.c.h.b16 %v94
    %v502 = vunpack.c.l.b16 %v95
    %v503 = vunpack.c.h.b16 %v95
    %v504 = vunpack.c.l.b16 %v96
    %v505 = vunpack.c.h.b16 %v96
    %v506 = vunpack.c.l.b16 %v97
    %v507 = vunpack.c.h.b16 %v97
    %v508 = vunpack.c.l.b16 %v98
    %v509 = vunpack.c.l.b16 %v99
    %v510 = vunpack.c.h.b16 %v99
    %v511 = vunpack.c.l.b16 %v100
    %v512 = vunpack.c.h.b16 %v100
    %v513 = vunpack.c.l.b16 %v101
    %v514 = vunpack.c.h.b16 %v101
    %v515 = vunpack.c.l.b16 %v102
    %v516 = vunpack.c.h.b16 %v102
    %v517 = vunpack.c.l.b16 %v103
    %v518 = vunpack.c.h.b16 %v103
    %v519 = vunpack.c.l.b16 %v104
    %v520 = vunpack.c.l.b16 %v105
    %v521 = vunpack.c.h.b16 %v105
    %v522 = vunpack.c.l.b16 %v106
    %v523 = vunpack.c.h.b16 %v106
    %v524 = vunpack.c.l.b16 %v107
    %v525 = vunpack.c.h.b16 %v107
    %v526 = vunpack.c.l.b16 %v108
    %v527 = vunpack.c.h.b16 %v108
    %v528 = vunpack.c.l.b16 %v109
    %v529 = vunpack.c.h.b16 %v109
    %v530 = vunpack.c.l.b16 %v110
    %v531 = vunpack.c.l.b16 %v111
    %v532 = vunpack.c.h.b16 %v111
    %v533 = vunpack.c.l.b16 %v112
    %v534 = vunpack.c.h.b16 %v112
    %v535 = vunpack.c.l.b16 %v113
    %v536 = vunpack.c.h.b16 %v113
    %v537 = vunpack.c.l.b16 %v114
    %v538 = vunpack.c.h.b16 %v114
    %v539 = vunpack.c.l.b16 %v115
    %v540 = vunpack.c.h.b16 %v115
    %v541 = vunpack.c.l.b16 %v116
    %v542 = vunpack.c.l.b16 %v117
    %v543 = vunpack.c.h.b16 %v117
    %v544 = vunpack.c.l.b16 %v118
    %v545 = vunpack.c.h.b16 %v118
    %v546 = vunpack.c.l.b16 %v119
    %v547 = vunpack.c.h.b16 %v119
    %v548 = vunpack.c.l.b16 %v120
    %v549 = vunpack.c.h.b16 %v120
    %v550 = vunpack.c.l.b16 %v121
    %v551 = vunpack.c.h.b16 %v121
    %v552 = vunpack.c.l.b16 %v122
    %v553 = vunpack.c.l.b16 %v123
    %v554 = vunpack.c.h.b16 %v123
    %v555 = vunpack.c.l.b16 %v124
    %v556 = vunpack.c.h.b16 %v124
    %v557 = vunpack.c.l.b16 %v125
    %v558 = vunpack.c.h.b16 %v125
    %v559 = vunpack.c.l.b16 %v126
    %v560 = vunpack.c.h.b16 %v126
    %v561 = vunpack.c.l.b16 %v127
    %v562 = vunpack.c.h.b16 %v127
    %v563 = vunpack.c.l.b16 %v128
    %v564 = vunpack.c.l.b16 %v129
    %v565 = vunpack.c.h.b16 %v129
    %v566 = vunpack.c.l.b16 %v130
    %v567 = vunpack.c.h.b16 %v130
    %v568 = vunpack.c.l.b16 %v131
    %v569 = vunpack.c.h.b16 %v131
    %v570 = vunpack.c.l.b16 %v132
    %v571 = vunpack.c.h.b16 %v132
    %v572 = vunpack.c.l.b16 %v133
    %v573 = vunpack.c.h.b16 %v133
    %v574 = vunpack.c.l.b16 %v134
    %v575 = vunpack.c.l.b16 %v135
    %v576 = vunpack.c.h.b16 %v135
    %v577 = vunpack.c.l.b16 %v136
    %v578 = vunpack.c.h.b16 %v136
    %v579 = vunpack.c.l.b16 %v137
    %v580 = vunpack.c.h.b16 %v137
    %v581 = vunpack.c.l.b16 %v138
    %v582 = vunpack.c.h.b16 %v138
    %v583 = vunpack.c.l.b16 %v139
    %v584 = vunpack.c.h.b16 %v139
    %v585 = vunpack.c.l.b16 %v140
    %v586 = vunpack.c.l.b16 %v141
    %v587 = vunpack.c.h.b16 %v141
    %v588 = vunpack.c.l.b16 %v142
    %v589 = vunpack.c.h.b16 %v142
    %v590 = vunpack.c.l.b16 %v143
    %v591 = vunpack.c.h.b16 %v143
    %v592 = vunpack.c.l.b16 %v144
    %v593 = vunpack.c.h.b16 %v144
    %v594 = vunpack.c.l.b16 %v145
    %v595 = vunpack.c.h.b16 %v145
    %v596 = vunpack.c.l.b16 %v146
    %v597 = vunpack.c.l.b16 %v147
    %v598 = vunpack.c.h.b16 %v147
    %v599 = vunpack.c.l.b16 %v148
    %v600 = vunpack.c.h.b16 %v148
    %v601 = vunpack.c.l.b16 %v149
    %v602 = vunpack.c.h.b16 %v149
    %v603 = vunpack.c.l.b16 %v150
    %v604 = vunpack.c.h.b16 %v150
    %v605 = vunpack.c.l.b16 %v151
    %v606 = vunpack.c.h.b16 %v151
    %v607 = vunpack.c.l.b16 %v152
    %v608 = vunpack.c.l.b16 %v153
    %v609 = vunpack.c.h.b16 %v153
    %v610 = vunpack.c.l.b16 %v154
    %v611 = vunpack.c.h.b16 %v154
    %v612 = vunpack.c.l.b16 %v155
    %v613 = vunpack.c.h.b16 %v155
    %v614 = vunpack.c.l.b16 %v156
    %v615 = vunpack.c.h.b16 %v156
    %v616 = vunpack.c.l.b16 %v157
    %v617 = vunpack.c.h.b16 %v157
    %v618 = vunpack.c.l.b16 %v158
    %v619 = vunpack.c.l.b16 %v159
    %v620 = vunpack.c.h.b16 %v159
    %v621 = vunpack.c.l.b16 %v160
    %v622 = vunpack.c.h.b16 %v160
    %v623 = vunpack.c.l.b16 %v161
    %v624 = vunpack.c.h.b16 %v161
    %v625 = vunpack.c.l.b16 %v162
    %v626 = vunpack.c.h.b16 %v162
    %v627 = vunpack.c.l.b16 %v163
    %v628 = vunpack.c.h.b16 %v163
    %v629 = vunpack.c.l.b16 %v164
    %v630 = vunpack.c.l.b16 %v165
    %v631 = vunpack.c.h.b16 %v165
    %v632 = vunpack.c.l.b16 %v166
    %v633 = vunpack.c.h.b16 %v166
    %v634 = vunpack.c.l.b16 %v167
    %v635 = vunpack.c.h.b16 %v167
    %v636 = vunpack.c.l.b16 %v168
    %v637 = vunpack.c.h.b16 %v168
    %v638 = vunpack.c.l.b16 %v169
    %v639 = vunpack.c.h.b16 %v169
    %v640 = vunpack.c.l.b16 %v170
    %v641 = vunpack.c.l.b16 %v171
    %v642 = vunpack.c.h.b16 %v171
    %v643 = vunpack.c.l.b16 %v172
    %v644 = vunpack.c.h.b16 %v172
    %v645 = vunpack.c.l.b16 %v173
    %v646 = vunpack.c.h.b16 %v173
    %v647 = vunpack.c.l.b16 %v174
    %v648 = vunpack.c.h.b16 %v174
    %v649 = vunpack.c.l.b16 %v175
    %v650 = vunpack.c.h.b16 %v175
    %v651 = vunpack.c.l.b16 %v176
    %v652 = vunpack.c.l.b16 %v177
    %v653 = vunpack.c.h.b16 %v177
    %v654 = vunpack.c.l.b16 %v178
    %v655 = vunpack.c.h.b16 %v178
    %v656 = vunpack.c.l.b16 %v179
    %v657 = vunpack.c.h.b16 %v179
    %v658 = vunpack.c.l.b16 %v180
    %v659 = vunpack.c.h.b16 %v180
    %v660 = vunpack.c.l.b16 %v181
    %v661 = vunpack.c.h.b16 %v181
    %v662 = vunpack.c.l.b16 %v182
    %v663 = vunpack.c.l.b16 %v183
    %v664 = vunpack.c.h.b16 %v183
    %v665 = vunpack.c.l.b16 %v184
    %v666 = vunpack.c.h.b16 %v184
    %v667 = vunpack.c.l.b16 %v185
    %v668 = vunpack.c.h.b16 %v185
    %v669 = vunpack.c.l.b16 %v186
    %v670 = vunpack.c.h.b16 %v186
    %v671 = vunpack.c.l.b16 %v187
    %v672 = vunpack.c.h.b16 %v187
    %v673 = vunpack.c.l.b16 %v188
    %v674 = vpack.c.b16 %v421, %v410
    %v675 = vpack.c.b16 %v422, %v411
    %v676 = vpack.c.b16 %v423, %v412
    %v677 = vpack.c.b16 %v424, %v413
    %v678 = vpack.c.b16 %v425, %v414
    %v679 = vpack.c.b16 %v426, %v415
    %v680 = vpack.c.b16 %v427, %v416
    %v681 = vpack.c.b16 %v428, %v417
    %v682 = vpack.c.b16 %v429, %v418
    %v683 = vpack.c.b16 %v430, %v419
    %v684 = vpack.c.b16 %v431, %v420
    %v685 = vpack.c.b16 %v443, %v432
    %v686 = vpack.c.b16 %v444, %v433
    %v687 = vpack.c.b16 %v445, %v434
    %v688 = vpack.c.b16 %v446, %v435
    %v689 = vpack.c.b16 %v447, %v436
    %v690 = vpack.c.b16 %v448, %v437
    %v691 = vpack.c.b16 %v449, %v438
    %v692 = vpack.c.b16 %v450, %v439
    %v693 = vpack.c.b16 %v451, %v440
    %v694 = vpack.c.b16 %v452, %v441
    %v695 = vpack.c.b16 %v453, %v442
    %v696 = vpack.c.b16 %v465, %v454
    %v697 = vpack.c.b16 %v466, %v455
    %v698 = vpack.c.b16 %v467, %v456
    %v699 = vpack.c.b16 %v468, %v457
    %v700 = vpack.c.b16 %v469, %v458
    %v701 = vpack.c.b16 %v470, %v459
    %v702 = vpack.c.b16 %v471, %v460
    %v703 = vpack.c.b16 %v472, %v461
    %v704 = vpack.c.b16 %v473, %v462
    %v705 = vpack.c.b16 %v474, %v463
    %v706 = vpack.c.b16 %v475, %v464
    %v707 = vpack.c.b16 %v487, %v476
    %v708 = vpack.c.b16 %v488, %v477
    %v709 = vpack.c.b16 %v489, %v478
    %v710 = vpack.c.b16 %v490, %v479
    %v711 = vpack.c.b16 %v491, %v480
    %v712 = vpack.c.b16 %v492, %v481
    %v713 = vpack.c.b16 %v493, %v482
    %v714 = vpack.c.b16 %v494, %v483
    %v715 = vpack.c.b16 %v495, %v484
    %v716 = vpack.c.b16 %v496, %v485
    %v717 = vpack.c.b16 %v497, %v486
    %v718 = vpack.c.b16 %v509, %v498
    %v719 = vpack.c.b16 %v510, %v499
    %v720 = vpack.c.b16 %v511, %v500
    %v721 = vpack.c.b16 %v512, %v501
    %v722 = vpack.c.b16 %v513, %v502
    %v723 = vpack.c.b16 %v514, %v503
    %v724 = vpack.c.b16 %v515, %v504
    %v725 = vpack.c.b16 %v516, %v505
    %v726 = vpack.c.b16 %v517, %v506
    %v727 = vpack.c.b16 %v518, %v507
    %v728 = vpack.c.b16 %v519, %v508
    %v729 = vpack.c.b16 %v531, %v520
    %v730 = vpack.c.b16 %v532, %v521
    %v731 = vpack.c.b16 %v533, %v522
    %v732 = vpack.c.b16 %v534, %v523
    %v733 = vpack.c.b16 %v535, %v524
    %v734 = vpack.c.b16 %v536, %v525
    %v735 = vpack.c.b16 %v537, %v526
    %v736 = vpack.c.b16 %v538, %v527
    %v737 = vpack.c.b16 %v539, %v528
    %v738 = vpack.c.b16 %v540, %v529
    %v739 = vpack.c.b16 %v541, %v530
    %v740 = vpack.c.b16 %v553, %v542
    %v741 = vpack.c.b16 %v554, %v543
    %v742 = vpack.c.b16 %v555, %v544
    %v743 = vpack.c.b16 %v556, %v545
    %v744 = vpack.c.b16 %v557, %v546
    %v745 = vpack.c.b16 %v558, %v547
    %v746 = vpack.c.b16 %v559, %v548
    %v747 = vpack.c.b16 %v560, %v549
    %v748 = vpack.c.b16 %v561, %v550
    %v749 = vpack.c.b16 %v562, %v551
    %v750 = vpack.c.b16 %v563, %v552
    %v751 = vpack.c.b16 %v575, %v564
    %v752 = vpack.c.b16 %v576, %v565
    %v753 = vpack.c.b16 %v577, %v566
    %v754 = vpack.c.b16 %v578, %v567
    %v755 = vpack.c.b16 %v579, %v568
    %v756 = vpack.c.b16 %v580, %v569
    %v757 = vpack.c.b16 %v581, %v570
    %v758 = vpack.c.b16 %v582, %v571
    %v759 = vpack.c.b16 %v583, %v572
    %v760 = vpack.c.b16 %v584, %v573
    %v761 = vpack.c.b16 %v585, %v574
    %v762 = vpack.c.b16 %v597, %v586
    %v763 = vpack.c.b16 %v598, %v587
    %v764 = vpack.c.b16 %v599, %v588
    %v765 = vpack.c.b16 %v600, %v589
    %v766 = vpack.c.b16 %v601, %v590
    %v767 = vpack.c.b16 %v602, %v591
    %v768 = vpack.c.b16 %v603, %v592
    %v769 = vpack.c.b16 %v604, %v593
    %v770 = vpack.c.b16 %v605, %v594
    %v771 = vpack.c.b16 %v606, %v595
    %v772 = vpack.c.b16 %v607, %v596
    %v773 = vpack.c.b16 %v619, %v608
    %v774 = vpack.c.b16 %v620, %v609
    %v775 = vpack.c.b16 %v621, %v610
    %v776 = vpack.c.b16 %v622, %v611
    %v777 = vpack.c.b16 %v623, %v612
    %v778 = vpack.c.b16 %v624, %v613
    %v779 = vpack.c.b16 %v625, %v614
    %v780 = vpack.c.b16 %v626, %v615
    %v781 = vpack.c.b16 %v627, %v616
    %v782 = vpack.c.b16 %v628, %v617
    %v783 = vpack.c.b16 %v629, %v618
    %v784 = vpack.c.b16 %v641, %v630
    %v785 = vpack.c.b16 %v642, %v631
    %v786 = vpack.c.b16 %v643, %v632
    %v787 = vpack.c.b16 %v644, %v633
    %v788 = vpack.c.b16 %v645, %v634
    %v789 = vpack.c.b16 %v646, %v635
    %v790 = vpack.c.b16 %v647, %v636
    %v791 = vpack.c.b16 %v648, %v637
    %v792 = vpack.c.b16 %v649, %v638
    %v793 = vpack.c.b16 %v650, %v639
    %v794 = vpack.c.b16 %v651, %v640
    %v795 = vpack.c.b16 %v663, %v652
    %v796 = vpack.c.b16 %v664, %v653
    %v797 = vpack.c.b16 %v665, %v654
    %v798 = vpack.c.b16 %v666, %v655
    %v799 = vpack.c.b16 %v667, %v656
    %v800 = vpack.c.b16 %v668, %v657
    %v801 = vpack.c.b16 %v669, %v658
    %v802 = vpack.c.b16 %v670, %v659
    %v803 = vpack.c.b16 %v671, %v660
    %v804 = vpack.c.b16 %v672, %v661
    %v805 = vpack.c.b16 %v673, %v662
    %vm938 = vcmask 523264
    %v940 = vsel %vm938, %v261, 0
    %v943 = vsel %vm938, %v263, 0
    %945 = vmatprep.subr.bf16.mxu0 %v752
    %946 = vmatpush1.bf16.msra.mxu0 %v751
    %947 = vmatprep.subr.bf16.mxu0 %v741
    %948 = vmatpush1.bf16.msra.mxu0 %v740
    %949 = vmatprep.subr.bf16.mxu0 %v730
    %950 = vmatpush1.bf16.msra.mxu0 %v729
    %951 = vmatprep.subr.bf16.mxu0 %v719
    %952 = vmatpush1.bf16.msra.mxu0 %v718
    %953 = vmatprep.subr.bf16.mxu0 %v708
    %954 = vmatpush1.bf16.msra.mxu0 %v707
    %955 = vmatprep.subr.bf16.mxu0 %v697
    %956 = vmatpush1.bf16.msra.mxu0 %v696
    %957 = vmatprep.subr.bf16.mxu0 %v686
    %958 = vmatpush1.bf16.msra.mxu0 %v685
    %959 = vmatprep.subr.bf16.mxu0 %v675
    %960 = vmatpush1.bf16.msra.mxu0 %v674
    %961 = vmatprep.subr.bf16.mxu0 0
    %962 = vmatpush2.bf16.msra.mxu0 0
    %963 = vmatprep.subr.bf16.mxu0 0
    %964 = vmatpush2.bf16.msra.mxu0 0
    %965 = vmatprep.subr.bf16.mxu0 0
    %966 = vmatpush2.bf16.msra.mxu0 0
    %967 = vmatprep.subr.bf16.mxu0 0
    %968 = vmatpush2.bf16.msra.mxu0 0
    %969 = vmatprep.subr.bf16.mxu0 %v796
    %970 = vmatpush2.bf16.msra.mxu0 %v795
    %971 = vmatprep.subr.bf16.mxu0 %v785
    %972 = vmatpush2.bf16.msra.mxu0 %v784
    %973 = vmatprep.subr.bf16.mxu0 %v774
    %974 = vmatpush2.bf16.msra.mxu0 %v773
    %975 = vmatprep.subr.bf16.mxu0 %v763
    %976 = vmatpush2.bf16.msra.mxu0 %v762
    %977 = vmatprep.mubr.bf16.mxu0 %v940
    %978 = vmatmul.mubr.bf16.gmra.mxu0 %v260
    %v979 = vpop.f32.mrf.mxu0
    %v980 = vadd.f32 %v196, %v979
    %v981 = vpop.f32.mrf.mxu0
    %v982 = vadd.f32 %v200, %v981
    %v983 = vpop.f32.mrf.mxu0
    %v984 = vadd.f32 %v196, %v983
    %v985 = vpop.f32.mrf.mxu0
    %v986 = vadd.f32 %v200, %v985
    %987 = vmatprep.mubr.bf16.mxu0 %v943
    %988 = vmatmul.mubr.bf16.gmra.mxu0 %v262
    %v989 = vpop.f32.mrf.mxu0
    %v990 = vadd.f32 %v196, %v989
    %v991 = vpop.f32.mrf.mxu0
    %v992 = vadd.f32 %v200, %v991
    %v993 = vpop.f32.mrf.mxu0
    %v994 = vadd.f32 %v196, %v993
    %v995 = vpop.f32.mrf.mxu0
    %v996 = vadd.f32 %v200, %v995
    %997 = vdwg.mxu0
    %998 = vmatprep.subr.bf16.mxu0 %v754
    %999 = vmatpush1.bf16.msra.mxu0 %v753
    %1000 = vmatprep.subr.bf16.mxu0 %v743
    %1001 = vmatpush1.bf16.msra.mxu0 %v742
    %1002 = vmatprep.subr.bf16.mxu0 %v732
    %1003 = vmatpush1.bf16.msra.mxu0 %v731
    %1004 = vmatprep.subr.bf16.mxu0 %v721
    %1005 = vmatpush1.bf16.msra.mxu0 %v720
    %1006 = vmatprep.subr.bf16.mxu0 %v710
    %1007 = vmatpush1.bf16.msra.mxu0 %v709
    %1008 = vmatprep.subr.bf16.mxu0 %v699
    %1009 = vmatpush1.bf16.msra.mxu0 %v698
    %1010 = vmatprep.subr.bf16.mxu0 %v688
    %1011 = vmatpush1.bf16.msra.mxu0 %v687
    %1012 = vmatprep.subr.bf16.mxu0 %v677
    %1013 = vmatpush1.bf16.msra.mxu0 %v676
    %1014 = vmatprep.subr.bf16.mxu0 0
    %1015 = vmatpush2.bf16.msra.mxu0 0
    %1016 = vmatprep.subr.bf16.mxu0 0
    %1017 = vmatpush2.bf16.msra.mxu0 0
    %1018 = vmatprep.subr.bf16.mxu0 0
    %1019 = vmatpush2.bf16.msra.mxu0 0
    %1020 = vmatprep.subr.bf16.mxu0 0
    %1021 = vmatpush2.bf16.msra.mxu0 0
    %1022 = vmatprep.subr.bf16.mxu0 %v798
    %1023 = vmatpush2.bf16.msra.mxu0 %v797
    %1024 = vmatprep.subr.bf16.mxu0 %v787
    %1025 = vmatpush2.bf16.msra.mxu0 %v786
    %1026 = vmatprep.subr.bf16.mxu0 %v776
    %1027 = vmatpush2.bf16.msra.mxu0 %v775
    %1028 = vmatprep.subr.bf16.mxu0 %v765
    %1029 = vmatpush2.bf16.msra.mxu0 %v764
    %1030 = vmatprep.mubr.bf16.mxu0 %v940
    %1031 = vmatmul.mubr.bf16.gmra.mxu0 %v260
    %v1032 = vpop.f32.mrf.mxu0
    %v1033 = vadd.f32 %v204, %v1032
    %v1034 = vpop.f32.mrf.mxu0
    %v1035 = vadd.f32 %v208, %v1034
    %v1036 = vpop.f32.mrf.mxu0
    %v1037 = vadd.f32 %v204, %v1036
    %v1038 = vpop.f32.mrf.mxu0
    %v1039 = vadd.f32 %v208, %v1038
    %1040 = vmatprep.mubr.bf16.mxu0 %v943
    %1041 = vmatmul.mubr.bf16.gmra.mxu0 %v262
    %v1042 = vpop.f32.mrf.mxu0
    %v1043 = vadd.f32 %v204, %v1042
    %v1044 = vpop.f32.mrf.mxu0
    %v1045 = vadd.f32 %v208, %v1044
    %v1046 = vpop.f32.mrf.mxu0
    %v1047 = vadd.f32 %v204, %v1046
    %v1048 = vpop.f32.mrf.mxu0
    %v1049 = vadd.f32 %v208, %v1048
    %1050 = vdwg.mxu0
    %1051 = vmatprep.subr.bf16.mxu0 %v756
    %1052 = vmatpush1.bf16.msra.mxu0 %v755
    %1053 = vmatprep.subr.bf16.mxu0 %v745
    %1054 = vmatpush1.bf16.msra.mxu0 %v744
    %1055 = vmatprep.subr.bf16.mxu0 %v734
    %1056 = vmatpush1.bf16.msra.mxu0 %v733
    %1057 = vmatprep.subr.bf16.mxu0 %v723
    %1058 = vmatpush1.bf16.msra.mxu0 %v722
    %1059 = vmatprep.subr.bf16.mxu0 %v712
    %1060 = vmatpush1.bf16.msra.mxu0 %v711
    %1061 = vmatprep.subr.bf16.mxu0 %v701
    %1062 = vmatpush1.bf16.msra.mxu0 %v700
    %1063 = vmatprep.subr.bf16.mxu0 %v690
    %1064 = vmatpush1.bf16.msra.mxu0 %v689
    %1065 = vmatprep.subr.bf16.mxu0 %v679
    %1066 = vmatpush1.bf16.msra.mxu0 %v678
    %1067 = vmatprep.subr.bf16.mxu0 0
    %1068 = vmatpush2.bf16.msra.mxu0 0
    %1069 = vmatprep.subr.bf16.mxu0 0
    %1070 = vmatpush2.bf16.msra.mxu0 0
    %1071 = vmatprep.subr.bf16.mxu0 0
    %1072 = vmatpush2.bf16.msra.mxu0 0
    %1073 = vmatprep.subr.bf16.mxu0 0
    %1074 = vmatpush2.bf16.msra.mxu0 0
    %1075 = vmatprep.subr.bf16.mxu0 %v800
    %1076 = vmatpush2.bf16.msra.mxu0 %v799
    %1077 = vmatprep.subr.bf16.mxu0 %v789
    %1078 = vmatpush2.bf16.msra.mxu0 %v788
    %1079 = vmatprep.subr.bf16.mxu0 %v778
    %1080 = vmatpush2.bf16.msra.mxu0 %v777
    %1081 = vmatprep.subr.bf16.mxu0 %v767
    %1082 = vmatpush2.bf16.msra.mxu0 %v766
    %1083 = vmatprep.mubr.bf16.mxu0 %v940
    %1084 = vmatmul.mubr.bf16.gmra.mxu0 %v260
    %v1085 = vpop.f32.mrf.mxu0
    %v1086 = vadd.f32 %v212, %v1085
    %v1087 = vpop.f32.mrf.mxu0
    %v1088 = vadd.f32 %v216, %v1087
    %v1089 = vpop.f32.mrf.mxu0
    %v1090 = vadd.f32 %v212, %v1089
    %v1091 = vpop.f32.mrf.mxu0
    %v1092 = vadd.f32 %v216, %v1091
    %1093 = vmatprep.mubr.bf16.mxu0 %v943
    %1094 = vmatmul.mubr.bf16.gmra.mxu0 %v262
    %v1095 = vpop.f32.mrf.mxu0
    %v1096 = vadd.f32 %v212, %v1095
    %v1097 = vpop.f32.mrf.mxu0
    %v1098 = vadd.f32 %v216, %v1097
    %v1099 = vpop.f32.mrf.mxu0
    %v1100 = vadd.f32 %v212, %v1099
    %v1101 = vpop.f32.mrf.mxu0
    %v1102 = vadd.f32 %v216, %v1101
    %1103 = vdwg.mxu0
    %1104 = vmatprep.subr.bf16.mxu0 %v758
    %1105 = vmatpush1.bf16.msra.mxu0 %v757
    %1106 = vmatprep.subr.bf16.mxu0 %v747
    %1107 = vmatpush1.bf16.msra.mxu0 %v746
    %1108 = vmatprep.subr.bf16.mxu0 %v736
    %1109 = vmatpush1.bf16.msra.mxu0 %v735
    %1110 = vmatprep.subr.bf16.mxu0 %v725
    %1111 = vmatpush1.bf16.msra.mxu0 %v724
    %1112 = vmatprep.subr.bf16.mxu0 %v714
    %1113 = vmatpush1.bf16.msra.mxu0 %v713
    %1114 = vmatprep.subr.bf16.mxu0 %v703
    %1115 = vmatpush1.bf16.msra.mxu0 %v702
    %1116 = vmatprep.subr.bf16.mxu0 %v692
    %1117 = vmatpush1.bf16.msra.mxu0 %v691
    %1118 = vmatprep.subr.bf16.mxu0 %v681
    %1119 = vmatpush1.bf16.msra.mxu0 %v680
    %1120 = vmatprep.subr.bf16.mxu0 0
    %1121 = vmatpush2.bf16.msra.mxu0 0
    %1122 = vmatprep.subr.bf16.mxu0 0
    %1123 = vmatpush2.bf16.msra.mxu0 0
    %1124 = vmatprep.subr.bf16.mxu0 0
    %1125 = vmatpush2.bf16.msra.mxu0 0
    %1126 = vmatprep.subr.bf16.mxu0 0
    %1127 = vmatpush2.bf16.msra.mxu0 0
    %1128 = vmatprep.subr.bf16.mxu0 %v802
    %1129 = vmatpush2.bf16.msra.mxu0 %v801
    %1130 = vmatprep.subr.bf16.mxu0 %v791
    %1131 = vmatpush2.bf16.msra.mxu0 %v790
    %1132 = vmatprep.subr.bf16.mxu0 %v780
    %1133 = vmatpush2.bf16.msra.mxu0 %v779
    %1134 = vmatprep.subr.bf16.mxu0 %v769
    %1135 = vmatpush2.bf16.msra.mxu0 %v768
    %1136 = vmatprep.mubr.bf16.mxu0 %v940
    %1137 = vmatmul.mubr.bf16.gmra.mxu0 %v260
    %v1138 = vpop.f32.mrf.mxu0
    %v1139 = vadd.f32 %v220, %v1138
    %v1140 = vpop.f32.mrf.mxu0
    %v1141 = vadd.f32 %v224, %v1140
    %v1142 = vpop.f32.mrf.mxu0
    %v1143 = vadd.f32 %v220, %v1142
    %v1144 = vpop.f32.mrf.mxu0
    %v1145 = vadd.f32 %v224, %v1144
    %1146 = vmatprep.mubr.bf16.mxu0 %v943
    %1147 = vmatmul.mubr.bf16.gmra.mxu0 %v262
    %v1148 = vpop.f32.mrf.mxu0
    %v1149 = vadd.f32 %v220, %v1148
    %v1150 = vpop.f32.mrf.mxu0
    %v1151 = vadd.f32 %v224, %v1150
    %v1152 = vpop.f32.mrf.mxu0
    %v1153 = vadd.f32 %v220, %v1152
    %v1154 = vpop.f32.mrf.mxu0
    %v1155 = vadd.f32 %v224, %v1154
    %1156 = vdwg.mxu0
    %1157 = vmatprep.subr.bf16.mxu0 %v760
    %1158 = vmatpush1.bf16.msra.mxu0 %v759
    %1159 = vmatprep.subr.bf16.mxu0 %v749
    %1160 = vmatpush1.bf16.msra.mxu0 %v748
    %1161 = vmatprep.subr.bf16.mxu0 %v738
    %1162 = vmatpush1.bf16.msra.mxu0 %v737
    %1163 = vmatprep.subr.bf16.mxu0 %v727
    %1164 = vmatpush1.bf16.msra.mxu0 %v726
    %1165 = vmatprep.subr.bf16.mxu0 %v716
    %1166 = vmatpush1.bf16.msra.mxu0 %v715
    %1167 = vmatprep.subr.bf16.mxu0 %v705
    %1168 = vmatpush1.bf16.msra.mxu0 %v704
    %1169 = vmatprep.subr.bf16.mxu0 %v694
    %1170 = vmatpush1.bf16.msra.mxu0 %v693
    %1171 = vmatprep.subr.bf16.mxu0 %v683
    %1172 = vmatpush1.bf16.msra.mxu0 %v682
    %1173 = vmatprep.subr.bf16.mxu0 0
    %1174 = vmatpush2.bf16.msra.mxu0 0
    %1175 = vmatprep.subr.bf16.mxu0 0
    %1176 = vmatpush2.bf16.msra.mxu0 0
    %1177 = vmatprep.subr.bf16.mxu0 0
    %1178 = vmatpush2.bf16.msra.mxu0 0
    %1179 = vmatprep.subr.bf16.mxu0 0
    %1180 = vmatpush2.bf16.msra.mxu0 0
    %1181 = vmatprep.subr.bf16.mxu0 %v804
    %1182 = vmatpush2.bf16.msra.mxu0 %v803
    %1183 = vmatprep.subr.bf16.mxu0 %v793
    %1184 = vmatpush2.bf16.msra.mxu0 %v792
    %1185 = vmatprep.subr.bf16.mxu0 %v782
    %1186 = vmatpush2.bf16.msra.mxu0 %v781
    %1187 = vmatprep.subr.bf16.mxu0 %v771
    %1188 = vmatpush2.bf16.msra.mxu0 %v770
    %1189 = vmatprep.mubr.bf16.mxu0 %v940
    %1190 = vmatmul.mubr.bf16.gmra.mxu0 %v260
    %v1191 = vpop.f32.mrf.mxu0
    %v1192 = vadd.f32 %v228, %v1191
    %v1193 = vpop.f32.mrf.mxu0
    %v1194 = vadd.f32 %v232, %v1193
    %v1195 = vpop.f32.mrf.mxu0
    %v1196 = vadd.f32 %v228, %v1195
    %v1197 = vpop.f32.mrf.mxu0
    %v1198 = vadd.f32 %v232, %v1197
    %1199 = vmatprep.mubr.bf16.mxu0 %v943
    %1200 = vmatmul.mubr.bf16.gmra.mxu0 %v262
    %v1201 = vpop.f32.mrf.mxu0
    %v1202 = vadd.f32 %v228, %v1201
    %v1203 = vpop.f32.mrf.mxu0
    %v1204 = vadd.f32 %v232, %v1203
    %v1205 = vpop.f32.mrf.mxu0
    %v1206 = vadd.f32 %v228, %v1205
    %v1207 = vpop.f32.mrf.mxu0
    %v1208 = vadd.f32 %v232, %v1207
    %1209 = vdwg.mxu0
    %1210 = vmatprep.subr.bf16.mxu0 0
    %1211 = vmatpush1.bf16.msra.mxu0 %v761
    %1212 = vmatprep.subr.bf16.mxu0 0
    %1213 = vmatpush1.bf16.msra.mxu0 %v750
    %1214 = vmatprep.subr.bf16.mxu0 0
    %1215 = vmatpush1.bf16.msra.mxu0 %v739
    %1216 = vmatprep.subr.bf16.mxu0 0
    %1217 = vmatpush1.bf16.msra.mxu0 %v728
    %1218 = vmatprep.subr.bf16.mxu0 0
    %1219 = vmatpush1.bf16.msra.mxu0 %v717
    %1220 = vmatprep.subr.bf16.mxu0 0
    %1221 = vmatpush1.bf16.msra.mxu0 %v706
    %1222 = vmatprep.subr.bf16.mxu0 0
    %1223 = vmatpush1.bf16.msra.mxu0 %v695
    %1224 = vmatprep.subr.bf16.mxu0 0
    %1225 = vmatpush1.bf16.msra.mxu0 %v684
    %1226 = vmatprep.subr.bf16.mxu0 0
    %1227 = vmatpush2.bf16.msra.mxu0 0
    %1228 = vmatprep.subr.bf16.mxu0 0
    %1229 = vmatpush2.bf16.msra.mxu0 0
    %1230 = vmatprep.subr.bf16.mxu0 0
    %1231 = vmatpush2.bf16.msra.mxu0 0
    %1232 = vmatprep.subr.bf16.mxu0 0
    %1233 = vmatpush2.bf16.msra.mxu0 0
    %1234 = vmatprep.subr.bf16.mxu0 0
    %1235 = vmatpush2.bf16.msra.mxu0 %v805
    %1236 = vmatprep.subr.bf16.mxu0 0
    %1237 = vmatpush2.bf16.msra.mxu0 %v794
    %1238 = vmatprep.subr.bf16.mxu0 0
    %1239 = vmatpush2.bf16.msra.mxu0 %v783
    %1240 = vmatprep.subr.bf16.mxu0 0
    %1241 = vmatpush2.bf16.msra.mxu0 %v772
    %1242 = vmatprep.mubr.bf16.mxu0 %v940
    %1243 = vmatmul.mubr.bf16.gmra.mxu0 %v260
    %v1244 = vpop.f32.mrf.mxu0
    %v1245 = vadd.f32 %v236, %v1244
    %v1246 = vpop.f32.mrf.mxu0
    %v1247 = vpop.f32.mrf.mxu0
    %v1248 = vadd.f32 %v236, %v1247
    %v1249 = vpop.f32.mrf.mxu0
    %1250 = vmatprep.mubr.bf16.mxu0 %v943
    %1251 = vmatmul.mubr.bf16.gmra.mxu0 %v262
    %v1252 = vpop.f32.mrf.mxu0
    %v1253 = vadd.f32 %v236, %v1252
    %v1254 = vpop.f32.mrf.mxu0
    %v1255 = vpop.f32.mrf.mxu0
    %v1256 = vadd.f32 %v236, %v1255
    %v1257 = vpop.f32.mrf.mxu0
    %1258 = vdwg.mxu0
    %v1259 = vmax.f32 %v980, 0.0
    %v1260 = vmax.f32 %v982, 0.0
    %v1261 = vmax.f32 %v1033, 0.0
    %v1262 = vmax.f32 %v1035, 0.0
    %v1263 = vmax.f32 %v1086, 0.0
    %v1264 = vmax.f32 %v1088, 0.0
    %v1265 = vmax.f32 %v1139, 0.0
    %v1266 = vmax.f32 %v1141, 0.0
    %v1267 = vmax.f32 %v1192, 0.0
    %v1268 = vmax.f32 %v1194, 0.0
    %v1269 = vmax.f32 %v1245, 0.0
    %v1270 = vmax.f32 %v984, 0.0
    %v1271 = vmax.f32 %v986, 0.0
    %v1272 = vmax.f32 %v1037, 0.0
    %v1273 = vmax.f32 %v1039, 0.0
    %v1274 = vmax.f32 %v1090, 0.0
    %v1275 = vmax.f32 %v1092, 0.0
    %v1276 = vmax.f32 %v1143, 0.0
    %v1277 = vmax.f32 %v1145, 0.0
    %v1278 = vmax.f32 %v1196, 0.0
    %v1279 = vmax.f32 %v1198, 0.0
    %v1280 = vmax.f32 %v1248, 0.0
    %v1281 = vmax.f32 %v990, 0.0
    %v1282 = vmax.f32 %v992, 0.0
    %v1283 = vmax.f32 %v1043, 0.0
    %v1284 = vmax.f32 %v1045, 0.0
    %v1285 = vmax.f32 %v1096, 0.0
    %v1286 = vmax.f32 %v1098, 0.0
    %v1287 = vmax.f32 %v1149, 0.0
    %v1288 = vmax.f32 %v1151, 0.0
    %v1289 = vmax.f32 %v1202, 0.0
    %v1290 = vmax.f32 %v1204, 0.0
    %v1291 = vmax.f32 %v1253, 0.0
    %v1292 = vmax.f32 %v994, 0.0
    %v1293 = vmax.f32 %v996, 0.0
    %v1294 = vmax.f32 %v1047, 0.0
    %v1295 = vmax.f32 %v1049, 0.0
    %v1296 = vmax.f32 %v1100, 0.0
    %v1297 = vmax.f32 %v1102, 0.0
    %v1298 = vmax.f32 %v1153, 0.0
    %v1299 = vmax.f32 %v1155, 0.0
    %v1300 = vmax.f32 %v1206, 0.0
    %v1301 = vmax.f32 %v1208, 0.0
    %v1302 = vmax.f32 %v1256, 0.0
    %v1303 = vpack.c.bf16 %v1270, %v1259
    %v1304 = vpack.c.bf16 %v1271, %v1260
    %v1305 = vpack.c.bf16 %v1272, %v1261
    %v1306 = vpack.c.bf16 %v1273, %v1262
    %v1307 = vpack.c.bf16 %v1274, %v1263
    %v1308 = vpack.c.bf16 %v1275, %v1264
    %v1309 = vpack.c.bf16 %v1276, %v1265
    %v1310 = vpack.c.bf16 %v1277, %v1266
    %v1311 = vpack.c.bf16 %v1278, %v1267
    %v1312 = vpack.c.bf16 %v1279, %v1268
    %v1313 = vpack.c.bf16 %v1280, %v1269
    %v1314 = vpack.c.bf16 %v1292, %v1281
    %v1315 = vpack.c.bf16 %v1293, %v1282
    %v1316 = vpack.c.bf16 %v1294, %v1283
    %v1317 = vpack.c.bf16 %v1295, %v1284
    %v1318 = vpack.c.bf16 %v1296, %v1285
    %v1319 = vpack.c.bf16 %v1297, %v1286
    %v1320 = vpack.c.bf16 %v1298, %v1287
    %v1321 = vpack.c.bf16 %v1299, %v1288
    %v1322 = vpack.c.bf16 %v1300, %v1289
    %v1323 = vpack.c.bf16 %v1301, %v1290
    %v1324 = vpack.c.bf16 %v1302, %v1291
    %v1347 = vunpack.c.l.b16 %v1303
    %v1348 = vunpack.c.l.b16 %v1304
    %v1349 = vunpack.c.l.b16 %v1305
    %v1350 = vunpack.c.l.b16 %v1306
    %v1351 = vunpack.c.l.b16 %v1307
    %v1352 = vunpack.c.l.b16 %v1308
    %v1353 = vunpack.c.l.b16 %v1309
    %v1354 = vunpack.c.l.b16 %v1310
    %v1355 = vunpack.c.l.b16 %v1311
    %v1356 = vunpack.c.l.b16 %v1312
    %v1357 = vunpack.c.l.b16 %v1313
    %v1358 = vunpack.c.h.b16 %v1303
    %v1359 = vunpack.c.h.b16 %v1304
    %v1360 = vunpack.c.h.b16 %v1305
    %v1361 = vunpack.c.h.b16 %v1306
    %v1362 = vunpack.c.h.b16 %v1307
    %v1363 = vunpack.c.h.b16 %v1308
    %v1364 = vunpack.c.h.b16 %v1309
    %v1365 = vunpack.c.h.b16 %v1310
    %v1366 = vunpack.c.h.b16 %v1311
    %v1367 = vunpack.c.h.b16 %v1312
    %v1368 = vunpack.c.h.b16 %v1313
    %v1369 = vunpack.c.l.b16 %v1314
    %v1370 = vunpack.c.l.b16 %v1315
    %v1371 = vunpack.c.l.b16 %v1316
    %v1372 = vunpack.c.l.b16 %v1317
    %v1373 = vunpack.c.l.b16 %v1318
    %v1374 = vunpack.c.l.b16 %v1319
    %v1375 = vunpack.c.l.b16 %v1320
    %v1376 = vunpack.c.l.b16 %v1321
    %v1377 = vunpack.c.l.b16 %v1322
    %v1378 = vunpack.c.l.b16 %v1323
    %v1379 = vunpack.c.l.b16 %v1324
    %v1380 = vunpack.c.h.b16 %v1314
    %v1381 = vunpack.c.h.b16 %v1315
    %v1382 = vunpack.c.h.b16 %v1316
    %v1383 = vunpack.c.h.b16 %v1317
    %v1384 = vunpack.c.h.b16 %v1318
    %v1385 = vunpack.c.h.b16 %v1319
    %v1386 = vunpack.c.h.b16 %v1320
    %v1387 = vunpack.c.h.b16 %v1321
    %v1388 = vunpack.c.h.b16 %v1322
    %v1389 = vunpack.c.h.b16 %v1323
    %v1390 = vunpack.c.h.b16 %v1324
    %v1391 = vpack.c.b16 %v1348, %v1347
    %v1392 = vpack.c.b16 %v1350, %v1349
    %v1393 = vpack.c.b16 %v1352, %v1351
    %v1394 = vpack.c.b16 %v1354, %v1353
    %v1395 = vpack.c.b16 %v1356, %v1355
    %v1396 = vpack.c.b16 %v1357, %v1357
    %v1397 = vpack.c.b16 %v1359, %v1358
    %v1398 = vpack.c.b16 %v1361, %v1360
    %v1399 = vpack.c.b16 %v1363, %v1362
    %v1400 = vpack.c.b16 %v1365, %v1364
    %v1401 = vpack.c.b16 %v1367, %v1366
    %v1402 = vpack.c.b16 %v1368, %v1368
    %v1403 = vpack.c.b16 %v1370, %v1369
    %v1404 = vpack.c.b16 %v1372, %v1371
    %v1405 = vpack.c.b16 %v1374, %v1373
    %v1406 = vpack.c.b16 %v1376, %v1375
    %v1407 = vpack.c.b16 %v1378, %v1377
    %v1408 = vpack.c.b16 %v1379, %v1379
    %v1409 = vpack.c.b16 %v1381, %v1380
    %v1410 = vpack.c.b16 %v1383, %v1382
    %v1411 = vpack.c.b16 %v1385, %v1384
    %v1412 = vpack.c.b16 %v1387, %v1386
    %v1413 = vpack.c.b16 %v1389, %v1388
    %v1414 = vpack.c.b16 %v1390, %v1390
    %1439 = vst [vmem:[%s3] sm:$0xff] %v1391
    %1440 = vst [vmem:[%s3 + $0x8] sm:$0xff] %v1392
    %1441 = vst [vmem:[%s3 + $0x10] sm:$0xff] %v1393
    %1442 = vst [vmem:[%s3 + $0x18] sm:$0xff] %v1394
    %1443 = vst [vmem:[%s3 + $0x20] sm:$0xff] %v1395
    %1444 = vst [vmem:[%s3 + $0x28] sm:$0xf] %v1396
    %1445 = vst [vmem:[%s3 + $0x2c] sm:$0xff] %v1397
    %1446 = vst [vmem:[%s3 + $0x34] sm:$0xff] %v1398
    %1447 = vst [vmem:[%s3 + $0x3c] sm:$0xff] %v1399
    %1448 = vst [vmem:[%s3 + $0x44] sm:$0xff] %v1400
    %1449 = vst [vmem:[%s3 + $0x4c] sm:$0xff] %v1401
    %1450 = vst [vmem:[%s3 + $0x54] sm:$0xf] %v1402
    %1451 = vst [vmem:[%s3 + $0x58] sm:$0xff] %v1403
    %1452 = vst [vmem:[%s3 + $0x60] sm:$0xff] %v1404
    %1453 = vst [vmem:[%s3 + $0x68] sm:$0xff] %v1405
    %1454 = vst [vmem:[%s3 + $0x70] sm:$0xff] %v1406
    %1455 = vst [vmem:[%s3 + $0x78] sm:$0xff] %v1407
    %1456 = vst [vmem:[%s3 + $0x80] sm:$0xf] %v1408
    %1457 = vst [vmem:[%s3 + $0x84] sm:$0xff] %v1409
    %1458 = vst [vmem:[%s3 + $0x8c] sm:$0xff] %v1410
    %1459 = vst [vmem:[%s3 + $0x94] sm:$0xff] %v1411
    %1460 = vst [vmem:[%s3 + $0x9c] sm:$0xff] %v1412
    %1461 = vst [vmem:[%s3 + $0xa4] sm:$0xff] %v1413
    %1462 = vst [vmem:[%s3 + $0xac] sm:$0xf] %v1414
    // Predicated region
    $region22: #{classifier_cnn_effnet_forward.2} parent=1 // pred_check
      _
    $region23: #{classifier_cnn_effnet_forward.2} parent=1 // pred_check_branch
      %1464 = sbr.rel (0) target = $region25
    $region24: #{classifier_cnn_effnet_forward.2} parent=1 // pred_region
      _
    $region25: #{classifier_cnn_effnet_forward.2} parent=1 // pred_fallthru
      _
    // Predicated region
    $region26: #{classifier_cnn_effnet_forward.2} parent=1 // pred_check
      _
    $region27: #{classifier_cnn_effnet_forward.2} parent=1 // pred_check_branch
      %1466 = sbr.rel (0) target = $region29
    $region28: #{classifier_cnn_effnet_forward.2} parent=1 // pred_region
      _
    $region29: #{classifier_cnn_effnet_forward.2} parent=1 // pred_fallthru
      _
    %1467 = vsyncpa [#allocation3], 1
    %1468 = vsyncpa [#allocation5], 1

// kernel: classifier_cnn_effnet_forward.3
$region0: #{classifier_cnn_effnet_forward.3}
  #allocation0 [shape = 'u32[]', space=smem, size = 0x4, offset = 0x4, fixed_abs, tag = 'smem constant byte address 0x4 - core index']
  #allocation1 [shape = 'u32[144,128]{1,0:T(1,128)}', space=vmem, size = 0x12000, scoped, tag = 'internal scratch']
  #allocation2 [shape = 'f32[24,704]{1,0:T(8,128)}', space=vmem, size = 0x12000, scoped, tag = 'scratch operand']
  %s0 = inlined_call_operand.vmem [shape: f32[3], index: 0, kind: input, shape index: {}]
  %s1 = inlined_call_operand.vmem [shape: bf16[32,1408], index: 1, kind: input, shape index: {}]
  %s2 = inlined_call_operand.vmem [shape: bf16[4,24,32], index: 2, kind: input, shape index: {}]
  %s3 = inlined_call_operand.vmem [shape: f32[2,24], index: 3, kind: input, shape index: {}]
  %s4 = inlined_call_operand.vmem [shape: bf16[3,4,1408,704], index: 4, kind: input, shape index: {}]
  %s5 = inlined_call_operand.vmem [shape: f32[3,1,704], index: 5, kind: input, shape index: {}]
  %s6 = inlined_call_operand.vmem [shape: bf16[3,704,256], index: 6, kind: input, shape index: {}]
  %s7 = inlined_call_operand.vmem [shape: f32[3,1,256], index: 7, kind: input, shape index: {}]
  %s8 = inlined_call_operand.vmem [shape: f32[3,2,256], index: 8, kind: output, shape index: {}]
  %s9 = sld [smem:[#allocation0]]
  $region77: #{classifier_cnn_effnet_forward.3} parent=0
    _
  %s11 = ssub.s32 1, %s9
  %s12 = scalar_select 0, %s11, %s9
  $region1: #{classifier_cnn_effnet_forward.3} parent=0
    #allocation3 [shape = 'u8[512]{0}', space=smem, size = 0x200, scoped, tag = 'input window, operand 0, single buffered']
    #allocation4 [shape = 's32[2]{0}', space=sflag, size = 0x8, scoped, tag = 'scoped memory for classifier_cnn_effnet_forward.3']
    %13 = vsyncpa [#allocation4], 0
    loop: start=0, step=1, limit=8
    $region2: #{classifier_cnn_effnet_forward.3} parent=1 // loop_pre_header
      _
    $region3: #{classifier_cnn_effnet_forward.3} parent=1 // loop_header
      %s15 = sphi 0, %s19
      %p16 = scmp.ge.s32.totalorder %s15, 8
      %s22 = sphi 0, %s34
      %s23 = sphi 0, %s30
      %s24 = sphi 0, %s22
      %s25 = sphi 0, %s23
      %s26 = sphi 0, %s24
      %s27 = sphi 0, %s25
      %s35 = sphi 0, %s35
      %s37 = sphi 0, %s35
      %s38 = sphi 0, %s37
      %s52 = sphi 0, %s38
      %s56 = sphi 0, %s56
      %s58 = sphi 0, %s56
      %s59 = sphi 0, %s58
      %s73 = sphi 0, %s59
      %s79 = sphi 0, %s81
      %s82 = sphi 0, %s79
      %s83 = sphi 0, %s82
      %s99 = sphi 0, %s83
      %s103 = sphi 0, %s103
      %s105 = sphi 0, %s103
      %s106 = sphi 0, %s105
      %s120 = sphi 0, %s106
      %s128 = sphi 0, %s130
      %s131 = sphi 0, %s128
      %s132 = sphi 0, %s131
      %s148 = sphi 0, %s132
      %s154 = sphi 0, %s156
      %s157 = sphi 0, %s154
      %s158 = sphi 0, %s157
      %s174 = sphi 0, %s158
      %s180 = sphi 0, %s182
      %s183 = sphi 0, %s180
      %s184 = sphi 0, %s183
      %s200 = sphi 0, %s184
      %s206 = sphi 0, %s208
      %s209 = sphi 0, %s206
      %s210 = sphi 0, %s209
      %s226 = sphi 0, %s210
      %s232 = sphi 0, %s234
      %s235 = sphi 0, %s232
      %s236 = sphi 0, %s235
      %s252 = sphi 0, %s236
    $region4: #{classifier_cnn_effnet_forward.3} parent=1 // loop_header_branch
      %18 = sbr.rel (%p16) target = $region8
    $region5: #{classifier_cnn_effnet_forward.3} parent=1 // loop_body
      %s20 = ssub.s32 %s15, 1
      %s21 = ssub.s32 %s15, 2
      %s28 = sadd.s32 1, %s23
      %p29 = scmp.ge.s32.totalorder %s28, 2
      %s30 = scalar_select %p29, 0, %s28
      %s31 = sadd.s32 1, %s22
      %s32 = scalar_select %p29, %s31, %s22
      %p33 = scmp.ge.s32.totalorder %s32, 3
      %s34 = scalar_select %p33, 0, %s32
      %s36 = sadd.s32 %s35, 1
      %p39 = scmp.eq.s32.totalorder %s15, 5
      %p40 = scmp.ne.s32.totalorder %s35, %s37
      %p41 = scmp.eq.s32.totalorder %s15, 0
      %p42 = por %p40, %p41
      %p43 = scmp.ne.s32.totalorder %s35, %s37
      %p44 = scmp.eq.s32.totalorder %s20, 5
      %p45 = por %p43, %p44
      %p46 = scmp.ne.s32.totalorder %s37, %s38
      %p47 = scmp.eq.s32.totalorder %s20, 0
      %p48 = por %p46, %p47
      %p49 = scmp.ne.s32.totalorder %s37, %s38
      %p50 = scmp.eq.s32.totalorder %s21, 5
      %p51 = por %p49, %p50
      %p53 = scmp.ne.s32.totalorder %s38, %s52
      %p54 = scmp.eq.s32.totalorder %s21, 0
      %p55 = por %p53, %p54
      %s57 = sadd.s32 %s56, 1
      %p60 = scmp.eq.s32.totalorder %s15, 5
      %p61 = scmp.ne.s32.totalorder %s56, %s58
      %p62 = scmp.eq.s32.totalorder %s15, 0
      %p63 = por %p61, %p62
      %p64 = scmp.ne.s32.totalorder %s56, %s58
      %p65 = scmp.eq.s32.totalorder %s20, 5
      %p66 = por %p64, %p65
      %p67 = scmp.ne.s32.totalorder %s58, %s59
      %p68 = scmp.eq.s32.totalorder %s20, 0
      %p69 = por %p67, %p68
      %p70 = scmp.ne.s32.totalorder %s58, %s59
      %p71 = scmp.eq.s32.totalorder %s21, 5
      %p72 = por %p70, %p71
      %p74 = scmp.ne.s32.totalorder %s59, %s73
      %p75 = scmp.eq.s32.totalorder %s21, 0
      %p76 = por %p74, %p75
      %s77 = ssub.s32 %s23, %s30
      %p78 = scmp.eq.s32.totalorder %s77, 0
      %s80 = sadd.s32 %s79, 1
      %s81 = scalar_select %p78, %s79, %s80
      %p84 = pneg %p78
      %p85 = scmp.eq.s32.totalorder %s15, 5
      %p86 = por %p84, %p85
      %p87 = scmp.ne.s32.totalorder %s79, %s82
      %p88 = scmp.eq.s32.totalorder %s15, 0
      %p89 = por %p87, %p88
      %p90 = scmp.ne.s32.totalorder %s79, %s82
      %p91 = scmp.eq.s32.totalorder %s20, 5
      %p92 = por %p90, %p91
      %p93 = scmp.ne.s32.totalorder %s82, %s83
      %p94 = scmp.eq.s32.totalorder %s20, 0
      %p95 = por %p93, %p94
      %p96 = scmp.ne.s32.totalorder %s82, %s83
      %p97 = scmp.eq.s32.totalorder %s21, 5
      %p98 = por %p96, %p97
      %p100 = scmp.ne.s32.totalorder %s83, %s99
      %p101 = scmp.eq.s32.totalorder %s21, 0
      %p102 = por %p100, %p101
      %s104 = sadd.s32 %s103, 1
      %p107 = scmp.eq.s32.totalorder %s15, 5
      %p108 = scmp.ne.s32.totalorder %s103, %s105
      %p109 = scmp.eq.s32.totalorder %s15, 0
      %p110 = por %p108, %p109
      %p111 = scmp.ne.s32.totalorder %s103, %s105
      %p112 = scmp.eq.s32.totalorder %s20, 5
      %p113 = por %p111, %p112
      %p114 = scmp.ne.s32.totalorder %s105, %s106
      %p115 = scmp.eq.s32.totalorder %s20, 0
      %p116 = por %p114, %p115
      %p117 = scmp.ne.s32.totalorder %s105, %s106
      %p118 = scmp.eq.s32.totalorder %s21, 5
      %p119 = por %p117, %p118
      %p121 = scmp.ne.s32.totalorder %s106, %s120
      %p122 = scmp.eq.s32.totalorder %s21, 0
      %p123 = por %p121, %p122
      %s124 = ssub.s32 %s22, %s34
      %s125 = ssub.s32 %s23, %s30
      %s126 = sor.u32 %s124, %s125
      %p127 = scmp.eq.s32.totalorder %s126, 0
      %s129 = sadd.s32 %s128, 1
      %s130 = scalar_select %p127, %s128, %s129
      %p133 = pneg %p127
      %p134 = scmp.eq.s32.totalorder %s15, 5
      %p135 = por %p133, %p134
      %p136 = scmp.ne.s32.totalorder %s128, %s131
      %p137 = scmp.eq.s32.totalorder %s15, 0
      %p138 = por %p136, %p137
      %p139 = scmp.ne.s32.totalorder %s128, %s131
      %p140 = scmp.eq.s32.totalorder %s20, 5
      %p141 = por %p139, %p140
      %p142 = scmp.ne.s32.totalorder %s131, %s132
      %p143 = scmp.eq.s32.totalorder %s20, 0
      %p144 = por %p142, %p143
      %p145 = scmp.ne.s32.totalorder %s131, %s132
      %p146 = scmp.eq.s32.totalorder %s21, 5
      %p147 = por %p145, %p146
      %p149 = scmp.ne.s32.totalorder %s132, %s148
      %p150 = scmp.eq.s32.totalorder %s21, 0
      %p151 = por %p149, %p150
      %s152 = ssub.s32 %s22, %s34
      %p153 = scmp.eq.s32.totalorder %s152, 0
      %s155 = sadd.s32 %s154, 1
      %s156 = scalar_select %p153, %s154, %s155
      %p159 = pneg %p153
      %p160 = scmp.eq.s32.totalorder %s15, 5
      %p161 = por %p159, %p160
      %p162 = scmp.ne.s32.totalorder %s154, %s157
      %p163 = scmp.eq.s32.totalorder %s15, 0
      %p164 = por %p162, %p163
      %p165 = scmp.ne.s32.totalorder %s154, %s157
      %p166 = scmp.eq.s32.totalorder %s20, 5
      %p167 = por %p165, %p166
      %p168 = scmp.ne.s32.totalorder %s157, %s158
      %p169 = scmp.eq.s32.totalorder %s20, 0
      %p170 = por %p168, %p169
      %p171 = scmp.ne.s32.totalorder %s157, %s158
      %p172 = scmp.eq.s32.totalorder %s21, 5
      %p173 = por %p171, %p172
      %p175 = scmp.ne.s32.totalorder %s158, %s174
      %p176 = scmp.eq.s32.totalorder %s21, 0
      %p177 = por %p175, %p176
      %s178 = ssub.s32 %s22, %s34
      %p179 = scmp.eq.s32.totalorder %s178, 0
      %s181 = sadd.s32 %s180, 1
      %s182 = scalar_select %p179, %s180, %s181
      %p185 = pneg %p179
      %p186 = scmp.eq.s32.totalorder %s15, 5
      %p187 = por %p185, %p186
      %p188 = scmp.ne.s32.totalorder %s180, %s183
      %p189 = scmp.eq.s32.totalorder %s15, 0
      %p190 = por %p188, %p189
      %p191 = scmp.ne.s32.totalorder %s180, %s183
      %p192 = scmp.eq.s32.totalorder %s20, 5
      %p193 = por %p191, %p192
      %p194 = scmp.ne.s32.totalorder %s183, %s184
      %p195 = scmp.eq.s32.totalorder %s20, 0
      %p196 = por %p194, %p195
      %p197 = scmp.ne.s32.totalorder %s183, %s184
      %p198 = scmp.eq.s32.totalorder %s21, 5
      %p199 = por %p197, %p198
      %p201 = scmp.ne.s32.totalorder %s184, %s200
      %p202 = scmp.eq.s32.totalorder %s21, 0
      %p203 = por %p201, %p202
      %s204 = ssub.s32 %s22, %s34
      %p205 = scmp.eq.s32.totalorder %s204, 0
      %s207 = sadd.s32 %s206, 1
      %s208 = scalar_select %p205, %s206, %s207
      %p211 = pneg %p205
      %p212 = scmp.eq.s32.totalorder %s15, 5
      %p213 = por %p211, %p212
      %p214 = scmp.ne.s32.totalorder %s206, %s209
      %p215 = scmp.eq.s32.totalorder %s15, 0
      %p216 = por %p214, %p215
      %p217 = scmp.ne.s32.totalorder %s206, %s209
      %p218 = scmp.eq.s32.totalorder %s20, 5
      %p219 = por %p217, %p218
      %p220 = scmp.ne.s32.totalorder %s209, %s210
      %p221 = scmp.eq.s32.totalorder %s20, 0
      %p222 = por %p220, %p221
      %p223 = scmp.ne.s32.totalorder %s209, %s210
      %p224 = scmp.eq.s32.totalorder %s21, 5
      %p225 = por %p223, %p224
      %p227 = scmp.ne.s32.totalorder %s210, %s226
      %p228 = scmp.eq.s32.totalorder %s21, 0
      %p229 = por %p227, %p228
      %s230 = ssub.s32 %s22, %s34
      %p231 = scmp.eq.s32.totalorder %s230, 0
      %s233 = sadd.s32 %s232, 1
      %s234 = scalar_select %p231, %s232, %s233
      %p237 = pneg %p231
      %p238 = scmp.eq.s32.totalorder %s15, 5
      %p239 = por %p237, %p238
      %p240 = scmp.ne.s32.totalorder %s232, %s235
      %p241 = scmp.eq.s32.totalorder %s15, 0
      %p242 = por %p240, %p241
      %p243 = scmp.ne.s32.totalorder %s232, %s235
      %p244 = scmp.eq.s32.totalorder %s20, 5
      %p245 = por %p243, %p244
      %p246 = scmp.ne.s32.totalorder %s235, %s236
      %p247 = scmp.eq.s32.totalorder %s20, 0
      %p248 = por %p246, %p247
      %p249 = scmp.ne.s32.totalorder %s235, %s236
      %p250 = scmp.eq.s32.totalorder %s21, 5
      %p251 = por %p249, %p250
      %p253 = scmp.ne.s32.totalorder %s236, %s252
      %p254 = scmp.eq.s32.totalorder %s21, 0
      %p255 = por %p253, %p254
      %p256 = scmp.le.s32.totalorder 1, %s15
      %p257 = scmp.lt.s32.totalorder %s15, 7
      %p258 = pnand %p256, %p257
      %p259 = pneg %p258
      // Predicated region
      $region9: #{classifier_cnn_effnet_forward.3} parent=5 // pred_check
        _
      $region10: #{classifier_cnn_effnet_forward.3} parent=5 // pred_check_branch
        %261 = sbr.rel (%p258) target = $region12
      $region11: #{classifier_cnn_effnet_forward.3} parent=5 // pred_region
        %s262 = ssub.s32 %s15, 1
        // Predicated region
        $region13: #{classifier_cnn_effnet_forward.3} parent=11 // pred_check
          %p263 = pneg %p48
        $region14: #{classifier_cnn_effnet_forward.3} parent=11 // pred_check_branch
          %265 = sbr.rel (%p263) target = $region16
        $region15: #{classifier_cnn_effnet_forward.3} parent=11 // pred_region
          %s267 = ssub.s32 16, 16
          %268 = vsyncadd [#allocation4], %s267
          %s270 = sshll.u32 %s0, 4
          %s271 = int_to_ptr.vmem [resolvable:$true] %s270
          %273 = dma.vmem_to_smem %s271, 16, [#allocation3], [#allocation4]
        $region16: #{classifier_cnn_effnet_forward.3} parent=11 // pred_fallthru
          _
        // Predicated region
        $region17: #{classifier_cnn_effnet_forward.3} parent=11 // pred_check
          %p274 = pneg %p69
        $region18: #{classifier_cnn_effnet_forward.3} parent=11 // pred_check_branch
          %276 = sbr.rel (%p274) target = $region20
        $region19: #{classifier_cnn_effnet_forward.3} parent=11 // pred_region
          _
        $region20: #{classifier_cnn_effnet_forward.3} parent=11 // pred_fallthru
          _
        // Predicated region
        $region21: #{classifier_cnn_effnet_forward.3} parent=11 // pred_check
          %p277 = pneg %p116
        $region22: #{classifier_cnn_effnet_forward.3} parent=11 // pred_check_branch
          %279 = sbr.rel (%p277) target = $region24
        $region23: #{classifier_cnn_effnet_forward.3} parent=11 // pred_region
          _
        $region24: #{classifier_cnn_effnet_forward.3} parent=11 // pred_fallthru
          _
      $region12: #{classifier_cnn_effnet_forward.3} parent=5 // pred_fallthru
        _
      %p280 = scmp.lt.s32.totalorder %s15, 6
      // Predicated region
      $region25: #{classifier_cnn_effnet_forward.3} parent=5 // pred_check
        %p281 = pneg %p280
      $region26: #{classifier_cnn_effnet_forward.3} parent=5 // pred_check_branch
        %283 = sbr.rel (%p281) target = $region28
      $region27: #{classifier_cnn_effnet_forward.3} parent=5 // pred_region
        // Predicated region
        $region29: #{classifier_cnn_effnet_forward.3} parent=27 // pred_check
          %p284 = pneg %p89
        $region30: #{classifier_cnn_effnet_forward.3} parent=27 // pred_check_branch
          %286 = sbr.rel (%p284) target = $region32
        $region31: #{classifier_cnn_effnet_forward.3} parent=27 // pred_region
          %s287 = smul.u32 2, %s23
          %p288 = scmp.lt.s32.totalorder %s287, 3
          %s289 = scalar_select %p288, %s287, 3
          %s290 = smul.addr %s289, 3
          %s291 = smul.addr %s290, 4
          %s292 = scalar_lea.vmem %s2, %s291
          %s293 = smul.u32 2, %s23
        $region32: #{classifier_cnn_effnet_forward.3} parent=27 // pred_fallthru
          _
        // Predicated region
        $region33: #{classifier_cnn_effnet_forward.3} parent=27 // pred_check
          %p294 = pneg %p138
        $region34: #{classifier_cnn_effnet_forward.3} parent=27 // pred_check_branch
          %296 = sbr.rel (%p294) target = $region36
        $region35: #{classifier_cnn_effnet_forward.3} parent=27 // pred_region
          %s297 = smul.u32 2, %s23
          %p298 = scmp.lt.s32.totalorder %s22, 2
          %s299 = scalar_select %p298, %s22, 2
          %p300 = scmp.lt.s32.totalorder %s297, 3
          %s301 = scalar_select %p300, %s297, 3
          %s302 = smul.addr %s301, 1056
          %s303 = smul.addr %s299, 4224
          %s304 = sadd.s32 %s302, %s303
          %s305 = smul.addr %s304, 4
          %s306 = scalar_lea.vmem %s4, %s305
          %s307 = smul.u32 2, %s23
        $region36: #{classifier_cnn_effnet_forward.3} parent=27 // pred_fallthru
          _
        // Predicated region
        $region37: #{classifier_cnn_effnet_forward.3} parent=27 // pred_check
          %p308 = pneg %p164
        $region38: #{classifier_cnn_effnet_forward.3} parent=27 // pred_check_branch
          %310 = sbr.rel (%p308) target = $region40
        $region39: #{classifier_cnn_effnet_forward.3} parent=27 // pred_region
          %p311 = scmp.lt.s32.totalorder %s22, 2
          %s312 = scalar_select %p311, %s22, 2
          %s313 = smul.addr %s312, 6
          %s314 = scalar_lea.vmem %s5, %s313
        $region40: #{classifier_cnn_effnet_forward.3} parent=27 // pred_fallthru
          _
        // Predicated region
        $region41: #{classifier_cnn_effnet_forward.3} parent=27 // pred_check
          %p315 = pneg %p190
        $region42: #{classifier_cnn_effnet_forward.3} parent=27 // pred_check_branch
          %317 = sbr.rel (%p315) target = $region44
        $region43: #{classifier_cnn_effnet_forward.3} parent=27 // pred_region
          %p318 = scmp.lt.s32.totalorder %s22, 2
          %s319 = scalar_select %p318, %s22, 2
          %s320 = smul.addr %s319, 176
          %s321 = smul.addr %s320, 4
          %s322 = scalar_lea.vmem %s6, %s321
        $region44: #{classifier_cnn_effnet_forward.3} parent=27 // pred_fallthru
          _
        // Predicated region
        $region45: #{classifier_cnn_effnet_forward.3} parent=27 // pred_check
          %p323 = pneg %p216
        $region46: #{classifier_cnn_effnet_forward.3} parent=27 // pred_check_branch
          %325 = sbr.rel (%p323) target = $region48
        $region47: #{classifier_cnn_effnet_forward.3} parent=27 // pred_region
          %p326 = scmp.lt.s32.totalorder %s22, 2
          %s327 = scalar_select %p326, %s22, 2
          %s328 = smul.addr %s327, 2
          %s329 = scalar_lea.vmem %s7, %s328
        $region48: #{classifier_cnn_effnet_forward.3} parent=27 // pred_fallthru
          _
      $region28: #{classifier_cnn_effnet_forward.3} parent=5 // pred_fallthru
        _
      %p330 = scmp.le.s32.totalorder 1, %s15
      %p331 = scmp.lt.s32.totalorder %s15, 7
      %p332 = pnand %p330, %p331
      %p333 = pneg %p332
      // Predicated region
      $region49: #{classifier_cnn_effnet_forward.3} parent=5 // pred_check
        _
      $region50: #{classifier_cnn_effnet_forward.3} parent=5 // pred_check_branch
        %335 = sbr.rel (%p332) target = $region52
      $region51: #{classifier_cnn_effnet_forward.3} parent=5 // pred_region
        %s336 = ssub.s32 %s15, 1
        // Predicated region
        $region53: #{classifier_cnn_effnet_forward.3} parent=51 // pred_check
          %p337 = pneg %p48
        $region54: #{classifier_cnn_effnet_forward.3} parent=51 // pred_check_branch
          %339 = sbr.rel (%p337) target = $region56
        $region55: #{classifier_cnn_effnet_forward.3} parent=51 // pred_region
          %340 = dma.done [#allocation4], 16
        $region56: #{classifier_cnn_effnet_forward.3} parent=51 // pred_fallthru
          _
        %341 = sfence
        %p342 = pneg %p48
        %p343 = pneg %p45
        %p344 = pneg %p69
        %p345 = pneg %p66
        %s346 = smul.u32 2, %s25
        %p347 = scmp.lt.s32.totalorder %s346, 3
        %s348 = scalar_select %p347, %s346, 3
        %s349 = smul.addr %s348, 3
        %s350 = smul.addr %s349, 4
        %s351 = scalar_lea.vmem %s2, %s350
        %p352 = pneg %p95
        %p353 = pneg %p92
        %p354 = pneg %p116
        %p355 = pneg %p113
        %s356 = smul.u32 2, %s25
        %p357 = scmp.lt.s32.totalorder %s24, 2
        %s358 = scalar_select %p357, %s24, 2
        %p359 = scmp.lt.s32.totalorder %s356, 3
        %s360 = scalar_select %p359, %s356, 3
        %s361 = smul.addr %s360, 1056
        %s362 = smul.addr %s358, 4224
        %s363 = sadd.s32 %s361, %s362
        %s364 = smul.addr %s363, 4
        %s365 = scalar_lea.vmem %s4, %s364
        %p366 = pneg %p144
        %p367 = pneg %p141
        %p368 = scmp.lt.s32.totalorder %s24, 2
        %s369 = scalar_select %p368, %s24, 2
        %s370 = smul.addr %s369, 6
        %s371 = scalar_lea.vmem %s5, %s370
        %p372 = pneg %p170
        %p373 = pneg %p167
        %p374 = scmp.lt.s32.totalorder %s24, 2
        %s375 = scalar_select %p374, %s24, 2
        %s376 = smul.addr %s375, 176
        %s377 = smul.addr %s376, 4
        %s378 = scalar_lea.vmem %s6, %s377
        %p379 = pneg %p196
        %p380 = pneg %p193
        %p381 = scmp.lt.s32.totalorder %s24, 2
        %s382 = scalar_select %p381, %s24, 2
        %s383 = smul.addr %s382, 2
        %s384 = scalar_lea.vmem %s7, %s383
        %p385 = pneg %p222
        %p386 = pneg %p219
        %p387 = pneg %p248
        %p388 = pneg %p245
        %p389 = scmp.lt.s32.totalorder %s24, 2
        %s390 = scalar_select %p389, %s24, 2
        %s391 = smul.addr %s390, 2
        %s392 = smul.addr %s391, 2
        %s393 = scalar_lea.vmem %s8, %s392
        %s394 = smul.u32 2, %s25
        %p395 = scmp.lt.s32.totalorder %s394, 3
        %s396 = scalar_select %p395, %s394, 3
        %s397 = smul.addr %s396, 3
        %s398 = smul.addr %s397, 4
        %s399 = scalar_lea.vmem %s2, %s398
        %s400 = smul.u32 2, %s25
        %s401 = smul.u32 2, %s25
        %p402 = scmp.lt.s32.totalorder %s24, 2
        %s403 = scalar_select %p402, %s24, 2
        %p404 = scmp.lt.s32.totalorder %s401, 3
        %s405 = scalar_select %p404, %s401, 3
        %s406 = smul.addr %s405, 1056
        %s407 = smul.addr %s403, 4224
        %s408 = sadd.s32 %s406, %s407
        %s409 = smul.addr %s408, 4
        %s410 = scalar_lea.vmem %s4, %s409
        %s411 = smul.u32 2, %s25
        %p412 = scmp.lt.s32.totalorder %s24, 2
        %s413 = scalar_select %p412, %s24, 2
        %s414 = smul.addr %s413, 6
        %s415 = scalar_lea.vmem %s5, %s414
        %p416 = scmp.lt.s32.totalorder %s24, 2
        %s417 = scalar_select %p416, %s24, 2
        %s418 = smul.addr %s417, 176
        %s419 = smul.addr %s418, 4
        %s420 = scalar_lea.vmem %s6, %s419
        %p421 = scmp.lt.s32.totalorder %s24, 2
        %s422 = scalar_select %p421, %s24, 2
        %s423 = smul.addr %s422, 2
        %s424 = scalar_lea.vmem %s7, %s423
        %p425 = scmp.lt.s32.totalorder %s24, 2
        %s426 = scalar_select %p425, %s24, 2
        %s427 = smul.addr %s426, 2
        %s428 = smul.addr %s427, 2
        %s429 = scalar_lea.vmem %s8, %s428
        %p431 = scmp.eq.s32.totalorder %s25, 0
        // Predicated region
        $region57: #{classifier_cnn_effnet_forward.3} parent=51 // pred_check
          %p432 = pneg %p431
        $region58: #{classifier_cnn_effnet_forward.3} parent=51 // pred_check_branch
          %434 = sbr.rel (%p432) target = $region60
        $region59: #{classifier_cnn_effnet_forward.3} parent=51 // pred_region
          %435 = vst [vmem:[#allocation2] sm:$0xff] 0.0
          %436 = vst [vmem:[#allocation2 + $0x8] sm:$0xff] 0.0
          %437 = vst [vmem:[#allocation2 + $0x10] sm:$0xff] 0.0
          %438 = vst [vmem:[#allocation2 + $0x18] sm:$0xff] 0.0
          %439 = vst [vmem:[#allocation2 + $0x20] sm:$0xff] 0.0
          %vm440 = vcmask 523264
          %441 = vst.msk [vmem:[#allocation2 + $0x28] sm:$0xff] %vm440, 0.0
          %442 = vst [vmem:[#allocation2 + $0x30] sm:$0xff] 0.0
          %443 = vst [vmem:[#allocation2 + $0x38] sm:$0xff] 0.0
          %444 = vst [vmem:[#allocation2 + $0x40] sm:$0xff] 0.0
          %445 = vst [vmem:[#allocation2 + $0x48] sm:$0xff] 0.0
          %446 = vst [vmem:[#allocation2 + $0x50] sm:$0xff] 0.0
          %447 = vst.msk [vmem:[#allocation2 + $0x58] sm:$0xff] %vm440, 0.0
          %448 = vst [vmem:[#allocation2 + $0x60] sm:$0xff] 0.0
          %449 = vst [vmem:[#allocation2 + $0x68] sm:$0xff] 0.0
          %450 = vst [vmem:[#allocation2 + $0x70] sm:$0xff] 0.0
          %451 = vst [vmem:[#allocation2 + $0x78] sm:$0xff] 0.0
          %452 = vst [vmem:[#allocation2 + $0x80] sm:$0xff] 0.0
          %453 = vst.msk [vmem:[#allocation2 + $0x88] sm:$0xff] %vm440, 0.0
        $region60: #{classifier_cnn_effnet_forward.3} parent=51 // pred_fallthru
          _
        %v454 = vld [vmem:[%s1] sm:$0xff]
        %v455 = vld [vmem:[%s1 + $0x8] sm:$0xff]
        %v456 = vld [vmem:[%s1 + $0x10] sm:$0xff]
        %v457 = vld [vmem:[%s1 + $0x18] sm:$0xff]
        %v458 = vld [vmem:[%s1 + $0x20] sm:$0xff]
        %v459 = vld [vmem:[%s1 + $0x28] sm:$0xf]
        %v460 = vld [vmem:[%s1 + $0x2c] sm:$0xff]
        %v461 = vld [vmem:[%s1 + $0x34] sm:$0xff]
        %v462 = vld [vmem:[%s1 + $0x3c] sm:$0xff]
        %v463 = vld [vmem:[%s1 + $0x44] sm:$0xff]
        %v464 = vld [vmem:[%s1 + $0x4c] sm:$0xff]
        %v465 = vld [vmem:[%s1 + $0x54] sm:$0xf]
        %v466 = vld [vmem:[%s1 + $0x58] sm:$0xff]
        %v467 = vld [vmem:[%s1 + $0x60] sm:$0xff]
        %v468 = vld [vmem:[%s1 + $0x68] sm:$0xff]
        %v469 = vld [vmem:[%s1 + $0x70] sm:$0xff]
        %v470 = vld [vmem:[%s1 + $0x78] sm:$0xff]
        %v471 = vld [vmem:[%s1 + $0x80] sm:$0xf]
        %v472 = vld [vmem:[%s1 + $0x84] sm:$0xff]
        %v473 = vld [vmem:[%s1 + $0x8c] sm:$0xff]
        %v474 = vld [vmem:[%s1 + $0x94] sm:$0xff]
        %v475 = vld [vmem:[%s1 + $0x9c] sm:$0xff]
        %v476 = vld [vmem:[%s1 + $0xa4] sm:$0xff]
        %v477 = vld [vmem:[%s1 + $0xac] sm:$0xf]
        %v478 = vld [vmem:[%s399] sm:$0xf]
        %v479 = vld [vmem:[%s399 + $0x4] sm:$0xf]
        %v480 = vld [vmem:[%s399 + $0x8] sm:$0xf]
        %v484 = vunpack.c.l.b16 %v478
        %v485 = vunpack.c.l.b16 %v479
        %v486 = vunpack.c.l.b16 %v480
        %v487 = vpack.c.b16 %v485, %v484
        %v488 = vpack.c.b16 %v486, %v486
        %v513 = vunpack.c.l.b16 %v454
        %v514 = vunpack.c.h.b16 %v454
        %v515 = vunpack.c.l.b16 %v455
        %v516 = vunpack.c.h.b16 %v455
        %v517 = vunpack.c.l.b16 %v456
        %v518 = vunpack.c.h.b16 %v456
        %v519 = vunpack.c.l.b16 %v457
        %v520 = vunpack.c.h.b16 %v457
        %v521 = vunpack.c.l.b16 %v458
        %v522 = vunpack.c.h.b16 %v458
        %v523 = vunpack.c.l.b16 %v459
        %v524 = vunpack.c.l.b16 %v460
        %v525 = vunpack.c.h.b16 %v460
        %v526 = vunpack.c.l.b16 %v461
        %v527 = vunpack.c.h.b16 %v461
        %v528 = vunpack.c.l.b16 %v462
        %v529 = vunpack.c.h.b16 %v462
        %v530 = vunpack.c.l.b16 %v463
        %v531 = vunpack.c.h.b16 %v463
        %v532 = vunpack.c.l.b16 %v464
        %v533 = vunpack.c.h.b16 %v464
        %v534 = vunpack.c.l.b16 %v465
        %v535 = vunpack.c.l.b16 %v466
        %v536 = vunpack.c.h.b16 %v466
        %v537 = vunpack.c.l.b16 %v467
        %v538 = vunpack.c.h.b16 %v467
        %v539 = vunpack.c.l.b16 %v468
        %v540 = vunpack.c.h.b16 %v468
        %v541 = vunpack.c.l.b16 %v469
        %v542 = vunpack.c.h.b16 %v469
        %v543 = vunpack.c.l.b16 %v470
        %v544 = vunpack.c.h.b16 %v470
        %v545 = vunpack.c.l.b16 %v471
        %v546 = vunpack.c.l.b16 %v472
        %v547 = vunpack.c.h.b16 %v472
        %v548 = vunpack.c.l.b16 %v473
        %v549 = vunpack.c.h.b16 %v473
        %v550 = vunpack.c.l.b16 %v474
        %v551 = vunpack.c.h.b16 %v474
        %v552 = vunpack.c.l.b16 %v475
        %v553 = vunpack.c.h.b16 %v475
        %v554 = vunpack.c.l.b16 %v476
        %v555 = vunpack.c.h.b16 %v476
        %v556 = vunpack.c.l.b16 %v477
        %v557 = vpack.c.b16 %v524, %v513
        %v558 = vpack.c.b16 %v525, %v514
        %v559 = vpack.c.b16 %v526, %v515
        %v560 = vpack.c.b16 %v527, %v516
        %v561 = vpack.c.b16 %v528, %v517
        %v562 = vpack.c.b16 %v529, %v518
        %v563 = vpack.c.b16 %v530, %v519
        %v564 = vpack.c.b16 %v531, %v520
        %v565 = vpack.c.b16 %v532, %v521
        %v566 = vpack.c.b16 %v533, %v522
        %v567 = vpack.c.b16 %v534, %v523
        %v568 = vpack.c.b16 %v546, %v535
        %v569 = vpack.c.b16 %v547, %v536
        %v570 = vpack.c.b16 %v548, %v537
        %v571 = vpack.c.b16 %v549, %v538
        %v572 = vpack.c.b16 %v550, %v539
        %v573 = vpack.c.b16 %v551, %v540
        %v574 = vpack.c.b16 %v552, %v541
        %v575 = vpack.c.b16 %v553, %v542
        %v576 = vpack.c.b16 %v554, %v543
        %v577 = vpack.c.b16 %v555, %v544
        %v578 = vpack.c.b16 %v556, %v545
        %vm601 = vcmask 261120
        %v603 = vsel %vm601, %v487, 0
        %v606 = vsel %vm601, %v488, 0
        %608 = vmatprep.subr.bf16.mxu0 0
        %609 = vmatpush1.bf16.msra.mxu0 0
        %610 = vmatprep.subr.bf16.mxu0 0
        %611 = vmatpush1.bf16.msra.mxu0 0
        %612 = vmatprep.subr.bf16.mxu0 0
        %613 = vmatpush1.bf16.msra.mxu0 0
        %614 = vmatprep.subr.bf16.mxu0 0
        %615 = vmatpush1.bf16.msra.mxu0 0
        %616 = vmatprep.subr.bf16.mxu0 0
        %617 = vmatpush1.bf16.msra.mxu0 0
        %618 = vmatprep.subr.bf16.mxu0 0
        %619 = vmatpush1.bf16.msra.mxu0 0
        %620 = vmatprep.subr.bf16.mxu0 %v569
        %621 = vmatpush1.bf16.msra.mxu0 %v568
        %622 = vmatprep.subr.bf16.mxu0 %v558
        %623 = vmatpush1.bf16.msra.mxu0 %v557
        %624 = vmatprep.subr.bf16.mxu0 0
        %625 = vmatpush2.bf16.msra.mxu0 0
        %626 = vmatprep.subr.bf16.mxu0 0
        %627 = vmatpush2.bf16.msra.mxu0 0
        %628 = vmatprep.subr.bf16.mxu0 0
        %629 = vmatpush2.bf16.msra.mxu0 0
        %630 = vmatprep.subr.bf16.mxu0 0
        %631 = vmatpush2.bf16.msra.mxu0 0
        %632 = vmatprep.subr.bf16.mxu0 0
        %633 = vmatpush2.bf16.msra.mxu0 0
        %634 = vmatprep.subr.bf16.mxu0 0
        %635 = vmatpush2.bf16.msra.mxu0 0
        %636 = vmatprep.subr.bf16.mxu0 0
        %637 = vmatpush2.bf16.msra.mxu0 0
        %638 = vmatprep.subr.bf16.mxu0 0
        %639 = vmatpush2.bf16.msra.mxu0 0
        %640 = vmatprep.mubr.bf16.mxu0 0
        %641 = vmatmul.mubr.bf16.gmra.mxu0 %v603
        %v642 = vpop.f32.mrf.mxu0
        %v643 = vadd.f32 0.0, %v642
        %v644 = vpop.f32.mrf.mxu0
        %v645 = vadd.f32 0.0, %v644
        %v646 = vpop.f32.mrf.mxu0
        %v647 = vadd.f32 0.0, %v646
        %v648 = vpop.f32.mrf.mxu0
        %v649 = vadd.f32 0.0, %v648
        %650 = vmatprep.mubr.bf16.mxu0 0
        %651 = vmatmul.mubr.bf16.gmra.mxu0 %v606
        %v652 = vpop.f32.mrf.mxu0
        %v653 = vadd.f32 0.0, %v652
        %v654 = vpop.f32.mrf.mxu0
        %v655 = vadd.f32 0.0, %v654
        %v656 = vpop.f32.mrf.mxu0
        %v657 = vpop.f32.mrf.mxu0
        %658 = vdwg.mxu0
        %659 = vmatprep.subr.bf16.mxu0 0
        %660 = vmatpush1.bf16.msra.mxu0 0
        %661 = vmatprep.subr.bf16.mxu0 0
        %662 = vmatpush1.bf16.msra.mxu0 0
        %663 = vmatprep.subr.bf16.mxu0 0
        %664 = vmatpush1.bf16.msra.mxu0 0
        %665 = vmatprep.subr.bf16.mxu0 0
        %666 = vmatpush1.bf16.msra.mxu0 0
        %667 = vmatprep.subr.bf16.mxu0 0
        %668 = vmatpush1.bf16.msra.mxu0 0
        %669 = vmatprep.subr.bf16.mxu0 0
        %670 = vmatpush1.bf16.msra.mxu0 0
        %671 = vmatprep.subr.bf16.mxu0 %v571
        %672 = vmatpush1.bf16.msra.mxu0 %v570
        %673 = vmatprep.subr.bf16.mxu0 %v560
        %674 = vmatpush1.bf16.msra.mxu0 %v559
        %675 = vmatprep.subr.bf16.mxu0 0
        %676 = vmatpush2.bf16.msra.mxu0 0
        %677 = vmatprep.subr.bf16.mxu0 0
        %678 = vmatpush2.bf16.msra.mxu0 0
        %679 = vmatprep.subr.bf16.mxu0 0
        %680 = vmatpush2.bf16.msra.mxu0 0
        %681 = vmatprep.subr.bf16.mxu0 0
        %682 = vmatpush2.bf16.msra.mxu0 0
        %683 = vmatprep.subr.bf16.mxu0 0
        %684 = vmatpush2.bf16.msra.mxu0 0
        %685 = vmatprep.subr.bf16.mxu0 0
        %686 = vmatpush2.bf16.msra.mxu0 0
        %687 = vmatprep.subr.bf16.mxu0 0
        %688 = vmatpush2.bf16.msra.mxu0 0
        %689 = vmatprep.subr.bf16.mxu0 0
        %690 = vmatpush2.bf16.msra.mxu0 0
        %691 = vmatprep.mubr.bf16.mxu0 0
        %692 = vmatmul.mubr.bf16.gmra.mxu0 %v603
        %v693 = vpop.f32.mrf.mxu0
        %v694 = vadd.f32 0.0, %v693
        %v695 = vpop.f32.mrf.mxu0
        %v696 = vadd.f32 0.0, %v695
        %v697 = vpop.f32.mrf.mxu0
        %v698 = vadd.f32 0.0, %v697
        %v699 = vpop.f32.mrf.mxu0
        %v700 = vadd.f32 0.0, %v699
        %701 = vmatprep.mubr.bf16.mxu0 0
        %702 = vmatmul.mubr.bf16.gmra.mxu0 %v606
        %v703 = vpop.f32.mrf.mxu0
        %v704 = vadd.f32 0.0, %v703
        %v705 = vpop.f32.mrf.mxu0
        %v706 = vadd.f32 0.0, %v705
        %v707 = vpop.f32.mrf.mxu0
        %v708 = vpop.f32.mrf.mxu0
        %709 = vdwg.mxu0
        %710 = vmatprep.subr.bf16.mxu0 0
        %711 = vmatpush1.bf16.msra.mxu0 0
        %712 = vmatprep.subr.bf16.mxu0 0
        %713 = vmatpush1.bf16.msra.mxu0 0
        %714 = vmatprep.subr.bf16.mxu0 0
        %715 = vmatpush1.bf16.msra.mxu0 0
        %716 = vmatprep.subr.bf16.mxu0 0
        %717 = vmatpush1.bf16.msra.mxu0 0
        %718 = vmatprep.subr.bf16.mxu0 0
        %719 = vmatpush1.bf16.msra.mxu0 0
        %720 = vmatprep.subr.bf16.mxu0 0
        %721 = vmatpush1.bf16.msra.mxu0 0
        %722 = vmatprep.subr.bf16.mxu0 %v573
        %723 = vmatpush1.bf16.msra.mxu0 %v572
        %724 = vmatprep.subr.bf16.mxu0 %v562
        %725 = vmatpush1.bf16.msra.mxu0 %v561
        %726 = vmatprep.subr.bf16.mxu0 0
        %727 = vmatpush2.bf16.msra.mxu0 0
        %728 = vmatprep.subr.bf16.mxu0 0
        %729 = vmatpush2.bf16.msra.mxu0 0
        %730 = vmatprep.subr.bf16.mxu0 0
        %731 = vmatpush2.bf16.msra.mxu0 0
        %732 = vmatprep.subr.bf16.mxu0 0
        %733 = vmatpush2.bf16.msra.mxu0 0
        %734 = vmatprep.subr.bf16.mxu0 0
        %735 = vmatpush2.bf16.msra.mxu0 0
        %736 = vmatprep.subr.bf16.mxu0 0
        %737 = vmatpush2.bf16.msra.mxu0 0
        %738 = vmatprep.subr.bf16.mxu0 0
        %739 = vmatpush2.bf16.msra.mxu0 0
        %740 = vmatprep.subr.bf16.mxu0 0
        %741 = vmatpush2.bf16.msra.mxu0 0
        %742 = vmatprep.mubr.bf16.mxu0 0
        %743 = vmatmul.mubr.bf16.gmra.mxu0 %v603
        %v744 = vpop.f32.mrf.mxu0
        %v745 = vadd.f32 0.0, %v744
        %v746 = vpop.f32.mrf.mxu0
        %v747 = vadd.f32 0.0, %v746
        %v748 = vpop.f32.mrf.mxu0
        %v749 = vadd.f32 0.0, %v748
        %v750 = vpop.f32.mrf.mxu0
        %v751 = vadd.f32 0.0, %v750
        %752 = vmatprep.mubr.bf16.mxu0 0
        %753 = vmatmul.mubr.bf16.gmra.mxu0 %v606
        %v754 = vpop.f32.mrf.mxu0
        %v755 = vadd.f32 0.0, %v754
        %v756 = vpop.f32.mrf.mxu0
        %v757 = vadd.f32 0.0, %v756
        %v758 = vpop.f32.mrf.mxu0
        %v759 = vpop.f32.mrf.mxu0
        %760 = vdwg.mxu0
        %761 = vmatprep.subr.bf16.mxu0 0
        %762 = vmatpush1.bf16.msra.mxu0 0
        %763 = vmatprep.subr.bf16.mxu0 0
        %764 = vmatpush1.bf16.msra.mxu0 0
        %765 = vmatprep.subr.bf16.mxu0 0
        %766 = vmatpush1.bf16.msra.mxu0 0
        %767 = vmatprep.subr.bf16.mxu0 0
        %768 = vmatpush1.bf16.msra.mxu0 0
        %769 = vmatprep.subr.bf16.mxu0 0
        %770 = vmatpush1.bf16.msra.mxu0 0
        %771 = vmatprep.subr.bf16.mxu0 0
        %772 = vmatpush1.bf16.msra.mxu0 0
        %773 = vmatprep.subr.bf16.mxu0 %v575
        %774 = vmatpush1.bf16.msra.mxu0 %v574
        %775 = vmatprep.subr.bf16.mxu0 %v564
        %776 = vmatpush1.bf16.msra.mxu0 %v563
        %777 = vmatprep.subr.bf16.mxu0 0
        %778 = vmatpush2.bf16.msra.mxu0 0
        %779 = vmatprep.subr.bf16.mxu0 0
        %780 = vmatpush2.bf16.msra.mxu0 0
        %781 = vmatprep.subr.bf16.mxu0 0
        %782 = vmatpush2.bf16.msra.mxu0 0
        %783 = vmatprep.subr.bf16.mxu0 0
        %784 = vmatpush2.bf16.msra.mxu0 0
        %785 = vmatprep.subr.bf16.mxu0 0
        %786 = vmatpush2.bf16.msra.mxu0 0
        %787 = vmatprep.subr.bf16.mxu0 0
        %788 = vmatpush2.bf16.msra.mxu0 0
        %789 = vmatprep.subr.bf16.mxu0 0
        %790 = vmatpush2.bf16.msra.mxu0 0
        %791 = vmatprep.subr.bf16.mxu0 0
        %792 = vmatpush2.bf16.msra.mxu0 0
        %793 = vmatprep.mubr.bf16.mxu0 0
        %794 = vmatmul.mubr.bf16.gmra.mxu0 %v603
        %v795 = vpop.f32.mrf.mxu0
        %v796 = vadd.f32 0.0, %v795
        %v797 = vpop.f32.mrf.mxu0
        %v798 = vadd.f32 0.0, %v797
        %v799 = vpop.f32.mrf.mxu0
        %v800 = vadd.f32 0.0, %v799
        %v801 = vpop.f32.mrf.mxu0
        %v802 = vadd.f32 0.0, %v801
        %803 = vmatprep.mubr.bf16.mxu0 0
        %804 = vmatmul.mubr.bf16.gmra.mxu0 %v606
        %v805 = vpop.f32.mrf.mxu0
        %v806 = vadd.f32 0.0, %v805
        %v807 = vpop.f32.mrf.mxu0
        %v808 = vadd.f32 0.0, %v807
        %v809 = vpop.f32.mrf.mxu0
        %v810 = vpop.f32.mrf.mxu0
        %811 = vdwg.mxu0
        %812 = vmatprep.subr.bf16.mxu0 0
        %813 = vmatpush1.bf16.msra.mxu0 0
        %814 = vmatprep.subr.bf16.mxu0 0
        %815 = vmatpush1.bf16.msra.mxu0 0
        %816 = vmatprep.subr.bf16.mxu0 0
        %817 = vmatpush1.bf16.msra.mxu0 0
        %818 = vmatprep.subr.bf16.mxu0 0
        %819 = vmatpush1.bf16.msra.mxu0 0
        %820 = vmatprep.subr.bf16.mxu0 0
        %821 = vmatpush1.bf16.msra.mxu0 0
        %822 = vmatprep.subr.bf16.mxu0 0
        %823 = vmatpush1.bf16.msra.mxu0 0
        %824 = vmatprep.subr.bf16.mxu0 %v577
        %825 = vmatpush1.bf16.msra.mxu0 %v576
        %826 = vmatprep.subr.bf16.mxu0 %v566
        %827 = vmatpush1.bf16.msra.mxu0 %v565
        %828 = vmatprep.subr.bf16.mxu0 0
        %829 = vmatpush2.bf16.msra.mxu0 0
        %830 = vmatprep.subr.bf16.mxu0 0
        %831 = vmatpush2.bf16.msra.mxu0 0
        %832 = vmatprep.subr.bf16.mxu0 0
        %833 = vmatpush2.bf16.msra.mxu0 0
        %834 = vmatprep.subr.bf16.mxu0 0
        %835 = vmatpush2.bf16.msra.mxu0 0
        %836 = vmatprep.subr.bf16.mxu0 0
        %837 = vmatpush2.bf16.msra.mxu0 0
        %838 = vmatprep.subr.bf16.mxu0 0
        %839 = vmatpush2.bf16.msra.mxu0 0
        %840 = vmatprep.subr.bf16.mxu0 0
        %841 = vmatpush2.bf16.msra.mxu0 0
        %842 = vmatprep.subr.bf16.mxu0 0
        %843 = vmatpush2.bf16.msra.mxu0 0
        %844 = vmatprep.mubr.bf16.mxu0 0
        %845 = vmatmul.mubr.bf16.gmra.mxu0 %v603
        %v846 = vpop.f32.mrf.mxu0
        %v847 = vadd.f32 0.0, %v846
        %v848 = vpop.f32.mrf.mxu0
        %v849 = vadd.f32 0.0, %v848
        %v850 = vpop.f32.mrf.mxu0
        %v851 = vadd.f32 0.0, %v850
        %v852 = vpop.f32.mrf.mxu0
        %v853 = vadd.f32 0.0, %v852
        %854 = vmatprep.mubr.bf16.mxu0 0
        %855 = vmatmul.mubr.bf16.gmra.mxu0 %v606
        %v856 = vpop.f32.mrf.mxu0
        %v857 = vadd.f32 0.0, %v856
        %v858 = vpop.f32.mrf.mxu0
        %v859 = vadd.f32 0.0, %v858
        %v860 = vpop.f32.mrf.mxu0
        %v861 = vpop.f32.mrf.mxu0
        %862 = vdwg.mxu0
        %863 = vmatprep.subr.bf16.mxu0 0
        %864 = vmatpush1.bf16.msra.mxu0 0
        %865 = vmatprep.subr.bf16.mxu0 0
        %866 = vmatpush1.bf16.msra.mxu0 0
        %867 = vmatprep.subr.bf16.mxu0 0
        %868 = vmatpush1.bf16.msra.mxu0 0
        %869 = vmatprep.subr.bf16.mxu0 0
        %870 = vmatpush1.bf16.msra.mxu0 0
        %871 = vmatprep.subr.bf16.mxu0 0
        %872 = vmatpush1.bf16.msra.mxu0 0
        %873 = vmatprep.subr.bf16.mxu0 0
        %874 = vmatpush1.bf16.msra.mxu0 0
        %875 = vmatprep.subr.bf16.mxu0 0
        %876 = vmatpush1.bf16.msra.mxu0 %v578
        %877 = vmatprep.subr.bf16.mxu0 0
        %878 = vmatpush1.bf16.msra.mxu0 %v567
        %879 = vmatprep.subr.bf16.mxu0 0
        %880 = vmatpush2.bf16.msra.mxu0 0
        %881 = vmatprep.subr.bf16.mxu0 0
        %882 = vmatpush2.bf16.msra.mxu0 0
        %883 = vmatprep.subr.bf16.mxu0 0
        %884 = vmatpush2.bf16.msra.mxu0 0
        %885 = vmatprep.subr.bf16.mxu0 0
        %886 = vmatpush2.bf16.msra.mxu0 0
        %887 = vmatprep.subr.bf16.mxu0 0
        %888 = vmatpush2.bf16.msra.mxu0 0
        %889 = vmatprep.subr.bf16.mxu0 0
        %890 = vmatpush2.bf16.msra.mxu0 0
        %891 = vmatprep.subr.bf16.mxu0 0
        %892 = vmatpush2.bf16.msra.mxu0 0
        %893 = vmatprep.subr.bf16.mxu0 0
        %894 = vmatpush2.bf16.msra.mxu0 0
        %895 = vmatprep.mubr.bf16.mxu0 0
        %896 = vmatmul.mubr.bf16.gmra.mxu0 %v603
        %v897 = vpop.f32.mrf.mxu0
        %v898 = vadd.f32 0.0, %v897
        %v899 = vpop.f32.mrf.mxu0
        %v900 = vpop.f32.mrf.mxu0
        %v901 = vadd.f32 0.0, %v900
        %v902 = vpop.f32.mrf.mxu0
        %903 = vmatprep.mubr.bf16.mxu0 0
        %904 = vmatmul.mubr.bf16.gmra.mxu0 %v606
        %v905 = vpop.f32.mrf.mxu0
        %v906 = vadd.f32 0.0, %v905
        %v907 = vpop.f32.mrf.mxu0
        %v908 = vpop.f32.mrf.mxu0
        %v909 = vpop.f32.mrf.mxu0
        %910 = vdwg.mxu0
        %v911 = vld [vmem:[#allocation2] sm:$0xff]
        %v912 = vld [vmem:[#allocation2 + $0x8] sm:$0xff]
        %v913 = vld [vmem:[#allocation2 + $0x10] sm:$0xff]
        %v914 = vld [vmem:[#allocation2 + $0x18] sm:$0xff]
        %v915 = vld [vmem:[#allocation2 + $0x20] sm:$0xff]
        %v916 = vld [vmem:[#allocation2 + $0x28] sm:$0xff]
        %v917 = vld [vmem:[#allocation2 + $0x30] sm:$0xff]
        %v918 = vld [vmem:[#allocation2 + $0x38] sm:$0xff]
        %v919 = vld [vmem:[#allocation2 + $0x40] sm:$0xff]
        %v920 = vld [vmem:[#allocation2 + $0x48] sm:$0xff]
        %v921 = vld [vmem:[#allocation2 + $0x50] sm:$0xff]
        %v922 = vld [vmem:[#allocation2 + $0x58] sm:$0xff]
        %v923 = vld [vmem:[#allocation2 + $0x60] sm:$0xff]
        %v924 = vld [vmem:[#allocation2 + $0x68] sm:$0xff]
        %v925 = vld [vmem:[#allocation2 + $0x70] sm:$0xff]
        %v926 = vld [vmem:[#allocation2 + $0x78] sm:$0xff]
        %v927 = vld [vmem:[#allocation2 + $0x80] sm:$0xff]
        %v928 = vld [vmem:[#allocation2 + $0x88] sm:$0xff]
        %v929 = vpack.c.bf16 %v647, %v643
        %v930 = vpack.c.bf16 %v649, %v645
        %v931 = vpack.c.bf16 %v698, %v694
        %v932 = vpack.c.bf16 %v700, %v696
        %v933 = vpack.c.bf16 %v749, %v745
        %v934 = vpack.c.bf16 %v751, %v747
        %v935 = vpack.c.bf16 %v800, %v796
        %v936 = vpack.c.bf16 %v802, %v798
        %v937 = vpack.c.bf16 %v851, %v847
        %v938 = vpack.c.bf16 %v853, %v849
        %v939 = vpack.c.bf16 %v901, %v898
        %v940 = vpack.c.bf16 %v653, %v653
        %v941 = vpack.c.bf16 %v655, %v655
        %v942 = vpack.c.bf16 %v704, %v704
        %v943 = vpack.c.bf16 %v706, %v706
        %v944 = vpack.c.bf16 %v755, %v755
        %v945 = vpack.c.bf16 %v757, %v757
        %v946 = vpack.c.bf16 %v806, %v806
        %v947 = vpack.c.bf16 %v808, %v808
        %v948 = vpack.c.bf16 %v857, %v857
        %v949 = vpack.c.bf16 %v859, %v859
        %v950 = vpack.c.bf16 %v906, %v906
        %v951 = vld [vmem:[%s410] sm:$0xff]
        %v952 = vld [vmem:[%s410 + $0x8] sm:$0xff]
        %v953 = vld [vmem:[%s410 + $0x10] sm:$0xff]
        %v954 = vld [vmem:[%s410 + $0x18] sm:$0xff]
        %v955 = vld [vmem:[%s410 + $0x20] sm:$0xff]
        %v956 = vld [vmem:[%s410 + $0x28] sm:$0xff]
        %v957 = vld [vmem:[%s410 + $0x30] sm:$0xff]
        %v958 = vld [vmem:[%s410 + $0x38] sm:$0xff]
        %v959 = vld [vmem:[%s410 + $0x40] sm:$0xff]
        %v960 = vld [vmem:[%s410 + $0x48] sm:$0xff]
        %v961 = vld [vmem:[%s410 + $0x50] sm:$0xff]
        %v962 = vld [vmem:[%s410 + $0x58] sm:$0xff]
        %v963 = vld [vmem:[%s410 + $0x60] sm:$0xff]
        %v964 = vld [vmem:[%s410 + $0x68] sm:$0xff]
        %v965 = vld [vmem:[%s410 + $0x70] sm:$0xff]
        %v966 = vld [vmem:[%s410 + $0x78] sm:$0xff]
        %v967 = vld [vmem:[%s410 + $0x80] sm:$0xff]
        %v968 = vld [vmem:[%s410 + $0x88] sm:$0xff]
        %v969 = vld [vmem:[%s410 + $0x90] sm:$0xff]
        %v970 = vld [vmem:[%s410 + $0x98] sm:$0xff]
        %v971 = vld [vmem:[%s410 + $0xa0] sm:$0xff]
        %v972 = vld [vmem:[%s410 + $0xa8] sm:$0xff]
        %v973 = vld [vmem:[%s410 + $0xb0] sm:$0xff]
        %v974 = vld [vmem:[%s410 + $0xb8] sm:$0xff]
        %v975 = vld [vmem:[%s410 + $0xc0] sm:$0xff]
        %v976 = vld [vmem:[%s410 + $0xc8] sm:$0xff]
        %v977 = vld [vmem:[%s410 + $0xd0] sm:$0xff]
        %v978 = vld [vmem:[%s410 + $0xd8] sm:$0xff]
        %v979 = vld [vmem:[%s410 + $0xe0] sm:$0xff]
        %v980 = vld [vmem:[%s410 + $0xe8] sm:$0xff]
        %v981 = vld [vmem:[%s410 + $0xf0] sm:$0xff]
        %v982 = vld [vmem:[%s410 + $0xf8] sm:$0xff]
        %v983 = vld [vmem:[%s410 + $0x100] sm:$0xff]
        %v984 = vld [vmem:[%s410 + $0x108] sm:$0xff]
        %v985 = vld [vmem:[%s410 + $0x110] sm:$0xff]
        %v986 = vld [vmem:[%s410 + $0x118] sm:$0xff]
        %v987 = vld [vmem:[%s410 + $0x120] sm:$0xff]
        %v988 = vld [vmem:[%s410 + $0x128] sm:$0xff]
        %v989 = vld [vmem:[%s410 + $0x130] sm:$0xff]
        %v990 = vld [vmem:[%s410 + $0x138] sm:$0xff]
        %v991 = vld [vmem:[%s410 + $0x140] sm:$0xff]
        %v992 = vld [vmem:[%s410 + $0x148] sm:$0xff]
        %v993 = vld [vmem:[%s410 + $0x150] sm:$0xff]
        %v994 = vld [vmem:[%s410 + $0x158] sm:$0xff]
        %v995 = vld [vmem:[%s410 + $0x160] sm:$0xff]
        %v996 = vld [vmem:[%s410 + $0x168] sm:$0xff]
        %v997 = vld [vmem:[%s410 + $0x170] sm:$0xff]
        %v998 = vld [vmem:[%s410 + $0x178] sm:$0xff]
        %v999 = vld [vmem:[%s410 + $0x180] sm:$0xff]
        %v1000 = vld [vmem:[%s410 + $0x188] sm:$0xff]
        %v1001 = vld [vmem:[%s410 + $0x190] sm:$0xff]
        %v1002 = vld [vmem:[%s410 + $0x198] sm:$0xff]
        %v1003 = vld [vmem:[%s410 + $0x1a0] sm:$0xff]
        %v1004 = vld [vmem:[%s410 + $0x1a8] sm:$0xff]
        %v1005 = vld [vmem:[%s410 + $0x1b0] sm:$0xff]
        %v1006 = vld [vmem:[%s410 + $0x1b8] sm:$0xff]
        %v1007 = vld [vmem:[%s410 + $0x1c0] sm:$0xff]
        %v1008 = vld [vmem:[%s410 + $0x1c8] sm:$0xff]
        %v1009 = vld [vmem:[%s410 + $0x1d0] sm:$0xff]
        %v1010 = vld [vmem:[%s410 + $0x1d8] sm:$0xff]
        %v1011 = vld [vmem:[%s410 + $0x1e0] sm:$0xff]
        %v1012 = vld [vmem:[%s410 + $0x1e8] sm:$0xff]
        %v1013 = vld [vmem:[%s410 + $0x1f0] sm:$0xff]
        %v1014 = vld [vmem:[%s410 + $0x1f8] sm:$0xff]
        %v1015 = vld [vmem:[%s410 + $0x200] sm:$0xff]
        %v1016 = vld [vmem:[%s410 + $0x208] sm:$0xff]
        %v1017 = vld [vmem:[%s410 + $0x210] sm:$0xff]
        %v1018 = vld [vmem:[%s410 + $0x218] sm:$0xff]
        %v1019 = vld [vmem:[%s410 + $0x220] sm:$0xff]
        %v1020 = vld [vmem:[%s410 + $0x228] sm:$0xff]
        %v1021 = vld [vmem:[%s410 + $0x230] sm:$0xff]
        %v1022 = vld [vmem:[%s410 + $0x238] sm:$0xff]
        %v1023 = vld [vmem:[%s410 + $0x240] sm:$0xff]
        %v1024 = vld [vmem:[%s410 + $0x248] sm:$0xff]
        %v1025 = vld [vmem:[%s410 + $0x250] sm:$0xff]
        %v1026 = vld [vmem:[%s410 + $0x258] sm:$0xff]
        %v1027 = vld [vmem:[%s410 + $0x260] sm:$0xff]
        %v1028 = vld [vmem:[%s410 + $0x268] sm:$0xff]
        %v1029 = vld [vmem:[%s410 + $0x270] sm:$0xff]
        %v1030 = vld [vmem:[%s410 + $0x278] sm:$0xff]
        %v1031 = vld [vmem:[%s410 + $0x280] sm:$0xff]
        %v1032 = vld [vmem:[%s410 + $0x288] sm:$0xff]
        %v1033 = vld [vmem:[%s410 + $0x290] sm:$0xff]
        %v1034 = vld [vmem:[%s410 + $0x298] sm:$0xff]
        %v1035 = vld [vmem:[%s410 + $0x2a0] sm:$0xff]
        %v1036 = vld [vmem:[%s410 + $0x2a8] sm:$0xff]
        %v1037 = vld [vmem:[%s410 + $0x2b0] sm:$0xff]
        %v1038 = vld [vmem:[%s410 + $0x2b8] sm:$0xff]
        %v1039 = vld [vmem:[%s410 + $0x2c0] sm:$0xff]
        %v1040 = vld [vmem:[%s410 + $0x2c8] sm:$0xff]
        %v1041 = vld [vmem:[%s410 + $0x2d0] sm:$0xff]
        %v1042 = vld [vmem:[%s410 + $0x2d8] sm:$0xff]
        %v1043 = vld [vmem:[%s410 + $0x2e0] sm:$0xff]
        %v1044 = vld [vmem:[%s410 + $0x2e8] sm:$0xff]
        %v1045 = vld [vmem:[%s410 + $0x2f0] sm:$0xff]
        %v1046 = vld [vmem:[%s410 + $0x2f8] sm:$0xff]
        %v1047 = vld [vmem:[%s410 + $0x300] sm:$0xff]
        %v1048 = vld [vmem:[%s410 + $0x308] sm:$0xff]
        %v1049 = vld [vmem:[%s410 + $0x310] sm:$0xff]
        %v1050 = vld [vmem:[%s410 + $0x318] sm:$0xff]
        %v1051 = vld [vmem:[%s410 + $0x320] sm:$0xff]
        %v1052 = vld [vmem:[%s410 + $0x328] sm:$0xff]
        %v1053 = vld [vmem:[%s410 + $0x330] sm:$0xff]
        %v1054 = vld [vmem:[%s410 + $0x338] sm:$0xff]
        %v1055 = vld [vmem:[%s410 + $0x340] sm:$0xff]
        %v1056 = vld [vmem:[%s410 + $0x348] sm:$0xff]
        %v1057 = vld [vmem:[%s410 + $0x350] sm:$0xff]
        %v1058 = vld [vmem:[%s410 + $0x358] sm:$0xff]
        %v1059 = vld [vmem:[%s410 + $0x360] sm:$0xff]
        %v1060 = vld [vmem:[%s410 + $0x368] sm:$0xff]
        %v1061 = vld [vmem:[%s410 + $0x370] sm:$0xff]
        %v1062 = vld [vmem:[%s410 + $0x378] sm:$0xff]
        %v1063 = vld [vmem:[%s410 + $0x380] sm:$0xff]
        %v1064 = vld [vmem:[%s410 + $0x388] sm:$0xff]
        %v1065 = vld [vmem:[%s410 + $0x390] sm:$0xff]
        %v1066 = vld [vmem:[%s410 + $0x398] sm:$0xff]
        %v1067 = vld [vmem:[%s410 + $0x3a0] sm:$0xff]
        %v1068 = vld [vmem:[%s410 + $0x3a8] sm:$0xff]
        %v1069 = vld [vmem:[%s410 + $0x3b0] sm:$0xff]
        %v1070 = vld [vmem:[%s410 + $0x3b8] sm:$0xff]
        %v1071 = vld [vmem:[%s410 + $0x3c0] sm:$0xff]
        %v1072 = vld [vmem:[%s410 + $0x3c8] sm:$0xff]
        %v1073 = vld [vmem:[%s410 + $0x3d0] sm:$0xff]
        %v1074 = vld [vmem:[%s410 + $0x3d8] sm:$0xff]
        %v1075 = vld [vmem:[%s410 + $0x3e0] sm:$0xff]
        %v1076 = vld [vmem:[%s410 + $0x3e8] sm:$0xff]
        %v1077 = vld [vmem:[%s410 + $0x3f0] sm:$0xff]
        %v1078 = vld [vmem:[%s410 + $0x3f8] sm:$0xff]
        %v1079 = vld [vmem:[%s410 + $0x400] sm:$0xff]
        %v1080 = vld [vmem:[%s410 + $0x408] sm:$0xff]
        %v1081 = vld [vmem:[%s410 + $0x410] sm:$0xff]
        %v1082 = vld [vmem:[%s410 + $0x418] sm:$0xff]
        %v1083 = vld [vmem:[%s410 + $0x420] sm:$0xff]
        %v1084 = vld [vmem:[%s410 + $0x428] sm:$0xff]
        %v1085 = vld [vmem:[%s410 + $0x430] sm:$0xff]
        %v1086 = vld [vmem:[%s410 + $0x438] sm:$0xff]
        %v1087 = vld [vmem:[%s410 + $0x440] sm:$0xff]
        %v1088 = vld [vmem:[%s410 + $0x448] sm:$0xff]
        %v1089 = vld [vmem:[%s410 + $0x450] sm:$0xff]
        %v1090 = vld [vmem:[%s410 + $0x458] sm:$0xff]
        %v1091 = vld [vmem:[%s410 + $0x460] sm:$0xff]
        %v1092 = vld [vmem:[%s410 + $0x468] sm:$0xff]
        %v1093 = vld [vmem:[%s410 + $0x470] sm:$0xff]
        %v1094 = vld [vmem:[%s410 + $0x478] sm:$0xff]
        %v1095 = vld [vmem:[%s410 + $0x480] sm:$0xff]
        %v1096 = vld [vmem:[%s410 + $0x488] sm:$0xff]
        %v1097 = vld [vmem:[%s410 + $0x490] sm:$0xff]
        %v1098 = vld [vmem:[%s410 + $0x498] sm:$0xff]
        %v1099 = vld [vmem:[%s410 + $0x4a0] sm:$0xff]
        %v1100 = vld [vmem:[%s410 + $0x4a8] sm:$0xff]
        %v1101 = vld [vmem:[%s410 + $0x4b0] sm:$0xff]
        %v1102 = vld [vmem:[%s410 + $0x4b8] sm:$0xff]
        %v1103 = vld [vmem:[%s410 + $0x4c0] sm:$0xff]
        %v1104 = vld [vmem:[%s410 + $0x4c8] sm:$0xff]
        %v1105 = vld [vmem:[%s410 + $0x4d0] sm:$0xff]
        %v1106 = vld [vmem:[%s410 + $0x4d8] sm:$0xff]
        %v1107 = vld [vmem:[%s410 + $0x4e0] sm:$0xff]
        %v1108 = vld [vmem:[%s410 + $0x4e8] sm:$0xff]
        %v1109 = vld [vmem:[%s410 + $0x4f0] sm:$0xff]
        %v1110 = vld [vmem:[%s410 + $0x4f8] sm:$0xff]
        %v1111 = vld [vmem:[%s410 + $0x500] sm:$0xff]
        %v1112 = vld [vmem:[%s410 + $0x508] sm:$0xff]
        %v1113 = vld [vmem:[%s410 + $0x510] sm:$0xff]
        %v1114 = vld [vmem:[%s410 + $0x518] sm:$0xff]
        %v1115 = vld [vmem:[%s410 + $0x520] sm:$0xff]
        %v1116 = vld [vmem:[%s410 + $0x528] sm:$0xff]
        %v1117 = vld [vmem:[%s410 + $0x530] sm:$0xff]
        %v1118 = vld [vmem:[%s410 + $0x538] sm:$0xff]
        %v1119 = vld [vmem:[%s410 + $0x540] sm:$0xff]
        %v1120 = vld [vmem:[%s410 + $0x548] sm:$0xff]
        %v1121 = vld [vmem:[%s410 + $0x550] sm:$0xff]
        %v1122 = vld [vmem:[%s410 + $0x558] sm:$0xff]
        %v1123 = vld [vmem:[%s410 + $0x560] sm:$0xff]
        %v1124 = vld [vmem:[%s410 + $0x568] sm:$0xff]
        %v1125 = vld [vmem:[%s410 + $0x570] sm:$0xff]
        %v1126 = vld [vmem:[%s410 + $0x578] sm:$0xff]
        %v1127 = vld [vmem:[%s410 + $0x580] sm:$0xff]
        %v1128 = vld [vmem:[%s410 + $0x588] sm:$0xff]
        %v1129 = vld [vmem:[%s410 + $0x590] sm:$0xff]
        %v1130 = vld [vmem:[%s410 + $0x598] sm:$0xff]
        %v1131 = vld [vmem:[%s410 + $0x5a0] sm:$0xff]
        %v1132 = vld [vmem:[%s410 + $0x5a8] sm:$0xff]
        %v1133 = vld [vmem:[%s410 + $0x5b0] sm:$0xff]
        %v1134 = vld [vmem:[%s410 + $0x5b8] sm:$0xff]
        %v1135 = vld [vmem:[%s410 + $0x5c0] sm:$0xff]
        %v1136 = vld [vmem:[%s410 + $0x5c8] sm:$0xff]
        %v1137 = vld [vmem:[%s410 + $0x5d0] sm:$0xff]
        %v1138 = vld [vmem:[%s410 + $0x5d8] sm:$0xff]
        %v1139 = vld [vmem:[%s410 + $0x5e0] sm:$0xff]
        %v1140 = vld [vmem:[%s410 + $0x5e8] sm:$0xff]
        %v1141 = vld [vmem:[%s410 + $0x5f0] sm:$0xff]
        %v1142 = vld [vmem:[%s410 + $0x5f8] sm:$0xff]
        %v1143 = vld [vmem:[%s410 + $0x600] sm:$0xff]
        %v1144 = vld [vmem:[%s410 + $0x608] sm:$0xff]
        %v1145 = vld [vmem:[%s410 + $0x610] sm:$0xff]
        %v1146 = vld [vmem:[%s410 + $0x618] sm:$0xff]
        %v1147 = vld [vmem:[%s410 + $0x620] sm:$0xff]
        %v1148 = vld [vmem:[%s410 + $0x628] sm:$0xff]
        %v1149 = vld [vmem:[%s410 + $0x630] sm:$0xff]
        %v1150 = vld [vmem:[%s410 + $0x638] sm:$0xff]
        %v1151 = vld [vmem:[%s410 + $0x640] sm:$0xff]
        %v1152 = vld [vmem:[%s410 + $0x648] sm:$0xff]
        %v1153 = vld [vmem:[%s410 + $0x650] sm:$0xff]
        %v1154 = vld [vmem:[%s410 + $0x658] sm:$0xff]
        %v1155 = vld [vmem:[%s410 + $0x660] sm:$0xff]
        %v1156 = vld [vmem:[%s410 + $0x668] sm:$0xff]
        %v1157 = vld [vmem:[%s410 + $0x670] sm:$0xff]
        %v1158 = vld [vmem:[%s410 + $0x678] sm:$0xff]
        %v1159 = vld [vmem:[%s410 + $0x680] sm:$0xff]
        %v1160 = vld [vmem:[%s410 + $0x688] sm:$0xff]
        %v1161 = vld [vmem:[%s410 + $0x690] sm:$0xff]
        %v1162 = vld [vmem:[%s410 + $0x698] sm:$0xff]
        %v1163 = vld [vmem:[%s410 + $0x6a0] sm:$0xff]
        %v1164 = vld [vmem:[%s410 + $0x6a8] sm:$0xff]
        %v1165 = vld [vmem:[%s410 + $0x6b0] sm:$0xff]
        %v1166 = vld [vmem:[%s410 + $0x6b8] sm:$0xff]
        %v1167 = vld [vmem:[%s410 + $0x6c0] sm:$0xff]
        %v1168 = vld [vmem:[%s410 + $0x6c8] sm:$0xff]
        %v1169 = vld [vmem:[%s410 + $0x6d0] sm:$0xff]
        %v1170 = vld [vmem:[%s410 + $0x6d8] sm:$0xff]
        %v1171 = vld [vmem:[%s410 + $0x6e0] sm:$0xff]
        %v1172 = vld [vmem:[%s410 + $0x6e8] sm:$0xff]
        %v1173 = vld [vmem:[%s410 + $0x6f0] sm:$0xff]
        %v1174 = vld [vmem:[%s410 + $0x6f8] sm:$0xff]
        %v1175 = vld [vmem:[%s410 + $0x700] sm:$0xff]
        %v1176 = vld [vmem:[%s410 + $0x708] sm:$0xff]
        %v1177 = vld [vmem:[%s410 + $0x710] sm:$0xff]
        %v1178 = vld [vmem:[%s410 + $0x718] sm:$0xff]
        %v1179 = vld [vmem:[%s410 + $0x720] sm:$0xff]
        %v1180 = vld [vmem:[%s410 + $0x728] sm:$0xff]
        %v1181 = vld [vmem:[%s410 + $0x730] sm:$0xff]
        %v1182 = vld [vmem:[%s410 + $0x738] sm:$0xff]
        %v1183 = vld [vmem:[%s410 + $0x740] sm:$0xff]
        %v1184 = vld [vmem:[%s410 + $0x748] sm:$0xff]
        %v1185 = vld [vmem:[%s410 + $0x750] sm:$0xff]
        %v1186 = vld [vmem:[%s410 + $0x758] sm:$0xff]
        %v1187 = vld [vmem:[%s410 + $0x760] sm:$0xff]
        %v1188 = vld [vmem:[%s410 + $0x768] sm:$0xff]
        %v1189 = vld [vmem:[%s410 + $0x770] sm:$0xff]
        %v1190 = vld [vmem:[%s410 + $0x778] sm:$0xff]
        %v1191 = vld [vmem:[%s410 + $0x780] sm:$0xff]
        %v1192 = vld [vmem:[%s410 + $0x788] sm:$0xff]
        %v1193 = vld [vmem:[%s410 + $0x790] sm:$0xff]
        %v1194 = vld [vmem:[%s410 + $0x798] sm:$0xff]
        %v1195 = vld [vmem:[%s410 + $0x7a0] sm:$0xff]
        %v1196 = vld [vmem:[%s410 + $0x7a8] sm:$0xff]
        %v1197 = vld [vmem:[%s410 + $0x7b0] sm:$0xff]
        %v1198 = vld [vmem:[%s410 + $0x7b8] sm:$0xff]
        %v1199 = vld [vmem:[%s410 + $0x7c0] sm:$0xff]
        %v1200 = vld [vmem:[%s410 + $0x7c8] sm:$0xff]
        %v1201 = vld [vmem:[%s410 + $0x7d0] sm:$0xff]
        %v1202 = vld [vmem:[%s410 + $0x7d8] sm:$0xff]
        %v1203 = vld [vmem:[%s410 + $0x7e0] sm:$0xff]
        %v1204 = vld [vmem:[%s410 + $0x7e8] sm:$0xff]
        %v1205 = vld [vmem:[%s410 + $0x7f0] sm:$0xff]
        %v1206 = vld [vmem:[%s410 + $0x7f8] sm:$0xff]
        %v1207 = vld [vmem:[%s410 + $0x800] sm:$0xff]
        %v1208 = vld [vmem:[%s410 + $0x808] sm:$0xff]
        %v1209 = vld [vmem:[%s410 + $0x810] sm:$0xff]
        %v1210 = vld [vmem:[%s410 + $0x818] sm:$0xff]
        %v1211 = vld [vmem:[%s410 + $0x820] sm:$0xff]
        %v1212 = vld [vmem:[%s410 + $0x828] sm:$0xff]
        %v1213 = vld [vmem:[%s410 + $0x830] sm:$0xff]
        %v1214 = vld [vmem:[%s410 + $0x838] sm:$0xff]
        %v1215 = vld [vmem:[%s410 + $0x840] sm:$0xff]
        %v1216 = vld [vmem:[%s410 + $0x848] sm:$0xff]
        %v1217 = vld [vmem:[%s410 + $0x850] sm:$0xff]
        %v1218 = vld [vmem:[%s410 + $0x858] sm:$0xff]
        %v1219 = vld [vmem:[%s410 + $0x860] sm:$0xff]
        %v1220 = vld [vmem:[%s410 + $0x868] sm:$0xff]
        %v1221 = vld [vmem:[%s410 + $0x870] sm:$0xff]
        %v1222 = vld [vmem:[%s410 + $0x878] sm:$0xff]
        %v1223 = vld [vmem:[%s410 + $0x880] sm:$0xff]
        %v1224 = vld [vmem:[%s410 + $0x888] sm:$0xff]
        %v1225 = vld [vmem:[%s410 + $0x890] sm:$0xff]
        %v1226 = vld [vmem:[%s410 + $0x898] sm:$0xff]
        %v1227 = vld [vmem:[%s410 + $0x8a0] sm:$0xff]
        %v1228 = vld [vmem:[%s410 + $0x8a8] sm:$0xff]
        %v1229 = vld [vmem:[%s410 + $0x8b0] sm:$0xff]
        %v1230 = vld [vmem:[%s410 + $0x8b8] sm:$0xff]
        %v1231 = vld [vmem:[%s410 + $0x8c0] sm:$0xff]
        %v1232 = vld [vmem:[%s410 + $0x8c8] sm:$0xff]
        %v1233 = vld [vmem:[%s410 + $0x8d0] sm:$0xff]
        %v1234 = vld [vmem:[%s410 + $0x8d8] sm:$0xff]
        %v1235 = vld [vmem:[%s410 + $0x8e0] sm:$0xff]
        %v1236 = vld [vmem:[%s410 + $0x8e8] sm:$0xff]
        %v1237 = vld [vmem:[%s410 + $0x8f0] sm:$0xff]
        %v1238 = vld [vmem:[%s410 + $0x8f8] sm:$0xff]
        %v1239 = vld [vmem:[%s410 + $0x900] sm:$0xff]
        %v1240 = vld [vmem:[%s410 + $0x908] sm:$0xff]
        %v1241 = vld [vmem:[%s410 + $0x910] sm:$0xff]
        %v1242 = vld [vmem:[%s410 + $0x918] sm:$0xff]
        %v1243 = vld [vmem:[%s410 + $0x920] sm:$0xff]
        %v1244 = vld [vmem:[%s410 + $0x928] sm:$0xff]
        %v1245 = vld [vmem:[%s410 + $0x930] sm:$0xff]
        %v1246 = vld [vmem:[%s410 + $0x938] sm:$0xff]
        %v1247 = vld [vmem:[%s410 + $0x940] sm:$0xff]
        %v1248 = vld [vmem:[%s410 + $0x948] sm:$0xff]
        %v1249 = vld [vmem:[%s410 + $0x950] sm:$0xff]
        %v1250 = vld [vmem:[%s410 + $0x958] sm:$0xff]
        %v1251 = vld [vmem:[%s410 + $0x960] sm:$0xff]
        %v1252 = vld [vmem:[%s410 + $0x968] sm:$0xff]
        %v1253 = vld [vmem:[%s410 + $0x970] sm:$0xff]
        %v1254 = vld [vmem:[%s410 + $0x978] sm:$0xff]
        %v1255 = vld [vmem:[%s410 + $0x980] sm:$0xff]
        %v1256 = vld [vmem:[%s410 + $0x988] sm:$0xff]
        %v1257 = vld [vmem:[%s410 + $0x990] sm:$0xff]
        %v1258 = vld [vmem:[%s410 + $0x998] sm:$0xff]
        %v1259 = vld [vmem:[%s410 + $0x9a0] sm:$0xff]
        %v1260 = vld [vmem:[%s410 + $0x9a8] sm:$0xff]
        %v1261 = vld [vmem:[%s410 + $0x9b0] sm:$0xff]
        %v1262 = vld [vmem:[%s410 + $0x9b8] sm:$0xff]
        %v1263 = vld [vmem:[%s410 + $0x9c0] sm:$0xff]
        %v1264 = vld [vmem:[%s410 + $0x9c8] sm:$0xff]
        %v1265 = vld [vmem:[%s410 + $0x9d0] sm:$0xff]
        %v1266 = vld [vmem:[%s410 + $0x9d8] sm:$0xff]
        %v1267 = vld [vmem:[%s410 + $0x9e0] sm:$0xff]
        %v1268 = vld [vmem:[%s410 + $0x9e8] sm:$0xff]
        %v1269 = vld [vmem:[%s410 + $0x9f0] sm:$0xff]
        %v1270 = vld [vmem:[%s410 + $0x9f8] sm:$0xff]
        %v1271 = vld [vmem:[%s410 + $0xa00] sm:$0xff]
        %v1272 = vld [vmem:[%s410 + $0xa08] sm:$0xff]
        %v1273 = vld [vmem:[%s410 + $0xa10] sm:$0xff]
        %v1274 = vld [vmem:[%s410 + $0xa18] sm:$0xff]
        %v1275 = vld [vmem:[%s410 + $0xa20] sm:$0xff]
        %v1276 = vld [vmem:[%s410 + $0xa28] sm:$0xff]
        %v1277 = vld [vmem:[%s410 + $0xa30] sm:$0xff]
        %v1278 = vld [vmem:[%s410 + $0xa38] sm:$0xff]
        %v1279 = vld [vmem:[%s410 + $0xa40] sm:$0xff]
        %v1280 = vld [vmem:[%s410 + $0xa48] sm:$0xff]
        %v1281 = vld [vmem:[%s410 + $0xa50] sm:$0xff]
        %v1282 = vld [vmem:[%s410 + $0xa58] sm:$0xff]
        %v1283 = vld [vmem:[%s410 + $0xa60] sm:$0xff]
        %v1284 = vld [vmem:[%s410 + $0xa68] sm:$0xff]
        %v1285 = vld [vmem:[%s410 + $0xa70] sm:$0xff]
        %v1286 = vld [vmem:[%s410 + $0xa78] sm:$0xff]
        %v1287 = vld [vmem:[%s410 + $0xa80] sm:$0xff]
        %v1288 = vld [vmem:[%s410 + $0xa88] sm:$0xff]
        %v1289 = vld [vmem:[%s410 + $0xa90] sm:$0xff]
        %v1290 = vld [vmem:[%s410 + $0xa98] sm:$0xff]
        %v1291 = vld [vmem:[%s410 + $0xaa0] sm:$0xff]
        %v1292 = vld [vmem:[%s410 + $0xaa8] sm:$0xff]
        %v1293 = vld [vmem:[%s410 + $0xab0] sm:$0xff]
        %v1294 = vld [vmem:[%s410 + $0xab8] sm:$0xff]
        %v1295 = vld [vmem:[%s410 + $0xac0] sm:$0xff]
        %v1296 = vld [vmem:[%s410 + $0xac8] sm:$0xff]
        %v1297 = vld [vmem:[%s410 + $0xad0] sm:$0xff]
        %v1298 = vld [vmem:[%s410 + $0xad8] sm:$0xff]
        %v1299 = vld [vmem:[%s410 + $0xae0] sm:$0xff]
        %v1300 = vld [vmem:[%s410 + $0xae8] sm:$0xff]
        %v1301 = vld [vmem:[%s410 + $0xaf0] sm:$0xff]
        %v1302 = vld [vmem:[%s410 + $0xaf8] sm:$0xff]
        %v1303 = vld [vmem:[%s410 + $0xb00] sm:$0xff]
        %v1304 = vld [vmem:[%s410 + $0xb08] sm:$0xff]
        %v1305 = vld [vmem:[%s410 + $0xb10] sm:$0xff]
        %v1306 = vld [vmem:[%s410 + $0xb18] sm:$0xff]
        %v1307 = vld [vmem:[%s410 + $0xb20] sm:$0xff]
        %v1308 = vld [vmem:[%s410 + $0xb28] sm:$0xff]
        %v1309 = vld [vmem:[%s410 + $0xb30] sm:$0xff]
        %v1310 = vld [vmem:[%s410 + $0xb38] sm:$0xff]
        %v1311 = vld [vmem:[%s410 + $0xb40] sm:$0xff]
        %v1312 = vld [vmem:[%s410 + $0xb48] sm:$0xff]
        %v1313 = vld [vmem:[%s410 + $0xb50] sm:$0xff]
        %v1314 = vld [vmem:[%s410 + $0xb58] sm:$0xff]
        %v1315 = vld [vmem:[%s410 + $0xb60] sm:$0xff]
        %v1316 = vld [vmem:[%s410 + $0xb68] sm:$0xff]
        %v1317 = vld [vmem:[%s410 + $0xb70] sm:$0xff]
        %v1318 = vld [vmem:[%s410 + $0xb78] sm:$0xff]
        %v1319 = vld [vmem:[%s410 + $0xb80] sm:$0xff]
        %v1320 = vld [vmem:[%s410 + $0xb88] sm:$0xff]
        %v1321 = vld [vmem:[%s410 + $0xb90] sm:$0xff]
        %v1322 = vld [vmem:[%s410 + $0xb98] sm:$0xff]
        %v1323 = vld [vmem:[%s410 + $0xba0] sm:$0xff]
        %v1324 = vld [vmem:[%s410 + $0xba8] sm:$0xff]
        %v1325 = vld [vmem:[%s410 + $0xbb0] sm:$0xff]
        %v1326 = vld [vmem:[%s410 + $0xbb8] sm:$0xff]
        %v1327 = vld [vmem:[%s410 + $0xbc0] sm:$0xff]
        %v1328 = vld [vmem:[%s410 + $0xbc8] sm:$0xff]
        %v1329 = vld [vmem:[%s410 + $0xbd0] sm:$0xff]
        %v1330 = vld [vmem:[%s410 + $0xbd8] sm:$0xff]
        %v1331 = vld [vmem:[%s410 + $0xbe0] sm:$0xff]
        %v1332 = vld [vmem:[%s410 + $0xbe8] sm:$0xff]
        %v1333 = vld [vmem:[%s410 + $0xbf0] sm:$0xff]
        %v1334 = vld [vmem:[%s410 + $0xbf8] sm:$0xff]
        %v1335 = vld [vmem:[%s410 + $0xc00] sm:$0xff]
        %v1336 = vld [vmem:[%s410 + $0xc08] sm:$0xff]
        %v1337 = vld [vmem:[%s410 + $0xc10] sm:$0xff]
        %v1338 = vld [vmem:[%s410 + $0xc18] sm:$0xff]
        %v1339 = vld [vmem:[%s410 + $0xc20] sm:$0xff]
        %v1340 = vld [vmem:[%s410 + $0xc28] sm:$0xff]
        %v1341 = vld [vmem:[%s410 + $0xc30] sm:$0xff]
        %v1342 = vld [vmem:[%s410 + $0xc38] sm:$0xff]
        %v1343 = vld [vmem:[%s410 + $0xc40] sm:$0xff]
        %v1344 = vld [vmem:[%s410 + $0xc48] sm:$0xff]
        %v1345 = vld [vmem:[%s410 + $0xc50] sm:$0xff]
        %v1346 = vld [vmem:[%s410 + $0xc58] sm:$0xff]
        %v1347 = vld [vmem:[%s410 + $0xc60] sm:$0xff]
        %v1348 = vld [vmem:[%s410 + $0xc68] sm:$0xff]
        %v1349 = vld [vmem:[%s410 + $0xc70] sm:$0xff]
        %v1350 = vld [vmem:[%s410 + $0xc78] sm:$0xff]
        %v1351 = vld [vmem:[%s410 + $0xc80] sm:$0xff]
        %v1352 = vld [vmem:[%s410 + $0xc88] sm:$0xff]
        %v1353 = vld [vmem:[%s410 + $0xc90] sm:$0xff]
        %v1354 = vld [vmem:[%s410 + $0xc98] sm:$0xff]
        %v1355 = vld [vmem:[%s410 + $0xca0] sm:$0xff]
        %v1356 = vld [vmem:[%s410 + $0xca8] sm:$0xff]
        %v1357 = vld [vmem:[%s410 + $0xcb0] sm:$0xff]
        %v1358 = vld [vmem:[%s410 + $0xcb8] sm:$0xff]
        %v1359 = vld [vmem:[%s410 + $0xcc0] sm:$0xff]
        %v1360 = vld [vmem:[%s410 + $0xcc8] sm:$0xff]
        %v1361 = vld [vmem:[%s410 + $0xcd0] sm:$0xff]
        %v1362 = vld [vmem:[%s410 + $0xcd8] sm:$0xff]
        %v1363 = vld [vmem:[%s410 + $0xce0] sm:$0xff]
        %v1364 = vld [vmem:[%s410 + $0xce8] sm:$0xff]
        %v1365 = vld [vmem:[%s410 + $0xcf0] sm:$0xff]
        %v1366 = vld [vmem:[%s410 + $0xcf8] sm:$0xff]
        %v1367 = vld [vmem:[%s410 + $0xd00] sm:$0xff]
        %v1368 = vld [vmem:[%s410 + $0xd08] sm:$0xff]
        %v1369 = vld [vmem:[%s410 + $0xd10] sm:$0xff]
        %v1370 = vld [vmem:[%s410 + $0xd18] sm:$0xff]
        %v1371 = vld [vmem:[%s410 + $0xd20] sm:$0xff]
        %v1372 = vld [vmem:[%s410 + $0xd28] sm:$0xff]
        %v1373 = vld [vmem:[%s410 + $0xd30] sm:$0xff]
        %v1374 = vld [vmem:[%s410 + $0xd38] sm:$0xff]
        %v1375 = vld [vmem:[%s410 + $0xd40] sm:$0xff]
        %v1376 = vld [vmem:[%s410 + $0xd48] sm:$0xff]
        %v1377 = vld [vmem:[%s410 + $0xd50] sm:$0xff]
        %v1378 = vld [vmem:[%s410 + $0xd58] sm:$0xff]
        %v1379 = vld [vmem:[%s410 + $0xd60] sm:$0xff]
        %v1380 = vld [vmem:[%s410 + $0xd68] sm:$0xff]
        %v1381 = vld [vmem:[%s410 + $0xd70] sm:$0xff]
        %v1382 = vld [vmem:[%s410 + $0xd78] sm:$0xff]
        %v1383 = vld [vmem:[%s410 + $0xd80] sm:$0xff]
        %v1384 = vld [vmem:[%s410 + $0xd88] sm:$0xff]
        %v1385 = vld [vmem:[%s410 + $0xd90] sm:$0xff]
        %v1386 = vld [vmem:[%s410 + $0xd98] sm:$0xff]
        %v1387 = vld [vmem:[%s410 + $0xda0] sm:$0xff]
        %v1388 = vld [vmem:[%s410 + $0xda8] sm:$0xff]
        %v1389 = vld [vmem:[%s410 + $0xdb0] sm:$0xff]
        %v1390 = vld [vmem:[%s410 + $0xdb8] sm:$0xff]
        %v1391 = vld [vmem:[%s410 + $0xdc0] sm:$0xff]
        %v1392 = vld [vmem:[%s410 + $0xdc8] sm:$0xff]
        %v1393 = vld [vmem:[%s410 + $0xdd0] sm:$0xff]
        %v1394 = vld [vmem:[%s410 + $0xdd8] sm:$0xff]
        %v1395 = vld [vmem:[%s410 + $0xde0] sm:$0xff]
        %v1396 = vld [vmem:[%s410 + $0xde8] sm:$0xff]
        %v1397 = vld [vmem:[%s410 + $0xdf0] sm:$0xff]
        %v1398 = vld [vmem:[%s410 + $0xdf8] sm:$0xff]
        %v1399 = vld [vmem:[%s410 + $0xe00] sm:$0xff]
        %v1400 = vld [vmem:[%s410 + $0xe08] sm:$0xff]
        %v1401 = vld [vmem:[%s410 + $0xe10] sm:$0xff]
        %v1402 = vld [vmem:[%s410 + $0xe18] sm:$0xff]
        %v1403 = vld [vmem:[%s410 + $0xe20] sm:$0xff]
        %v1404 = vld [vmem:[%s410 + $0xe28] sm:$0xff]
        %v1405 = vld [vmem:[%s410 + $0xe30] sm:$0xff]
        %v1406 = vld [vmem:[%s410 + $0xe38] sm:$0xff]
        %v1407 = vld [vmem:[%s410 + $0xe40] sm:$0xff]
        %v1408 = vld [vmem:[%s410 + $0xe48] sm:$0xff]
        %v1409 = vld [vmem:[%s410 + $0xe50] sm:$0xff]
        %v1410 = vld [vmem:[%s410 + $0xe58] sm:$0xff]
        %v1411 = vld [vmem:[%s410 + $0xe60] sm:$0xff]
        %v1412 = vld [vmem:[%s410 + $0xe68] sm:$0xff]
        %v1413 = vld [vmem:[%s410 + $0xe70] sm:$0xff]
        %v1414 = vld [vmem:[%s410 + $0xe78] sm:$0xff]
        %v1415 = vld [vmem:[%s410 + $0xe80] sm:$0xff]
        %v1416 = vld [vmem:[%s410 + $0xe88] sm:$0xff]
        %v1417 = vld [vmem:[%s410 + $0xe90] sm:$0xff]
        %v1418 = vld [vmem:[%s410 + $0xe98] sm:$0xff]
        %v1419 = vld [vmem:[%s410 + $0xea0] sm:$0xff]
        %v1420 = vld [vmem:[%s410 + $0xea8] sm:$0xff]
        %v1421 = vld [vmem:[%s410 + $0xeb0] sm:$0xff]
        %v1422 = vld [vmem:[%s410 + $0xeb8] sm:$0xff]
        %v1423 = vld [vmem:[%s410 + $0xec0] sm:$0xff]
        %v1424 = vld [vmem:[%s410 + $0xec8] sm:$0xff]
        %v1425 = vld [vmem:[%s410 + $0xed0] sm:$0xff]
        %v1426 = vld [vmem:[%s410 + $0xed8] sm:$0xff]
        %v1427 = vld [vmem:[%s410 + $0xee0] sm:$0xff]
        %v1428 = vld [vmem:[%s410 + $0xee8] sm:$0xff]
        %v1429 = vld [vmem:[%s410 + $0xef0] sm:$0xff]
        %v1430 = vld [vmem:[%s410 + $0xef8] sm:$0xff]
        %v1431 = vld [vmem:[%s410 + $0xf00] sm:$0xff]
        %v1432 = vld [vmem:[%s410 + $0xf08] sm:$0xff]
        %v1433 = vld [vmem:[%s410 + $0xf10] sm:$0xff]
        %v1434 = vld [vmem:[%s410 + $0xf18] sm:$0xff]
        %v1435 = vld [vmem:[%s410 + $0xf20] sm:$0xff]
        %v1436 = vld [vmem:[%s410 + $0xf28] sm:$0xff]
        %v1437 = vld [vmem:[%s410 + $0xf30] sm:$0xff]
        %v1438 = vld [vmem:[%s410 + $0xf38] sm:$0xff]
        %v1439 = vld [vmem:[%s410 + $0xf40] sm:$0xff]
        %v1440 = vld [vmem:[%s410 + $0xf48] sm:$0xff]
        %v1441 = vld [vmem:[%s410 + $0xf50] sm:$0xff]
        %v1442 = vld [vmem:[%s410 + $0xf58] sm:$0xff]
        %v1443 = vld [vmem:[%s410 + $0xf60] sm:$0xff]
        %v1444 = vld [vmem:[%s410 + $0xf68] sm:$0xff]
        %v1445 = vld [vmem:[%s410 + $0xf70] sm:$0xff]
        %v1446 = vld [vmem:[%s410 + $0xf78] sm:$0xff]
        %v1447 = vld [vmem:[%s410 + $0xf80] sm:$0xff]
        %v1448 = vld [vmem:[%s410 + $0xf88] sm:$0xff]
        %v1449 = vld [vmem:[%s410 + $0xf90] sm:$0xff]
        %v1450 = vld [vmem:[%s410 + $0xf98] sm:$0xff]
        %v1451 = vld [vmem:[%s410 + $0xfa0] sm:$0xff]
        %v1452 = vld [vmem:[%s410 + $0xfa8] sm:$0xff]
        %v1453 = vld [vmem:[%s410 + $0xfb0] sm:$0xff]
        %v1454 = vld [vmem:[%s410 + $0xfb8] sm:$0xff]
        %v1455 = vld [vmem:[%s410 + $0xfc0] sm:$0xff]
        %v1456 = vld [vmem:[%s410 + $0xfc8] sm:$0xff]
        %v1457 = vld [vmem:[%s410 + $0xfd0] sm:$0xff]
        %v1458 = vld [vmem:[%s410 + $0xfd8] sm:$0xff]
        %v1459 = vld [vmem:[%s410 + $0xfe0] sm:$0xff]
        %v1460 = vld [vmem:[%s410 + $0xfe8] sm:$0xff]
        %v1461 = vld [vmem:[%s410 + $0xff0] sm:$0xff]
        %v1462 = vld [vmem:[%s410 + $0xff8] sm:$0xff]
        %v1463 = vld [vmem:[%s410 + $0x1000] sm:$0xff]
        %v1464 = vld [vmem:[%s410 + $0x1008] sm:$0xff]
        %v1465 = vld [vmem:[%s410 + $0x1010] sm:$0xff]
        %v1466 = vld [vmem:[%s410 + $0x1018] sm:$0xff]
        %v1467 = vld [vmem:[%s410 + $0x1020] sm:$0xff]
        %v1468 = vld [vmem:[%s410 + $0x1028] sm:$0xff]
        %v1469 = vld [vmem:[%s410 + $0x1030] sm:$0xff]
        %v1470 = vld [vmem:[%s410 + $0x1038] sm:$0xff]
        %v1471 = vld [vmem:[%s410 + $0x1040] sm:$0xff]
        %v1472 = vld [vmem:[%s410 + $0x1048] sm:$0xff]
        %v1473 = vld [vmem:[%s410 + $0x1050] sm:$0xff]
        %v1474 = vld [vmem:[%s410 + $0x1058] sm:$0xff]
        %v1475 = vld [vmem:[%s410 + $0x1060] sm:$0xff]
        %v1476 = vld [vmem:[%s410 + $0x1068] sm:$0xff]
        %v1477 = vld [vmem:[%s410 + $0x1070] sm:$0xff]
        %v1478 = vld [vmem:[%s410 + $0x1078] sm:$0xff]
        %v2007 = vunpack.c.l.b16 %v951
        %v2008 = vunpack.c.h.b16 %v951
        %v2009 = vunpack.c.l.b16 %v952
        %v2010 = vunpack.c.h.b16 %v952
        %v2011 = vunpack.c.l.b16 %v953
        %v2012 = vunpack.c.h.b16 %v953
        %v2013 = vunpack.c.l.b16 %v954
        %v2014 = vunpack.c.h.b16 %v954
        %v2015 = vunpack.c.l.b16 %v955
        %v2016 = vunpack.c.h.b16 %v955
        %v2017 = vunpack.c.l.b16 %v956
        %v2018 = vunpack.c.h.b16 %v956
        %v2019 = vunpack.c.l.b16 %v957
        %v2020 = vunpack.c.h.b16 %v957
        %v2021 = vunpack.c.l.b16 %v958
        %v2022 = vunpack.c.h.b16 %v958
        %v2023 = vunpack.c.l.b16 %v959
        %v2024 = vunpack.c.h.b16 %v959
        %v2025 = vunpack.c.l.b16 %v960
        %v2026 = vunpack.c.h.b16 %v960
        %v2027 = vunpack.c.l.b16 %v961
        %v2028 = vunpack.c.h.b16 %v961
        %v2029 = vunpack.c.l.b16 %v962
        %v2030 = vunpack.c.h.b16 %v962
        %v2031 = vunpack.c.l.b16 %v963
        %v2032 = vunpack.c.h.b16 %v963
        %v2033 = vunpack.c.l.b16 %v964
        %v2034 = vunpack.c.h.b16 %v964
        %v2035 = vunpack.c.l.b16 %v965
        %v2036 = vunpack.c.h.b16 %v965
        %v2037 = vunpack.c.l.b16 %v966
        %v2038 = vunpack.c.h.b16 %v966
        %v2039 = vunpack.c.l.b16 %v967
        %v2040 = vunpack.c.h.b16 %v967
        %v2041 = vunpack.c.l.b16 %v968
        %v2042 = vunpack.c.h.b16 %v968
        %v2043 = vunpack.c.l.b16 %v969
        %v2044 = vunpack.c.h.b16 %v969
        %v2045 = vunpack.c.l.b16 %v970
        %v2046 = vunpack.c.h.b16 %v970
        %v2047 = vunpack.c.l.b16 %v971
        %v2048 = vunpack.c.h.b16 %v971
        %v2049 = vunpack.c.l.b16 %v972
        %v2050 = vunpack.c.h.b16 %v972
        %v2051 = vunpack.c.l.b16 %v973
        %v2052 = vunpack.c.h.b16 %v973
        %v2053 = vunpack.c.l.b16 %v974
        %v2054 = vunpack.c.h.b16 %v974
        %v2055 = vunpack.c.l.b16 %v975
        %v2056 = vunpack.c.h.b16 %v975
        %v2057 = vunpack.c.l.b16 %v976
        %v2058 = vunpack.c.h.b16 %v976
        %v2059 = vunpack.c.l.b16 %v977
        %v2060 = vunpack.c.h.b16 %v977
        %v2061 = vunpack.c.l.b16 %v978
        %v2062 = vunpack.c.h.b16 %v978
        %v2063 = vunpack.c.l.b16 %v979
        %v2064 = vunpack.c.h.b16 %v979
        %v2065 = vunpack.c.l.b16 %v980
        %v2066 = vunpack.c.h.b16 %v980
        %v2067 = vunpack.c.l.b16 %v981
        %v2068 = vunpack.c.h.b16 %v981
        %v2069 = vunpack.c.l.b16 %v982
        %v2070 = vunpack.c.h.b16 %v982
        %v2071 = vunpack.c.l.b16 %v983
        %v2072 = vunpack.c.h.b16 %v983
        %v2073 = vunpack.c.l.b16 %v984
        %v2074 = vunpack.c.h.b16 %v984
        %v2075 = vunpack.c.l.b16 %v985
        %v2076 = vunpack.c.h.b16 %v985
        %v2077 = vunpack.c.l.b16 %v986
        %v2078 = vunpack.c.h.b16 %v986
        %v2079 = vunpack.c.l.b16 %v987
        %v2080 = vunpack.c.h.b16 %v987
        %v2081 = vunpack.c.l.b16 %v988
        %v2082 = vunpack.c.h.b16 %v988
        %v2083 = vunpack.c.l.b16 %v989
        %v2084 = vunpack.c.h.b16 %v989
        %v2085 = vunpack.c.l.b16 %v990
        %v2086 = vunpack.c.h.b16 %v990
        %v2087 = vunpack.c.l.b16 %v991
        %v2088 = vunpack.c.h.b16 %v991
        %v2089 = vunpack.c.l.b16 %v992
        %v2090 = vunpack.c.h.b16 %v992
        %v2091 = vunpack.c.l.b16 %v993
        %v2092 = vunpack.c.h.b16 %v993
        %v2093 = vunpack.c.l.b16 %v994
        %v2094 = vunpack.c.h.b16 %v994
        %v2095 = vunpack.c.l.b16 %v995
        %v2096 = vunpack.c.h.b16 %v995
        %v2097 = vunpack.c.l.b16 %v996
        %v2098 = vunpack.c.h.b16 %v996
        %v2099 = vunpack.c.l.b16 %v997
        %v2100 = vunpack.c.h.b16 %v997
        %v2101 = vunpack.c.l.b16 %v998
        %v2102 = vunpack.c.h.b16 %v998
        %v2103 = vunpack.c.l.b16 %v999
        %v2104 = vunpack.c.h.b16 %v999
        %v2105 = vunpack.c.l.b16 %v1000
        %v2106 = vunpack.c.h.b16 %v1000
        %v2107 = vunpack.c.l.b16 %v1001
        %v2108 = vunpack.c.h.b16 %v1001
        %v2109 = vunpack.c.l.b16 %v1002
        %v2110 = vunpack.c.h.b16 %v1002
        %v2111 = vunpack.c.l.b16 %v1003
        %v2112 = vunpack.c.h.b16 %v1003
        %v2113 = vunpack.c.l.b16 %v1004
        %v2114 = vunpack.c.h.b16 %v1004
        %v2115 = vunpack.c.l.b16 %v1005
        %v2116 = vunpack.c.h.b16 %v1005
        %v2117 = vunpack.c.l.b16 %v1006
        %v2118 = vunpack.c.h.b16 %v1006
        %v2119 = vunpack.c.l.b16 %v1007
        %v2120 = vunpack.c.h.b16 %v1007
        %v2121 = vunpack.c.l.b16 %v1008
        %v2122 = vunpack.c.h.b16 %v1008
        %v2123 = vunpack.c.l.b16 %v1009
        %v2124 = vunpack.c.h.b16 %v1009
        %v2125 = vunpack.c.l.b16 %v1010
        %v2126 = vunpack.c.h.b16 %v1010
        %v2127 = vunpack.c.l.b16 %v1011
        %v2128 = vunpack.c.h.b16 %v1011
        %v2129 = vunpack.c.l.b16 %v1012
        %v2130 = vunpack.c.h.b16 %v1012
        %v2131 = vunpack.c.l.b16 %v1013
        %v2132 = vunpack.c.h.b16 %v1013
        %v2133 = vunpack.c.l.b16 %v1014
        %v2134 = vunpack.c.h.b16 %v1014
        %v2135 = vunpack.c.l.b16 %v1015
        %v2136 = vunpack.c.h.b16 %v1015
        %v2137 = vunpack.c.l.b16 %v1016
        %v2138 = vunpack.c.h.b16 %v1016
        %v2139 = vunpack.c.l.b16 %v1017
        %v2140 = vunpack.c.h.b16 %v1017
        %v2141 = vunpack.c.l.b16 %v1018
        %v2142 = vunpack.c.h.b16 %v1018
        %v2143 = vunpack.c.l.b16 %v1019
        %v2144 = vunpack.c.h.b16 %v1019
        %v2145 = vunpack.c.l.b16 %v1020
        %v2146 = vunpack.c.h.b16 %v1020
        %v2147 = vunpack.c.l.b16 %v1021
        %v2148 = vunpack.c.h.b16 %v1021
        %v2149 = vunpack.c.l.b16 %v1022
        %v2150 = vunpack.c.h.b16 %v1022
        %v2151 = vunpack.c.l.b16 %v1023
        %v2152 = vunpack.c.h.b16 %v1023
        %v2153 = vunpack.c.l.b16 %v1024
        %v2154 = vunpack.c.h.b16 %v1024
        %v2155 = vunpack.c.l.b16 %v1025
        %v2156 = vunpack.c.h.b16 %v1025
        %v2157 = vunpack.c.l.b16 %v1026
        %v2158 = vunpack.c.h.b16 %v1026
        %v2159 = vunpack.c.l.b16 %v1027
        %v2160 = vunpack.c.h.b16 %v1027
        %v2161 = vunpack.c.l.b16 %v1028
        %v2162 = vunpack.c.h.b16 %v1028
        %v2163 = vunpack.c.l.b16 %v1029
        %v2164 = vunpack.c.h.b16 %v1029
        %v2165 = vunpack.c.l.b16 %v1030
        %v2166 = vunpack.c.h.b16 %v1030
        %v2167 = vunpack.c.l.b16 %v1031
        %v2168 = vunpack.c.h.b16 %v1031
        %v2169 = vunpack.c.l.b16 %v1032
        %v2170 = vunpack.c.h.b16 %v1032
        %v2171 = vunpack.c.l.b16 %v1033
        %v2172 = vunpack.c.h.b16 %v1033
        %v2173 = vunpack.c.l.b16 %v1034
        %v2174 = vunpack.c.h.b16 %v1034
        %v2175 = vunpack.c.l.b16 %v1035
        %v2176 = vunpack.c.h.b16 %v1035
        %v2177 = vunpack.c.l.b16 %v1036
        %v2178 = vunpack.c.h.b16 %v1036
        %v2179 = vunpack.c.l.b16 %v1037
        %v2180 = vunpack.c.h.b16 %v1037
        %v2181 = vunpack.c.l.b16 %v1038
        %v2182 = vunpack.c.h.b16 %v1038
        %v2183 = vunpack.c.l.b16 %v1039
        %v2184 = vunpack.c.h.b16 %v1039
        %v2185 = vunpack.c.l.b16 %v1040
        %v2186 = vunpack.c.h.b16 %v1040
        %v2187 = vunpack.c.l.b16 %v1041
        %v2188 = vunpack.c.h.b16 %v1041
        %v2189 = vunpack.c.l.b16 %v1042
        %v2190 = vunpack.c.h.b16 %v1042
        %v2191 = vunpack.c.l.b16 %v1043
        %v2192 = vunpack.c.h.b16 %v1043
        %v2193 = vunpack.c.l.b16 %v1044
        %v2194 = vunpack.c.h.b16 %v1044
        %v2195 = vunpack.c.l.b16 %v1045
        %v2196 = vunpack.c.h.b16 %v1045
        %v2197 = vunpack.c.l.b16 %v1046
        %v2198 = vunpack.c.h.b16 %v1046
        %v2199 = vunpack.c.l.b16 %v1047
        %v2200 = vunpack.c.h.b16 %v1047
        %v2201 = vunpack.c.l.b16 %v1048
        %v2202 = vunpack.c.h.b16 %v1048
        %v2203 = vunpack.c.l.b16 %v1049
        %v2204 = vunpack.c.h.b16 %v1049
        %v2205 = vunpack.c.l.b16 %v1050
        %v2206 = vunpack.c.h.b16 %v1050
        %v2207 = vunpack.c.l.b16 %v1051
        %v2208 = vunpack.c.h.b16 %v1051
        %v2209 = vunpack.c.l.b16 %v1052
        %v2210 = vunpack.c.h.b16 %v1052
        %v2211 = vunpack.c.l.b16 %v1053
        %v2212 = vunpack.c.h.b16 %v1053
        %v2213 = vunpack.c.l.b16 %v1054
        %v2214 = vunpack.c.h.b16 %v1054
        %v2215 = vunpack.c.l.b16 %v1055
        %v2216 = vunpack.c.h.b16 %v1055
        %v2217 = vunpack.c.l.b16 %v1056
        %v2218 = vunpack.c.h.b16 %v1056
        %v2219 = vunpack.c.l.b16 %v1057
        %v2220 = vunpack.c.h.b16 %v1057
        %v2221 = vunpack.c.l.b16 %v1058
        %v2222 = vunpack.c.h.b16 %v1058
        %v2223 = vunpack.c.l.b16 %v1059
        %v2224 = vunpack.c.h.b16 %v1059
        %v2225 = vunpack.c.l.b16 %v1060
        %v2226 = vunpack.c.h.b16 %v1060
        %v2227 = vunpack.c.l.b16 %v1061
        %v2228 = vunpack.c.h.b16 %v1061
        %v2229 = vunpack.c.l.b16 %v1062
        %v2230 = vunpack.c.h.b16 %v1062
        %v2231 = vunpack.c.l.b16 %v1063
        %v2232 = vunpack.c.h.b16 %v1063
        %v2233 = vunpack.c.l.b16 %v1064
        %v2234 = vunpack.c.h.b16 %v1064
        %v2235 = vunpack.c.l.b16 %v1065
        %v2236 = vunpack.c.h.b16 %v1065
        %v2237 = vunpack.c.l.b16 %v1066
        %v2238 = vunpack.c.h.b16 %v1066
        %v2239 = vunpack.c.l.b16 %v1067
        %v2240 = vunpack.c.h.b16 %v1067
        %v2241 = vunpack.c.l.b16 %v1068
        %v2242 = vunpack.c.h.b16 %v1068
        %v2243 = vunpack.c.l.b16 %v1069
        %v2244 = vunpack.c.h.b16 %v1069
        %v2245 = vunpack.c.l.b16 %v1070
        %v2246 = vunpack.c.h.b16 %v1070
        %v2247 = vunpack.c.l.b16 %v1071
        %v2248 = vunpack.c.h.b16 %v1071
        %v2249 = vunpack.c.l.b16 %v1072
        %v2250 = vunpack.c.h.b16 %v1072
        %v2251 = vunpack.c.l.b16 %v1073
        %v2252 = vunpack.c.h.b16 %v1073
        %v2253 = vunpack.c.l.b16 %v1074
        %v2254 = vunpack.c.h.b16 %v1074
        %v2255 = vunpack.c.l.b16 %v1075
        %v2256 = vunpack.c.h.b16 %v1075
        %v2257 = vunpack.c.l.b16 %v1076
        %v2258 = vunpack.c.h.b16 %v1076
        %v2259 = vunpack.c.l.b16 %v1077
        %v2260 = vunpack.c.h.b16 %v1077
        %v2261 = vunpack.c.l.b16 %v1078
        %v2262 = vunpack.c.h.b16 %v1078
        %v2263 = vunpack.c.l.b16 %v1079
        %v2264 = vunpack.c.h.b16 %v1079
        %v2265 = vunpack.c.l.b16 %v1080
        %v2266 = vunpack.c.h.b16 %v1080
        %v2267 = vunpack.c.l.b16 %v1081
        %v2268 = vunpack.c.h.b16 %v1081
        %v2269 = vunpack.c.l.b16 %v1082
        %v2270 = vunpack.c.h.b16 %v1082
        %v2271 = vunpack.c.l.b16 %v1083
        %v2272 = vunpack.c.h.b16 %v1083
        %v2273 = vunpack.c.l.b16 %v1084
        %v2274 = vunpack.c.h.b16 %v1084
        %v2275 = vunpack.c.l.b16 %v1085
        %v2276 = vunpack.c.h.b16 %v1085
        %v2277 = vunpack.c.l.b16 %v1086
        %v2278 = vunpack.c.h.b16 %v1086
        %v2279 = vunpack.c.l.b16 %v1087
        %v2280 = vunpack.c.h.b16 %v1087
        %v2281 = vunpack.c.l.b16 %v1088
        %v2282 = vunpack.c.h.b16 %v1088
        %v2283 = vunpack.c.l.b16 %v1089
        %v2284 = vunpack.c.h.b16 %v1089
        %v2285 = vunpack.c.l.b16 %v1090
        %v2286 = vunpack.c.h.b16 %v1090
        %v2287 = vunpack.c.l.b16 %v1091
        %v2288 = vunpack.c.h.b16 %v1091
        %v2289 = vunpack.c.l.b16 %v1092
        %v2290 = vunpack.c.h.b16 %v1092
        %v2291 = vunpack.c.l.b16 %v1093
        %v2292 = vunpack.c.h.b16 %v1093
        %v2293 = vunpack.c.l.b16 %v1094
        %v2294 = vunpack.c.h.b16 %v1094
        %v2295 = vunpack.c.l.b16 %v1095
        %v2296 = vunpack.c.h.b16 %v1095
        %v2297 = vunpack.c.l.b16 %v1096
        %v2298 = vunpack.c.h.b16 %v1096
        %v2299 = vunpack.c.l.b16 %v1097
        %v2300 = vunpack.c.h.b16 %v1097
        %v2301 = vunpack.c.l.b16 %v1098
        %v2302 = vunpack.c.h.b16 %v1098
        %v2303 = vunpack.c.l.b16 %v1099
        %v2304 = vunpack.c.h.b16 %v1099
        %v2305 = vunpack.c.l.b16 %v1100
        %v2306 = vunpack.c.h.b16 %v1100
        %v2307 = vunpack.c.l.b16 %v1101
        %v2308 = vunpack.c.h.b16 %v1101
        %v2309 = vunpack.c.l.b16 %v1102
        %v2310 = vunpack.c.h.b16 %v1102
        %v2311 = vunpack.c.l.b16 %v1103
        %v2312 = vunpack.c.h.b16 %v1103
        %v2313 = vunpack.c.l.b16 %v1104
        %v2314 = vunpack.c.h.b16 %v1104
        %v2315 = vunpack.c.l.b16 %v1105
        %v2316 = vunpack.c.h.b16 %v1105
        %v2317 = vunpack.c.l.b16 %v1106
        %v2318 = vunpack.c.h.b16 %v1106
        %v2319 = vunpack.c.l.b16 %v1107
        %v2320 = vunpack.c.h.b16 %v1107
        %v2321 = vunpack.c.l.b16 %v1108
        %v2322 = vunpack.c.h.b16 %v1108
        %v2323 = vunpack.c.l.b16 %v1109
        %v2324 = vunpack.c.h.b16 %v1109
        %v2325 = vunpack.c.l.b16 %v1110
        %v2326 = vunpack.c.h.b16 %v1110
        %v2327 = vunpack.c.l.b16 %v1111
        %v2328 = vunpack.c.h.b16 %v1111
        %v2329 = vunpack.c.l.b16 %v1112
        %v2330 = vunpack.c.h.b16 %v1112
        %v2331 = vunpack.c.l.b16 %v1113
        %v2332 = vunpack.c.h.b16 %v1113
        %v2333 = vunpack.c.l.b16 %v1114
        %v2334 = vunpack.c.h.b16 %v1114
        %v2335 = vunpack.c.l.b16 %v1115
        %v2336 = vunpack.c.h.b16 %v1115
        %v2337 = vunpack.c.l.b16 %v1116
        %v2338 = vunpack.c.h.b16 %v1116
        %v2339 = vunpack.c.l.b16 %v1117
        %v2340 = vunpack.c.h.b16 %v1117
        %v2341 = vunpack.c.l.b16 %v1118
        %v2342 = vunpack.c.h.b16 %v1118
        %v2343 = vunpack.c.l.b16 %v1119
        %v2344 = vunpack.c.h.b16 %v1119
        %v2345 = vunpack.c.l.b16 %v1120
        %v2346 = vunpack.c.h.b16 %v1120
        %v2347 = vunpack.c.l.b16 %v1121
        %v2348 = vunpack.c.h.b16 %v1121
        %v2349 = vunpack.c.l.b16 %v1122
        %v2350 = vunpack.c.h.b16 %v1122
        %v2351 = vunpack.c.l.b16 %v1123
        %v2352 = vunpack.c.h.b16 %v1123
        %v2353 = vunpack.c.l.b16 %v1124
        %v2354 = vunpack.c.h.b16 %v1124
        %v2355 = vunpack.c.l.b16 %v1125
        %v2356 = vunpack.c.h.b16 %v1125
        %v2357 = vunpack.c.l.b16 %v1126
        %v2358 = vunpack.c.h.b16 %v1126
        %v2359 = vunpack.c.l.b16 %v1127
        %v2360 = vunpack.c.h.b16 %v1127
        %v2361 = vunpack.c.l.b16 %v1128
        %v2362 = vunpack.c.h.b16 %v1128
        %v2363 = vunpack.c.l.b16 %v1129
        %v2364 = vunpack.c.h.b16 %v1129
        %v2365 = vunpack.c.l.b16 %v1130
        %v2366 = vunpack.c.h.b16 %v1130
        %v2367 = vunpack.c.l.b16 %v1131
        %v2368 = vunpack.c.h.b16 %v1131
        %v2369 = vunpack.c.l.b16 %v1132
        %v2370 = vunpack.c.h.b16 %v1132
        %v2371 = vunpack.c.l.b16 %v1133
        %v2372 = vunpack.c.h.b16 %v1133
        %v2373 = vunpack.c.l.b16 %v1134
        %v2374 = vunpack.c.h.b16 %v1134
        %v2375 = vunpack.c.l.b16 %v1135
        %v2376 = vunpack.c.h.b16 %v1135
        %v2377 = vunpack.c.l.b16 %v1136
        %v2378 = vunpack.c.h.b16 %v1136
        %v2379 = vunpack.c.l.b16 %v1137
        %v2380 = vunpack.c.h.b16 %v1137
        %v2381 = vunpack.c.l.b16 %v1138
        %v2382 = vunpack.c.h.b16 %v1138
        %v2383 = vunpack.c.l.b16 %v1139
        %v2384 = vunpack.c.h.b16 %v1139
        %v2385 = vunpack.c.l.b16 %v1140
        %v2386 = vunpack.c.h.b16 %v1140
        %v2387 = vunpack.c.l.b16 %v1141
        %v2388 = vunpack.c.h.b16 %v1141
        %v2389 = vunpack.c.l.b16 %v1142
        %v2390 = vunpack.c.h.b16 %v1142
        %v2391 = vunpack.c.l.b16 %v1143
        %v2392 = vunpack.c.h.b16 %v1143
        %v2393 = vunpack.c.l.b16 %v1144
        %v2394 = vunpack.c.h.b16 %v1144
        %v2395 = vunpack.c.l.b16 %v1145
        %v2396 = vunpack.c.h.b16 %v1145
        %v2397 = vunpack.c.l.b16 %v1146
        %v2398 = vunpack.c.h.b16 %v1146
        %v2399 = vunpack.c.l.b16 %v1147
        %v2400 = vunpack.c.h.b16 %v1147
        %v2401 = vunpack.c.l.b16 %v1148
        %v2402 = vunpack.c.h.b16 %v1148
        %v2403 = vunpack.c.l.b16 %v1149
        %v2404 = vunpack.c.h.b16 %v1149
        %v2405 = vunpack.c.l.b16 %v1150
        %v2406 = vunpack.c.h.b16 %v1150
        %v2407 = vunpack.c.l.b16 %v1151
        %v2408 = vunpack.c.h.b16 %v1151
        %v2409 = vunpack.c.l.b16 %v1152
        %v2410 = vunpack.c.h.b16 %v1152
        %v2411 = vunpack.c.l.b16 %v1153
        %v2412 = vunpack.c.h.b16 %v1153
        %v2413 = vunpack.c.l.b16 %v1154
        %v2414 = vunpack.c.h.b16 %v1154
        %v2415 = vunpack.c.l.b16 %v1155
        %v2416 = vunpack.c.h.b16 %v1155
        %v2417 = vunpack.c.l.b16 %v1156
        %v2418 = vunpack.c.h.b16 %v1156
        %v2419 = vunpack.c.l.b16 %v1157
        %v2420 = vunpack.c.h.b16 %v1157
        %v2421 = vunpack.c.l.b16 %v1158
        %v2422 = vunpack.c.h.b16 %v1158
        %v2423 = vunpack.c.l.b16 %v1159
        %v2424 = vunpack.c.h.b16 %v1159
        %v2425 = vunpack.c.l.b16 %v1160
        %v2426 = vunpack.c.h.b16 %v1160
        %v2427 = vunpack.c.l.b16 %v1161
        %v2428 = vunpack.c.h.b16 %v1161
        %v2429 = vunpack.c.l.b16 %v1162
        %v2430 = vunpack.c.h.b16 %v1162
        %v2431 = vunpack.c.l.b16 %v1163
        %v2432 = vunpack.c.h.b16 %v1163
        %v2433 = vunpack.c.l.b16 %v1164
        %v2434 = vunpack.c.h.b16 %v1164
        %v2435 = vunpack.c.l.b16 %v1165
        %v2436 = vunpack.c.h.b16 %v1165
        %v2437 = vunpack.c.l.b16 %v1166
        %v2438 = vunpack.c.h.b16 %v1166
        %v2439 = vunpack.c.l.b16 %v1167
        %v2440 = vunpack.c.h.b16 %v1167
        %v2441 = vunpack.c.l.b16 %v1168
        %v2442 = vunpack.c.h.b16 %v1168
        %v2443 = vunpack.c.l.b16 %v1169
        %v2444 = vunpack.c.h.b16 %v1169
        %v2445 = vunpack.c.l.b16 %v1170
        %v2446 = vunpack.c.h.b16 %v1170
        %v2447 = vunpack.c.l.b16 %v1171
        %v2448 = vunpack.c.h.b16 %v1171
        %v2449 = vunpack.c.l.b16 %v1172
        %v2450 = vunpack.c.h.b16 %v1172
        %v2451 = vunpack.c.l.b16 %v1173
        %v2452 = vunpack.c.h.b16 %v1173
        %v2453 = vunpack.c.l.b16 %v1174
        %v2454 = vunpack.c.h.b16 %v1174
        %v2455 = vunpack.c.l.b16 %v1175
        %v2456 = vunpack.c.h.b16 %v1175
        %v2457 = vunpack.c.l.b16 %v1176
        %v2458 = vunpack.c.h.b16 %v1176
        %v2459 = vunpack.c.l.b16 %v1177
        %v2460 = vunpack.c.h.b16 %v1177
        %v2461 = vunpack.c.l.b16 %v1178
        %v2462 = vunpack.c.h.b16 %v1178
        %v2463 = vunpack.c.l.b16 %v1179
        %v2464 = vunpack.c.h.b16 %v1179
        %v2465 = vunpack.c.l.b16 %v1180
        %v2466 = vunpack.c.h.b16 %v1180
        %v2467 = vunpack.c.l.b16 %v1181
        %v2468 = vunpack.c.h.b16 %v1181
        %v2469 = vunpack.c.l.b16 %v1182
        %v2470 = vunpack.c.h.b16 %v1182
        %v2471 = vunpack.c.l.b16 %v1183
        %v2472 = vunpack.c.h.b16 %v1183
        %v2473 = vunpack.c.l.b16 %v1184
        %v2474 = vunpack.c.h.b16 %v1184
        %v2475 = vunpack.c.l.b16 %v1185
        %v2476 = vunpack.c.h.b16 %v1185
        %v2477 = vunpack.c.l.b16 %v1186
        %v2478 = vunpack.c.h.b16 %v1186
        %v2479 = vunpack.c.l.b16 %v1187
        %v2480 = vunpack.c.h.b16 %v1187
        %v2481 = vunpack.c.l.b16 %v1188
        %v2482 = vunpack.c.h.b16 %v1188
        %v2483 = vunpack.c.l.b16 %v1189
        %v2484 = vunpack.c.h.b16 %v1189
        %v2485 = vunpack.c.l.b16 %v1190
        %v2486 = vunpack.c.h.b16 %v1190
        %v2487 = vunpack.c.l.b16 %v1191
        %v2488 = vunpack.c.h.b16 %v1191
        %v2489 = vunpack.c.l.b16 %v1192
        %v2490 = vunpack.c.h.b16 %v1192
        %v2491 = vunpack.c.l.b16 %v1193
        %v2492 = vunpack.c.h.b16 %v1193
        %v2493 = vunpack.c.l.b16 %v1194
        %v2494 = vunpack.c.h.b16 %v1194
        %v2495 = vunpack.c.l.b16 %v1195
        %v2496 = vunpack.c.h.b16 %v1195
        %v2497 = vunpack.c.l.b16 %v1196
        %v2498 = vunpack.c.h.b16 %v1196
        %v2499 = vunpack.c.l.b16 %v1197
        %v2500 = vunpack.c.h.b16 %v1197
        %v2501 = vunpack.c.l.b16 %v1198
        %v2502 = vunpack.c.h.b16 %v1198
        %v2503 = vunpack.c.l.b16 %v1199
        %v2504 = vunpack.c.h.b16 %v1199
        %v2505 = vunpack.c.l.b16 %v1200
        %v2506 = vunpack.c.h.b16 %v1200
        %v2507 = vunpack.c.l.b16 %v1201
        %v2508 = vunpack.c.h.b16 %v1201
        %v2509 = vunpack.c.l.b16 %v1202
        %v2510 = vunpack.c.h.b16 %v1202
        %v2511 = vunpack.c.l.b16 %v1203
        %v2512 = vunpack.c.h.b16 %v1203
        %v2513 = vunpack.c.l.b16 %v1204
        %v2514 = vunpack.c.h.b16 %v1204
        %v2515 = vunpack.c.l.b16 %v1205
        %v2516 = vunpack.c.h.b16 %v1205
        %v2517 = vunpack.c.l.b16 %v1206
        %v2518 = vunpack.c.h.b16 %v1206
        %v2519 = vunpack.c.l.b16 %v1207
        %v2520 = vunpack.c.h.b16 %v1207
        %v2521 = vunpack.c.l.b16 %v1208
        %v2522 = vunpack.c.h.b16 %v1208
        %v2523 = vunpack.c.l.b16 %v1209
        %v2524 = vunpack.c.h.b16 %v1209
        %v2525 = vunpack.c.l.b16 %v1210
        %v2526 = vunpack.c.h.b16 %v1210
        %v2527 = vunpack.c.l.b16 %v1211
        %v2528 = vunpack.c.h.b16 %v1211
        %v2529 = vunpack.c.l.b16 %v1212
        %v2530 = vunpack.c.h.b16 %v1212
        %v2531 = vunpack.c.l.b16 %v1213
        %v2532 = vunpack.c.h.b16 %v1213
        %v2533 = vunpack.c.l.b16 %v1214
        %v2534 = vunpack.c.h.b16 %v1214
        %v2535 = vunpack.c.l.b16 %v1215
        %v2536 = vunpack.c.h.b16 %v1215
        %v2537 = vunpack.c.l.b16 %v1216
        %v2538 = vunpack.c.h.b16 %v1216
        %v2539 = vunpack.c.l.b16 %v1217
        %v2540 = vunpack.c.h.b16 %v1217
        %v2541 = vunpack.c.l.b16 %v1218
        %v2542 = vunpack.c.h.b16 %v1218
        %v2543 = vunpack.c.l.b16 %v1219
        %v2544 = vunpack.c.h.b16 %v1219
        %v2545 = vunpack.c.l.b16 %v1220
        %v2546 = vunpack.c.h.b16 %v1220
        %v2547 = vunpack.c.l.b16 %v1221
        %v2548 = vunpack.c.h.b16 %v1221
        %v2549 = vunpack.c.l.b16 %v1222
        %v2550 = vunpack.c.h.b16 %v1222
        %v2551 = vunpack.c.l.b16 %v1223
        %v2552 = vunpack.c.h.b16 %v1223
        %v2553 = vunpack.c.l.b16 %v1224
        %v2554 = vunpack.c.h.b16 %v1224
        %v2555 = vunpack.c.l.b16 %v1225
        %v2556 = vunpack.c.h.b16 %v1225
        %v2557 = vunpack.c.l.b16 %v1226
        %v2558 = vunpack.c.h.b16 %v1226
        %v2559 = vunpack.c.l.b16 %v1227
        %v2560 = vunpack.c.h.b16 %v1227
        %v2561 = vunpack.c.l.b16 %v1228
        %v2562 = vunpack.c.h.b16 %v1228
        %v2563 = vunpack.c.l.b16 %v1229
        %v2564 = vunpack.c.h.b16 %v1229
        %v2565 = vunpack.c.l.b16 %v1230
        %v2566 = vunpack.c.h.b16 %v1230
        %v2567 = vunpack.c.l.b16 %v1231
        %v2568 = vunpack.c.h.b16 %v1231
        %v2569 = vunpack.c.l.b16 %v1232
        %v2570 = vunpack.c.h.b16 %v1232
        %v2571 = vunpack.c.l.b16 %v1233
        %v2572 = vunpack.c.h.b16 %v1233
        %v2573 = vunpack.c.l.b16 %v1234
        %v2574 = vunpack.c.h.b16 %v1234
        %v2575 = vunpack.c.l.b16 %v1235
        %v2576 = vunpack.c.h.b16 %v1235
        %v2577 = vunpack.c.l.b16 %v1236
        %v2578 = vunpack.c.h.b16 %v1236
        %v2579 = vunpack.c.l.b16 %v1237
        %v2580 = vunpack.c.h.b16 %v1237
        %v2581 = vunpack.c.l.b16 %v1238
        %v2582 = vunpack.c.h.b16 %v1238
        %v2583 = vunpack.c.l.b16 %v1239
        %v2584 = vunpack.c.h.b16 %v1239
        %v2585 = vunpack.c.l.b16 %v1240
        %v2586 = vunpack.c.h.b16 %v1240
        %v2587 = vunpack.c.l.b16 %v1241
        %v2588 = vunpack.c.h.b16 %v1241
        %v2589 = vunpack.c.l.b16 %v1242
        %v2590 = vunpack.c.h.b16 %v1242
        %v2591 = vunpack.c.l.b16 %v1243
        %v2592 = vunpack.c.h.b16 %v1243
        %v2593 = vunpack.c.l.b16 %v1244
        %v2594 = vunpack.c.h.b16 %v1244
        %v2595 = vunpack.c.l.b16 %v1245
        %v2596 = vunpack.c.h.b16 %v1245
        %v2597 = vunpack.c.l.b16 %v1246
        %v2598 = vunpack.c.h.b16 %v1246
        %v2599 = vunpack.c.l.b16 %v1247
        %v2600 = vunpack.c.h.b16 %v1247
        %v2601 = vunpack.c.l.b16 %v1248
        %v2602 = vunpack.c.h.b16 %v1248
        %v2603 = vunpack.c.l.b16 %v1249
        %v2604 = vunpack.c.h.b16 %v1249
        %v2605 = vunpack.c.l.b16 %v1250
        %v2606 = vunpack.c.h.b16 %v1250
        %v2607 = vunpack.c.l.b16 %v1251
        %v2608 = vunpack.c.h.b16 %v1251
        %v2609 = vunpack.c.l.b16 %v1252
        %v2610 = vunpack.c.h.b16 %v1252
        %v2611 = vunpack.c.l.b16 %v1253
        %v2612 = vunpack.c.h.b16 %v1253
        %v2613 = vunpack.c.l.b16 %v1254
        %v2614 = vunpack.c.h.b16 %v1254
        %v2615 = vunpack.c.l.b16 %v1255
        %v2616 = vunpack.c.h.b16 %v1255
        %v2617 = vunpack.c.l.b16 %v1256
        %v2618 = vunpack.c.h.b16 %v1256
        %v2619 = vunpack.c.l.b16 %v1257
        %v2620 = vunpack.c.h.b16 %v1257
        %v2621 = vunpack.c.l.b16 %v1258
        %v2622 = vunpack.c.h.b16 %v1258
        %v2623 = vunpack.c.l.b16 %v1259
        %v2624 = vunpack.c.h.b16 %v1259
        %v2625 = vunpack.c.l.b16 %v1260
        %v2626 = vunpack.c.h.b16 %v1260
        %v2627 = vunpack.c.l.b16 %v1261
        %v2628 = vunpack.c.h.b16 %v1261
        %v2629 = vunpack.c.l.b16 %v1262
        %v2630 = vunpack.c.h.b16 %v1262
        %v2631 = vunpack.c.l.b16 %v1263
        %v2632 = vunpack.c.h.b16 %v1263
        %v2633 = vunpack.c.l.b16 %v1264
        %v2634 = vunpack.c.h.b16 %v1264
        %v2635 = vunpack.c.l.b16 %v1265
        %v2636 = vunpack.c.h.b16 %v1265
        %v2637 = vunpack.c.l.b16 %v1266
        %v2638 = vunpack.c.h.b16 %v1266
        %v2639 = vunpack.c.l.b16 %v1267
        %v2640 = vunpack.c.h.b16 %v1267
        %v2641 = vunpack.c.l.b16 %v1268
        %v2642 = vunpack.c.h.b16 %v1268
        %v2643 = vunpack.c.l.b16 %v1269
        %v2644 = vunpack.c.h.b16 %v1269
        %v2645 = vunpack.c.l.b16 %v1270
        %v2646 = vunpack.c.h.b16 %v1270
        %v2647 = vunpack.c.l.b16 %v1271
        %v2648 = vunpack.c.h.b16 %v1271
        %v2649 = vunpack.c.l.b16 %v1272
        %v2650 = vunpack.c.h.b16 %v1272
        %v2651 = vunpack.c.l.b16 %v1273
        %v2652 = vunpack.c.h.b16 %v1273
        %v2653 = vunpack.c.l.b16 %v1274
        %v2654 = vunpack.c.h.b16 %v1274
        %v2655 = vunpack.c.l.b16 %v1275
        %v2656 = vunpack.c.h.b16 %v1275
        %v2657 = vunpack.c.l.b16 %v1276
        %v2658 = vunpack.c.h.b16 %v1276
        %v2659 = vunpack.c.l.b16 %v1277
        %v2660 = vunpack.c.h.b16 %v1277
        %v2661 = vunpack.c.l.b16 %v1278
        %v2662 = vunpack.c.h.b16 %v1278
        %v2663 = vunpack.c.l.b16 %v1279
        %v2664 = vunpack.c.h.b16 %v1279
        %v2665 = vunpack.c.l.b16 %v1280
        %v2666 = vunpack.c.h.b16 %v1280
        %v2667 = vunpack.c.l.b16 %v1281
        %v2668 = vunpack.c.h.b16 %v1281
        %v2669 = vunpack.c.l.b16 %v1282
        %v2670 = vunpack.c.h.b16 %v1282
        %v2671 = vunpack.c.l.b16 %v1283
        %v2672 = vunpack.c.h.b16 %v1283
        %v2673 = vunpack.c.l.b16 %v1284
        %v2674 = vunpack.c.h.b16 %v1284
        %v2675 = vunpack.c.l.b16 %v1285
        %v2676 = vunpack.c.h.b16 %v1285
        %v2677 = vunpack.c.l.b16 %v1286
        %v2678 = vunpack.c.h.b16 %v1286
        %v2679 = vunpack.c.l.b16 %v1287
        %v2680 = vunpack.c.h.b16 %v1287
        %v2681 = vunpack.c.l.b16 %v1288
        %v2682 = vunpack.c.h.b16 %v1288
        %v2683 = vunpack.c.l.b16 %v1289
        %v2684 = vunpack.c.h.b16 %v1289
        %v2685 = vunpack.c.l.b16 %v1290
        %v2686 = vunpack.c.h.b16 %v1290
        %v2687 = vunpack.c.l.b16 %v1291
        %v2688 = vunpack.c.h.b16 %v1291
        %v2689 = vunpack.c.l.b16 %v1292
        %v2690 = vunpack.c.h.b16 %v1292
        %v2691 = vunpack.c.l.b16 %v1293
        %v2692 = vunpack.c.h.b16 %v1293
        %v2693 = vunpack.c.l.b16 %v1294
        %v2694 = vunpack.c.h.b16 %v1294
        %v2695 = vunpack.c.l.b16 %v1295
        %v2696 = vunpack.c.h.b16 %v1295
        %v2697 = vunpack.c.l.b16 %v1296
        %v2698 = vunpack.c.h.b16 %v1296
        %v2699 = vunpack.c.l.b16 %v1297
        %v2700 = vunpack.c.h.b16 %v1297
        %v2701 = vunpack.c.l.b16 %v1298
        %v2702 = vunpack.c.h.b16 %v1298
        %v2703 = vunpack.c.l.b16 %v1299
        %v2704 = vunpack.c.h.b16 %v1299
        %v2705 = vunpack.c.l.b16 %v1300
        %v2706 = vunpack.c.h.b16 %v1300
        %v2707 = vunpack.c.l.b16 %v1301
        %v2708 = vunpack.c.h.b16 %v1301
        %v2709 = vunpack.c.l.b16 %v1302
        %v2710 = vunpack.c.h.b16 %v1302
        %v2711 = vunpack.c.l.b16 %v1303
        %v2712 = vunpack.c.h.b16 %v1303
        %v2713 = vunpack.c.l.b16 %v1304
        %v2714 = vunpack.c.h.b16 %v1304
        %v2715 = vunpack.c.l.b16 %v1305
        %v2716 = vunpack.c.h.b16 %v1305
        %v2717 = vunpack.c.l.b16 %v1306
        %v2718 = vunpack.c.h.b16 %v1306
        %v2719 = vunpack.c.l.b16 %v1307
        %v2720 = vunpack.c.h.b16 %v1307
        %v2721 = vunpack.c.l.b16 %v1308
        %v2722 = vunpack.c.h.b16 %v1308
        %v2723 = vunpack.c.l.b16 %v1309
        %v2724 = vunpack.c.h.b16 %v1309
        %v2725 = vunpack.c.l.b16 %v1310
        %v2726 = vunpack.c.h.b16 %v1310
        %v2727 = vunpack.c.l.b16 %v1311
        %v2728 = vunpack.c.h.b16 %v1311
        %v2729 = vunpack.c.l.b16 %v1312
        %v2730 = vunpack.c.h.b16 %v1312
        %v2731 = vunpack.c.l.b16 %v1313
        %v2732 = vunpack.c.h.b16 %v1313
        %v2733 = vunpack.c.l.b16 %v1314
        %v2734 = vunpack.c.h.b16 %v1314
        %v2735 = vunpack.c.l.b16 %v1315
        %v2736 = vunpack.c.h.b16 %v1315
        %v2737 = vunpack.c.l.b16 %v1316
        %v2738 = vunpack.c.h.b16 %v1316
        %v2739 = vunpack.c.l.b16 %v1317
        %v2740 = vunpack.c.h.b16 %v1317
        %v2741 = vunpack.c.l.b16 %v1318
        %v2742 = vunpack.c.h.b16 %v1318
        %v2743 = vunpack.c.l.b16 %v1319
        %v2744 = vunpack.c.h.b16 %v1319
        %v2745 = vunpack.c.l.b16 %v1320
        %v2746 = vunpack.c.h.b16 %v1320
        %v2747 = vunpack.c.l.b16 %v1321
        %v2748 = vunpack.c.h.b16 %v1321
        %v2749 = vunpack.c.l.b16 %v1322
        %v2750 = vunpack.c.h.b16 %v1322
        %v2751 = vunpack.c.l.b16 %v1323
        %v2752 = vunpack.c.h.b16 %v1323
        %v2753 = vunpack.c.l.b16 %v1324
        %v2754 = vunpack.c.h.b16 %v1324
        %v2755 = vunpack.c.l.b16 %v1325
        %v2756 = vunpack.c.h.b16 %v1325
        %v2757 = vunpack.c.l.b16 %v1326
        %v2758 = vunpack.c.h.b16 %v1326
        %v2759 = vunpack.c.l.b16 %v1327
        %v2760 = vunpack.c.h.b16 %v1327
        %v2761 = vunpack.c.l.b16 %v1328
        %v2762 = vunpack.c.h.b16 %v1328
        %v2763 = vunpack.c.l.b16 %v1329
        %v2764 = vunpack.c.h.b16 %v1329
        %v2765 = vunpack.c.l.b16 %v1330
        %v2766 = vunpack.c.h.b16 %v1330
        %v2767 = vunpack.c.l.b16 %v1331
        %v2768 = vunpack.c.h.b16 %v1331
        %v2769 = vunpack.c.l.b16 %v1332
        %v2770 = vunpack.c.h.b16 %v1332
        %v2771 = vunpack.c.l.b16 %v1333
        %v2772 = vunpack.c.h.b16 %v1333
        %v2773 = vunpack.c.l.b16 %v1334
        %v2774 = vunpack.c.h.b16 %v1334
        %v2775 = vunpack.c.l.b16 %v1335
        %v2776 = vunpack.c.h.b16 %v1335
        %v2777 = vunpack.c.l.b16 %v1336
        %v2778 = vunpack.c.h.b16 %v1336
        %v2779 = vunpack.c.l.b16 %v1337
        %v2780 = vunpack.c.h.b16 %v1337
        %v2781 = vunpack.c.l.b16 %v1338
        %v2782 = vunpack.c.h.b16 %v1338
        %v2783 = vunpack.c.l.b16 %v1339
        %v2784 = vunpack.c.h.b16 %v1339
        %v2785 = vunpack.c.l.b16 %v1340
        %v2786 = vunpack.c.h.b16 %v1340
        %v2787 = vunpack.c.l.b16 %v1341
        %v2788 = vunpack.c.h.b16 %v1341
        %v2789 = vunpack.c.l.b16 %v1342
        %v2790 = vunpack.c.h.b16 %v1342
        %v2791 = vunpack.c.l.b16 %v1343
        %v2792 = vunpack.c.h.b16 %v1343
        %v2793 = vunpack.c.l.b16 %v1344
        %v2794 = vunpack.c.h.b16 %v1344
        %v2795 = vunpack.c.l.b16 %v1345
        %v2796 = vunpack.c.h.b16 %v1345
        %v2797 = vunpack.c.l.b16 %v1346
        %v2798 = vunpack.c.h.b16 %v1346
        %v2799 = vunpack.c.l.b16 %v1347
        %v2800 = vunpack.c.h.b16 %v1347
        %v2801 = vunpack.c.l.b16 %v1348
        %v2802 = vunpack.c.h.b16 %v1348
        %v2803 = vunpack.c.l.b16 %v1349
        %v2804 = vunpack.c.h.b16 %v1349
        %v2805 = vunpack.c.l.b16 %v1350
        %v2806 = vunpack.c.h.b16 %v1350
        %v2807 = vunpack.c.l.b16 %v1351
        %v2808 = vunpack.c.h.b16 %v1351
        %v2809 = vunpack.c.l.b16 %v1352
        %v2810 = vunpack.c.h.b16 %v1352
        %v2811 = vunpack.c.l.b16 %v1353
        %v2812 = vunpack.c.h.b16 %v1353
        %v2813 = vunpack.c.l.b16 %v1354
        %v2814 = vunpack.c.h.b16 %v1354
        %v2815 = vunpack.c.l.b16 %v1355
        %v2816 = vunpack.c.h.b16 %v1355
        %v2817 = vunpack.c.l.b16 %v1356
        %v2818 = vunpack.c.h.b16 %v1356
        %v2819 = vunpack.c.l.b16 %v1357
        %v2820 = vunpack.c.h.b16 %v1357
        %v2821 = vunpack.c.l.b16 %v1358
        %v2822 = vunpack.c.h.b16 %v1358
        %v2823 = vunpack.c.l.b16 %v1359
        %v2824 = vunpack.c.h.b16 %v1359
        %v2825 = vunpack.c.l.b16 %v1360
        %v2826 = vunpack.c.h.b16 %v1360
        %v2827 = vunpack.c.l.b16 %v1361
        %v2828 = vunpack.c.h.b16 %v1361
        %v2829 = vunpack.c.l.b16 %v1362
        %v2830 = vunpack.c.h.b16 %v1362
        %v2831 = vunpack.c.l.b16 %v1363
        %v2832 = vunpack.c.h.b16 %v1363
        %v2833 = vunpack.c.l.b16 %v1364
        %v2834 = vunpack.c.h.b16 %v1364
        %v2835 = vunpack.c.l.b16 %v1365
        %v2836 = vunpack.c.h.b16 %v1365
        %v2837 = vunpack.c.l.b16 %v1366
        %v2838 = vunpack.c.h.b16 %v1366
        %v2839 = vunpack.c.l.b16 %v1367
        %v2840 = vunpack.c.h.b16 %v1367
        %v2841 = vunpack.c.l.b16 %v1368
        %v2842 = vunpack.c.h.b16 %v1368
        %v2843 = vunpack.c.l.b16 %v1369
        %v2844 = vunpack.c.h.b16 %v1369
        %v2845 = vunpack.c.l.b16 %v1370
        %v2846 = vunpack.c.h.b16 %v1370
        %v2847 = vunpack.c.l.b16 %v1371
        %v2848 = vunpack.c.h.b16 %v1371
        %v2849 = vunpack.c.l.b16 %v1372
        %v2850 = vunpack.c.h.b16 %v1372
        %v2851 = vunpack.c.l.b16 %v1373
        %v2852 = vunpack.c.h.b16 %v1373
        %v2853 = vunpack.c.l.b16 %v1374
        %v2854 = vunpack.c.h.b16 %v1374
        %v2855 = vunpack.c.l.b16 %v1375
        %v2856 = vunpack.c.h.b16 %v1375
        %v2857 = vunpack.c.l.b16 %v1376
        %v2858 = vunpack.c.h.b16 %v1376
        %v2859 = vunpack.c.l.b16 %v1377
        %v2860 = vunpack.c.h.b16 %v1377
        %v2861 = vunpack.c.l.b16 %v1378
        %v2862 = vunpack.c.h.b16 %v1378
        %v2863 = vunpack.c.l.b16 %v1379
        %v2864 = vunpack.c.h.b16 %v1379
        %v2865 = vunpack.c.l.b16 %v1380
        %v2866 = vunpack.c.h.b16 %v1380
        %v2867 = vunpack.c.l.b16 %v1381
        %v2868 = vunpack.c.h.b16 %v1381
        %v2869 = vunpack.c.l.b16 %v1382
        %v2870 = vunpack.c.h.b16 %v1382
        %v2871 = vunpack.c.l.b16 %v1383
        %v2872 = vunpack.c.h.b16 %v1383
        %v2873 = vunpack.c.l.b16 %v1384
        %v2874 = vunpack.c.h.b16 %v1384
        %v2875 = vunpack.c.l.b16 %v1385
        %v2876 = vunpack.c.h.b16 %v1385
        %v2877 = vunpack.c.l.b16 %v1386
        %v2878 = vunpack.c.h.b16 %v1386
        %v2879 = vunpack.c.l.b16 %v1387
        %v2880 = vunpack.c.h.b16 %v1387
        %v2881 = vunpack.c.l.b16 %v1388
        %v2882 = vunpack.c.h.b16 %v1388
        %v2883 = vunpack.c.l.b16 %v1389
        %v2884 = vunpack.c.h.b16 %v1389
        %v2885 = vunpack.c.l.b16 %v1390
        %v2886 = vunpack.c.h.b16 %v1390
        %v2887 = vunpack.c.l.b16 %v1391
        %v2888 = vunpack.c.h.b16 %v1391
        %v2889 = vunpack.c.l.b16 %v1392
        %v2890 = vunpack.c.h.b16 %v1392
        %v2891 = vunpack.c.l.b16 %v1393
        %v2892 = vunpack.c.h.b16 %v1393
        %v2893 = vunpack.c.l.b16 %v1394
        %v2894 = vunpack.c.h.b16 %v1394
        %v2895 = vunpack.c.l.b16 %v1395
        %v2896 = vunpack.c.h.b16 %v1395
        %v2897 = vunpack.c.l.b16 %v1396
        %v2898 = vunpack.c.h.b16 %v1396
        %v2899 = vunpack.c.l.b16 %v1397
        %v2900 = vunpack.c.h.b16 %v1397
        %v2901 = vunpack.c.l.b16 %v1398
        %v2902 = vunpack.c.h.b16 %v1398
        %v2903 = vunpack.c.l.b16 %v1399
        %v2904 = vunpack.c.h.b16 %v1399
        %v2905 = vunpack.c.l.b16 %v1400
        %v2906 = vunpack.c.h.b16 %v1400
        %v2907 = vunpack.c.l.b16 %v1401
        %v2908 = vunpack.c.h.b16 %v1401
        %v2909 = vunpack.c.l.b16 %v1402
        %v2910 = vunpack.c.h.b16 %v1402
        %v2911 = vunpack.c.l.b16 %v1403
        %v2912 = vunpack.c.h.b16 %v1403
        %v2913 = vunpack.c.l.b16 %v1404
        %v2914 = vunpack.c.h.b16 %v1404
        %v2915 = vunpack.c.l.b16 %v1405
        %v2916 = vunpack.c.h.b16 %v1405
        %v2917 = vunpack.c.l.b16 %v1406
        %v2918 = vunpack.c.h.b16 %v1406
        %v2919 = vunpack.c.l.b16 %v1407
        %v2920 = vunpack.c.h.b16 %v1407
        %v2921 = vunpack.c.l.b16 %v1408
        %v2922 = vunpack.c.h.b16 %v1408
        %v2923 = vunpack.c.l.b16 %v1409
        %v2924 = vunpack.c.h.b16 %v1409
        %v2925 = vunpack.c.l.b16 %v1410
        %v2926 = vunpack.c.h.b16 %v1410
        %v2927 = vunpack.c.l.b16 %v1411
        %v2928 = vunpack.c.h.b16 %v1411
        %v2929 = vunpack.c.l.b16 %v1412
        %v2930 = vunpack.c.h.b16 %v1412
        %v2931 = vunpack.c.l.b16 %v1413
        %v2932 = vunpack.c.h.b16 %v1413
        %v2933 = vunpack.c.l.b16 %v1414
        %v2934 = vunpack.c.h.b16 %v1414
        %v2935 = vunpack.c.l.b16 %v1415
        %v2936 = vunpack.c.h.b16 %v1415
        %v2937 = vunpack.c.l.b16 %v1416
        %v2938 = vunpack.c.h.b16 %v1416
        %v2939 = vunpack.c.l.b16 %v1417
        %v2940 = vunpack.c.h.b16 %v1417
        %v2941 = vunpack.c.l.b16 %v1418
        %v2942 = vunpack.c.h.b16 %v1418
        %v2943 = vunpack.c.l.b16 %v1419
        %v2944 = vunpack.c.h.b16 %v1419
        %v2945 = vunpack.c.l.b16 %v1420
        %v2946 = vunpack.c.h.b16 %v1420
        %v2947 = vunpack.c.l.b16 %v1421
        %v2948 = vunpack.c.h.b16 %v1421
        %v2949 = vunpack.c.l.b16 %v1422
        %v2950 = vunpack.c.h.b16 %v1422
        %v2951 = vunpack.c.l.b16 %v1423
        %v2952 = vunpack.c.h.b16 %v1423
        %v2953 = vunpack.c.l.b16 %v1424
        %v2954 = vunpack.c.h.b16 %v1424
        %v2955 = vunpack.c.l.b16 %v1425
        %v2956 = vunpack.c.h.b16 %v1425
        %v2957 = vunpack.c.l.b16 %v1426
        %v2958 = vunpack.c.h.b16 %v1426
        %v2959 = vunpack.c.l.b16 %v1427
        %v2960 = vunpack.c.h.b16 %v1427
        %v2961 = vunpack.c.l.b16 %v1428
        %v2962 = vunpack.c.h.b16 %v1428
        %v2963 = vunpack.c.l.b16 %v1429
        %v2964 = vunpack.c.h.b16 %v1429
        %v2965 = vunpack.c.l.b16 %v1430
        %v2966 = vunpack.c.h.b16 %v1430
        %v2967 = vunpack.c.l.b16 %v1431
        %v2968 = vunpack.c.h.b16 %v1431
        %v2969 = vunpack.c.l.b16 %v1432
        %v2970 = vunpack.c.h.b16 %v1432
        %v2971 = vunpack.c.l.b16 %v1433
        %v2972 = vunpack.c.h.b16 %v1433
        %v2973 = vunpack.c.l.b16 %v1434
        %v2974 = vunpack.c.h.b16 %v1434
        %v2975 = vunpack.c.l.b16 %v1435
        %v2976 = vunpack.c.h.b16 %v1435
        %v2977 = vunpack.c.l.b16 %v1436
        %v2978 = vunpack.c.h.b16 %v1436
        %v2979 = vunpack.c.l.b16 %v1437
        %v2980 = vunpack.c.h.b16 %v1437
        %v2981 = vunpack.c.l.b16 %v1438
        %v2982 = vunpack.c.h.b16 %v1438
        %v2983 = vunpack.c.l.b16 %v1439
        %v2984 = vunpack.c.h.b16 %v1439
        %v2985 = vunpack.c.l.b16 %v1440
        %v2986 = vunpack.c.h.b16 %v1440
        %v2987 = vunpack.c.l.b16 %v1441
        %v2988 = vunpack.c.h.b16 %v1441
        %v2989 = vunpack.c.l.b16 %v1442
        %v2990 = vunpack.c.h.b16 %v1442
        %v2991 = vunpack.c.l.b16 %v1443
        %v2992 = vunpack.c.h.b16 %v1443
        %v2993 = vunpack.c.l.b16 %v1444
        %v2994 = vunpack.c.h.b16 %v1444
        %v2995 = vunpack.c.l.b16 %v1445
        %v2996 = vunpack.c.h.b16 %v1445
        %v2997 = vunpack.c.l.b16 %v1446
        %v2998 = vunpack.c.h.b16 %v1446
        %v2999 = vunpack.c.l.b16 %v1447
        %v3000 = vunpack.c.h.b16 %v1447
        %v3001 = vunpack.c.l.b16 %v1448
        %v3002 = vunpack.c.h.b16 %v1448
        %v3003 = vunpack.c.l.b16 %v1449
        %v3004 = vunpack.c.h.b16 %v1449
        %v3005 = vunpack.c.l.b16 %v1450
        %v3006 = vunpack.c.h.b16 %v1450
        %v3007 = vunpack.c.l.b16 %v1451
        %v3008 = vunpack.c.h.b16 %v1451
        %v3009 = vunpack.c.l.b16 %v1452
        %v3010 = vunpack.c.h.b16 %v1452
        %v3011 = vunpack.c.l.b16 %v1453
        %v3012 = vunpack.c.h.b16 %v1453
        %v3013 = vunpack.c.l.b16 %v1454
        %v3014 = vunpack.c.h.b16 %v1454
        %v3015 = vunpack.c.l.b16 %v1455
        %v3016 = vunpack.c.h.b16 %v1455
        %v3017 = vunpack.c.l.b16 %v1456
        %v3018 = vunpack.c.h.b16 %v1456
        %v3019 = vunpack.c.l.b16 %v1457
        %v3020 = vunpack.c.h.b16 %v1457
        %v3021 = vunpack.c.l.b16 %v1458
        %v3022 = vunpack.c.h.b16 %v1458
        %v3023 = vunpack.c.l.b16 %v1459
        %v3024 = vunpack.c.h.b16 %v1459
        %v3025 = vunpack.c.l.b16 %v1460
        %v3026 = vunpack.c.h.b16 %v1460
        %v3027 = vunpack.c.l.b16 %v1461
        %v3028 = vunpack.c.h.b16 %v1461
        %v3029 = vunpack.c.l.b16 %v1462
        %v3030 = vunpack.c.h.b16 %v1462
        %v3031 = vunpack.c.l.b16 %v1463
        %v3032 = vunpack.c.h.b16 %v1463
        %v3033 = vunpack.c.l.b16 %v1464
        %v3034 = vunpack.c.h.b16 %v1464
        %v3035 = vunpack.c.l.b16 %v1465
        %v3036 = vunpack.c.h.b16 %v1465
        %v3037 = vunpack.c.l.b16 %v1466
        %v3038 = vunpack.c.h.b16 %v1466
        %v3039 = vunpack.c.l.b16 %v1467
        %v3040 = vunpack.c.h.b16 %v1467
        %v3041 = vunpack.c.l.b16 %v1468
        %v3042 = vunpack.c.h.b16 %v1468
        %v3043 = vunpack.c.l.b16 %v1469
        %v3044 = vunpack.c.h.b16 %v1469
        %v3045 = vunpack.c.l.b16 %v1470
        %v3046 = vunpack.c.h.b16 %v1470
        %v3047 = vunpack.c.l.b16 %v1471
        %v3048 = vunpack.c.h.b16 %v1471
        %v3049 = vunpack.c.l.b16 %v1472
        %v3050 = vunpack.c.h.b16 %v1472
        %v3051 = vunpack.c.l.b16 %v1473
        %v3052 = vunpack.c.h.b16 %v1473
        %v3053 = vunpack.c.l.b16 %v1474
        %v3054 = vunpack.c.h.b16 %v1474
        %v3055 = vunpack.c.l.b16 %v1475
        %v3056 = vunpack.c.h.b16 %v1475
        %v3057 = vunpack.c.l.b16 %v1476
        %v3058 = vunpack.c.h.b16 %v1476
        %v3059 = vunpack.c.l.b16 %v1477
        %v3060 = vunpack.c.h.b16 %v1477
        %v3061 = vunpack.c.l.b16 %v1478
        %v3062 = vunpack.c.h.b16 %v1478
        %v3063 = vpack.c.b16 %v2013, %v2007
        %v3064 = vpack.c.b16 %v2014, %v2008
        %v3065 = vpack.c.b16 %v2015, %v2009
        %v3066 = vpack.c.b16 %v2016, %v2010
        %v3067 = vpack.c.b16 %v2017, %v2011
        %v3068 = vpack.c.b16 %v2018, %v2012
        %v3069 = vpack.c.b16 %v2025, %v2019
        %v3070 = vpack.c.b16 %v2026, %v2020
        %v3071 = vpack.c.b16 %v2027, %v2021
        %v3072 = vpack.c.b16 %v2028, %v2022
        %v3073 = vpack.c.b16 %v2029, %v2023
        %v3074 = vpack.c.b16 %v2030, %v2024
        %v3075 = vpack.c.b16 %v2037, %v2031
        %v3076 = vpack.c.b16 %v2038, %v2032
        %v3077 = vpack.c.b16 %v2039, %v2033
        %v3078 = vpack.c.b16 %v2040, %v2034
        %v3079 = vpack.c.b16 %v2041, %v2035
        %v3080 = vpack.c.b16 %v2042, %v2036
        %v3081 = vpack.c.b16 %v2049, %v2043
        %v3082 = vpack.c.b16 %v2050, %v2044
        %v3083 = vpack.c.b16 %v2051, %v2045
        %v3084 = vpack.c.b16 %v2052, %v2046
        %v3085 = vpack.c.b16 %v2053, %v2047
        %v3086 = vpack.c.b16 %v2054, %v2048
        %v3087 = vpack.c.b16 %v2061, %v2055
        %v3088 = vpack.c.b16 %v2062, %v2056
        %v3089 = vpack.c.b16 %v2063, %v2057
        %v3090 = vpack.c.b16 %v2064, %v2058
        %v3091 = vpack.c.b16 %v2065, %v2059
        %v3092 = vpack.c.b16 %v2066, %v2060
        %v3093 = vpack.c.b16 %v2073, %v2067
        %v3094 = vpack.c.b16 %v2074, %v2068
        %v3095 = vpack.c.b16 %v2075, %v2069
        %v3096 = vpack.c.b16 %v2076, %v2070
        %v3097 = vpack.c.b16 %v2077, %v2071
        %v3098 = vpack.c.b16 %v2078, %v2072
        %v3099 = vpack.c.b16 %v2085, %v2079
        %v3100 = vpack.c.b16 %v2086, %v2080
        %v3101 = vpack.c.b16 %v2087, %v2081
        %v3102 = vpack.c.b16 %v2088, %v2082
        %v3103 = vpack.c.b16 %v2089, %v2083
        %v3104 = vpack.c.b16 %v2090, %v2084
        %v3105 = vpack.c.b16 %v2097, %v2091
        %v3106 = vpack.c.b16 %v2098, %v2092
        %v3107 = vpack.c.b16 %v2099, %v2093
        %v3108 = vpack.c.b16 %v2100, %v2094
        %v3109 = vpack.c.b16 %v2101, %v2095
        %v3110 = vpack.c.b16 %v2102, %v2096
        %v3111 = vpack.c.b16 %v2109, %v2103
        %v3112 = vpack.c.b16 %v2110, %v2104
        %v3113 = vpack.c.b16 %v2111, %v2105
        %v3114 = vpack.c.b16 %v2112, %v2106
        %v3115 = vpack.c.b16 %v2113, %v2107
        %v3116 = vpack.c.b16 %v2114, %v2108
        %v3117 = vpack.c.b16 %v2121, %v2115
        %v3118 = vpack.c.b16 %v2122, %v2116
        %v3119 = vpack.c.b16 %v2123, %v2117
        %v3120 = vpack.c.b16 %v2124, %v2118
        %v3121 = vpack.c.b16 %v2125, %v2119
        %v3122 = vpack.c.b16 %v2126, %v2120
        %v3123 = vpack.c.b16 %v2133, %v2127
        %v3124 = vpack.c.b16 %v2134, %v2128
        %v3125 = vpack.c.b16 %v2135, %v2129
        %v3126 = vpack.c.b16 %v2136, %v2130
        %v3127 = vpack.c.b16 %v2137, %v2131
        %v3128 = vpack.c.b16 %v2138, %v2132
        %v3129 = vpack.c.b16 %v2145, %v2139
        %v3130 = vpack.c.b16 %v2146, %v2140
        %v3131 = vpack.c.b16 %v2147, %v2141
        %v3132 = vpack.c.b16 %v2148, %v2142
        %v3133 = vpack.c.b16 %v2149, %v2143
        %v3134 = vpack.c.b16 %v2150, %v2144
        %v3135 = vpack.c.b16 %v2157, %v2151
        %v3136 = vpack.c.b16 %v2158, %v2152
        %v3137 = vpack.c.b16 %v2159, %v2153
        %v3138 = vpack.c.b16 %v2160, %v2154
        %v3139 = vpack.c.b16 %v2161, %v2155
        %v3140 = vpack.c.b16 %v2162, %v2156
        %v3141 = vpack.c.b16 %v2169, %v2163
        %v3142 = vpack.c.b16 %v2170, %v2164
        %v3143 = vpack.c.b16 %v2171, %v2165
        %v3144 = vpack.c.b16 %v2172, %v2166
        %v3145 = vpack.c.b16 %v2173, %v2167
        %v3146 = vpack.c.b16 %v2174, %v2168
        %v3147 = vpack.c.b16 %v2181, %v2175
        %v3148 = vpack.c.b16 %v2182, %v2176
        %v3149 = vpack.c.b16 %v2183, %v2177
        %v3150 = vpack.c.b16 %v2184, %v2178
        %v3151 = vpack.c.b16 %v2185, %v2179
        %v3152 = vpack.c.b16 %v2186, %v2180
        %v3153 = vpack.c.b16 %v2193, %v2187
        %v3154 = vpack.c.b16 %v2194, %v2188
        %v3155 = vpack.c.b16 %v2195, %v2189
        %v3156 = vpack.c.b16 %v2196, %v2190
        %v3157 = vpack.c.b16 %v2197, %v2191
        %v3158 = vpack.c.b16 %v2198, %v2192
        %v3159 = vpack.c.b16 %v2205, %v2199
        %v3160 = vpack.c.b16 %v2206, %v2200
        %v3161 = vpack.c.b16 %v2207, %v2201
        %v3162 = vpack.c.b16 %v2208, %v2202
        %v3163 = vpack.c.b16 %v2209, %v2203
        %v3164 = vpack.c.b16 %v2210, %v2204
        %v3165 = vpack.c.b16 %v2217, %v2211
        %v3166 = vpack.c.b16 %v2218, %v2212
        %v3167 = vpack.c.b16 %v2219, %v2213
        %v3168 = vpack.c.b16 %v2220, %v2214
        %v3169 = vpack.c.b16 %v2221, %v2215
        %v3170 = vpack.c.b16 %v2222, %v2216
        %v3171 = vpack.c.b16 %v2229, %v2223
        %v3172 = vpack.c.b16 %v2230, %v2224
        %v3173 = vpack.c.b16 %v2231, %v2225
        %v3174 = vpack.c.b16 %v2232, %v2226
        %v3175 = vpack.c.b16 %v2233, %v2227
        %v3176 = vpack.c.b16 %v2234, %v2228
        %v3177 = vpack.c.b16 %v2241, %v2235
        %v3178 = vpack.c.b16 %v2242, %v2236
        %v3179 = vpack.c.b16 %v2243, %v2237
        %v3180 = vpack.c.b16 %v2244, %v2238
        %v3181 = vpack.c.b16 %v2245, %v2239
        %v3182 = vpack.c.b16 %v2246, %v2240
        %v3183 = vpack.c.b16 %v2253, %v2247
        %v3184 = vpack.c.b16 %v2254, %v2248
        %v3185 = vpack.c.b16 %v2255, %v2249
        %v3186 = vpack.c.b16 %v2256, %v2250
        %v3187 = vpack.c.b16 %v2257, %v2251
        %v3188 = vpack.c.b16 %v2258, %v2252
        %v3189 = vpack.c.b16 %v2265, %v2259
        %v3190 = vpack.c.b16 %v2266, %v2260
        %v3191 = vpack.c.b16 %v2267, %v2261
        %v3192 = vpack.c.b16 %v2268, %v2262
        %v3193 = vpack.c.b16 %v2269, %v2263
        %v3194 = vpack.c.b16 %v2270, %v2264
        %v3195 = vpack.c.b16 %v2277, %v2271
        %v3196 = vpack.c.b16 %v2278, %v2272
        %v3197 = vpack.c.b16 %v2279, %v2273
        %v3198 = vpack.c.b16 %v2280, %v2274
        %v3199 = vpack.c.b16 %v2281, %v2275
        %v3200 = vpack.c.b16 %v2282, %v2276
        %v3201 = vpack.c.b16 %v2289, %v2283
        %v3202 = vpack.c.b16 %v2290, %v2284
        %v3203 = vpack.c.b16 %v2291, %v2285
        %v3204 = vpack.c.b16 %v2292, %v2286
        %v3205 = vpack.c.b16 %v2293, %v2287
        %v3206 = vpack.c.b16 %v2294, %v2288
        %v3207 = vpack.c.b16 %v2301, %v2295
        %v3208 = vpack.c.b16 %v2302, %v2296
        %v3209 = vpack.c.b16 %v2303, %v2297
        %v3210 = vpack.c.b16 %v2304, %v2298
        %v3211 = vpack.c.b16 %v2305, %v2299
        %v3212 = vpack.c.b16 %v2306, %v2300
        %v3213 = vpack.c.b16 %v2313, %v2307
        %v3214 = vpack.c.b16 %v2314, %v2308
        %v3215 = vpack.c.b16 %v2315, %v2309
        %v3216 = vpack.c.b16 %v2316, %v2310
        %v3217 = vpack.c.b16 %v2317, %v2311
        %v3218 = vpack.c.b16 %v2318, %v2312
        %v3219 = vpack.c.b16 %v2325, %v2319
        %v3220 = vpack.c.b16 %v2326, %v2320
        %v3221 = vpack.c.b16 %v2327, %v2321
        %v3222 = vpack.c.b16 %v2328, %v2322
        %v3223 = vpack.c.b16 %v2329, %v2323
        %v3224 = vpack.c.b16 %v2330, %v2324
        %v3225 = vpack.c.b16 %v2337, %v2331
        %v3226 = vpack.c.b16 %v2338, %v2332
        %v3227 = vpack.c.b16 %v2339, %v2333
        %v3228 = vpack.c.b16 %v2340, %v2334
        %v3229 = vpack.c.b16 %v2341, %v2335
        %v3230 = vpack.c.b16 %v2342, %v2336
        %v3231 = vpack.c.b16 %v2349, %v2343
        %v3232 = vpack.c.b16 %v2350, %v2344
        %v3233 = vpack.c.b16 %v2351, %v2345
        %v3234 = vpack.c.b16 %v2352, %v2346
        %v3235 = vpack.c.b16 %v2353, %v2347
        %v3236 = vpack.c.b16 %v2354, %v2348
        %v3237 = vpack.c.b16 %v2361, %v2355
        %v3238 = vpack.c.b16 %v2362, %v2356
        %v3239 = vpack.c.b16 %v2363, %v2357
        %v3240 = vpack.c.b16 %v2364, %v2358
        %v3241 = vpack.c.b16 %v2365, %v2359
        %v3242 = vpack.c.b16 %v2366, %v2360
        %v3243 = vpack.c.b16 %v2373, %v2367
        %v3244 = vpack.c.b16 %v2374, %v2368
        %v3245 = vpack.c.b16 %v2375, %v2369
        %v3246 = vpack.c.b16 %v2376, %v2370
        %v3247 = vpack.c.b16 %v2377, %v2371
        %v3248 = vpack.c.b16 %v2378, %v2372
        %v3249 = vpack.c.b16 %v2385, %v2379
        %v3250 = vpack.c.b16 %v2386, %v2380
        %v3251 = vpack.c.b16 %v2387, %v2381
        %v3252 = vpack.c.b16 %v2388, %v2382
        %v3253 = vpack.c.b16 %v2389, %v2383
        %v3254 = vpack.c.b16 %v2390, %v2384
        %v3255 = vpack.c.b16 %v2397, %v2391
        %v3256 = vpack.c.b16 %v2398, %v2392
        %v3257 = vpack.c.b16 %v2399, %v2393
        %v3258 = vpack.c.b16 %v2400, %v2394
        %v3259 = vpack.c.b16 %v2401, %v2395
        %v3260 = vpack.c.b16 %v2402, %v2396
        %v3261 = vpack.c.b16 %v2409, %v2403
        %v3262 = vpack.c.b16 %v2410, %v2404
        %v3263 = vpack.c.b16 %v2411, %v2405
        %v3264 = vpack.c.b16 %v2412, %v2406
        %v3265 = vpack.c.b16 %v2413, %v2407
        %v3266 = vpack.c.b16 %v2414, %v2408
        %v3267 = vpack.c.b16 %v2421, %v2415
        %v3268 = vpack.c.b16 %v2422, %v2416
        %v3269 = vpack.c.b16 %v2423, %v2417
        %v3270 = vpack.c.b16 %v2424, %v2418
        %v3271 = vpack.c.b16 %v2425, %v2419
        %v3272 = vpack.c.b16 %v2426, %v2420
        %v3273 = vpack.c.b16 %v2433, %v2427
        %v3274 = vpack.c.b16 %v2434, %v2428
        %v3275 = vpack.c.b16 %v2435, %v2429
        %v3276 = vpack.c.b16 %v2436, %v2430
        %v3277 = vpack.c.b16 %v2437, %v2431
        %v3278 = vpack.c.b16 %v2438, %v2432
        %v3279 = vpack.c.b16 %v2445, %v2439
        %v3280 = vpack.c.b16 %v2446, %v2440
        %v3281 = vpack.c.b16 %v2447, %v2441
        %v3282 = vpack.c.b16 %v2448, %v2442
        %v3283 = vpack.c.b16 %v2449, %v2443
        %v3284 = vpack.c.b16 %v2450, %v2444
        %v3285 = vpack.c.b16 %v2457, %v2451
        %v3286 = vpack.c.b16 %v2458, %v2452
        %v3287 = vpack.c.b16 %v2459, %v2453
        %v3288 = vpack.c.b16 %v2460, %v2454
        %v3289 = vpack.c.b16 %v2461, %v2455
        %v3290 = vpack.c.b16 %v2462, %v2456
        %v3291 = vpack.c.b16 %v2469, %v2463
        %v3292 = vpack.c.b16 %v2470, %v2464
        %v3293 = vpack.c.b16 %v2471, %v2465
        %v3294 = vpack.c.b16 %v2472, %v2466
        %v3295 = vpack.c.b16 %v2473, %v2467
        %v3296 = vpack.c.b16 %v2474, %v2468
        %v3297 = vpack.c.b16 %v2481, %v2475
        %v3298 = vpack.c.b16 %v2482, %v2476
        %v3299 = vpack.c.b16 %v2483, %v2477
        %v3300 = vpack.c.b16 %v2484, %v2478
        %v3301 = vpack.c.b16 %v2485, %v2479
        %v3302 = vpack.c.b16 %v2486, %v2480
        %v3303 = vpack.c.b16 %v2493, %v2487
        %v3304 = vpack.c.b16 %v2494, %v2488
        %v3305 = vpack.c.b16 %v2495, %v2489
        %v3306 = vpack.c.b16 %v2496, %v2490
        %v3307 = vpack.c.b16 %v2497, %v2491
        %v3308 = vpack.c.b16 %v2498, %v2492
        %v3309 = vpack.c.b16 %v2505, %v2499
        %v3310 = vpack.c.b16 %v2506, %v2500
        %v3311 = vpack.c.b16 %v2507, %v2501
        %v3312 = vpack.c.b16 %v2508, %v2502
        %v3313 = vpack.c.b16 %v2509, %v2503
        %v3314 = vpack.c.b16 %v2510, %v2504
        %v3315 = vpack.c.b16 %v2517, %v2511
        %v3316 = vpack.c.b16 %v2518, %v2512
        %v3317 = vpack.c.b16 %v2519, %v2513
        %v3318 = vpack.c.b16 %v2520, %v2514
        %v3319 = vpack.c.b16 %v2521, %v2515
        %v3320 = vpack.c.b16 %v2522, %v2516
        %v3321 = vpack.c.b16 %v2529, %v2523
        %v3322 = vpack.c.b16 %v2530, %v2524
        %v3323 = vpack.c.b16 %v2531, %v2525
        %v3324 = vpack.c.b16 %v2532, %v2526
        %v3325 = vpack.c.b16 %v2533, %v2527
        %v3326 = vpack.c.b16 %v2534, %v2528
        %v3327 = vpack.c.b16 %v2541, %v2535
        %v3328 = vpack.c.b16 %v2542, %v2536
        %v3329 = vpack.c.b16 %v2543, %v2537
        %v3330 = vpack.c.b16 %v2544, %v2538
        %v3331 = vpack.c.b16 %v2545, %v2539
        %v3332 = vpack.c.b16 %v2546, %v2540
        %v3333 = vpack.c.b16 %v2553, %v2547
        %v3334 = vpack.c.b16 %v2554, %v2548
        %v3335 = vpack.c.b16 %v2555, %v2549
        %v3336 = vpack.c.b16 %v2556, %v2550
        %v3337 = vpack.c.b16 %v2557, %v2551
        %v3338 = vpack.c.b16 %v2558, %v2552
        %v3339 = vpack.c.b16 %v2565, %v2559
        %v3340 = vpack.c.b16 %v2566, %v2560
        %v3341 = vpack.c.b16 %v2567, %v2561
        %v3342 = vpack.c.b16 %v2568, %v2562
        %v3343 = vpack.c.b16 %v2569, %v2563
        %v3344 = vpack.c.b16 %v2570, %v2564
        %v3345 = vpack.c.b16 %v2577, %v2571
        %v3346 = vpack.c.b16 %v2578, %v2572
        %v3347 = vpack.c.b16 %v2579, %v2573
        %v3348 = vpack.c.b16 %v2580, %v2574
        %v3349 = vpack.c.b16 %v2581, %v2575
        %v3350 = vpack.c.b16 %v2582, %v2576
        %v3351 = vpack.c.b16 %v2589, %v2583
        %v3352 = vpack.c.b16 %v2590, %v2584
        %v3353 = vpack.c.b16 %v2591, %v2585
        %v3354 = vpack.c.b16 %v2592, %v2586
        %v3355 = vpack.c.b16 %v2593, %v2587
        %v3356 = vpack.c.b16 %v2594, %v2588
        %v3357 = vpack.c.b16 %v2601, %v2595
        %v3358 = vpack.c.b16 %v2602, %v2596
        %v3359 = vpack.c.b16 %v2603, %v2597
        %v3360 = vpack.c.b16 %v2604, %v2598
        %v3361 = vpack.c.b16 %v2605, %v2599
        %v3362 = vpack.c.b16 %v2606, %v2600
        %v3363 = vpack.c.b16 %v2613, %v2607
        %v3364 = vpack.c.b16 %v2614, %v2608
        %v3365 = vpack.c.b16 %v2615, %v2609
        %v3366 = vpack.c.b16 %v2616, %v2610
        %v3367 = vpack.c.b16 %v2617, %v2611
        %v3368 = vpack.c.b16 %v2618, %v2612
        %v3369 = vpack.c.b16 %v2625, %v2619
        %v3370 = vpack.c.b16 %v2626, %v2620
        %v3371 = vpack.c.b16 %v2627, %v2621
        %v3372 = vpack.c.b16 %v2628, %v2622
        %v3373 = vpack.c.b16 %v2629, %v2623
        %v3374 = vpack.c.b16 %v2630, %v2624
        %v3375 = vpack.c.b16 %v2637, %v2631
        %v3376 = vpack.c.b16 %v2638, %v2632
        %v3377 = vpack.c.b16 %v2639, %v2633
        %v3378 = vpack.c.b16 %v2640, %v2634
        %v3379 = vpack.c.b16 %v2641, %v2635
        %v3380 = vpack.c.b16 %v2642, %v2636
        %v3381 = vpack.c.b16 %v2649, %v2643
        %v3382 = vpack.c.b16 %v2650, %v2644
        %v3383 = vpack.c.b16 %v2651, %v2645
        %v3384 = vpack.c.b16 %v2652, %v2646
        %v3385 = vpack.c.b16 %v2653, %v2647
        %v3386 = vpack.c.b16 %v2654, %v2648
        %v3387 = vpack.c.b16 %v2661, %v2655
        %v3388 = vpack.c.b16 %v2662, %v2656
        %v3389 = vpack.c.b16 %v2663, %v2657
        %v3390 = vpack.c.b16 %v2664, %v2658
        %v3391 = vpack.c.b16 %v2665, %v2659
        %v3392 = vpack.c.b16 %v2666, %v2660
        %v3393 = vpack.c.b16 %v2673, %v2667
        %v3394 = vpack.c.b16 %v2674, %v2668
        %v3395 = vpack.c.b16 %v2675, %v2669
        %v3396 = vpack.c.b16 %v2676, %v2670
        %v3397 = vpack.c.b16 %v2677, %v2671
        %v3398 = vpack.c.b16 %v2678, %v2672
        %v3399 = vpack.c.b16 %v2685, %v2679
        %v3400 = vpack.c.b16 %v2686, %v2680
        %v3401 = vpack.c.b16 %v2687, %v2681
        %v3402 = vpack.c.b16 %v2688, %v2682
        %v3403 = vpack.c.b16 %v2689, %v2683
        %v3404 = vpack.c.b16 %v2690, %v2684
        %v3405 = vpack.c.b16 %v2697, %v2691
        %v3406 = vpack.c.b16 %v2698, %v2692
        %v3407 = vpack.c.b16 %v2699, %v2693
        %v3408 = vpack.c.b16 %v2700, %v2694
        %v3409 = vpack.c.b16 %v2701, %v2695
        %v3410 = vpack.c.b16 %v2702, %v2696
        %v3411 = vpack.c.b16 %v2709, %v2703
        %v3412 = vpack.c.b16 %v2710, %v2704
        %v3413 = vpack.c.b16 %v2711, %v2705
        %v3414 = vpack.c.b16 %v2712, %v2706
        %v3415 = vpack.c.b16 %v2713, %v2707
        %v3416 = vpack.c.b16 %v2714, %v2708
        %v3417 = vpack.c.b16 %v2721, %v2715
        %v3418 = vpack.c.b16 %v2722, %v2716
        %v3419 = vpack.c.b16 %v2723, %v2717
        %v3420 = vpack.c.b16 %v2724, %v2718
        %v3421 = vpack.c.b16 %v2725, %v2719
        %v3422 = vpack.c.b16 %v2726, %v2720
        %v3423 = vpack.c.b16 %v2733, %v2727
        %v3424 = vpack.c.b16 %v2734, %v2728
        %v3425 = vpack.c.b16 %v2735, %v2729
        %v3426 = vpack.c.b16 %v2736, %v2730
        %v3427 = vpack.c.b16 %v2737, %v2731
        %v3428 = vpack.c.b16 %v2738, %v2732
        %v3429 = vpack.c.b16 %v2745, %v2739
        %v3430 = vpack.c.b16 %v2746, %v2740
        %v3431 = vpack.c.b16 %v2747, %v2741
        %v3432 = vpack.c.b16 %v2748, %v2742
        %v3433 = vpack.c.b16 %v2749, %v2743
        %v3434 = vpack.c.b16 %v2750, %v2744
        %v3435 = vpack.c.b16 %v2757, %v2751
        %v3436 = vpack.c.b16 %v2758, %v2752
        %v3437 = vpack.c.b16 %v2759, %v2753
        %v3438 = vpack.c.b16 %v2760, %v2754
        %v3439 = vpack.c.b16 %v2761, %v2755
        %v3440 = vpack.c.b16 %v2762, %v2756
        %v3441 = vpack.c.b16 %v2769, %v2763
        %v3442 = vpack.c.b16 %v2770, %v2764
        %v3443 = vpack.c.b16 %v2771, %v2765
        %v3444 = vpack.c.b16 %v2772, %v2766
        %v3445 = vpack.c.b16 %v2773, %v2767
        %v3446 = vpack.c.b16 %v2774, %v2768
        %v3447 = vpack.c.b16 %v2781, %v2775
        %v3448 = vpack.c.b16 %v2782, %v2776
        %v3449 = vpack.c.b16 %v2783, %v2777
        %v3450 = vpack.c.b16 %v2784, %v2778
        %v3451 = vpack.c.b16 %v2785, %v2779
        %v3452 = vpack.c.b16 %v2786, %v2780
        %v3453 = vpack.c.b16 %v2793, %v2787
        %v3454 = vpack.c.b16 %v2794, %v2788
        %v3455 = vpack.c.b16 %v2795, %v2789
        %v3456 = vpack.c.b16 %v2796, %v2790
        %v3457 = vpack.c.b16 %v2797, %v2791
        %v3458 = vpack.c.b16 %v2798, %v2792
        %v3459 = vpack.c.b16 %v2805, %v2799
        %v3460 = vpack.c.b16 %v2806, %v2800
        %v3461 = vpack.c.b16 %v2807, %v2801
        %v3462 = vpack.c.b16 %v2808, %v2802
        %v3463 = vpack.c.b16 %v2809, %v2803
        %v3464 = vpack.c.b16 %v2810, %v2804
        %v3465 = vpack.c.b16 %v2817, %v2811
        %v3466 = vpack.c.b16 %v2818, %v2812
        %v3467 = vpack.c.b16 %v2819, %v2813
        %v3468 = vpack.c.b16 %v2820, %v2814
        %v3469 = vpack.c.b16 %v2821, %v2815
        %v3470 = vpack.c.b16 %v2822, %v2816
        %v3471 = vpack.c.b16 %v2829, %v2823
        %v3472 = vpack.c.b16 %v2830, %v2824
        %v3473 = vpack.c.b16 %v2831, %v2825
        %v3474 = vpack.c.b16 %v2832, %v2826
        %v3475 = vpack.c.b16 %v2833, %v2827
        %v3476 = vpack.c.b16 %v2834, %v2828
        %v3477 = vpack.c.b16 %v2841, %v2835
        %v3478 = vpack.c.b16 %v2842, %v2836
        %v3479 = vpack.c.b16 %v2843, %v2837
        %v3480 = vpack.c.b16 %v2844, %v2838
        %v3481 = vpack.c.b16 %v2845, %v2839
        %v3482 = vpack.c.b16 %v2846, %v2840
        %v3483 = vpack.c.b16 %v2853, %v2847
        %v3484 = vpack.c.b16 %v2854, %v2848
        %v3485 = vpack.c.b16 %v2855, %v2849
        %v3486 = vpack.c.b16 %v2856, %v2850
        %v3487 = vpack.c.b16 %v2857, %v2851
        %v3488 = vpack.c.b16 %v2858, %v2852
        %v3489 = vpack.c.b16 %v2865, %v2859
        %v3490 = vpack.c.b16 %v2866, %v2860
        %v3491 = vpack.c.b16 %v2867, %v2861
        %v3492 = vpack.c.b16 %v2868, %v2862
        %v3493 = vpack.c.b16 %v2869, %v2863
        %v3494 = vpack.c.b16 %v2870, %v2864
        %v3495 = vpack.c.b16 %v2877, %v2871
        %v3496 = vpack.c.b16 %v2878, %v2872
        %v3497 = vpack.c.b16 %v2879, %v2873
        %v3498 = vpack.c.b16 %v2880, %v2874
        %v3499 = vpack.c.b16 %v2881, %v2875
        %v3500 = vpack.c.b16 %v2882, %v2876
        %v3501 = vpack.c.b16 %v2889, %v2883
        %v3502 = vpack.c.b16 %v2890, %v2884
        %v3503 = vpack.c.b16 %v2891, %v2885
        %v3504 = vpack.c.b16 %v2892, %v2886
        %v3505 = vpack.c.b16 %v2893, %v2887
        %v3506 = vpack.c.b16 %v2894, %v2888
        %v3507 = vpack.c.b16 %v2901, %v2895
        %v3508 = vpack.c.b16 %v2902, %v2896
        %v3509 = vpack.c.b16 %v2903, %v2897
        %v3510 = vpack.c.b16 %v2904, %v2898
        %v3511 = vpack.c.b16 %v2905, %v2899
        %v3512 = vpack.c.b16 %v2906, %v2900
        %v3513 = vpack.c.b16 %v2913, %v2907
        %v3514 = vpack.c.b16 %v2914, %v2908
        %v3515 = vpack.c.b16 %v2915, %v2909
        %v3516 = vpack.c.b16 %v2916, %v2910
        %v3517 = vpack.c.b16 %v2917, %v2911
        %v3518 = vpack.c.b16 %v2918, %v2912
        %v3519 = vpack.c.b16 %v2925, %v2919
        %v3520 = vpack.c.b16 %v2926, %v2920
        %v3521 = vpack.c.b16 %v2927, %v2921
        %v3522 = vpack.c.b16 %v2928, %v2922
        %v3523 = vpack.c.b16 %v2929, %v2923
        %v3524 = vpack.c.b16 %v2930, %v2924
        %v3525 = vpack.c.b16 %v2937, %v2931
        %v3526 = vpack.c.b16 %v2938, %v2932
        %v3527 = vpack.c.b16 %v2939, %v2933
        %v3528 = vpack.c.b16 %v2940, %v2934
        %v3529 = vpack.c.b16 %v2941, %v2935
        %v3530 = vpack.c.b16 %v2942, %v2936
        %v3531 = vpack.c.b16 %v2949, %v2943
        %v3532 = vpack.c.b16 %v2950, %v2944
        %v3533 = vpack.c.b16 %v2951, %v2945
        %v3534 = vpack.c.b16 %v2952, %v2946
        %v3535 = vpack.c.b16 %v2953, %v2947
        %v3536 = vpack.c.b16 %v2954, %v2948
        %v3537 = vpack.c.b16 %v2961, %v2955
        %v3538 = vpack.c.b16 %v2962, %v2956
        %v3539 = vpack.c.b16 %v2963, %v2957
        %v3540 = vpack.c.b16 %v2964, %v2958
        %v3541 = vpack.c.b16 %v2965, %v2959
        %v3542 = vpack.c.b16 %v2966, %v2960
        %v3543 = vpack.c.b16 %v2973, %v2967
        %v3544 = vpack.c.b16 %v2974, %v2968
        %v3545 = vpack.c.b16 %v2975, %v2969
        %v3546 = vpack.c.b16 %v2976, %v2970
        %v3547 = vpack.c.b16 %v2977, %v2971
        %v3548 = vpack.c.b16 %v2978, %v2972
        %v3549 = vpack.c.b16 %v2985, %v2979
        %v3550 = vpack.c.b16 %v2986, %v2980
        %v3551 = vpack.c.b16 %v2987, %v2981
        %v3552 = vpack.c.b16 %v2988, %v2982
        %v3553 = vpack.c.b16 %v2989, %v2983
        %v3554 = vpack.c.b16 %v2990, %v2984
        %v3555 = vpack.c.b16 %v2997, %v2991
        %v3556 = vpack.c.b16 %v2998, %v2992
        %v3557 = vpack.c.b16 %v2999, %v2993
        %v3558 = vpack.c.b16 %v3000, %v2994
        %v3559 = vpack.c.b16 %v3001, %v2995
        %v3560 = vpack.c.b16 %v3002, %v2996
        %v3561 = vpack.c.b16 %v3009, %v3003
        %v3562 = vpack.c.b16 %v3010, %v3004
        %v3563 = vpack.c.b16 %v3011, %v3005
        %v3564 = vpack.c.b16 %v3012, %v3006
        %v3565 = vpack.c.b16 %v3013, %v3007
        %v3566 = vpack.c.b16 %v3014, %v3008
        %v3567 = vpack.c.b16 %v3021, %v3015
        %v3568 = vpack.c.b16 %v3022, %v3016
        %v3569 = vpack.c.b16 %v3023, %v3017
        %v3570 = vpack.c.b16 %v3024, %v3018
        %v3571 = vpack.c.b16 %v3025, %v3019
        %v3572 = vpack.c.b16 %v3026, %v3020
        %v3573 = vpack.c.b16 %v3033, %v3027
        %v3574 = vpack.c.b16 %v3034, %v3028
        %v3575 = vpack.c.b16 %v3035, %v3029
        %v3576 = vpack.c.b16 %v3036, %v3030
        %v3577 = vpack.c.b16 %v3037, %v3031
        %v3578 = vpack.c.b16 %v3038, %v3032
        %v3579 = vpack.c.b16 %v3045, %v3039
        %v3580 = vpack.c.b16 %v3046, %v3040
        %v3581 = vpack.c.b16 %v3047, %v3041
        %v3582 = vpack.c.b16 %v3048, %v3042
        %v3583 = vpack.c.b16 %v3049, %v3043
        %v3584 = vpack.c.b16 %v3050, %v3044
        %v3585 = vpack.c.b16 %v3057, %v3051
        %v3586 = vpack.c.b16 %v3058, %v3052
        %v3587 = vpack.c.b16 %v3059, %v3053
        %v3588 = vpack.c.b16 %v3060, %v3054
        %v3589 = vpack.c.b16 %v3061, %v3055
        %v3590 = vpack.c.b16 %v3062, %v3056
        %4119 = vmatprep.subr.bf16.mxu0 %v3106
        %4120 = vmatpush1.bf16.msra.mxu0 %v3105
        %4121 = vmatprep.subr.bf16.mxu0 %v3100
        %4122 = vmatpush1.bf16.msra.mxu0 %v3099
        %4123 = vmatprep.subr.bf16.mxu0 %v3094
        %4124 = vmatpush1.bf16.msra.mxu0 %v3093
        %4125 = vmatprep.subr.bf16.mxu0 %v3088
        %4126 = vmatpush1.bf16.msra.mxu0 %v3087
        %4127 = vmatprep.subr.bf16.mxu0 %v3082
        %4128 = vmatpush1.bf16.msra.mxu0 %v3081
        %4129 = vmatprep.subr.bf16.mxu0 %v3076
        %4130 = vmatpush1.bf16.msra.mxu0 %v3075
        %4131 = vmatprep.subr.bf16.mxu0 %v3070
        %4132 = vmatpush1.bf16.msra.mxu0 %v3069
        %4133 = vmatprep.subr.bf16.mxu0 %v3064
        %4134 = vmatpush1.bf16.msra.mxu0 %v3063
        %4135 = vmatprep.subr.bf16.mxu0 %v3154
        %4136 = vmatpush2.bf16.msra.mxu0 %v3153
        %4137 = vmatprep.subr.bf16.mxu0 %v3148
        %4138 = vmatpush2.bf16.msra.mxu0 %v3147
        %4139 = vmatprep.subr.bf16.mxu0 %v3142
        %4140 = vmatpush2.bf16.msra.mxu0 %v3141
        %4141 = vmatprep.subr.bf16.mxu0 %v3136
        %4142 = vmatpush2.bf16.msra.mxu0 %v3135
        %4143 = vmatprep.subr.bf16.mxu0 %v3130
        %4144 = vmatpush2.bf16.msra.mxu0 %v3129
        %4145 = vmatprep.subr.bf16.mxu0 %v3124
        %4146 = vmatpush2.bf16.msra.mxu0 %v3123
        %4147 = vmatprep.subr.bf16.mxu0 %v3118
        %4148 = vmatpush2.bf16.msra.mxu0 %v3117
        %4149 = vmatprep.subr.bf16.mxu0 %v3112
        %4150 = vmatpush2.bf16.msra.mxu0 %v3111
        %4151 = vmatprep.mubr.bf16.mxu0 %v930
        %4152 = vmatmul.mubr.bf16.gmra.mxu0 %v929
        %v4153 = vpop.f32.mrf.mxu0
        %v4154 = vadd.f32 0.0, %v4153
        %v4155 = vpop.f32.mrf.mxu0
        %v4156 = vadd.f32 0.0, %v4155
        %v4157 = vpop.f32.mrf.mxu0
        %v4158 = vadd.f32 0.0, %v4157
        %v4159 = vpop.f32.mrf.mxu0
        %v4160 = vadd.f32 0.0, %v4159
        %4161 = vmatprep.mubr.bf16.mxu0 %v941
        %4162 = vmatmul.mubr.bf16.gmra.mxu0 %v940
        %v4163 = vpop.f32.mrf.mxu0
        %v4164 = vadd.f32 0.0, %v4163
        %v4165 = vpop.f32.mrf.mxu0
        %v4166 = vadd.f32 0.0, %v4165
        %v4167 = vpop.f32.mrf.mxu0
        %v4168 = vpop.f32.mrf.mxu0
        %4169 = vdwg.mxu0
        %4170 = vmatprep.subr.bf16.mxu0 %v3202
        %4171 = vmatpush1.bf16.msra.mxu0 %v3201
        %4172 = vmatprep.subr.bf16.mxu0 %v3196
        %4173 = vmatpush1.bf16.msra.mxu0 %v3195
        %4174 = vmatprep.subr.bf16.mxu0 %v3190
        %4175 = vmatpush1.bf16.msra.mxu0 %v3189
        %4176 = vmatprep.subr.bf16.mxu0 %v3184
        %4177 = vmatpush1.bf16.msra.mxu0 %v3183
        %4178 = vmatprep.subr.bf16.mxu0 %v3178
        %4179 = vmatpush1.bf16.msra.mxu0 %v3177
        %4180 = vmatprep.subr.bf16.mxu0 %v3172
        %4181 = vmatpush1.bf16.msra.mxu0 %v3171
        %4182 = vmatprep.subr.bf16.mxu0 %v3166
        %4183 = vmatpush1.bf16.msra.mxu0 %v3165
        %4184 = vmatprep.subr.bf16.mxu0 %v3160
        %4185 = vmatpush1.bf16.msra.mxu0 %v3159
        %4186 = vmatprep.subr.bf16.mxu0 %v3250
        %4187 = vmatpush2.bf16.msra.mxu0 %v3249
        %4188 = vmatprep.subr.bf16.mxu0 %v3244
        %4189 = vmatpush2.bf16.msra.mxu0 %v3243
        %4190 = vmatprep.subr.bf16.mxu0 %v3238
        %4191 = vmatpush2.bf16.msra.mxu0 %v3237
        %4192 = vmatprep.subr.bf16.mxu0 %v3232
        %4193 = vmatpush2.bf16.msra.mxu0 %v3231
        %4194 = vmatprep.subr.bf16.mxu0 %v3226
        %4195 = vmatpush2.bf16.msra.mxu0 %v3225
        %4196 = vmatprep.subr.bf16.mxu0 %v3220
        %4197 = vmatpush2.bf16.msra.mxu0 %v3219
        %4198 = vmatprep.subr.bf16.mxu0 %v3214
        %4199 = vmatpush2.bf16.msra.mxu0 %v3213
        %4200 = vmatprep.subr.bf16.mxu0 %v3208
        %4201 = vmatpush2.bf16.msra.mxu0 %v3207
        %4202 = vmatprep.mubr.bf16.mxu0 %v932
        %4203 = vmatmul.mubr.bf16.gmra.mxu0 %v931
        %v4204 = vpop.f32.mrf.mxu0
        %v4205 = vadd.f32 %v4154, %v4204
        %v4206 = vpop.f32.mrf.mxu0
        %v4207 = vadd.f32 %v4156, %v4206
        %v4208 = vpop.f32.mrf.mxu0
        %v4209 = vadd.f32 %v4158, %v4208
        %v4210 = vpop.f32.mrf.mxu0
        %v4211 = vadd.f32 %v4160, %v4210
        %4212 = vmatprep.mubr.bf16.mxu0 %v943
        %4213 = vmatmul.mubr.bf16.gmra.mxu0 %v942
        %v4214 = vpop.f32.mrf.mxu0
        %v4215 = vadd.f32 %v4164, %v4214
        %v4216 = vpop.f32.mrf.mxu0
        %v4217 = vadd.f32 %v4166, %v4216
        %v4218 = vpop.f32.mrf.mxu0
        %v4219 = vpop.f32.mrf.mxu0
        %4220 = vdwg.mxu0
        %4221 = vmatprep.subr.bf16.mxu0 %v3298
        %4222 = vmatpush1.bf16.msra.mxu0 %v3297
        %4223 = vmatprep.subr.bf16.mxu0 %v3292
        %4224 = vmatpush1.bf16.msra.mxu0 %v3291
        %4225 = vmatprep.subr.bf16.mxu0 %v3286
        %4226 = vmatpush1.bf16.msra.mxu0 %v3285
        %4227 = vmatprep.subr.bf16.mxu0 %v3280
        %4228 = vmatpush1.bf16.msra.mxu0 %v3279
        %4229 = vmatprep.subr.bf16.mxu0 %v3274
        %4230 = vmatpush1.bf16.msra.mxu0 %v3273
        %4231 = vmatprep.subr.bf16.mxu0 %v3268
        %4232 = vmatpush1.bf16.msra.mxu0 %v3267
        %4233 = vmatprep.subr.bf16.mxu0 %v3262
        %4234 = vmatpush1.bf16.msra.mxu0 %v3261
        %4235 = vmatprep.subr.bf16.mxu0 %v3256
        %4236 = vmatpush1.bf16.msra.mxu0 %v3255
        %4237 = vmatprep.subr.bf16.mxu0 %v3346
        %4238 = vmatpush2.bf16.msra.mxu0 %v3345
        %4239 = vmatprep.subr.bf16.mxu0 %v3340
        %4240 = vmatpush2.bf16.msra.mxu0 %v3339
        %4241 = vmatprep.subr.bf16.mxu0 %v3334
        %4242 = vmatpush2.bf16.msra.mxu0 %v3333
        %4243 = vmatprep.subr.bf16.mxu0 %v3328
        %4244 = vmatpush2.bf16.msra.mxu0 %v3327
        %4245 = vmatprep.subr.bf16.mxu0 %v3322
        %4246 = vmatpush2.bf16.msra.mxu0 %v3321
        %4247 = vmatprep.subr.bf16.mxu0 %v3316
        %4248 = vmatpush2.bf16.msra.mxu0 %v3315
        %4249 = vmatprep.subr.bf16.mxu0 %v3310
        %4250 = vmatpush2.bf16.msra.mxu0 %v3309
        %4251 = vmatprep.subr.bf16.mxu0 %v3304
        %4252 = vmatpush2.bf16.msra.mxu0 %v3303
        %4253 = vmatprep.mubr.bf16.mxu0 %v934
        %4254 = vmatmul.mubr.bf16.gmra.mxu0 %v933
        %v4255 = vpop.f32.mrf.mxu0
        %v4256 = vadd.f32 %v4205, %v4255
        %v4257 = vpop.f32.mrf.mxu0
        %v4258 = vadd.f32 %v4207, %v4257
        %v4259 = vpop.f32.mrf.mxu0
        %v4260 = vadd.f32 %v4209, %v4259
        %v4261 = vpop.f32.mrf.mxu0
        %v4262 = vadd.f32 %v4211, %v4261
        %4263 = vmatprep.mubr.bf16.mxu0 %v945
        %4264 = vmatmul.mubr.bf16.gmra.mxu0 %v944
        %v4265 = vpop.f32.mrf.mxu0
        %v4266 = vadd.f32 %v4215, %v4265
        %v4267 = vpop.f32.mrf.mxu0
        %v4268 = vadd.f32 %v4217, %v4267
        %v4269 = vpop.f32.mrf.mxu0
        %v4270 = vpop.f32.mrf.mxu0
        %4271 = vdwg.mxu0
        %4272 = vmatprep.subr.bf16.mxu0 %v3394
        %4273 = vmatpush1.bf16.msra.mxu0 %v3393
        %4274 = vmatprep.subr.bf16.mxu0 %v3388
        %4275 = vmatpush1.bf16.msra.mxu0 %v3387
        %4276 = vmatprep.subr.bf16.mxu0 %v3382
        %4277 = vmatpush1.bf16.msra.mxu0 %v3381
        %4278 = vmatprep.subr.bf16.mxu0 %v3376
        %4279 = vmatpush1.bf16.msra.mxu0 %v3375
        %4280 = vmatprep.subr.bf16.mxu0 %v3370
        %4281 = vmatpush1.bf16.msra.mxu0 %v3369
        %4282 = vmatprep.subr.bf16.mxu0 %v3364
        %4283 = vmatpush1.bf16.msra.mxu0 %v3363
        %4284 = vmatprep.subr.bf16.mxu0 %v3358
        %4285 = vmatpush1.bf16.msra.mxu0 %v3357
        %4286 = vmatprep.subr.bf16.mxu0 %v3352
        %4287 = vmatpush1.bf16.msra.mxu0 %v3351
        %4288 = vmatprep.subr.bf16.mxu0 %v3442
        %4289 = vmatpush2.bf16.msra.mxu0 %v3441
        %4290 = vmatprep.subr.bf16.mxu0 %v3436
        %4291 = vmatpush2.bf16.msra.mxu0 %v3435
        %4292 = vmatprep.subr.bf16.mxu0 %v3430
        %4293 = vmatpush2.bf16.msra.mxu0 %v3429
        %4294 = vmatprep.subr.bf16.mxu0 %v3424
        %4295 = vmatpush2.bf16.msra.mxu0 %v3423
        %4296 = vmatprep.subr.bf16.mxu0 %v3418
        %4297 = vmatpush2.bf16.msra.mxu0 %v3417
        %4298 = vmatprep.subr.bf16.mxu0 %v3412
        %4299 = vmatpush2.bf16.msra.mxu0 %v3411
        %4300 = vmatprep.subr.bf16.mxu0 %v3406
        %4301 = vmatpush2.bf16.msra.mxu0 %v3405
        %4302 = vmatprep.subr.bf16.mxu0 %v3400
        %4303 = vmatpush2.bf16.msra.mxu0 %v3399
        %4304 = vmatprep.mubr.bf16.mxu0 %v936
        %4305 = vmatmul.mubr.bf16.gmra.mxu0 %v935
        %v4306 = vpop.f32.mrf.mxu0
        %v4307 = vadd.f32 %v4256, %v4306
        %v4308 = vpop.f32.mrf.mxu0
        %v4309 = vadd.f32 %v4258, %v4308
        %v4310 = vpop.f32.mrf.mxu0
        %v4311 = vadd.f32 %v4260, %v4310
        %v4312 = vpop.f32.mrf.mxu0
        %v4313 = vadd.f32 %v4262, %v4312
        %4314 = vmatprep.mubr.bf16.mxu0 %v947
        %4315 = vmatmul.mubr.bf16.gmra.mxu0 %v946
        %v4316 = vpop.f32.mrf.mxu0
        %v4317 = vadd.f32 %v4266, %v4316
        %v4318 = vpop.f32.mrf.mxu0
        %v4319 = vadd.f32 %v4268, %v4318
        %v4320 = vpop.f32.mrf.mxu0
        %v4321 = vpop.f32.mrf.mxu0
        %4322 = vdwg.mxu0
        %4323 = vmatprep.subr.bf16.mxu0 %v3490
        %4324 = vmatpush1.bf16.msra.mxu0 %v3489
        %4325 = vmatprep.subr.bf16.mxu0 %v3484
        %4326 = vmatpush1.bf16.msra.mxu0 %v3483
        %4327 = vmatprep.subr.bf16.mxu0 %v3478
        %4328 = vmatpush1.bf16.msra.mxu0 %v3477
        %4329 = vmatprep.subr.bf16.mxu0 %v3472
        %4330 = vmatpush1.bf16.msra.mxu0 %v3471
        %4331 = vmatprep.subr.bf16.mxu0 %v3466
        %4332 = vmatpush1.bf16.msra.mxu0 %v3465
        %4333 = vmatprep.subr.bf16.mxu0 %v3460
        %4334 = vmatpush1.bf16.msra.mxu0 %v3459
        %4335 = vmatprep.subr.bf16.mxu0 %v3454
        %4336 = vmatpush1.bf16.msra.mxu0 %v3453
        %4337 = vmatprep.subr.bf16.mxu0 %v3448
        %4338 = vmatpush1.bf16.msra.mxu0 %v3447
        %4339 = vmatprep.subr.bf16.mxu0 %v3538
        %4340 = vmatpush2.bf16.msra.mxu0 %v3537
        %4341 = vmatprep.subr.bf16.mxu0 %v3532
        %4342 = vmatpush2.bf16.msra.mxu0 %v3531
        %4343 = vmatprep.subr.bf16.mxu0 %v3526
        %4344 = vmatpush2.bf16.msra.mxu0 %v3525
        %4345 = vmatprep.subr.bf16.mxu0 %v3520
        %4346 = vmatpush2.bf16.msra.mxu0 %v3519
        %4347 = vmatprep.subr.bf16.mxu0 %v3514
        %4348 = vmatpush2.bf16.msra.mxu0 %v3513
        %4349 = vmatprep.subr.bf16.mxu0 %v3508
        %4350 = vmatpush2.bf16.msra.mxu0 %v3507
        %4351 = vmatprep.subr.bf16.mxu0 %v3502
        %4352 = vmatpush2.bf16.msra.mxu0 %v3501
        %4353 = vmatprep.subr.bf16.mxu0 %v3496
        %4354 = vmatpush2.bf16.msra.mxu0 %v3495
        %4355 = vmatprep.mubr.bf16.mxu0 %v938
        %4356 = vmatmul.mubr.bf16.gmra.mxu0 %v937
        %v4357 = vpop.f32.mrf.mxu0
        %v4358 = vadd.f32 %v4307, %v4357
        %v4359 = vpop.f32.mrf.mxu0
        %v4360 = vadd.f32 %v4309, %v4359
        %v4361 = vpop.f32.mrf.mxu0
        %v4362 = vadd.f32 %v4311, %v4361
        %v4363 = vpop.f32.mrf.mxu0
        %v4364 = vadd.f32 %v4313, %v4363
        %4365 = vmatprep.mubr.bf16.mxu0 %v949
        %4366 = vmatmul.mubr.bf16.gmra.mxu0 %v948
        %v4367 = vpop.f32.mrf.mxu0
        %v4368 = vadd.f32 %v4317, %v4367
        %v4369 = vpop.f32.mrf.mxu0
        %v4370 = vadd.f32 %v4319, %v4369
        %v4371 = vpop.f32.mrf.mxu0
        %v4372 = vpop.f32.mrf.mxu0
        %4373 = vdwg.mxu0
        %4374 = vmatprep.subr.bf16.mxu0 %v3586
        %4375 = vmatpush1.bf16.msra.mxu0 %v3585
        %4376 = vmatprep.subr.bf16.mxu0 %v3580
        %4377 = vmatpush1.bf16.msra.mxu0 %v3579
        %4378 = vmatprep.subr.bf16.mxu0 %v3574
        %4379 = vmatpush1.bf16.msra.mxu0 %v3573
        %4380 = vmatprep.subr.bf16.mxu0 %v3568
        %4381 = vmatpush1.bf16.msra.mxu0 %v3567
        %4382 = vmatprep.subr.bf16.mxu0 %v3562
        %4383 = vmatpush1.bf16.msra.mxu0 %v3561
        %4384 = vmatprep.subr.bf16.mxu0 %v3556
        %4385 = vmatpush1.bf16.msra.mxu0 %v3555
        %4386 = vmatprep.subr.bf16.mxu0 %v3550
        %4387 = vmatpush1.bf16.msra.mxu0 %v3549
        %4388 = vmatprep.subr.bf16.mxu0 %v3544
        %4389 = vmatpush1.bf16.msra.mxu0 %v3543
        %4390 = vmatprep.subr.bf16.mxu0 0
        %4391 = vmatpush2.bf16.msra.mxu0 0
        %4392 = vmatprep.subr.bf16.mxu0 0
        %4393 = vmatpush2.bf16.msra.mxu0 0
        %4394 = vmatprep.subr.bf16.mxu0 0
        %4395 = vmatpush2.bf16.msra.mxu0 0
        %4396 = vmatprep.subr.bf16.mxu0 0
        %4397 = vmatpush2.bf16.msra.mxu0 0
        %4398 = vmatprep.subr.bf16.mxu0 0
        %4399 = vmatpush2.bf16.msra.mxu0 0
        %4400 = vmatprep.subr.bf16.mxu0 0
        %4401 = vmatpush2.bf16.msra.mxu0 0
        %4402 = vmatprep.subr.bf16.mxu0 0
        %4403 = vmatpush2.bf16.msra.mxu0 0
        %4404 = vmatprep.subr.bf16.mxu0 0
        %4405 = vmatpush2.bf16.msra.mxu0 0
        %4406 = vmatprep.mubr.bf16.mxu0 0
        %4407 = vmatmul.mubr.bf16.gmra.mxu0 %v939
        %v4408 = vpop.f32.mrf.mxu0
        %v4409 = vadd.f32 %v4358, %v4408
        %v4410 = vpop.f32.mrf.mxu0
        %v4411 = vadd.f32 %v4360, %v4410
        %v4412 = vpop.f32.mrf.mxu0
        %v4413 = vadd.f32 %v4362, %v4412
        %v4414 = vpop.f32.mrf.mxu0
        %v4415 = vadd.f32 %v4364, %v4414
        %4416 = vmatprep.mubr.bf16.mxu0 0
        %4417 = vmatmul.mubr.bf16.gmra.mxu0 %v950
        %v4418 = vpop.f32.mrf.mxu0
        %v4419 = vadd.f32 %v4368, %v4418
        %v4420 = vpop.f32.mrf.mxu0
        %v4421 = vadd.f32 %v4370, %v4420
        %v4422 = vpop.f32.mrf.mxu0
        %v4423 = vpop.f32.mrf.mxu0
        %4424 = vdwg.mxu0
        %4425 = vmatprep.subr.bf16.mxu0 %v3108
        %4426 = vmatpush1.bf16.msra.mxu0 %v3107
        %4427 = vmatprep.subr.bf16.mxu0 %v3102
        %4428 = vmatpush1.bf16.msra.mxu0 %v3101
        %4429 = vmatprep.subr.bf16.mxu0 %v3096
        %4430 = vmatpush1.bf16.msra.mxu0 %v3095
        %4431 = vmatprep.subr.bf16.mxu0 %v3090
        %4432 = vmatpush1.bf16.msra.mxu0 %v3089
        %4433 = vmatprep.subr.bf16.mxu0 %v3084
        %4434 = vmatpush1.bf16.msra.mxu0 %v3083
        %4435 = vmatprep.subr.bf16.mxu0 %v3078
        %4436 = vmatpush1.bf16.msra.mxu0 %v3077
        %4437 = vmatprep.subr.bf16.mxu0 %v3072
        %4438 = vmatpush1.bf16.msra.mxu0 %v3071
        %4439 = vmatprep.subr.bf16.mxu0 %v3066
        %4440 = vmatpush1.bf16.msra.mxu0 %v3065
        %4441 = vmatprep.subr.bf16.mxu0 %v3156
        %4442 = vmatpush2.bf16.msra.mxu0 %v3155
        %4443 = vmatprep.subr.bf16.mxu0 %v3150
        %4444 = vmatpush2.bf16.msra.mxu0 %v3149
        %4445 = vmatprep.subr.bf16.mxu0 %v3144
        %4446 = vmatpush2.bf16.msra.mxu0 %v3143
        %4447 = vmatprep.subr.bf16.mxu0 %v3138
        %4448 = vmatpush2.bf16.msra.mxu0 %v3137
        %4449 = vmatprep.subr.bf16.mxu0 %v3132
        %4450 = vmatpush2.bf16.msra.mxu0 %v3131
        %4451 = vmatprep.subr.bf16.mxu0 %v3126
        %4452 = vmatpush2.bf16.msra.mxu0 %v3125
        %4453 = vmatprep.subr.bf16.mxu0 %v3120
        %4454 = vmatpush2.bf16.msra.mxu0 %v3119
        %4455 = vmatprep.subr.bf16.mxu0 %v3114
        %4456 = vmatpush2.bf16.msra.mxu0 %v3113
        %4457 = vmatprep.mubr.bf16.mxu0 %v930
        %4458 = vmatmul.mubr.bf16.gmra.mxu0 %v929
        %v4459 = vpop.f32.mrf.mxu0
        %v4460 = vadd.f32 0.0, %v4459
        %v4461 = vpop.f32.mrf.mxu0
        %v4462 = vadd.f32 0.0, %v4461
        %v4463 = vpop.f32.mrf.mxu0
        %v4464 = vadd.f32 0.0, %v4463
        %v4465 = vpop.f32.mrf.mxu0
        %v4466 = vadd.f32 0.0, %v4465
        %4467 = vmatprep.mubr.bf16.mxu0 %v941
        %4468 = vmatmul.mubr.bf16.gmra.mxu0 %v940
        %v4469 = vpop.f32.mrf.mxu0
        %v4470 = vadd.f32 0.0, %v4469
        %v4471 = vpop.f32.mrf.mxu0
        %v4472 = vadd.f32 0.0, %v4471
        %v4473 = vpop.f32.mrf.mxu0
        %v4474 = vpop.f32.mrf.mxu0
        %4475 = vdwg.mxu0
        %4476 = vmatprep.subr.bf16.mxu0 %v3204
        %4477 = vmatpush1.bf16.msra.mxu0 %v3203
        %4478 = vmatprep.subr.bf16.mxu0 %v3198
        %4479 = vmatpush1.bf16.msra.mxu0 %v3197
        %4480 = vmatprep.subr.bf16.mxu0 %v3192
        %4481 = vmatpush1.bf16.msra.mxu0 %v3191
        %4482 = vmatprep.subr.bf16.mxu0 %v3186
        %4483 = vmatpush1.bf16.msra.mxu0 %v3185
        %4484 = vmatprep.subr.bf16.mxu0 %v3180
        %4485 = vmatpush1.bf16.msra.mxu0 %v3179
        %4486 = vmatprep.subr.bf16.mxu0 %v3174
        %4487 = vmatpush1.bf16.msra.mxu0 %v3173
        %4488 = vmatprep.subr.bf16.mxu0 %v3168
        %4489 = vmatpush1.bf16.msra.mxu0 %v3167
        %4490 = vmatprep.subr.bf16.mxu0 %v3162
        %4491 = vmatpush1.bf16.msra.mxu0 %v3161
        %4492 = vmatprep.subr.bf16.mxu0 %v3252
        %4493 = vmatpush2.bf16.msra.mxu0 %v3251
        %4494 = vmatprep.subr.bf16.mxu0 %v3246
        %4495 = vmatpush2.bf16.msra.mxu0 %v3245
        %4496 = vmatprep.subr.bf16.mxu0 %v3240
        %4497 = vmatpush2.bf16.msra.mxu0 %v3239
        %4498 = vmatprep.subr.bf16.mxu0 %v3234
        %4499 = vmatpush2.bf16.msra.mxu0 %v3233
        %4500 = vmatprep.subr.bf16.mxu0 %v3228
        %4501 = vmatpush2.bf16.msra.mxu0 %v3227
        %4502 = vmatprep.subr.bf16.mxu0 %v3222
        %4503 = vmatpush2.bf16.msra.mxu0 %v3221
        %4504 = vmatprep.subr.bf16.mxu0 %v3216
        %4505 = vmatpush2.bf16.msra.mxu0 %v3215
        %4506 = vmatprep.subr.bf16.mxu0 %v3210
        %4507 = vmatpush2.bf16.msra.mxu0 %v3209
        %4508 = vmatprep.mubr.bf16.mxu0 %v932
        %4509 = vmatmul.mubr.bf16.gmra.mxu0 %v931
        %v4510 = vpop.f32.mrf.mxu0
        %v4511 = vadd.f32 %v4460, %v4510
        %v4512 = vpop.f32.mrf.mxu0
        %v4513 = vadd.f32 %v4462, %v4512
        %v4514 = vpop.f32.mrf.mxu0
        %v4515 = vadd.f32 %v4464, %v4514
        %v4516 = vpop.f32.mrf.mxu0
        %v4517 = vadd.f32 %v4466, %v4516
        %4518 = vmatprep.mubr.bf16.mxu0 %v943
        %4519 = vmatmul.mubr.bf16.gmra.mxu0 %v942
        %v4520 = vpop.f32.mrf.mxu0
        %v4521 = vadd.f32 %v4470, %v4520
        %v4522 = vpop.f32.mrf.mxu0
        %v4523 = vadd.f32 %v4472, %v4522
        %v4524 = vpop.f32.mrf.mxu0
        %v4525 = vpop.f32.mrf.mxu0
        %4526 = vdwg.mxu0
        %4527 = vmatprep.subr.bf16.mxu0 %v3300
        %4528 = vmatpush1.bf16.msra.mxu0 %v3299
        %4529 = vmatprep.subr.bf16.mxu0 %v3294
        %4530 = vmatpush1.bf16.msra.mxu0 %v3293
        %4531 = vmatprep.subr.bf16.mxu0 %v3288
        %4532 = vmatpush1.bf16.msra.mxu0 %v3287
        %4533 = vmatprep.subr.bf16.mxu0 %v3282
        %4534 = vmatpush1.bf16.msra.mxu0 %v3281
        %4535 = vmatprep.subr.bf16.mxu0 %v3276
        %4536 = vmatpush1.bf16.msra.mxu0 %v3275
        %4537 = vmatprep.subr.bf16.mxu0 %v3270
        %4538 = vmatpush1.bf16.msra.mxu0 %v3269
        %4539 = vmatprep.subr.bf16.mxu0 %v3264
        %4540 = vmatpush1.bf16.msra.mxu0 %v3263
        %4541 = vmatprep.subr.bf16.mxu0 %v3258
        %4542 = vmatpush1.bf16.msra.mxu0 %v3257
        %4543 = vmatprep.subr.bf16.mxu0 %v3348
        %4544 = vmatpush2.bf16.msra.mxu0 %v3347
        %4545 = vmatprep.subr.bf16.mxu0 %v3342
        %4546 = vmatpush2.bf16.msra.mxu0 %v3341
        %4547 = vmatprep.subr.bf16.mxu0 %v3336
        %4548 = vmatpush2.bf16.msra.mxu0 %v3335
        %4549 = vmatprep.subr.bf16.mxu0 %v3330
        %4550 = vmatpush2.bf16.msra.mxu0 %v3329
        %4551 = vmatprep.subr.bf16.mxu0 %v3324
        %4552 = vmatpush2.bf16.msra.mxu0 %v3323
        %4553 = vmatprep.subr.bf16.mxu0 %v3318
        %4554 = vmatpush2.bf16.msra.mxu0 %v3317
        %4555 = vmatprep.subr.bf16.mxu0 %v3312
        %4556 = vmatpush2.bf16.msra.mxu0 %v3311
        %4557 = vmatprep.subr.bf16.mxu0 %v3306
        %4558 = vmatpush2.bf16.msra.mxu0 %v3305
        %4559 = vmatprep.mubr.bf16.mxu0 %v934
        %4560 = vmatmul.mubr.bf16.gmra.mxu0 %v933
        %v4561 = vpop.f32.mrf.mxu0
        %v4562 = vadd.f32 %v4511, %v4561
        %v4563 = vpop.f32.mrf.mxu0
        %v4564 = vadd.f32 %v4513, %v4563
        %v4565 = vpop.f32.mrf.mxu0
        %v4566 = vadd.f32 %v4515, %v4565
        %v4567 = vpop.f32.mrf.mxu0
        %v4568 = vadd.f32 %v4517, %v4567
        %4569 = vmatprep.mubr.bf16.mxu0 %v945
        %4570 = vmatmul.mubr.bf16.gmra.mxu0 %v944
        %v4571 = vpop.f32.mrf.mxu0
        %v4572 = vadd.f32 %v4521, %v4571
        %v4573 = vpop.f32.mrf.mxu0
        %v4574 = vadd.f32 %v4523, %v4573
        %v4575 = vpop.f32.mrf.mxu0
        %v4576 = vpop.f32.mrf.mxu0
        %4577 = vdwg.mxu0
        %4578 = vmatprep.subr.bf16.mxu0 %v3396
        %4579 = vmatpush1.bf16.msra.mxu0 %v3395
        %4580 = vmatprep.subr.bf16.mxu0 %v3390
        %4581 = vmatpush1.bf16.msra.mxu0 %v3389
        %4582 = vmatprep.subr.bf16.mxu0 %v3384
        %4583 = vmatpush1.bf16.msra.mxu0 %v3383
        %4584 = vmatprep.subr.bf16.mxu0 %v3378
        %4585 = vmatpush1.bf16.msra.mxu0 %v3377
        %4586 = vmatprep.subr.bf16.mxu0 %v3372
        %4587 = vmatpush1.bf16.msra.mxu0 %v3371
        %4588 = vmatprep.subr.bf16.mxu0 %v3366
        %4589 = vmatpush1.bf16.msra.mxu0 %v3365
        %4590 = vmatprep.subr.bf16.mxu0 %v3360
        %4591 = vmatpush1.bf16.msra.mxu0 %v3359
        %4592 = vmatprep.subr.bf16.mxu0 %v3354
        %4593 = vmatpush1.bf16.msra.mxu0 %v3353
        %4594 = vmatprep.subr.bf16.mxu0 %v3444
        %4595 = vmatpush2.bf16.msra.mxu0 %v3443
        %4596 = vmatprep.subr.bf16.mxu0 %v3438
        %4597 = vmatpush2.bf16.msra.mxu0 %v3437
        %4598 = vmatprep.subr.bf16.mxu0 %v3432
        %4599 = vmatpush2.bf16.msra.mxu0 %v3431
        %4600 = vmatprep.subr.bf16.mxu0 %v3426
        %4601 = vmatpush2.bf16.msra.mxu0 %v3425
        %4602 = vmatprep.subr.bf16.mxu0 %v3420
        %4603 = vmatpush2.bf16.msra.mxu0 %v3419
        %4604 = vmatprep.subr.bf16.mxu0 %v3414
        %4605 = vmatpush2.bf16.msra.mxu0 %v3413
        %4606 = vmatprep.subr.bf16.mxu0 %v3408
        %4607 = vmatpush2.bf16.msra.mxu0 %v3407
        %4608 = vmatprep.subr.bf16.mxu0 %v3402
        %4609 = vmatpush2.bf16.msra.mxu0 %v3401
        %4610 = vmatprep.mubr.bf16.mxu0 %v936
        %4611 = vmatmul.mubr.bf16.gmra.mxu0 %v935
        %v4612 = vpop.f32.mrf.mxu0
        %v4613 = vadd.f32 %v4562, %v4612
        %v4614 = vpop.f32.mrf.mxu0
        %v4615 = vadd.f32 %v4564, %v4614
        %v4616 = vpop.f32.mrf.mxu0
        %v4617 = vadd.f32 %v4566, %v4616
        %v4618 = vpop.f32.mrf.mxu0
        %v4619 = vadd.f32 %v4568, %v4618
        %4620 = vmatprep.mubr.bf16.mxu0 %v947
        %4621 = vmatmul.mubr.bf16.gmra.mxu0 %v946
        %v4622 = vpop.f32.mrf.mxu0
        %v4623 = vadd.f32 %v4572, %v4622
        %v4624 = vpop.f32.mrf.mxu0
        %v4625 = vadd.f32 %v4574, %v4624
        %v4626 = vpop.f32.mrf.mxu0
        %v4627 = vpop.f32.mrf.mxu0
        %4628 = vdwg.mxu0
        %4629 = vmatprep.subr.bf16.mxu0 %v3492
        %4630 = vmatpush1.bf16.msra.mxu0 %v3491
        %4631 = vmatprep.subr.bf16.mxu0 %v3486
        %4632 = vmatpush1.bf16.msra.mxu0 %v3485
        %4633 = vmatprep.subr.bf16.mxu0 %v3480
        %4634 = vmatpush1.bf16.msra.mxu0 %v3479
        %4635 = vmatprep.subr.bf16.mxu0 %v3474
        %4636 = vmatpush1.bf16.msra.mxu0 %v3473
        %4637 = vmatprep.subr.bf16.mxu0 %v3468
        %4638 = vmatpush1.bf16.msra.mxu0 %v3467
        %4639 = vmatprep.subr.bf16.mxu0 %v3462
        %4640 = vmatpush1.bf16.msra.mxu0 %v3461
        %4641 = vmatprep.subr.bf16.mxu0 %v3456
        %4642 = vmatpush1.bf16.msra.mxu0 %v3455
        %4643 = vmatprep.subr.bf16.mxu0 %v3450
        %4644 = vmatpush1.bf16.msra.mxu0 %v3449
        %4645 = vmatprep.subr.bf16.mxu0 %v3540
        %4646 = vmatpush2.bf16.msra.mxu0 %v3539
        %4647 = vmatprep.subr.bf16.mxu0 %v3534
        %4648 = vmatpush2.bf16.msra.mxu0 %v3533
        %4649 = vmatprep.subr.bf16.mxu0 %v3528
        %4650 = vmatpush2.bf16.msra.mxu0 %v3527
        %4651 = vmatprep.subr.bf16.mxu0 %v3522
        %4652 = vmatpush2.bf16.msra.mxu0 %v3521
        %4653 = vmatprep.subr.bf16.mxu0 %v3516
        %4654 = vmatpush2.bf16.msra.mxu0 %v3515
        %4655 = vmatprep.subr.bf16.mxu0 %v3510
        %4656 = vmatpush2.bf16.msra.mxu0 %v3509
        %4657 = vmatprep.subr.bf16.mxu0 %v3504
        %4658 = vmatpush2.bf16.msra.mxu0 %v3503
        %4659 = vmatprep.subr.bf16.mxu0 %v3498
        %4660 = vmatpush2.bf16.msra.mxu0 %v3497
        %4661 = vmatprep.mubr.bf16.mxu0 %v938
        %4662 = vmatmul.mubr.bf16.gmra.mxu0 %v937
        %v4663 = vpop.f32.mrf.mxu0
        %v4664 = vadd.f32 %v4613, %v4663
        %v4665 = vpop.f32.mrf.mxu0
        %v4666 = vadd.f32 %v4615, %v4665
        %v4667 = vpop.f32.mrf.mxu0
        %v4668 = vadd.f32 %v4617, %v4667
        %v4669 = vpop.f32.mrf.mxu0
        %v4670 = vadd.f32 %v4619, %v4669
        %4671 = vmatprep.mubr.bf16.mxu0 %v949
        %4672 = vmatmul.mubr.bf16.gmra.mxu0 %v948
        %v4673 = vpop.f32.mrf.mxu0
        %v4674 = vadd.f32 %v4623, %v4673
        %v4675 = vpop.f32.mrf.mxu0
        %v4676 = vadd.f32 %v4625, %v4675
        %v4677 = vpop.f32.mrf.mxu0
        %v4678 = vpop.f32.mrf.mxu0
        %4679 = vdwg.mxu0
        %4680 = vmatprep.subr.bf16.mxu0 %v3588
        %4681 = vmatpush1.bf16.msra.mxu0 %v3587
        %4682 = vmatprep.subr.bf16.mxu0 %v3582
        %4683 = vmatpush1.bf16.msra.mxu0 %v3581
        %4684 = vmatprep.subr.bf16.mxu0 %v3576
        %4685 = vmatpush1.bf16.msra.mxu0 %v3575
        %4686 = vmatprep.subr.bf16.mxu0 %v3570
        %4687 = vmatpush1.bf16.msra.mxu0 %v3569
        %4688 = vmatprep.subr.bf16.mxu0 %v3564
        %4689 = vmatpush1.bf16.msra.mxu0 %v3563
        %4690 = vmatprep.subr.bf16.mxu0 %v3558
        %4691 = vmatpush1.bf16.msra.mxu0 %v3557
        %4692 = vmatprep.subr.bf16.mxu0 %v3552
        %4693 = vmatpush1.bf16.msra.mxu0 %v3551
        %4694 = vmatprep.subr.bf16.mxu0 %v3546
        %4695 = vmatpush1.bf16.msra.mxu0 %v3545
        %4696 = vmatprep.subr.bf16.mxu0 0
        %4697 = vmatpush2.bf16.msra.mxu0 0
        %4698 = vmatprep.subr.bf16.mxu0 0
        %4699 = vmatpush2.bf16.msra.mxu0 0
        %4700 = vmatprep.subr.bf16.mxu0 0
        %4701 = vmatpush2.bf16.msra.mxu0 0
        %4702 = vmatprep.subr.bf16.mxu0 0
        %4703 = vmatpush2.bf16.msra.mxu0 0
        %4704 = vmatprep.subr.bf16.mxu0 0
        %4705 = vmatpush2.bf16.msra.mxu0 0
        %4706 = vmatprep.subr.bf16.mxu0 0
        %4707 = vmatpush2.bf16.msra.mxu0 0
        %4708 = vmatprep.subr.bf16.mxu0 0
        %4709 = vmatpush2.bf16.msra.mxu0 0
        %4710 = vmatprep.subr.bf16.mxu0 0
        %4711 = vmatpush2.bf16.msra.mxu0 0
        %4712 = vmatprep.mubr.bf16.mxu0 0
        %4713 = vmatmul.mubr.bf16.gmra.mxu0 %v939
        %v4714 = vpop.f32.mrf.mxu0
        %v4715 = vadd.f32 %v4664, %v4714
        %v4716 = vpop.f32.mrf.mxu0
        %v4717 = vadd.f32 %v4666, %v4716
        %v4718 = vpop.f32.mrf.mxu0
        %v4719 = vadd.f32 %v4668, %v4718
        %v4720 = vpop.f32.mrf.mxu0
        %v4721 = vadd.f32 %v4670, %v4720
        %4722 = vmatprep.mubr.bf16.mxu0 0
        %4723 = vmatmul.mubr.bf16.gmra.mxu0 %v950
        %v4724 = vpop.f32.mrf.mxu0
        %v4725 = vadd.f32 %v4674, %v4724
        %v4726 = vpop.f32.mrf.mxu0
        %v4727 = vadd.f32 %v4676, %v4726
        %v4728 = vpop.f32.mrf.mxu0
        %v4729 = vpop.f32.mrf.mxu0
        %4730 = vdwg.mxu0
        %4731 = vmatprep.subr.bf16.mxu0 %v3110
        %4732 = vmatpush1.bf16.msra.mxu0 %v3109
        %4733 = vmatprep.subr.bf16.mxu0 %v3104
        %4734 = vmatpush1.bf16.msra.mxu0 %v3103
        %4735 = vmatprep.subr.bf16.mxu0 %v3098
        %4736 = vmatpush1.bf16.msra.mxu0 %v3097
        %4737 = vmatprep.subr.bf16.mxu0 %v3092
        %4738 = vmatpush1.bf16.msra.mxu0 %v3091
        %4739 = vmatprep.subr.bf16.mxu0 %v3086
        %4740 = vmatpush1.bf16.msra.mxu0 %v3085
        %4741 = vmatprep.subr.bf16.mxu0 %v3080
        %4742 = vmatpush1.bf16.msra.mxu0 %v3079
        %4743 = vmatprep.subr.bf16.mxu0 %v3074
        %4744 = vmatpush1.bf16.msra.mxu0 %v3073
        %4745 = vmatprep.subr.bf16.mxu0 %v3068
        %4746 = vmatpush1.bf16.msra.mxu0 %v3067
        %4747 = vmatprep.subr.bf16.mxu0 %v3158
        %4748 = vmatpush2.bf16.msra.mxu0 %v3157
        %4749 = vmatprep.subr.bf16.mxu0 %v3152
        %4750 = vmatpush2.bf16.msra.mxu0 %v3151
        %4751 = vmatprep.subr.bf16.mxu0 %v3146
        %4752 = vmatpush2.bf16.msra.mxu0 %v3145
        %4753 = vmatprep.subr.bf16.mxu0 %v3140
        %4754 = vmatpush2.bf16.msra.mxu0 %v3139
        %4755 = vmatprep.subr.bf16.mxu0 %v3134
        %4756 = vmatpush2.bf16.msra.mxu0 %v3133
        %4757 = vmatprep.subr.bf16.mxu0 %v3128
        %4758 = vmatpush2.bf16.msra.mxu0 %v3127
        %4759 = vmatprep.subr.bf16.mxu0 %v3122
        %4760 = vmatpush2.bf16.msra.mxu0 %v3121
        %4761 = vmatprep.subr.bf16.mxu0 %v3116
        %4762 = vmatpush2.bf16.msra.mxu0 %v3115
        %4763 = vmatprep.mubr.bf16.mxu0 %v930
        %4764 = vmatmul.mubr.bf16.gmra.mxu0 %v929
        %v4765 = vpop.f32.mrf.mxu0
        %v4766 = vadd.f32 0.0, %v4765
        %v4767 = vpop.f32.mrf.mxu0
        %v4768 = vadd.f32 0.0, %v4767
        %v4769 = vpop.f32.mrf.mxu0
        %v4770 = vadd.f32 0.0, %v4769
        %v4771 = vpop.f32.mrf.mxu0
        %v4772 = vadd.f32 0.0, %v4771
        %4773 = vmatprep.mubr.bf16.mxu0 %v941
        %4774 = vmatmul.mubr.bf16.gmra.mxu0 %v940
        %v4775 = vpop.f32.mrf.mxu0
        %v4776 = vadd.f32 0.0, %v4775
        %v4777 = vpop.f32.mrf.mxu0
        %v4778 = vadd.f32 0.0, %v4777
        %v4779 = vpop.f32.mrf.mxu0
        %v4780 = vpop.f32.mrf.mxu0
        %4781 = vdwg.mxu0
        %4782 = vmatprep.subr.bf16.mxu0 %v3206
        %4783 = vmatpush1.bf16.msra.mxu0 %v3205
        %4784 = vmatprep.subr.bf16.mxu0 %v3200
        %4785 = vmatpush1.bf16.msra.mxu0 %v3199
        %4786 = vmatprep.subr.bf16.mxu0 %v3194
        %4787 = vmatpush1.bf16.msra.mxu0 %v3193
        %4788 = vmatprep.subr.bf16.mxu0 %v3188
        %4789 = vmatpush1.bf16.msra.mxu0 %v3187
        %4790 = vmatprep.subr.bf16.mxu0 %v3182
        %4791 = vmatpush1.bf16.msra.mxu0 %v3181
        %4792 = vmatprep.subr.bf16.mxu0 %v3176
        %4793 = vmatpush1.bf16.msra.mxu0 %v3175
        %4794 = vmatprep.subr.bf16.mxu0 %v3170
        %4795 = vmatpush1.bf16.msra.mxu0 %v3169
        %4796 = vmatprep.subr.bf16.mxu0 %v3164
        %4797 = vmatpush1.bf16.msra.mxu0 %v3163
        %4798 = vmatprep.subr.bf16.mxu0 %v3254
        %4799 = vmatpush2.bf16.msra.mxu0 %v3253
        %4800 = vmatprep.subr.bf16.mxu0 %v3248
        %4801 = vmatpush2.bf16.msra.mxu0 %v3247
        %4802 = vmatprep.subr.bf16.mxu0 %v3242
        %4803 = vmatpush2.bf16.msra.mxu0 %v3241
        %4804 = vmatprep.subr.bf16.mxu0 %v3236
        %4805 = vmatpush2.bf16.msra.mxu0 %v3235
        %4806 = vmatprep.subr.bf16.mxu0 %v3230
        %4807 = vmatpush2.bf16.msra.mxu0 %v3229
        %4808 = vmatprep.subr.bf16.mxu0 %v3224
        %4809 = vmatpush2.bf16.msra.mxu0 %v3223
        %4810 = vmatprep.subr.bf16.mxu0 %v3218
        %4811 = vmatpush2.bf16.msra.mxu0 %v3217
        %4812 = vmatprep.subr.bf16.mxu0 %v3212
        %4813 = vmatpush2.bf16.msra.mxu0 %v3211
        %4814 = vmatprep.mubr.bf16.mxu0 %v932
        %4815 = vmatmul.mubr.bf16.gmra.mxu0 %v931
        %v4816 = vpop.f32.mrf.mxu0
        %v4817 = vadd.f32 %v4766, %v4816
        %v4818 = vpop.f32.mrf.mxu0
        %v4819 = vadd.f32 %v4768, %v4818
        %v4820 = vpop.f32.mrf.mxu0
        %v4821 = vadd.f32 %v4770, %v4820
        %v4822 = vpop.f32.mrf.mxu0
        %v4823 = vadd.f32 %v4772, %v4822
        %4824 = vmatprep.mubr.bf16.mxu0 %v943
        %4825 = vmatmul.mubr.bf16.gmra.mxu0 %v942
        %v4826 = vpop.f32.mrf.mxu0
        %v4827 = vadd.f32 %v4776, %v4826
        %v4828 = vpop.f32.mrf.mxu0
        %v4829 = vadd.f32 %v4778, %v4828
        %v4830 = vpop.f32.mrf.mxu0
        %v4831 = vpop.f32.mrf.mxu0
        %4832 = vdwg.mxu0
        %4833 = vmatprep.subr.bf16.mxu0 %v3302
        %4834 = vmatpush1.bf16.msra.mxu0 %v3301
        %4835 = vmatprep.subr.bf16.mxu0 %v3296
        %4836 = vmatpush1.bf16.msra.mxu0 %v3295
        %4837 = vmatprep.subr.bf16.mxu0 %v3290
        %4838 = vmatpush1.bf16.msra.mxu0 %v3289
        %4839 = vmatprep.subr.bf16.mxu0 %v3284
        %4840 = vmatpush1.bf16.msra.mxu0 %v3283
        %4841 = vmatprep.subr.bf16.mxu0 %v3278
        %4842 = vmatpush1.bf16.msra.mxu0 %v3277
        %4843 = vmatprep.subr.bf16.mxu0 %v3272
        %4844 = vmatpush1.bf16.msra.mxu0 %v3271
        %4845 = vmatprep.subr.bf16.mxu0 %v3266
        %4846 = vmatpush1.bf16.msra.mxu0 %v3265
        %4847 = vmatprep.subr.bf16.mxu0 %v3260
        %4848 = vmatpush1.bf16.msra.mxu0 %v3259
        %4849 = vmatprep.subr.bf16.mxu0 %v3350
        %4850 = vmatpush2.bf16.msra.mxu0 %v3349
        %4851 = vmatprep.subr.bf16.mxu0 %v3344
        %4852 = vmatpush2.bf16.msra.mxu0 %v3343
        %4853 = vmatprep.subr.bf16.mxu0 %v3338
        %4854 = vmatpush2.bf16.msra.mxu0 %v3337
        %4855 = vmatprep.subr.bf16.mxu0 %v3332
        %4856 = vmatpush2.bf16.msra.mxu0 %v3331
        %4857 = vmatprep.subr.bf16.mxu0 %v3326
        %4858 = vmatpush2.bf16.msra.mxu0 %v3325
        %4859 = vmatprep.subr.bf16.mxu0 %v3320
        %4860 = vmatpush2.bf16.msra.mxu0 %v3319
        %4861 = vmatprep.subr.bf16.mxu0 %v3314
        %4862 = vmatpush2.bf16.msra.mxu0 %v3313
        %4863 = vmatprep.subr.bf16.mxu0 %v3308
        %4864 = vmatpush2.bf16.msra.mxu0 %v3307
        %4865 = vmatprep.mubr.bf16.mxu0 %v934
        %4866 = vmatmul.mubr.bf16.gmra.mxu0 %v933
        %v4867 = vpop.f32.mrf.mxu0
        %v4868 = vadd.f32 %v4817, %v4867
        %v4869 = vpop.f32.mrf.mxu0
        %v4870 = vadd.f32 %v4819, %v4869
        %v4871 = vpop.f32.mrf.mxu0
        %v4872 = vadd.f32 %v4821, %v4871
        %v4873 = vpop.f32.mrf.mxu0
        %v4874 = vadd.f32 %v4823, %v4873
        %4875 = vmatprep.mubr.bf16.mxu0 %v945
        %4876 = vmatmul.mubr.bf16.gmra.mxu0 %v944
        %v4877 = vpop.f32.mrf.mxu0
        %v4878 = vadd.f32 %v4827, %v4877
        %v4879 = vpop.f32.mrf.mxu0
        %v4880 = vadd.f32 %v4829, %v4879
        %v4881 = vpop.f32.mrf.mxu0
        %v4882 = vpop.f32.mrf.mxu0
        %4883 = vdwg.mxu0
        %4884 = vmatprep.subr.bf16.mxu0 %v3398
        %4885 = vmatpush1.bf16.msra.mxu0 %v3397
        %4886 = vmatprep.subr.bf16.mxu0 %v3392
        %4887 = vmatpush1.bf16.msra.mxu0 %v3391
        %4888 = vmatprep.subr.bf16.mxu0 %v3386
        %4889 = vmatpush1.bf16.msra.mxu0 %v3385
        %4890 = vmatprep.subr.bf16.mxu0 %v3380
        %4891 = vmatpush1.bf16.msra.mxu0 %v3379
        %4892 = vmatprep.subr.bf16.mxu0 %v3374
        %4893 = vmatpush1.bf16.msra.mxu0 %v3373
        %4894 = vmatprep.subr.bf16.mxu0 %v3368
        %4895 = vmatpush1.bf16.msra.mxu0 %v3367
        %4896 = vmatprep.subr.bf16.mxu0 %v3362
        %4897 = vmatpush1.bf16.msra.mxu0 %v3361
        %4898 = vmatprep.subr.bf16.mxu0 %v3356
        %4899 = vmatpush1.bf16.msra.mxu0 %v3355
        %4900 = vmatprep.subr.bf16.mxu0 %v3446
        %4901 = vmatpush2.bf16.msra.mxu0 %v3445
        %4902 = vmatprep.subr.bf16.mxu0 %v3440
        %4903 = vmatpush2.bf16.msra.mxu0 %v3439
        %4904 = vmatprep.subr.bf16.mxu0 %v3434
        %4905 = vmatpush2.bf16.msra.mxu0 %v3433
        %4906 = vmatprep.subr.bf16.mxu0 %v3428
        %4907 = vmatpush2.bf16.msra.mxu0 %v3427
        %4908 = vmatprep.subr.bf16.mxu0 %v3422
        %4909 = vmatpush2.bf16.msra.mxu0 %v3421
        %4910 = vmatprep.subr.bf16.mxu0 %v3416
        %4911 = vmatpush2.bf16.msra.mxu0 %v3415
        %4912 = vmatprep.subr.bf16.mxu0 %v3410
        %4913 = vmatpush2.bf16.msra.mxu0 %v3409
        %4914 = vmatprep.subr.bf16.mxu0 %v3404
        %4915 = vmatpush2.bf16.msra.mxu0 %v3403
        %4916 = vmatprep.mubr.bf16.mxu0 %v936
        %4917 = vmatmul.mubr.bf16.gmra.mxu0 %v935
        %v4918 = vpop.f32.mrf.mxu0
        %v4919 = vadd.f32 %v4868, %v4918
        %v4920 = vpop.f32.mrf.mxu0
        %v4921 = vadd.f32 %v4870, %v4920
        %v4922 = vpop.f32.mrf.mxu0
        %v4923 = vadd.f32 %v4872, %v4922
        %v4924 = vpop.f32.mrf.mxu0
        %v4925 = vadd.f32 %v4874, %v4924
        %4926 = vmatprep.mubr.bf16.mxu0 %v947
        %4927 = vmatmul.mubr.bf16.gmra.mxu0 %v946
        %v4928 = vpop.f32.mrf.mxu0
        %v4929 = vadd.f32 %v4878, %v4928
        %v4930 = vpop.f32.mrf.mxu0
        %v4931 = vadd.f32 %v4880, %v4930
        %v4932 = vpop.f32.mrf.mxu0
        %v4933 = vpop.f32.mrf.mxu0
        %4934 = vdwg.mxu0
        %4935 = vmatprep.subr.bf16.mxu0 %v3494
        %4936 = vmatpush1.bf16.msra.mxu0 %v3493
        %4937 = vmatprep.subr.bf16.mxu0 %v3488
        %4938 = vmatpush1.bf16.msra.mxu0 %v3487
        %4939 = vmatprep.subr.bf16.mxu0 %v3482
        %4940 = vmatpush1.bf16.msra.mxu0 %v3481
        %4941 = vmatprep.subr.bf16.mxu0 %v3476
        %4942 = vmatpush1.bf16.msra.mxu0 %v3475
        %4943 = vmatprep.subr.bf16.mxu0 %v3470
        %4944 = vmatpush1.bf16.msra.mxu0 %v3469
        %4945 = vmatprep.subr.bf16.mxu0 %v3464
        %4946 = vmatpush1.bf16.msra.mxu0 %v3463
        %4947 = vmatprep.subr.bf16.mxu0 %v3458
        %4948 = vmatpush1.bf16.msra.mxu0 %v3457
        %4949 = vmatprep.subr.bf16.mxu0 %v3452
        %4950 = vmatpush1.bf16.msra.mxu0 %v3451
        %4951 = vmatprep.subr.bf16.mxu0 %v3542
        %4952 = vmatpush2.bf16.msra.mxu0 %v3541
        %4953 = vmatprep.subr.bf16.mxu0 %v3536
        %4954 = vmatpush2.bf16.msra.mxu0 %v3535
        %4955 = vmatprep.subr.bf16.mxu0 %v3530
        %4956 = vmatpush2.bf16.msra.mxu0 %v3529
        %4957 = vmatprep.subr.bf16.mxu0 %v3524
        %4958 = vmatpush2.bf16.msra.mxu0 %v3523
        %4959 = vmatprep.subr.bf16.mxu0 %v3518
        %4960 = vmatpush2.bf16.msra.mxu0 %v3517
        %4961 = vmatprep.subr.bf16.mxu0 %v3512
        %4962 = vmatpush2.bf16.msra.mxu0 %v3511
        %4963 = vmatprep.subr.bf16.mxu0 %v3506
        %4964 = vmatpush2.bf16.msra.mxu0 %v3505
        %4965 = vmatprep.subr.bf16.mxu0 %v3500
        %4966 = vmatpush2.bf16.msra.mxu0 %v3499
        %4967 = vmatprep.mubr.bf16.mxu0 %v938
        %4968 = vmatmul.mubr.bf16.gmra.mxu0 %v937
        %v4969 = vpop.f32.mrf.mxu0
        %v4970 = vadd.f32 %v4919, %v4969
        %v4971 = vpop.f32.mrf.mxu0
        %v4972 = vadd.f32 %v4921, %v4971
        %v4973 = vpop.f32.mrf.mxu0
        %v4974 = vadd.f32 %v4923, %v4973
        %v4975 = vpop.f32.mrf.mxu0
        %v4976 = vadd.f32 %v4925, %v4975
        %4977 = vmatprep.mubr.bf16.mxu0 %v949
        %4978 = vmatmul.mubr.bf16.gmra.mxu0 %v948
        %v4979 = vpop.f32.mrf.mxu0
        %v4980 = vadd.f32 %v4929, %v4979
        %v4981 = vpop.f32.mrf.mxu0
        %v4982 = vadd.f32 %v4931, %v4981
        %v4983 = vpop.f32.mrf.mxu0
        %v4984 = vpop.f32.mrf.mxu0
        %4985 = vdwg.mxu0
        %4986 = vmatprep.subr.bf16.mxu0 %v3590
        %4987 = vmatpush1.bf16.msra.mxu0 %v3589
        %4988 = vmatprep.subr.bf16.mxu0 %v3584
        %4989 = vmatpush1.bf16.msra.mxu0 %v3583
        %4990 = vmatprep.subr.bf16.mxu0 %v3578
        %4991 = vmatpush1.bf16.msra.mxu0 %v3577
        %4992 = vmatprep.subr.bf16.mxu0 %v3572
        %4993 = vmatpush1.bf16.msra.mxu0 %v3571
        %4994 = vmatprep.subr.bf16.mxu0 %v3566
        %4995 = vmatpush1.bf16.msra.mxu0 %v3565
        %4996 = vmatprep.subr.bf16.mxu0 %v3560
        %4997 = vmatpush1.bf16.msra.mxu0 %v3559
        %4998 = vmatprep.subr.bf16.mxu0 %v3554
        %4999 = vmatpush1.bf16.msra.mxu0 %v3553
        %5000 = vmatprep.subr.bf16.mxu0 %v3548
        %5001 = vmatpush1.bf16.msra.mxu0 %v3547
        %5002 = vmatprep.subr.bf16.mxu0 0
        %5003 = vmatpush2.bf16.msra.mxu0 0
        %5004 = vmatprep.subr.bf16.mxu0 0
        %5005 = vmatpush2.bf16.msra.mxu0 0
        %5006 = vmatprep.subr.bf16.mxu0 0
        %5007 = vmatpush2.bf16.msra.mxu0 0
        %5008 = vmatprep.subr.bf16.mxu0 0
        %5009 = vmatpush2.bf16.msra.mxu0 0
        %5010 = vmatprep.subr.bf16.mxu0 0
        %5011 = vmatpush2.bf16.msra.mxu0 0
        %5012 = vmatprep.subr.bf16.mxu0 0
        %5013 = vmatpush2.bf16.msra.mxu0 0
        %5014 = vmatprep.subr.bf16.mxu0 0
        %5015 = vmatpush2.bf16.msra.mxu0 0
        %5016 = vmatprep.subr.bf16.mxu0 0
        %5017 = vmatpush2.bf16.msra.mxu0 0
        %5018 = vmatprep.mubr.bf16.mxu0 0
        %5019 = vmatmul.mubr.bf16.gmra.mxu0 %v939
        %v5020 = vpop.f32.mrf.mxu0
        %v5021 = vadd.f32 %v4970, %v5020
        %v5022 = vpop.f32.mrf.mxu0
        %v5023 = vadd.f32 %v4972, %v5022
        %v5024 = vpop.f32.mrf.mxu0
        %v5025 = vadd.f32 %v4974, %v5024
        %v5026 = vpop.f32.mrf.mxu0
        %v5027 = vadd.f32 %v4976, %v5026
        %5028 = vmatprep.mubr.bf16.mxu0 0
        %5029 = vmatmul.mubr.bf16.gmra.mxu0 %v950
        %v5030 = vpop.f32.mrf.mxu0
        %v5031 = vadd.f32 %v4980, %v5030
        %v5032 = vpop.f32.mrf.mxu0
        %v5033 = vadd.f32 %v4982, %v5032
        %v5034 = vpop.f32.mrf.mxu0
        %v5035 = vpop.f32.mrf.mxu0
        %5036 = vdwg.mxu0
        %v5037 = vadd.f32 %v911, %v4409
        %v5038 = vadd.f32 %v912, %v4411
        %v5039 = vadd.f32 %v913, %v4715
        %v5040 = vadd.f32 %v914, %v4717
        %v5041 = vadd.f32 %v915, %v5021
        %v5042 = vadd.f32 %v916, %v5023
        %v5043 = vadd.f32 %v917, %v4413
        %v5044 = vadd.f32 %v918, %v4415
        %v5045 = vadd.f32 %v919, %v4719
        %v5046 = vadd.f32 %v920, %v4721
        %v5047 = vadd.f32 %v921, %v5025
        %v5048 = vadd.f32 %v922, %v5027
        %v5049 = vadd.f32 %v923, %v4419
        %v5050 = vadd.f32 %v924, %v4421
        %v5051 = vadd.f32 %v925, %v4725
        %v5052 = vadd.f32 %v926, %v4727
        %v5053 = vadd.f32 %v927, %v5031
        %v5054 = vadd.f32 %v928, %v5033
        %5055 = vst [vmem:[#allocation2] sm:$0xff] %v5037
        %5056 = vst [vmem:[#allocation2 + $0x8] sm:$0xff] %v5038
        %5057 = vst [vmem:[#allocation2 + $0x10] sm:$0xff] %v5039
        %5058 = vst [vmem:[#allocation2 + $0x18] sm:$0xff] %v5040
        %5059 = vst [vmem:[#allocation2 + $0x20] sm:$0xff] %v5041
        %vm5060 = vcmask 523264
        %5061 = vst.msk [vmem:[#allocation2 + $0x28] sm:$0xff] %vm5060, %v5042
        %5062 = vst [vmem:[#allocation2 + $0x30] sm:$0xff] %v5043
        %5063 = vst [vmem:[#allocation2 + $0x38] sm:$0xff] %v5044
        %5064 = vst [vmem:[#allocation2 + $0x40] sm:$0xff] %v5045
        %5065 = vst [vmem:[#allocation2 + $0x48] sm:$0xff] %v5046
        %5066 = vst [vmem:[#allocation2 + $0x50] sm:$0xff] %v5047
        %5067 = vst.msk [vmem:[#allocation2 + $0x58] sm:$0xff] %vm5060, %v5048
        %5068 = vst [vmem:[#allocation2 + $0x60] sm:$0xff] %v5049
        %5069 = vst [vmem:[#allocation2 + $0x68] sm:$0xff] %v5050
        %5070 = vst [vmem:[#allocation2 + $0x70] sm:$0xff] %v5051
        %5071 = vst [vmem:[#allocation2 + $0x78] sm:$0xff] %v5052
        %5072 = vst [vmem:[#allocation2 + $0x80] sm:$0xff] %v5053
        %5073 = vst.msk [vmem:[#allocation2 + $0x88] sm:$0xff] %vm5060, %v5054
        %s5074 = scalar_lea.vmem %s399, 12
        %v5075 = vld [vmem:[%s5074] sm:$0xf]
        %v5076 = vld [vmem:[%s5074 + $0x4] sm:$0xf]
        %v5077 = vld [vmem:[%s5074 + $0x8] sm:$0xf]
        %v5081 = vunpack.c.l.b16 %v5075
        %v5082 = vunpack.c.l.b16 %v5076
        %v5083 = vunpack.c.l.b16 %v5077
        %v5084 = vpack.c.b16 %v5082, %v5081
        %v5085 = vpack.c.b16 %v5083, %v5083
        %v5087 = vsel %vm601, %v5084, 0
        %v5090 = vsel %vm601, %v5085, 0
        %5092 = vmatprep.subr.bf16.mxu0 0
        %5093 = vmatpush1.bf16.msra.mxu0 0
        %5094 = vmatprep.subr.bf16.mxu0 0
        %5095 = vmatpush1.bf16.msra.mxu0 0
        %5096 = vmatprep.subr.bf16.mxu0 0
        %5097 = vmatpush1.bf16.msra.mxu0 0
        %5098 = vmatprep.subr.bf16.mxu0 0
        %5099 = vmatpush1.bf16.msra.mxu0 0
        %5100 = vmatprep.subr.bf16.mxu0 0
        %5101 = vmatpush1.bf16.msra.mxu0 0
        %5102 = vmatprep.subr.bf16.mxu0 0
        %5103 = vmatpush1.bf16.msra.mxu0 0
        %5104 = vmatprep.subr.bf16.mxu0 %v569
        %5105 = vmatpush1.bf16.msra.mxu0 %v568
        %5106 = vmatprep.subr.bf16.mxu0 %v558
        %5107 = vmatpush1.bf16.msra.mxu0 %v557
        %5108 = vmatprep.subr.bf16.mxu0 0
        %5109 = vmatpush2.bf16.msra.mxu0 0
        %5110 = vmatprep.subr.bf16.mxu0 0
        %5111 = vmatpush2.bf16.msra.mxu0 0
        %5112 = vmatprep.subr.bf16.mxu0 0
        %5113 = vmatpush2.bf16.msra.mxu0 0
        %5114 = vmatprep.subr.bf16.mxu0 0
        %5115 = vmatpush2.bf16.msra.mxu0 0
        %5116 = vmatprep.subr.bf16.mxu0 0
        %5117 = vmatpush2.bf16.msra.mxu0 0
        %5118 = vmatprep.subr.bf16.mxu0 0
        %5119 = vmatpush2.bf16.msra.mxu0 0
        %5120 = vmatprep.subr.bf16.mxu0 0
        %5121 = vmatpush2.bf16.msra.mxu0 0
        %5122 = vmatprep.subr.bf16.mxu0 0
        %5123 = vmatpush2.bf16.msra.mxu0 0
        %5124 = vmatprep.mubr.bf16.mxu0 0
        %5125 = vmatmul.mubr.bf16.gmra.mxu0 %v5087
        %v5126 = vpop.f32.mrf.mxu0
        %v5127 = vadd.f32 0.0, %v5126
        %v5128 = vpop.f32.mrf.mxu0
        %v5129 = vadd.f32 0.0, %v5128
        %v5130 = vpop.f32.mrf.mxu0
        %v5131 = vadd.f32 0.0, %v5130
        %v5132 = vpop.f32.mrf.mxu0
        %v5133 = vadd.f32 0.0, %v5132
        %5134 = vmatprep.mubr.bf16.mxu0 0
        %5135 = vmatmul.mubr.bf16.gmra.mxu0 %v5090
        %v5136 = vpop.f32.mrf.mxu0
        %v5137 = vadd.f32 0.0, %v5136
        %v5138 = vpop.f32.mrf.mxu0
        %v5139 = vadd.f32 0.0, %v5138
        %v5140 = vpop.f32.mrf.mxu0
        %v5141 = vpop.f32.mrf.mxu0
        %5142 = vdwg.mxu0
        %5143 = vmatprep.subr.bf16.mxu0 0
        %5144 = vmatpush1.bf16.msra.mxu0 0
        %5145 = vmatprep.subr.bf16.mxu0 0
        %5146 = vmatpush1.bf16.msra.mxu0 0
        %5147 = vmatprep.subr.bf16.mxu0 0
        %5148 = vmatpush1.bf16.msra.mxu0 0
        %5149 = vmatprep.subr.bf16.mxu0 0
        %5150 = vmatpush1.bf16.msra.mxu0 0
        %5151 = vmatprep.subr.bf16.mxu0 0
        %5152 = vmatpush1.bf16.msra.mxu0 0
        %5153 = vmatprep.subr.bf16.mxu0 0
        %5154 = vmatpush1.bf16.msra.mxu0 0
        %5155 = vmatprep.subr.bf16.mxu0 %v571
        %5156 = vmatpush1.bf16.msra.mxu0 %v570
        %5157 = vmatprep.subr.bf16.mxu0 %v560
        %5158 = vmatpush1.bf16.msra.mxu0 %v559
        %5159 = vmatprep.subr.bf16.mxu0 0
        %5160 = vmatpush2.bf16.msra.mxu0 0
        %5161 = vmatprep.subr.bf16.mxu0 0
        %5162 = vmatpush2.bf16.msra.mxu0 0
        %5163 = vmatprep.subr.bf16.mxu0 0
        %5164 = vmatpush2.bf16.msra.mxu0 0
        %5165 = vmatprep.subr.bf16.mxu0 0
        %5166 = vmatpush2.bf16.msra.mxu0 0
        %5167 = vmatprep.subr.bf16.mxu0 0
        %5168 = vmatpush2.bf16.msra.mxu0 0
        %5169 = vmatprep.subr.bf16.mxu0 0
        %5170 = vmatpush2.bf16.msra.mxu0 0
        %5171 = vmatprep.subr.bf16.mxu0 0
        %5172 = vmatpush2.bf16.msra.mxu0 0
        %5173 = vmatprep.subr.bf16.mxu0 0
        %5174 = vmatpush2.bf16.msra.mxu0 0
        %5175 = vmatprep.mubr.bf16.mxu0 0
        %5176 = vmatmul.mubr.bf16.gmra.mxu0 %v5087
        %v5177 = vpop.f32.mrf.mxu0
        %v5178 = vadd.f32 0.0, %v5177
        %v5179 = vpop.f32.mrf.mxu0
        %v5180 = vadd.f32 0.0, %v5179
        %v5181 = vpop.f32.mrf.mxu0
        %v5182 = vadd.f32 0.0, %v5181
        %v5183 = vpop.f32.mrf.mxu0
        %v5184 = vadd.f32 0.0, %v5183
        %5185 = vmatprep.mubr.bf16.mxu0 0
        %5186 = vmatmul.mubr.bf16.gmra.mxu0 %v5090
        %v5187 = vpop.f32.mrf.mxu0
        %v5188 = vadd.f32 0.0, %v5187
        %v5189 = vpop.f32.mrf.mxu0
        %v5190 = vadd.f32 0.0, %v5189
        %v5191 = vpop.f32.mrf.mxu0
        %v5192 = vpop.f32.mrf.mxu0
        %5193 = vdwg.mxu0
        %5194 = vmatprep.subr.bf16.mxu0 0
        %5195 = vmatpush1.bf16.msra.mxu0 0
        %5196 = vmatprep.subr.bf16.mxu0 0
        %5197 = vmatpush1.bf16.msra.mxu0 0
        %5198 = vmatprep.subr.bf16.mxu0 0
        %5199 = vmatpush1.bf16.msra.mxu0 0
        %5200 = vmatprep.subr.bf16.mxu0 0
        %5201 = vmatpush1.bf16.msra.mxu0 0
        %5202 = vmatprep.subr.bf16.mxu0 0
        %5203 = vmatpush1.bf16.msra.mxu0 0
        %5204 = vmatprep.subr.bf16.mxu0 0
        %5205 = vmatpush1.bf16.msra.mxu0 0
        %5206 = vmatprep.subr.bf16.mxu0 %v573
        %5207 = vmatpush1.bf16.msra.mxu0 %v572
        %5208 = vmatprep.subr.bf16.mxu0 %v562
        %5209 = vmatpush1.bf16.msra.mxu0 %v561
        %5210 = vmatprep.subr.bf16.mxu0 0
        %5211 = vmatpush2.bf16.msra.mxu0 0
        %5212 = vmatprep.subr.bf16.mxu0 0
        %5213 = vmatpush2.bf16.msra.mxu0 0
        %5214 = vmatprep.subr.bf16.mxu0 0
        %5215 = vmatpush2.bf16.msra.mxu0 0
        %5216 = vmatprep.subr.bf16.mxu0 0
        %5217 = vmatpush2.bf16.msra.mxu0 0
        %5218 = vmatprep.subr.bf16.mxu0 0
        %5219 = vmatpush2.bf16.msra.mxu0 0
        %5220 = vmatprep.subr.bf16.mxu0 0
        %5221 = vmatpush2.bf16.msra.mxu0 0
        %5222 = vmatprep.subr.bf16.mxu0 0
        %5223 = vmatpush2.bf16.msra.mxu0 0
        %5224 = vmatprep.subr.bf16.mxu0 0
        %5225 = vmatpush2.bf16.msra.mxu0 0
        %5226 = vmatprep.mubr.bf16.mxu0 0
        %5227 = vmatmul.mubr.bf16.gmra.mxu0 %v5087
        %v5228 = vpop.f32.mrf.mxu0
        %v5229 = vadd.f32 0.0, %v5228
        %v5230 = vpop.f32.mrf.mxu0
        %v5231 = vadd.f32 0.0, %v5230
        %v5232 = vpop.f32.mrf.mxu0
        %v5233 = vadd.f32 0.0, %v5232
        %v5234 = vpop.f32.mrf.mxu0
        %v5235 = vadd.f32 0.0, %v5234
        %5236 = vmatprep.mubr.bf16.mxu0 0
        %5237 = vmatmul.mubr.bf16.gmra.mxu0 %v5090
        %v5238 = vpop.f32.mrf.mxu0
        %v5239 = vadd.f32 0.0, %v5238
        %v5240 = vpop.f32.mrf.mxu0
        %v5241 = vadd.f32 0.0, %v5240
        %v5242 = vpop.f32.mrf.mxu0
        %v5243 = vpop.f32.mrf.mxu0
        %5244 = vdwg.mxu0
        %5245 = vmatprep.subr.bf16.mxu0 0
        %5246 = vmatpush1.bf16.msra.mxu0 0
        %5247 = vmatprep.subr.bf16.mxu0 0
        %5248 = vmatpush1.bf16.msra.mxu0 0
        %5249 = vmatprep.subr.bf16.mxu0 0
        %5250 = vmatpush1.bf16.msra.mxu0 0
        %5251 = vmatprep.subr.bf16.mxu0 0
        %5252 = vmatpush1.bf16.msra.mxu0 0
        %5253 = vmatprep.subr.bf16.mxu0 0
        %5254 = vmatpush1.bf16.msra.mxu0 0
        %5255 = vmatprep.subr.bf16.mxu0 0
        %5256 = vmatpush1.bf16.msra.mxu0 0
        %5257 = vmatprep.subr.bf16.mxu0 %v575
        %5258 = vmatpush1.bf16.msra.mxu0 %v574
        %5259 = vmatprep.subr.bf16.mxu0 %v564
        %5260 = vmatpush1.bf16.msra.mxu0 %v563
        %5261 = vmatprep.subr.bf16.mxu0 0
        %5262 = vmatpush2.bf16.msra.mxu0 0
        %5263 = vmatprep.subr.bf16.mxu0 0
        %5264 = vmatpush2.bf16.msra.mxu0 0
        %5265 = vmatprep.subr.bf16.mxu0 0
        %5266 = vmatpush2.bf16.msra.mxu0 0
        %5267 = vmatprep.subr.bf16.mxu0 0
        %5268 = vmatpush2.bf16.msra.mxu0 0
        %5269 = vmatprep.subr.bf16.mxu0 0
        %5270 = vmatpush2.bf16.msra.mxu0 0
        %5271 = vmatprep.subr.bf16.mxu0 0
        %5272 = vmatpush2.bf16.msra.mxu0 0
        %5273 = vmatprep.subr.bf16.mxu0 0
        %5274 = vmatpush2.bf16.msra.mxu0 0
        %5275 = vmatprep.subr.bf16.mxu0 0
        %5276 = vmatpush2.bf16.msra.mxu0 0
        %5277 = vmatprep.mubr.bf16.mxu0 0
        %5278 = vmatmul.mubr.bf16.gmra.mxu0 %v5087
        %v5279 = vpop.f32.mrf.mxu0
        %v5280 = vadd.f32 0.0, %v5279
        %v5281 = vpop.f32.mrf.mxu0
        %v5282 = vadd.f32 0.0, %v5281
        %v5283 = vpop.f32.mrf.mxu0
        %v5284 = vadd.f32 0.0, %v5283
        %v5285 = vpop.f32.mrf.mxu0
        %v5286 = vadd.f32 0.0, %v5285
        %5287 = vmatprep.mubr.bf16.mxu0 0
        %5288 = vmatmul.mubr.bf16.gmra.mxu0 %v5090
        %v5289 = vpop.f32.mrf.mxu0
        %v5290 = vadd.f32 0.0, %v5289
        %v5291 = vpop.f32.mrf.mxu0
        %v5292 = vadd.f32 0.0, %v5291
        %v5293 = vpop.f32.mrf.mxu0
        %v5294 = vpop.f32.mrf.mxu0
        %5295 = vdwg.mxu0
        %5296 = vmatprep.subr.bf16.mxu0 0
        %5297 = vmatpush1.bf16.msra.mxu0 0
        %5298 = vmatprep.subr.bf16.mxu0 0
        %5299 = vmatpush1.bf16.msra.mxu0 0
        %5300 = vmatprep.subr.bf16.mxu0 0
        %5301 = vmatpush1.bf16.msra.mxu0 0
        %5302 = vmatprep.subr.bf16.mxu0 0
        %5303 = vmatpush1.bf16.msra.mxu0 0
        %5304 = vmatprep.subr.bf16.mxu0 0
        %5305 = vmatpush1.bf16.msra.mxu0 0
        %5306 = vmatprep.subr.bf16.mxu0 0
        %5307 = vmatpush1.bf16.msra.mxu0 0
        %5308 = vmatprep.subr.bf16.mxu0 %v577
        %5309 = vmatpush1.bf16.msra.mxu0 %v576
        %5310 = vmatprep.subr.bf16.mxu0 %v566
        %5311 = vmatpush1.bf16.msra.mxu0 %v565
        %5312 = vmatprep.subr.bf16.mxu0 0
        %5313 = vmatpush2.bf16.msra.mxu0 0
        %5314 = vmatprep.subr.bf16.mxu0 0
        %5315 = vmatpush2.bf16.msra.mxu0 0
        %5316 = vmatprep.subr.bf16.mxu0 0
        %5317 = vmatpush2.bf16.msra.mxu0 0
        %5318 = vmatprep.subr.bf16.mxu0 0
        %5319 = vmatpush2.bf16.msra.mxu0 0
        %5320 = vmatprep.subr.bf16.mxu0 0
        %5321 = vmatpush2.bf16.msra.mxu0 0
        %5322 = vmatprep.subr.bf16.mxu0 0
        %5323 = vmatpush2.bf16.msra.mxu0 0
        %5324 = vmatprep.subr.bf16.mxu0 0
        %5325 = vmatpush2.bf16.msra.mxu0 0
        %5326 = vmatprep.subr.bf16.mxu0 0
        %5327 = vmatpush2.bf16.msra.mxu0 0
        %5328 = vmatprep.mubr.bf16.mxu0 0
        %5329 = vmatmul.mubr.bf16.gmra.mxu0 %v5087
        %v5330 = vpop.f32.mrf.mxu0
        %v5331 = vadd.f32 0.0, %v5330
        %v5332 = vpop.f32.mrf.mxu0
        %v5333 = vadd.f32 0.0, %v5332
        %v5334 = vpop.f32.mrf.mxu0
        %v5335 = vadd.f32 0.0, %v5334
        %v5336 = vpop.f32.mrf.mxu0
        %v5337 = vadd.f32 0.0, %v5336
        %5338 = vmatprep.mubr.bf16.mxu0 0
        %5339 = vmatmul.mubr.bf16.gmra.mxu0 %v5090
        %v5340 = vpop.f32.mrf.mxu0
        %v5341 = vadd.f32 0.0, %v5340
        %v5342 = vpop.f32.mrf.mxu0
        %v5343 = vadd.f32 0.0, %v5342
        %v5344 = vpop.f32.mrf.mxu0
        %v5345 = vpop.f32.mrf.mxu0
        %5346 = vdwg.mxu0
        %5347 = vmatprep.subr.bf16.mxu0 0
        %5348 = vmatpush1.bf16.msra.mxu0 0
        %5349 = vmatprep.subr.bf16.mxu0 0
        %5350 = vmatpush1.bf16.msra.mxu0 0
        %5351 = vmatprep.subr.bf16.mxu0 0
        %5352 = vmatpush1.bf16.msra.mxu0 0
        %5353 = vmatprep.subr.bf16.mxu0 0
        %5354 = vmatpush1.bf16.msra.mxu0 0
        %5355 = vmatprep.subr.bf16.mxu0 0
        %5356 = vmatpush1.bf16.msra.mxu0 0
        %5357 = vmatprep.subr.bf16.mxu0 0
        %5358 = vmatpush1.bf16.msra.mxu0 0
        %5359 = vmatprep.subr.bf16.mxu0 0
        %5360 = vmatpush1.bf16.msra.mxu0 %v578
        %5361 = vmatprep.subr.bf16.mxu0 0
        %5362 = vmatpush1.bf16.msra.mxu0 %v567
        %5363 = vmatprep.subr.bf16.mxu0 0
        %5364 = vmatpush2.bf16.msra.mxu0 0
        %5365 = vmatprep.subr.bf16.mxu0 0
        %5366 = vmatpush2.bf16.msra.mxu0 0
        %5367 = vmatprep.subr.bf16.mxu0 0
        %5368 = vmatpush2.bf16.msra.mxu0 0
        %5369 = vmatprep.subr.bf16.mxu0 0
        %5370 = vmatpush2.bf16.msra.mxu0 0
        %5371 = vmatprep.subr.bf16.mxu0 0
        %5372 = vmatpush2.bf16.msra.mxu0 0
        %5373 = vmatprep.subr.bf16.mxu0 0
        %5374 = vmatpush2.bf16.msra.mxu0 0
        %5375 = vmatprep.subr.bf16.mxu0 0
        %5376 = vmatpush2.bf16.msra.mxu0 0
        %5377 = vmatprep.subr.bf16.mxu0 0
        %5378 = vmatpush2.bf16.msra.mxu0 0
        %5379 = vmatprep.mubr.bf16.mxu0 0
        %5380 = vmatmul.mubr.bf16.gmra.mxu0 %v5087
        %v5381 = vpop.f32.mrf.mxu0
        %v5382 = vadd.f32 0.0, %v5381
        %v5383 = vpop.f32.mrf.mxu0
        %v5384 = vpop.f32.mrf.mxu0
        %v5385 = vadd.f32 0.0, %v5384
        %v5386 = vpop.f32.mrf.mxu0
        %5387 = vmatprep.mubr.bf16.mxu0 0
        %5388 = vmatmul.mubr.bf16.gmra.mxu0 %v5090
        %v5389 = vpop.f32.mrf.mxu0
        %v5390 = vadd.f32 0.0, %v5389
        %v5391 = vpop.f32.mrf.mxu0
        %v5392 = vpop.f32.mrf.mxu0
        %v5393 = vpop.f32.mrf.mxu0
        %5394 = vdwg.mxu0
        %v5395 = vld [vmem:[#allocation2] sm:$0xff]
        %v5396 = vld [vmem:[#allocation2 + $0x8] sm:$0xff]
        %v5397 = vld [vmem:[#allocation2 + $0x10] sm:$0xff]
        %v5398 = vld [vmem:[#allocation2 + $0x18] sm:$0xff]
        %v5399 = vld [vmem:[#allocation2 + $0x20] sm:$0xff]
        %v5400 = vld [vmem:[#allocation2 + $0x28] sm:$0xff]
        %v5401 = vld [vmem:[#allocation2 + $0x30] sm:$0xff]
        %v5402 = vld [vmem:[#allocation2 + $0x38] sm:$0xff]
        %v5403 = vld [vmem:[#allocation2 + $0x40] sm:$0xff]
        %v5404 = vld [vmem:[#allocation2 + $0x48] sm:$0xff]
        %v5405 = vld [vmem:[#allocation2 + $0x50] sm:$0xff]
        %v5406 = vld [vmem:[#allocation2 + $0x58] sm:$0xff]
        %v5407 = vld [vmem:[#allocation2 + $0x60] sm:$0xff]
        %v5408 = vld [vmem:[#allocation2 + $0x68] sm:$0xff]
        %v5409 = vld [vmem:[#allocation2 + $0x70] sm:$0xff]
        %v5410 = vld [vmem:[#allocation2 + $0x78] sm:$0xff]
        %v5411 = vld [vmem:[#allocation2 + $0x80] sm:$0xff]
        %v5412 = vld [vmem:[#allocation2 + $0x88] sm:$0xff]
        %v5413 = vpack.c.bf16 %v5131, %v5127
        %v5414 = vpack.c.bf16 %v5133, %v5129
        %v5415 = vpack.c.bf16 %v5182, %v5178
        %v5416 = vpack.c.bf16 %v5184, %v5180
        %v5417 = vpack.c.bf16 %v5233, %v5229
        %v5418 = vpack.c.bf16 %v5235, %v5231
        %v5419 = vpack.c.bf16 %v5284, %v5280
        %v5420 = vpack.c.bf16 %v5286, %v5282
        %v5421 = vpack.c.bf16 %v5335, %v5331
        %v5422 = vpack.c.bf16 %v5337, %v5333
        %v5423 = vpack.c.bf16 %v5385, %v5382
        %v5424 = vpack.c.bf16 %v5137, %v5137
        %v5425 = vpack.c.bf16 %v5139, %v5139
        %v5426 = vpack.c.bf16 %v5188, %v5188
        %v5427 = vpack.c.bf16 %v5190, %v5190
        %v5428 = vpack.c.bf16 %v5239, %v5239
        %v5429 = vpack.c.bf16 %v5241, %v5241
        %v5430 = vpack.c.bf16 %v5290, %v5290
        %v5431 = vpack.c.bf16 %v5292, %v5292
        %v5432 = vpack.c.bf16 %v5341, %v5341
        %v5433 = vpack.c.bf16 %v5343, %v5343
        %v5434 = vpack.c.bf16 %v5390, %v5390
        %s5435 = scalar_lea.vmem %s410, 4224
        %v5436 = vld [vmem:[%s5435] sm:$0xff]
        %v5437 = vld [vmem:[%s5435 + $0x8] sm:$0xff]
        %v5438 = vld [vmem:[%s5435 + $0x10] sm:$0xff]
        %v5439 = vld [vmem:[%s5435 + $0x18] sm:$0xff]
        %v5440 = vld [vmem:[%s5435 + $0x20] sm:$0xff]
        %v5441 = vld [vmem:[%s5435 + $0x28] sm:$0xff]
        %v5442 = vld [vmem:[%s5435 + $0x30] sm:$0xff]
        %v5443 = vld [vmem:[%s5435 + $0x38] sm:$0xff]
        %v5444 = vld [vmem:[%s5435 + $0x40] sm:$0xff]
        %v5445 = vld [vmem:[%s5435 + $0x48] sm:$0xff]
        %v5446 = vld [vmem:[%s5435 + $0x50] sm:$0xff]
        %v5447 = vld [vmem:[%s5435 + $0x58] sm:$0xff]
        %v5448 = vld [vmem:[%s5435 + $0x60] sm:$0xff]
        %v5449 = vld [vmem:[%s5435 + $0x68] sm:$0xff]
        %v5450 = vld [vmem:[%s5435 + $0x70] sm:$0xff]
        %v5451 = vld [vmem:[%s5435 + $0x78] sm:$0xff]
        %v5452 = vld [vmem:[%s5435 + $0x80] sm:$0xff]
        %v5453 = vld [vmem:[%s5435 + $0x88] sm:$0xff]
        %v5454 = vld [vmem:[%s5435 + $0x90] sm:$0xff]
        %v5455 = vld [vmem:[%s5435 + $0x98] sm:$0xff]
        %v5456 = vld [vmem:[%s5435 + $0xa0] sm:$0xff]
        %v5457 = vld [vmem:[%s5435 + $0xa8] sm:$0xff]
        %v5458 = vld [vmem:[%s5435 + $0xb0] sm:$0xff]
        %v5459 = vld [vmem:[%s5435 + $0xb8] sm:$0xff]
        %v5460 = vld [vmem:[%s5435 + $0xc0] sm:$0xff]
        %v5461 = vld [vmem:[%s5435 + $0xc8] sm:$0xff]
        %v5462 = vld [vmem:[%s5435 + $0xd0] sm:$0xff]
        %v5463 = vld [vmem:[%s5435 + $0xd8] sm:$0xff]
        %v5464 = vld [vmem:[%s5435 + $0xe0] sm:$0xff]
        %v5465 = vld [vmem:[%s5435 + $0xe8] sm:$0xff]
        %v5466 = vld [vmem:[%s5435 + $0xf0] sm:$0xff]
        %v5467 = vld [vmem:[%s5435 + $0xf8] sm:$0xff]
        %v5468 = vld [vmem:[%s5435 + $0x100] sm:$0xff]
        %v5469 = vld [vmem:[%s5435 + $0x108] sm:$0xff]
        %v5470 = vld [vmem:[%s5435 + $0x110] sm:$0xff]
        %v5471 = vld [vmem:[%s5435 + $0x118] sm:$0xff]
        %v5472 = vld [vmem:[%s5435 + $0x120] sm:$0xff]
        %v5473 = vld [vmem:[%s5435 + $0x128] sm:$0xff]
        %v5474 = vld [vmem:[%s5435 + $0x130] sm:$0xff]
        %v5475 = vld [vmem:[%s5435 + $0x138] sm:$0xff]
        %v5476 = vld [vmem:[%s5435 + $0x140] sm:$0xff]
        %v5477 = vld [vmem:[%s5435 + $0x148] sm:$0xff]
        %v5478 = vld [vmem:[%s5435 + $0x150] sm:$0xff]
        %v5479 = vld [vmem:[%s5435 + $0x158] sm:$0xff]
        %v5480 = vld [vmem:[%s5435 + $0x160] sm:$0xff]
        %v5481 = vld [vmem:[%s5435 + $0x168] sm:$0xff]
        %v5482 = vld [vmem:[%s5435 + $0x170] sm:$0xff]
        %v5483 = vld [vmem:[%s5435 + $0x178] sm:$0xff]
        %v5484 = vld [vmem:[%s5435 + $0x180] sm:$0xff]
        %v5485 = vld [vmem:[%s5435 + $0x188] sm:$0xff]
        %v5486 = vld [vmem:[%s5435 + $0x190] sm:$0xff]
        %v5487 = vld [vmem:[%s5435 + $0x198] sm:$0xff]
        %v5488 = vld [vmem:[%s5435 + $0x1a0] sm:$0xff]
        %v5489 = vld [vmem:[%s5435 + $0x1a8] sm:$0xff]
        %v5490 = vld [vmem:[%s5435 + $0x1b0] sm:$0xff]
        %v5491 = vld [vmem:[%s5435 + $0x1b8] sm:$0xff]
        %v5492 = vld [vmem:[%s5435 + $0x1c0] sm:$0xff]
        %v5493 = vld [vmem:[%s5435 + $0x1c8] sm:$0xff]
        %v5494 = vld [vmem:[%s5435 + $0x1d0] sm:$0xff]
        %v5495 = vld [vmem:[%s5435 + $0x1d8] sm:$0xff]
        %v5496 = vld [vmem:[%s5435 + $0x1e0] sm:$0xff]
        %v5497 = vld [vmem:[%s5435 + $0x1e8] sm:$0xff]
        %v5498 = vld [vmem:[%s5435 + $0x1f0] sm:$0xff]
        %v5499 = vld [vmem:[%s5435 + $0x1f8] sm:$0xff]
        %v5500 = vld [vmem:[%s5435 + $0x200] sm:$0xff]
        %v5501 = vld [vmem:[%s5435 + $0x208] sm:$0xff]
        %v5502 = vld [vmem:[%s5435 + $0x210] sm:$0xff]
        %v5503 = vld [vmem:[%s5435 + $0x218] sm:$0xff]
        %v5504 = vld [vmem:[%s5435 + $0x220] sm:$0xff]
        %v5505 = vld [vmem:[%s5435 + $0x228] sm:$0xff]
        %v5506 = vld [vmem:[%s5435 + $0x230] sm:$0xff]
        %v5507 = vld [vmem:[%s5435 + $0x238] sm:$0xff]
        %v5508 = vld [vmem:[%s5435 + $0x240] sm:$0xff]
        %v5509 = vld [vmem:[%s5435 + $0x248] sm:$0xff]
        %v5510 = vld [vmem:[%s5435 + $0x250] sm:$0xff]
        %v5511 = vld [vmem:[%s5435 + $0x258] sm:$0xff]
        %v5512 = vld [vmem:[%s5435 + $0x260] sm:$0xff]
        %v5513 = vld [vmem:[%s5435 + $0x268] sm:$0xff]
        %v5514 = vld [vmem:[%s5435 + $0x270] sm:$0xff]
        %v5515 = vld [vmem:[%s5435 + $0x278] sm:$0xff]
        %v5516 = vld [vmem:[%s5435 + $0x280] sm:$0xff]
        %v5517 = vld [vmem:[%s5435 + $0x288] sm:$0xff]
        %v5518 = vld [vmem:[%s5435 + $0x290] sm:$0xff]
        %v5519 = vld [vmem:[%s5435 + $0x298] sm:$0xff]
        %v5520 = vld [vmem:[%s5435 + $0x2a0] sm:$0xff]
        %v5521 = vld [vmem:[%s5435 + $0x2a8] sm:$0xff]
        %v5522 = vld [vmem:[%s5435 + $0x2b0] sm:$0xff]
        %v5523 = vld [vmem:[%s5435 + $0x2b8] sm:$0xff]
        %v5524 = vld [vmem:[%s5435 + $0x2c0] sm:$0xff]
        %v5525 = vld [vmem:[%s5435 + $0x2c8] sm:$0xff]
        %v5526 = vld [vmem:[%s5435 + $0x2d0] sm:$0xff]
        %v5527 = vld [vmem:[%s5435 + $0x2d8] sm:$0xff]
        %v5528 = vld [vmem:[%s5435 + $0x2e0] sm:$0xff]
        %v5529 = vld [vmem:[%s5435 + $0x2e8] sm:$0xff]
        %v5530 = vld [vmem:[%s5435 + $0x2f0] sm:$0xff]
        %v5531 = vld [vmem:[%s5435 + $0x2f8] sm:$0xff]
        %v5532 = vld [vmem:[%s5435 + $0x300] sm:$0xff]
        %v5533 = vld [vmem:[%s5435 + $0x308] sm:$0xff]
        %v5534 = vld [vmem:[%s5435 + $0x310] sm:$0xff]
        %v5535 = vld [vmem:[%s5435 + $0x318] sm:$0xff]
        %v5536 = vld [vmem:[%s5435 + $0x320] sm:$0xff]
        %v5537 = vld [vmem:[%s5435 + $0x328] sm:$0xff]
        %v5538 = vld [vmem:[%s5435 + $0x330] sm:$0xff]
        %v5539 = vld [vmem:[%s5435 + $0x338] sm:$0xff]
        %v5540 = vld [vmem:[%s5435 + $0x340] sm:$0xff]
        %v5541 = vld [vmem:[%s5435 + $0x348] sm:$0xff]
        %v5542 = vld [vmem:[%s5435 + $0x350] sm:$0xff]
        %v5543 = vld [vmem:[%s5435 + $0x358] sm:$0xff]
        %v5544 = vld [vmem:[%s5435 + $0x360] sm:$0xff]
        %v5545 = vld [vmem:[%s5435 + $0x368] sm:$0xff]
        %v5546 = vld [vmem:[%s5435 + $0x370] sm:$0xff]
        %v5547 = vld [vmem:[%s5435 + $0x378] sm:$0xff]
        %v5548 = vld [vmem:[%s5435 + $0x380] sm:$0xff]
        %v5549 = vld [vmem:[%s5435 + $0x388] sm:$0xff]
        %v5550 = vld [vmem:[%s5435 + $0x390] sm:$0xff]
        %v5551 = vld [vmem:[%s5435 + $0x398] sm:$0xff]
        %v5552 = vld [vmem:[%s5435 + $0x3a0] sm:$0xff]
        %v5553 = vld [vmem:[%s5435 + $0x3a8] sm:$0xff]
        %v5554 = vld [vmem:[%s5435 + $0x3b0] sm:$0xff]
        %v5555 = vld [vmem:[%s5435 + $0x3b8] sm:$0xff]
        %v5556 = vld [vmem:[%s5435 + $0x3c0] sm:$0xff]
        %v5557 = vld [vmem:[%s5435 + $0x3c8] sm:$0xff]
        %v5558 = vld [vmem:[%s5435 + $0x3d0] sm:$0xff]
        %v5559 = vld [vmem:[%s5435 + $0x3d8] sm:$0xff]
        %v5560 = vld [vmem:[%s5435 + $0x3e0] sm:$0xff]
        %v5561 = vld [vmem:[%s5435 + $0x3e8] sm:$0xff]
        %v5562 = vld [vmem:[%s5435 + $0x3f0] sm:$0xff]
        %v5563 = vld [vmem:[%s5435 + $0x3f8] sm:$0xff]
        %v5564 = vld [vmem:[%s5435 + $0x400] sm:$0xff]
        %v5565 = vld [vmem:[%s5435 + $0x408] sm:$0xff]
        %v5566 = vld [vmem:[%s5435 + $0x410] sm:$0xff]
        %v5567 = vld [vmem:[%s5435 + $0x418] sm:$0xff]
        %v5568 = vld [vmem:[%s5435 + $0x420] sm:$0xff]
        %v5569 = vld [vmem:[%s5435 + $0x428] sm:$0xff]
        %v5570 = vld [vmem:[%s5435 + $0x430] sm:$0xff]
        %v5571 = vld [vmem:[%s5435 + $0x438] sm:$0xff]
        %v5572 = vld [vmem:[%s5435 + $0x440] sm:$0xff]
        %v5573 = vld [vmem:[%s5435 + $0x448] sm:$0xff]
        %v5574 = vld [vmem:[%s5435 + $0x450] sm:$0xff]
        %v5575 = vld [vmem:[%s5435 + $0x458] sm:$0xff]
        %v5576 = vld [vmem:[%s5435 + $0x460] sm:$0xff]
        %v5577 = vld [vmem:[%s5435 + $0x468] sm:$0xff]
        %v5578 = vld [vmem:[%s5435 + $0x470] sm:$0xff]
        %v5579 = vld [vmem:[%s5435 + $0x478] sm:$0xff]
        %v5580 = vld [vmem:[%s5435 + $0x480] sm:$0xff]
        %v5581 = vld [vmem:[%s5435 + $0x488] sm:$0xff]
        %v5582 = vld [vmem:[%s5435 + $0x490] sm:$0xff]
        %v5583 = vld [vmem:[%s5435 + $0x498] sm:$0xff]
        %v5584 = vld [vmem:[%s5435 + $0x4a0] sm:$0xff]
        %v5585 = vld [vmem:[%s5435 + $0x4a8] sm:$0xff]
        %v5586 = vld [vmem:[%s5435 + $0x4b0] sm:$0xff]
        %v5587 = vld [vmem:[%s5435 + $0x4b8] sm:$0xff]
        %v5588 = vld [vmem:[%s5435 + $0x4c0] sm:$0xff]
        %v5589 = vld [vmem:[%s5435 + $0x4c8] sm:$0xff]
        %v5590 = vld [vmem:[%s5435 + $0x4d0] sm:$0xff]
        %v5591 = vld [vmem:[%s5435 + $0x4d8] sm:$0xff]
        %v5592 = vld [vmem:[%s5435 + $0x4e0] sm:$0xff]
        %v5593 = vld [vmem:[%s5435 + $0x4e8] sm:$0xff]
        %v5594 = vld [vmem:[%s5435 + $0x4f0] sm:$0xff]
        %v5595 = vld [vmem:[%s5435 + $0x4f8] sm:$0xff]
        %v5596 = vld [vmem:[%s5435 + $0x500] sm:$0xff]
        %v5597 = vld [vmem:[%s5435 + $0x508] sm:$0xff]
        %v5598 = vld [vmem:[%s5435 + $0x510] sm:$0xff]
        %v5599 = vld [vmem:[%s5435 + $0x518] sm:$0xff]
        %v5600 = vld [vmem:[%s5435 + $0x520] sm:$0xff]
        %v5601 = vld [vmem:[%s5435 + $0x528] sm:$0xff]
        %v5602 = vld [vmem:[%s5435 + $0x530] sm:$0xff]
        %v5603 = vld [vmem:[%s5435 + $0x538] sm:$0xff]
        %v5604 = vld [vmem:[%s5435 + $0x540] sm:$0xff]
        %v5605 = vld [vmem:[%s5435 + $0x548] sm:$0xff]
        %v5606 = vld [vmem:[%s5435 + $0x550] sm:$0xff]
        %v5607 = vld [vmem:[%s5435 + $0x558] sm:$0xff]
        %v5608 = vld [vmem:[%s5435 + $0x560] sm:$0xff]
        %v5609 = vld [vmem:[%s5435 + $0x568] sm:$0xff]
        %v5610 = vld [vmem:[%s5435 + $0x570] sm:$0xff]
        %v5611 = vld [vmem:[%s5435 + $0x578] sm:$0xff]
        %v5612 = vld [vmem:[%s5435 + $0x580] sm:$0xff]
        %v5613 = vld [vmem:[%s5435 + $0x588] sm:$0xff]
        %v5614 = vld [vmem:[%s5435 + $0x590] sm:$0xff]
        %v5615 = vld [vmem:[%s5435 + $0x598] sm:$0xff]
        %v5616 = vld [vmem:[%s5435 + $0x5a0] sm:$0xff]
        %v5617 = vld [vmem:[%s5435 + $0x5a8] sm:$0xff]
        %v5618 = vld [vmem:[%s5435 + $0x5b0] sm:$0xff]
        %v5619 = vld [vmem:[%s5435 + $0x5b8] sm:$0xff]
        %v5620 = vld [vmem:[%s5435 + $0x5c0] sm:$0xff]
        %v5621 = vld [vmem:[%s5435 + $0x5c8] sm:$0xff]
        %v5622 = vld [vmem:[%s5435 + $0x5d0] sm:$0xff]
        %v5623 = vld [vmem:[%s5435 + $0x5d8] sm:$0xff]
        %v5624 = vld [vmem:[%s5435 + $0x5e0] sm:$0xff]
        %v5625 = vld [vmem:[%s5435 + $0x5e8] sm:$0xff]
        %v5626 = vld [vmem:[%s5435 + $0x5f0] sm:$0xff]
        %v5627 = vld [vmem:[%s5435 + $0x5f8] sm:$0xff]
        %v5628 = vld [vmem:[%s5435 + $0x600] sm:$0xff]
        %v5629 = vld [vmem:[%s5435 + $0x608] sm:$0xff]
        %v5630 = vld [vmem:[%s5435 + $0x610] sm:$0xff]
        %v5631 = vld [vmem:[%s5435 + $0x618] sm:$0xff]
        %v5632 = vld [vmem:[%s5435 + $0x620] sm:$0xff]
        %v5633 = vld [vmem:[%s5435 + $0x628] sm:$0xff]
        %v5634 = vld [vmem:[%s5435 + $0x630] sm:$0xff]
        %v5635 = vld [vmem:[%s5435 + $0x638] sm:$0xff]
        %v5636 = vld [vmem:[%s5435 + $0x640] sm:$0xff]
        %v5637 = vld [vmem:[%s5435 + $0x648] sm:$0xff]
        %v5638 = vld [vmem:[%s5435 + $0x650] sm:$0xff]
        %v5639 = vld [vmem:[%s5435 + $0x658] sm:$0xff]
        %v5640 = vld [vmem:[%s5435 + $0x660] sm:$0xff]
        %v5641 = vld [vmem:[%s5435 + $0x668] sm:$0xff]
        %v5642 = vld [vmem:[%s5435 + $0x670] sm:$0xff]
        %v5643 = vld [vmem:[%s5435 + $0x678] sm:$0xff]
        %v5644 = vld [vmem:[%s5435 + $0x680] sm:$0xff]
        %v5645 = vld [vmem:[%s5435 + $0x688] sm:$0xff]
        %v5646 = vld [vmem:[%s5435 + $0x690] sm:$0xff]
        %v5647 = vld [vmem:[%s5435 + $0x698] sm:$0xff]
        %v5648 = vld [vmem:[%s5435 + $0x6a0] sm:$0xff]
        %v5649 = vld [vmem:[%s5435 + $0x6a8] sm:$0xff]
        %v5650 = vld [vmem:[%s5435 + $0x6b0] sm:$0xff]
        %v5651 = vld [vmem:[%s5435 + $0x6b8] sm:$0xff]
        %v5652 = vld [vmem:[%s5435 + $0x6c0] sm:$0xff]
        %v5653 = vld [vmem:[%s5435 + $0x6c8] sm:$0xff]
        %v5654 = vld [vmem:[%s5435 + $0x6d0] sm:$0xff]
        %v5655 = vld [vmem:[%s5435 + $0x6d8] sm:$0xff]
        %v5656 = vld [vmem:[%s5435 + $0x6e0] sm:$0xff]
        %v5657 = vld [vmem:[%s5435 + $0x6e8] sm:$0xff]
        %v5658 = vld [vmem:[%s5435 + $0x6f0] sm:$0xff]
        %v5659 = vld [vmem:[%s5435 + $0x6f8] sm:$0xff]
        %v5660 = vld [vmem:[%s5435 + $0x700] sm:$0xff]
        %v5661 = vld [vmem:[%s5435 + $0x708] sm:$0xff]
        %v5662 = vld [vmem:[%s5435 + $0x710] sm:$0xff]
        %v5663 = vld [vmem:[%s5435 + $0x718] sm:$0xff]
        %v5664 = vld [vmem:[%s5435 + $0x720] sm:$0xff]
        %v5665 = vld [vmem:[%s5435 + $0x728] sm:$0xff]
        %v5666 = vld [vmem:[%s5435 + $0x730] sm:$0xff]
        %v5667 = vld [vmem:[%s5435 + $0x738] sm:$0xff]
        %v5668 = vld [vmem:[%s5435 + $0x740] sm:$0xff]
        %v5669 = vld [vmem:[%s5435 + $0x748] sm:$0xff]
        %v5670 = vld [vmem:[%s5435 + $0x750] sm:$0xff]
        %v5671 = vld [vmem:[%s5435 + $0x758] sm:$0xff]
        %v5672 = vld [vmem:[%s5435 + $0x760] sm:$0xff]
        %v5673 = vld [vmem:[%s5435 + $0x768] sm:$0xff]
        %v5674 = vld [vmem:[%s5435 + $0x770] sm:$0xff]
        %v5675 = vld [vmem:[%s5435 + $0x778] sm:$0xff]
        %v5676 = vld [vmem:[%s5435 + $0x780] sm:$0xff]
        %v5677 = vld [vmem:[%s5435 + $0x788] sm:$0xff]
        %v5678 = vld [vmem:[%s5435 + $0x790] sm:$0xff]
        %v5679 = vld [vmem:[%s5435 + $0x798] sm:$0xff]
        %v5680 = vld [vmem:[%s5435 + $0x7a0] sm:$0xff]
        %v5681 = vld [vmem:[%s5435 + $0x7a8] sm:$0xff]
        %v5682 = vld [vmem:[%s5435 + $0x7b0] sm:$0xff]
        %v5683 = vld [vmem:[%s5435 + $0x7b8] sm:$0xff]
        %v5684 = vld [vmem:[%s5435 + $0x7c0] sm:$0xff]
        %v5685 = vld [vmem:[%s5435 + $0x7c8] sm:$0xff]
        %v5686 = vld [vmem:[%s5435 + $0x7d0] sm:$0xff]
        %v5687 = vld [vmem:[%s5435 + $0x7d8] sm:$0xff]
        %v5688 = vld [vmem:[%s5435 + $0x7e0] sm:$0xff]
        %v5689 = vld [vmem:[%s5435 + $0x7e8] sm:$0xff]
        %v5690 = vld [vmem:[%s5435 + $0x7f0] sm:$0xff]
        %v5691 = vld [vmem:[%s5435 + $0x7f8] sm:$0xff]
        %v5692 = vld [vmem:[%s5435 + $0x800] sm:$0xff]
        %v5693 = vld [vmem:[%s5435 + $0x808] sm:$0xff]
        %v5694 = vld [vmem:[%s5435 + $0x810] sm:$0xff]
        %v5695 = vld [vmem:[%s5435 + $0x818] sm:$0xff]
        %v5696 = vld [vmem:[%s5435 + $0x820] sm:$0xff]
        %v5697 = vld [vmem:[%s5435 + $0x828] sm:$0xff]
        %v5698 = vld [vmem:[%s5435 + $0x830] sm:$0xff]
        %v5699 = vld [vmem:[%s5435 + $0x838] sm:$0xff]
        %v5700 = vld [vmem:[%s5435 + $0x840] sm:$0xff]
        %v5701 = vld [vmem:[%s5435 + $0x848] sm:$0xff]
        %v5702 = vld [vmem:[%s5435 + $0x850] sm:$0xff]
        %v5703 = vld [vmem:[%s5435 + $0x858] sm:$0xff]
        %v5704 = vld [vmem:[%s5435 + $0x860] sm:$0xff]
        %v5705 = vld [vmem:[%s5435 + $0x868] sm:$0xff]
        %v5706 = vld [vmem:[%s5435 + $0x870] sm:$0xff]
        %v5707 = vld [vmem:[%s5435 + $0x878] sm:$0xff]
        %v5708 = vld [vmem:[%s5435 + $0x880] sm:$0xff]
        %v5709 = vld [vmem:[%s5435 + $0x888] sm:$0xff]
        %v5710 = vld [vmem:[%s5435 + $0x890] sm:$0xff]
        %v5711 = vld [vmem:[%s5435 + $0x898] sm:$0xff]
        %v5712 = vld [vmem:[%s5435 + $0x8a0] sm:$0xff]
        %v5713 = vld [vmem:[%s5435 + $0x8a8] sm:$0xff]
        %v5714 = vld [vmem:[%s5435 + $0x8b0] sm:$0xff]
        %v5715 = vld [vmem:[%s5435 + $0x8b8] sm:$0xff]
        %v5716 = vld [vmem:[%s5435 + $0x8c0] sm:$0xff]
        %v5717 = vld [vmem:[%s5435 + $0x8c8] sm:$0xff]
        %v5718 = vld [vmem:[%s5435 + $0x8d0] sm:$0xff]
        %v5719 = vld [vmem:[%s5435 + $0x8d8] sm:$0xff]
        %v5720 = vld [vmem:[%s5435 + $0x8e0] sm:$0xff]
        %v5721 = vld [vmem:[%s5435 + $0x8e8] sm:$0xff]
        %v5722 = vld [vmem:[%s5435 + $0x8f0] sm:$0xff]
        %v5723 = vld [vmem:[%s5435 + $0x8f8] sm:$0xff]
        %v5724 = vld [vmem:[%s5435 + $0x900] sm:$0xff]
        %v5725 = vld [vmem:[%s5435 + $0x908] sm:$0xff]
        %v5726 = vld [vmem:[%s5435 + $0x910] sm:$0xff]
        %v5727 = vld [vmem:[%s5435 + $0x918] sm:$0xff]
        %v5728 = vld [vmem:[%s5435 + $0x920] sm:$0xff]
        %v5729 = vld [vmem:[%s5435 + $0x928] sm:$0xff]
        %v5730 = vld [vmem:[%s5435 + $0x930] sm:$0xff]
        %v5731 = vld [vmem:[%s5435 + $0x938] sm:$0xff]
        %v5732 = vld [vmem:[%s5435 + $0x940] sm:$0xff]
        %v5733 = vld [vmem:[%s5435 + $0x948] sm:$0xff]
        %v5734 = vld [vmem:[%s5435 + $0x950] sm:$0xff]
        %v5735 = vld [vmem:[%s5435 + $0x958] sm:$0xff]
        %v5736 = vld [vmem:[%s5435 + $0x960] sm:$0xff]
        %v5737 = vld [vmem:[%s5435 + $0x968] sm:$0xff]
        %v5738 = vld [vmem:[%s5435 + $0x970] sm:$0xff]
        %v5739 = vld [vmem:[%s5435 + $0x978] sm:$0xff]
        %v5740 = vld [vmem:[%s5435 + $0x980] sm:$0xff]
        %v5741 = vld [vmem:[%s5435 + $0x988] sm:$0xff]
        %v5742 = vld [vmem:[%s5435 + $0x990] sm:$0xff]
        %v5743 = vld [vmem:[%s5435 + $0x998] sm:$0xff]
        %v5744 = vld [vmem:[%s5435 + $0x9a0] sm:$0xff]
        %v5745 = vld [vmem:[%s5435 + $0x9a8] sm:$0xff]
        %v5746 = vld [vmem:[%s5435 + $0x9b0] sm:$0xff]
        %v5747 = vld [vmem:[%s5435 + $0x9b8] sm:$0xff]
        %v5748 = vld [vmem:[%s5435 + $0x9c0] sm:$0xff]
        %v5749 = vld [vmem:[%s5435 + $0x9c8] sm:$0xff]
        %v5750 = vld [vmem:[%s5435 + $0x9d0] sm:$0xff]
        %v5751 = vld [vmem:[%s5435 + $0x9d8] sm:$0xff]
        %v5752 = vld [vmem:[%s5435 + $0x9e0] sm:$0xff]
        %v5753 = vld [vmem:[%s5435 + $0x9e8] sm:$0xff]
        %v5754 = vld [vmem:[%s5435 + $0x9f0] sm:$0xff]
        %v5755 = vld [vmem:[%s5435 + $0x9f8] sm:$0xff]
        %v5756 = vld [vmem:[%s5435 + $0xa00] sm:$0xff]
        %v5757 = vld [vmem:[%s5435 + $0xa08] sm:$0xff]
        %v5758 = vld [vmem:[%s5435 + $0xa10] sm:$0xff]
        %v5759 = vld [vmem:[%s5435 + $0xa18] sm:$0xff]
        %v5760 = vld [vmem:[%s5435 + $0xa20] sm:$0xff]
        %v5761 = vld [vmem:[%s5435 + $0xa28] sm:$0xff]
        %v5762 = vld [vmem:[%s5435 + $0xa30] sm:$0xff]
        %v5763 = vld [vmem:[%s5435 + $0xa38] sm:$0xff]
        %v5764 = vld [vmem:[%s5435 + $0xa40] sm:$0xff]
        %v5765 = vld [vmem:[%s5435 + $0xa48] sm:$0xff]
        %v5766 = vld [vmem:[%s5435 + $0xa50] sm:$0xff]
        %v5767 = vld [vmem:[%s5435 + $0xa58] sm:$0xff]
        %v5768 = vld [vmem:[%s5435 + $0xa60] sm:$0xff]
        %v5769 = vld [vmem:[%s5435 + $0xa68] sm:$0xff]
        %v5770 = vld [vmem:[%s5435 + $0xa70] sm:$0xff]
        %v5771 = vld [vmem:[%s5435 + $0xa78] sm:$0xff]
        %v5772 = vld [vmem:[%s5435 + $0xa80] sm:$0xff]
        %v5773 = vld [vmem:[%s5435 + $0xa88] sm:$0xff]
        %v5774 = vld [vmem:[%s5435 + $0xa90] sm:$0xff]
        %v5775 = vld [vmem:[%s5435 + $0xa98] sm:$0xff]
        %v5776 = vld [vmem:[%s5435 + $0xaa0] sm:$0xff]
        %v5777 = vld [vmem:[%s5435 + $0xaa8] sm:$0xff]
        %v5778 = vld [vmem:[%s5435 + $0xab0] sm:$0xff]
        %v5779 = vld [vmem:[%s5435 + $0xab8] sm:$0xff]
        %v5780 = vld [vmem:[%s5435 + $0xac0] sm:$0xff]
        %v5781 = vld [vmem:[%s5435 + $0xac8] sm:$0xff]
        %v5782 = vld [vmem:[%s5435 + $0xad0] sm:$0xff]
        %v5783 = vld [vmem:[%s5435 + $0xad8] sm:$0xff]
        %v5784 = vld [vmem:[%s5435 + $0xae0] sm:$0xff]
        %v5785 = vld [vmem:[%s5435 + $0xae8] sm:$0xff]
        %v5786 = vld [vmem:[%s5435 + $0xaf0] sm:$0xff]
        %v5787 = vld [vmem:[%s5435 + $0xaf8] sm:$0xff]
        %v5788 = vld [vmem:[%s5435 + $0xb00] sm:$0xff]
        %v5789 = vld [vmem:[%s5435 + $0xb08] sm:$0xff]
        %v5790 = vld [vmem:[%s5435 + $0xb10] sm:$0xff]
        %v5791 = vld [vmem:[%s5435 + $0xb18] sm:$0xff]
        %v5792 = vld [vmem:[%s5435 + $0xb20] sm:$0xff]
        %v5793 = vld [vmem:[%s5435 + $0xb28] sm:$0xff]
        %v5794 = vld [vmem:[%s5435 + $0xb30] sm:$0xff]
        %v5795 = vld [vmem:[%s5435 + $0xb38] sm:$0xff]
        %v5796 = vld [vmem:[%s5435 + $0xb40] sm:$0xff]
        %v5797 = vld [vmem:[%s5435 + $0xb48] sm:$0xff]
        %v5798 = vld [vmem:[%s5435 + $0xb50] sm:$0xff]
        %v5799 = vld [vmem:[%s5435 + $0xb58] sm:$0xff]
        %v5800 = vld [vmem:[%s5435 + $0xb60] sm:$0xff]
        %v5801 = vld [vmem:[%s5435 + $0xb68] sm:$0xff]
        %v5802 = vld [vmem:[%s5435 + $0xb70] sm:$0xff]
        %v5803 = vld [vmem:[%s5435 + $0xb78] sm:$0xff]
        %v5804 = vld [vmem:[%s5435 + $0xb80] sm:$0xff]
        %v5805 = vld [vmem:[%s5435 + $0xb88] sm:$0xff]
        %v5806 = vld [vmem:[%s5435 + $0xb90] sm:$0xff]
        %v5807 = vld [vmem:[%s5435 + $0xb98] sm:$0xff]
        %v5808 = vld [vmem:[%s5435 + $0xba0] sm:$0xff]
        %v5809 = vld [vmem:[%s5435 + $0xba8] sm:$0xff]
        %v5810 = vld [vmem:[%s5435 + $0xbb0] sm:$0xff]
        %v5811 = vld [vmem:[%s5435 + $0xbb8] sm:$0xff]
        %v5812 = vld [vmem:[%s5435 + $0xbc0] sm:$0xff]
        %v5813 = vld [vmem:[%s5435 + $0xbc8] sm:$0xff]
        %v5814 = vld [vmem:[%s5435 + $0xbd0] sm:$0xff]
        %v5815 = vld [vmem:[%s5435 + $0xbd8] sm:$0xff]
        %v5816 = vld [vmem:[%s5435 + $0xbe0] sm:$0xff]
        %v5817 = vld [vmem:[%s5435 + $0xbe8] sm:$0xff]
        %v5818 = vld [vmem:[%s5435 + $0xbf0] sm:$0xff]
        %v5819 = vld [vmem:[%s5435 + $0xbf8] sm:$0xff]
        %v5820 = vld [vmem:[%s5435 + $0xc00] sm:$0xff]
        %v5821 = vld [vmem:[%s5435 + $0xc08] sm:$0xff]
        %v5822 = vld [vmem:[%s5435 + $0xc10] sm:$0xff]
        %v5823 = vld [vmem:[%s5435 + $0xc18] sm:$0xff]
        %v5824 = vld [vmem:[%s5435 + $0xc20] sm:$0xff]
        %v5825 = vld [vmem:[%s5435 + $0xc28] sm:$0xff]
        %v5826 = vld [vmem:[%s5435 + $0xc30] sm:$0xff]
        %v5827 = vld [vmem:[%s5435 + $0xc38] sm:$0xff]
        %v5828 = vld [vmem:[%s5435 + $0xc40] sm:$0xff]
        %v5829 = vld [vmem:[%s5435 + $0xc48] sm:$0xff]
        %v5830 = vld [vmem:[%s5435 + $0xc50] sm:$0xff]
        %v5831 = vld [vmem:[%s5435 + $0xc58] sm:$0xff]
        %v5832 = vld [vmem:[%s5435 + $0xc60] sm:$0xff]
        %v5833 = vld [vmem:[%s5435 + $0xc68] sm:$0xff]
        %v5834 = vld [vmem:[%s5435 + $0xc70] sm:$0xff]
        %v5835 = vld [vmem:[%s5435 + $0xc78] sm:$0xff]
        %v5836 = vld [vmem:[%s5435 + $0xc80] sm:$0xff]
        %v5837 = vld [vmem:[%s5435 + $0xc88] sm:$0xff]
        %v5838 = vld [vmem:[%s5435 + $0xc90] sm:$0xff]
        %v5839 = vld [vmem:[%s5435 + $0xc98] sm:$0xff]
        %v5840 = vld [vmem:[%s5435 + $0xca0] sm:$0xff]
        %v5841 = vld [vmem:[%s5435 + $0xca8] sm:$0xff]
        %v5842 = vld [vmem:[%s5435 + $0xcb0] sm:$0xff]
        %v5843 = vld [vmem:[%s5435 + $0xcb8] sm:$0xff]
        %v5844 = vld [vmem:[%s5435 + $0xcc0] sm:$0xff]
        %v5845 = vld [vmem:[%s5435 + $0xcc8] sm:$0xff]
        %v5846 = vld [vmem:[%s5435 + $0xcd0] sm:$0xff]
        %v5847 = vld [vmem:[%s5435 + $0xcd8] sm:$0xff]
        %v5848 = vld [vmem:[%s5435 + $0xce0] sm:$0xff]
        %v5849 = vld [vmem:[%s5435 + $0xce8] sm:$0xff]
        %v5850 = vld [vmem:[%s5435 + $0xcf0] sm:$0xff]
        %v5851 = vld [vmem:[%s5435 + $0xcf8] sm:$0xff]
        %v5852 = vld [vmem:[%s5435 + $0xd00] sm:$0xff]
        %v5853 = vld [vmem:[%s5435 + $0xd08] sm:$0xff]
        %v5854 = vld [vmem:[%s5435 + $0xd10] sm:$0xff]
        %v5855 = vld [vmem:[%s5435 + $0xd18] sm:$0xff]
        %v5856 = vld [vmem:[%s5435 + $0xd20] sm:$0xff]
        %v5857 = vld [vmem:[%s5435 + $0xd28] sm:$0xff]
        %v5858 = vld [vmem:[%s5435 + $0xd30] sm:$0xff]
        %v5859 = vld [vmem:[%s5435 + $0xd38] sm:$0xff]
        %v5860 = vld [vmem:[%s5435 + $0xd40] sm:$0xff]
        %v5861 = vld [vmem:[%s5435 + $0xd48] sm:$0xff]
        %v5862 = vld [vmem:[%s5435 + $0xd50] sm:$0xff]
        %v5863 = vld [vmem:[%s5435 + $0xd58] sm:$0xff]
        %v5864 = vld [vmem:[%s5435 + $0xd60] sm:$0xff]
        %v5865 = vld [vmem:[%s5435 + $0xd68] sm:$0xff]
        %v5866 = vld [vmem:[%s5435 + $0xd70] sm:$0xff]
        %v5867 = vld [vmem:[%s5435 + $0xd78] sm:$0xff]
        %v5868 = vld [vmem:[%s5435 + $0xd80] sm:$0xff]
        %v5869 = vld [vmem:[%s5435 + $0xd88] sm:$0xff]
        %v5870 = vld [vmem:[%s5435 + $0xd90] sm:$0xff]
        %v5871 = vld [vmem:[%s5435 + $0xd98] sm:$0xff]
        %v5872 = vld [vmem:[%s5435 + $0xda0] sm:$0xff]
        %v5873 = vld [vmem:[%s5435 + $0xda8] sm:$0xff]
        %v5874 = vld [vmem:[%s5435 + $0xdb0] sm:$0xff]
        %v5875 = vld [vmem:[%s5435 + $0xdb8] sm:$0xff]
        %v5876 = vld [vmem:[%s5435 + $0xdc0] sm:$0xff]
        %v5877 = vld [vmem:[%s5435 + $0xdc8] sm:$0xff]
        %v5878 = vld [vmem:[%s5435 + $0xdd0] sm:$0xff]
        %v5879 = vld [vmem:[%s5435 + $0xdd8] sm:$0xff]
        %v5880 = vld [vmem:[%s5435 + $0xde0] sm:$0xff]
        %v5881 = vld [vmem:[%s5435 + $0xde8] sm:$0xff]
        %v5882 = vld [vmem:[%s5435 + $0xdf0] sm:$0xff]
        %v5883 = vld [vmem:[%s5435 + $0xdf8] sm:$0xff]
        %v5884 = vld [vmem:[%s5435 + $0xe00] sm:$0xff]
        %v5885 = vld [vmem:[%s5435 + $0xe08] sm:$0xff]
        %v5886 = vld [vmem:[%s5435 + $0xe10] sm:$0xff]
        %v5887 = vld [vmem:[%s5435 + $0xe18] sm:$0xff]
        %v5888 = vld [vmem:[%s5435 + $0xe20] sm:$0xff]
        %v5889 = vld [vmem:[%s5435 + $0xe28] sm:$0xff]
        %v5890 = vld [vmem:[%s5435 + $0xe30] sm:$0xff]
        %v5891 = vld [vmem:[%s5435 + $0xe38] sm:$0xff]
        %v5892 = vld [vmem:[%s5435 + $0xe40] sm:$0xff]
        %v5893 = vld [vmem:[%s5435 + $0xe48] sm:$0xff]
        %v5894 = vld [vmem:[%s5435 + $0xe50] sm:$0xff]
        %v5895 = vld [vmem:[%s5435 + $0xe58] sm:$0xff]
        %v5896 = vld [vmem:[%s5435 + $0xe60] sm:$0xff]
        %v5897 = vld [vmem:[%s5435 + $0xe68] sm:$0xff]
        %v5898 = vld [vmem:[%s5435 + $0xe70] sm:$0xff]
        %v5899 = vld [vmem:[%s5435 + $0xe78] sm:$0xff]
        %v5900 = vld [vmem:[%s5435 + $0xe80] sm:$0xff]
        %v5901 = vld [vmem:[%s5435 + $0xe88] sm:$0xff]
        %v5902 = vld [vmem:[%s5435 + $0xe90] sm:$0xff]
        %v5903 = vld [vmem:[%s5435 + $0xe98] sm:$0xff]
        %v5904 = vld [vmem:[%s5435 + $0xea0] sm:$0xff]
        %v5905 = vld [vmem:[%s5435 + $0xea8] sm:$0xff]
        %v5906 = vld [vmem:[%s5435 + $0xeb0] sm:$0xff]
        %v5907 = vld [vmem:[%s5435 + $0xeb8] sm:$0xff]
        %v5908 = vld [vmem:[%s5435 + $0xec0] sm:$0xff]
        %v5909 = vld [vmem:[%s5435 + $0xec8] sm:$0xff]
        %v5910 = vld [vmem:[%s5435 + $0xed0] sm:$0xff]
        %v5911 = vld [vmem:[%s5435 + $0xed8] sm:$0xff]
        %v5912 = vld [vmem:[%s5435 + $0xee0] sm:$0xff]
        %v5913 = vld [vmem:[%s5435 + $0xee8] sm:$0xff]
        %v5914 = vld [vmem:[%s5435 + $0xef0] sm:$0xff]
        %v5915 = vld [vmem:[%s5435 + $0xef8] sm:$0xff]
        %v5916 = vld [vmem:[%s5435 + $0xf00] sm:$0xff]
        %v5917 = vld [vmem:[%s5435 + $0xf08] sm:$0xff]
        %v5918 = vld [vmem:[%s5435 + $0xf10] sm:$0xff]
        %v5919 = vld [vmem:[%s5435 + $0xf18] sm:$0xff]
        %v5920 = vld [vmem:[%s5435 + $0xf20] sm:$0xff]
        %v5921 = vld [vmem:[%s5435 + $0xf28] sm:$0xff]
        %v5922 = vld [vmem:[%s5435 + $0xf30] sm:$0xff]
        %v5923 = vld [vmem:[%s5435 + $0xf38] sm:$0xff]
        %v5924 = vld [vmem:[%s5435 + $0xf40] sm:$0xff]
        %v5925 = vld [vmem:[%s5435 + $0xf48] sm:$0xff]
        %v5926 = vld [vmem:[%s5435 + $0xf50] sm:$0xff]
        %v5927 = vld [vmem:[%s5435 + $0xf58] sm:$0xff]
        %v5928 = vld [vmem:[%s5435 + $0xf60] sm:$0xff]
        %v5929 = vld [vmem:[%s5435 + $0xf68] sm:$0xff]
        %v5930 = vld [vmem:[%s5435 + $0xf70] sm:$0xff]
        %v5931 = vld [vmem:[%s5435 + $0xf78] sm:$0xff]
        %v5932 = vld [vmem:[%s5435 + $0xf80] sm:$0xff]
        %v5933 = vld [vmem:[%s5435 + $0xf88] sm:$0xff]
        %v5934 = vld [vmem:[%s5435 + $0xf90] sm:$0xff]
        %v5935 = vld [vmem:[%s5435 + $0xf98] sm:$0xff]
        %v5936 = vld [vmem:[%s5435 + $0xfa0] sm:$0xff]
        %v5937 = vld [vmem:[%s5435 + $0xfa8] sm:$0xff]
        %v5938 = vld [vmem:[%s5435 + $0xfb0] sm:$0xff]
        %v5939 = vld [vmem:[%s5435 + $0xfb8] sm:$0xff]
        %v5940 = vld [vmem:[%s5435 + $0xfc0] sm:$0xff]
        %v5941 = vld [vmem:[%s5435 + $0xfc8] sm:$0xff]
        %v5942 = vld [vmem:[%s5435 + $0xfd0] sm:$0xff]
        %v5943 = vld [vmem:[%s5435 + $0xfd8] sm:$0xff]
        %v5944 = vld [vmem:[%s5435 + $0xfe0] sm:$0xff]
        %v5945 = vld [vmem:[%s5435 + $0xfe8] sm:$0xff]
        %v5946 = vld [vmem:[%s5435 + $0xff0] sm:$0xff]
        %v5947 = vld [vmem:[%s5435 + $0xff8] sm:$0xff]
        %v5948 = vld [vmem:[%s5435 + $0x1000] sm:$0xff]
        %v5949 = vld [vmem:[%s5435 + $0x1008] sm:$0xff]
        %v5950 = vld [vmem:[%s5435 + $0x1010] sm:$0xff]
        %v5951 = vld [vmem:[%s5435 + $0x1018] sm:$0xff]
        %v5952 = vld [vmem:[%s5435 + $0x1020] sm:$0xff]
        %v5953 = vld [vmem:[%s5435 + $0x1028] sm:$0xff]
        %v5954 = vld [vmem:[%s5435 + $0x1030] sm:$0xff]
        %v5955 = vld [vmem:[%s5435 + $0x1038] sm:$0xff]
        %v5956 = vld [vmem:[%s5435 + $0x1040] sm:$0xff]
        %v5957 = vld [vmem:[%s5435 + $0x1048] sm:$0xff]
        %v5958 = vld [vmem:[%s5435 + $0x1050] sm:$0xff]
        %v5959 = vld [vmem:[%s5435 + $0x1058] sm:$0xff]
        %v5960 = vld [vmem:[%s5435 + $0x1060] sm:$0xff]
        %v5961 = vld [vmem:[%s5435 + $0x1068] sm:$0xff]
        %v5962 = vld [vmem:[%s5435 + $0x1070] sm:$0xff]
        %v5963 = vld [vmem:[%s5435 + $0x1078] sm:$0xff]
        %v6492 = vunpack.c.l.b16 %v5436
        %v6493 = vunpack.c.h.b16 %v5436
        %v6494 = vunpack.c.l.b16 %v5437
        %v6495 = vunpack.c.h.b16 %v5437
        %v6496 = vunpack.c.l.b16 %v5438
        %v6497 = vunpack.c.h.b16 %v5438
        %v6498 = vunpack.c.l.b16 %v5439
        %v6499 = vunpack.c.h.b16 %v5439
        %v6500 = vunpack.c.l.b16 %v5440
        %v6501 = vunpack.c.h.b16 %v5440
        %v6502 = vunpack.c.l.b16 %v5441
        %v6503 = vunpack.c.h.b16 %v5441
        %v6504 = vunpack.c.l.b16 %v5442
        %v6505 = vunpack.c.h.b16 %v5442
        %v6506 = vunpack.c.l.b16 %v5443
        %v6507 = vunpack.c.h.b16 %v5443
        %v6508 = vunpack.c.l.b16 %v5444
        %v6509 = vunpack.c.h.b16 %v5444
        %v6510 = vunpack.c.l.b16 %v5445
        %v6511 = vunpack.c.h.b16 %v5445
        %v6512 = vunpack.c.l.b16 %v5446
        %v6513 = vunpack.c.h.b16 %v5446
        %v6514 = vunpack.c.l.b16 %v5447
        %v6515 = vunpack.c.h.b16 %v5447
        %v6516 = vunpack.c.l.b16 %v5448
        %v6517 = vunpack.c.h.b16 %v5448
        %v6518 = vunpack.c.l.b16 %v5449
        %v6519 = vunpack.c.h.b16 %v5449
        %v6520 = vunpack.c.l.b16 %v5450
        %v6521 = vunpack.c.h.b16 %v5450
        %v6522 = vunpack.c.l.b16 %v5451
        %v6523 = vunpack.c.h.b16 %v5451
        %v6524 = vunpack.c.l.b16 %v5452
        %v6525 = vunpack.c.h.b16 %v5452
        %v6526 = vunpack.c.l.b16 %v5453
        %v6527 = vunpack.c.h.b16 %v5453
        %v6528 = vunpack.c.l.b16 %v5454
        %v6529 = vunpack.c.h.b16 %v5454
        %v6530 = vunpack.c.l.b16 %v5455
        %v6531 = vunpack.c.h.b16 %v5455
        %v6532 = vunpack.c.l.b16 %v5456
        %v6533 = vunpack.c.h.b16 %v5456
        %v6534 = vunpack.c.l.b16 %v5457
        %v6535 = vunpack.c.h.b16 %v5457
        %v6536 = vunpack.c.l.b16 %v5458
        %v6537 = vunpack.c.h.b16 %v5458
        %v6538 = vunpack.c.l.b16 %v5459
        %v6539 = vunpack.c.h.b16 %v5459
        %v6540 = vunpack.c.l.b16 %v5460
        %v6541 = vunpack.c.h.b16 %v5460
        %v6542 = vunpack.c.l.b16 %v5461
        %v6543 = vunpack.c.h.b16 %v5461
        %v6544 = vunpack.c.l.b16 %v5462
        %v6545 = vunpack.c.h.b16 %v5462
        %v6546 = vunpack.c.l.b16 %v5463
        %v6547 = vunpack.c.h.b16 %v5463
        %v6548 = vunpack.c.l.b16 %v5464
        %v6549 = vunpack.c.h.b16 %v5464
        %v6550 = vunpack.c.l.b16 %v5465
        %v6551 = vunpack.c.h.b16 %v5465
        %v6552 = vunpack.c.l.b16 %v5466
        %v6553 = vunpack.c.h.b16 %v5466
        %v6554 = vunpack.c.l.b16 %v5467
        %v6555 = vunpack.c.h.b16 %v5467
        %v6556 = vunpack.c.l.b16 %v5468
        %v6557 = vunpack.c.h.b16 %v5468
        %v6558 = vunpack.c.l.b16 %v5469
        %v6559 = vunpack.c.h.b16 %v5469
        %v6560 = vunpack.c.l.b16 %v5470
        %v6561 = vunpack.c.h.b16 %v5470
        %v6562 = vunpack.c.l.b16 %v5471
        %v6563 = vunpack.c.h.b16 %v5471
        %v6564 = vunpack.c.l.b16 %v5472
        %v6565 = vunpack.c.h.b16 %v5472
        %v6566 = vunpack.c.l.b16 %v5473
        %v6567 = vunpack.c.h.b16 %v5473
        %v6568 = vunpack.c.l.b16 %v5474
        %v6569 = vunpack.c.h.b16 %v5474
        %v6570 = vunpack.c.l.b16 %v5475
        %v6571 = vunpack.c.h.b16 %v5475
        %v6572 = vunpack.c.l.b16 %v5476
        %v6573 = vunpack.c.h.b16 %v5476
        %v6574 = vunpack.c.l.b16 %v5477
        %v6575 = vunpack.c.h.b16 %v5477
        %v6576 = vunpack.c.l.b16 %v5478
        %v6577 = vunpack.c.h.b16 %v5478
        %v6578 = vunpack.c.l.b16 %v5479
        %v6579 = vunpack.c.h.b16 %v5479
        %v6580 = vunpack.c.l.b16 %v5480
        %v6581 = vunpack.c.h.b16 %v5480
        %v6582 = vunpack.c.l.b16 %v5481
        %v6583 = vunpack.c.h.b16 %v5481
        %v6584 = vunpack.c.l.b16 %v5482
        %v6585 = vunpack.c.h.b16 %v5482
        %v6586 = vunpack.c.l.b16 %v5483
        %v6587 = vunpack.c.h.b16 %v5483
        %v6588 = vunpack.c.l.b16 %v5484
        %v6589 = vunpack.c.h.b16 %v5484
        %v6590 = vunpack.c.l.b16 %v5485
        %v6591 = vunpack.c.h.b16 %v5485
        %v6592 = vunpack.c.l.b16 %v5486
        %v6593 = vunpack.c.h.b16 %v5486
        %v6594 = vunpack.c.l.b16 %v5487
        %v6595 = vunpack.c.h.b16 %v5487
        %v6596 = vunpack.c.l.b16 %v5488
        %v6597 = vunpack.c.h.b16 %v5488
        %v6598 = vunpack.c.l.b16 %v5489
        %v6599 = vunpack.c.h.b16 %v5489
        %v6600 = vunpack.c.l.b16 %v5490
        %v6601 = vunpack.c.h.b16 %v5490
        %v6602 = vunpack.c.l.b16 %v5491
        %v6603 = vunpack.c.h.b16 %v5491
        %v6604 = vunpack.c.l.b16 %v5492
        %v6605 = vunpack.c.h.b16 %v5492
        %v6606 = vunpack.c.l.b16 %v5493
        %v6607 = vunpack.c.h.b16 %v5493
        %v6608 = vunpack.c.l.b16 %v5494
        %v6609 = vunpack.c.h.b16 %v5494
        %v6610 = vunpack.c.l.b16 %v5495
        %v6611 = vunpack.c.h.b16 %v5495
        %v6612 = vunpack.c.l.b16 %v5496
        %v6613 = vunpack.c.h.b16 %v5496
        %v6614 = vunpack.c.l.b16 %v5497
        %v6615 = vunpack.c.h.b16 %v5497
        %v6616 = vunpack.c.l.b16 %v5498
        %v6617 = vunpack.c.h.b16 %v5498
        %v6618 = vunpack.c.l.b16 %v5499
        %v6619 = vunpack.c.h.b16 %v5499
        %v6620 = vunpack.c.l.b16 %v5500
        %v6621 = vunpack.c.h.b16 %v5500
        %v6622 = vunpack.c.l.b16 %v5501
        %v6623 = vunpack.c.h.b16 %v5501
        %v6624 = vunpack.c.l.b16 %v5502
        %v6625 = vunpack.c.h.b16 %v5502
        %v6626 = vunpack.c.l.b16 %v5503
        %v6627 = vunpack.c.h.b16 %v5503
        %v6628 = vunpack.c.l.b16 %v5504
        %v6629 = vunpack.c.h.b16 %v5504
        %v6630 = vunpack.c.l.b16 %v5505
        %v6631 = vunpack.c.h.b16 %v5505
        %v6632 = vunpack.c.l.b16 %v5506
        %v6633 = vunpack.c.h.b16 %v5506
        %v6634 = vunpack.c.l.b16 %v5507
        %v6635 = vunpack.c.h.b16 %v5507
        %v6636 = vunpack.c.l.b16 %v5508
        %v6637 = vunpack.c.h.b16 %v5508
        %v6638 = vunpack.c.l.b16 %v5509
        %v6639 = vunpack.c.h.b16 %v5509
        %v6640 = vunpack.c.l.b16 %v5510
        %v6641 = vunpack.c.h.b16 %v5510
        %v6642 = vunpack.c.l.b16 %v5511
        %v6643 = vunpack.c.h.b16 %v5511
        %v6644 = vunpack.c.l.b16 %v5512
        %v6645 = vunpack.c.h.b16 %v5512
        %v6646 = vunpack.c.l.b16 %v5513
        %v6647 = vunpack.c.h.b16 %v5513
        %v6648 = vunpack.c.l.b16 %v5514
        %v6649 = vunpack.c.h.b16 %v5514
        %v6650 = vunpack.c.l.b16 %v5515
        %v6651 = vunpack.c.h.b16 %v5515
        %v6652 = vunpack.c.l.b16 %v5516
        %v6653 = vunpack.c.h.b16 %v5516
        %v6654 = vunpack.c.l.b16 %v5517
        %v6655 = vunpack.c.h.b16 %v5517
        %v6656 = vunpack.c.l.b16 %v5518
        %v6657 = vunpack.c.h.b16 %v5518
        %v6658 = vunpack.c.l.b16 %v5519
        %v6659 = vunpack.c.h.b16 %v5519
        %v6660 = vunpack.c.l.b16 %v5520
        %v6661 = vunpack.c.h.b16 %v5520
        %v6662 = vunpack.c.l.b16 %v5521
        %v6663 = vunpack.c.h.b16 %v5521
        %v6664 = vunpack.c.l.b16 %v5522
        %v6665 = vunpack.c.h.b16 %v5522
        %v6666 = vunpack.c.l.b16 %v5523
        %v6667 = vunpack.c.h.b16 %v5523
        %v6668 = vunpack.c.l.b16 %v5524
        %v6669 = vunpack.c.h.b16 %v5524
        %v6670 = vunpack.c.l.b16 %v5525
        %v6671 = vunpack.c.h.b16 %v5525
        %v6672 = vunpack.c.l.b16 %v5526
        %v6673 = vunpack.c.h.b16 %v5526
        %v6674 = vunpack.c.l.b16 %v5527
        %v6675 = vunpack.c.h.b16 %v5527
        %v6676 = vunpack.c.l.b16 %v5528
        %v6677 = vunpack.c.h.b16 %v5528
        %v6678 = vunpack.c.l.b16 %v5529
        %v6679 = vunpack.c.h.b16 %v5529
        %v6680 = vunpack.c.l.b16 %v5530
        %v6681 = vunpack.c.h.b16 %v5530
        %v6682 = vunpack.c.l.b16 %v5531
        %v6683 = vunpack.c.h.b16 %v5531
        %v6684 = vunpack.c.l.b16 %v5532
        %v6685 = vunpack.c.h.b16 %v5532
        %v6686 = vunpack.c.l.b16 %v5533
        %v6687 = vunpack.c.h.b16 %v5533
        %v6688 = vunpack.c.l.b16 %v5534
        %v6689 = vunpack.c.h.b16 %v5534
        %v6690 = vunpack.c.l.b16 %v5535
        %v6691 = vunpack.c.h.b16 %v5535
        %v6692 = vunpack.c.l.b16 %v5536
        %v6693 = vunpack.c.h.b16 %v5536
        %v6694 = vunpack.c.l.b16 %v5537
        %v6695 = vunpack.c.h.b16 %v5537
        %v6696 = vunpack.c.l.b16 %v5538
        %v6697 = vunpack.c.h.b16 %v5538
        %v6698 = vunpack.c.l.b16 %v5539
        %v6699 = vunpack.c.h.b16 %v5539
        %v6700 = vunpack.c.l.b16 %v5540
        %v6701 = vunpack.c.h.b16 %v5540
        %v6702 = vunpack.c.l.b16 %v5541
        %v6703 = vunpack.c.h.b16 %v5541
        %v6704 = vunpack.c.l.b16 %v5542
        %v6705 = vunpack.c.h.b16 %v5542
        %v6706 = vunpack.c.l.b16 %v5543
        %v6707 = vunpack.c.h.b16 %v5543
        %v6708 = vunpack.c.l.b16 %v5544
        %v6709 = vunpack.c.h.b16 %v5544
        %v6710 = vunpack.c.l.b16 %v5545
        %v6711 = vunpack.c.h.b16 %v5545
        %v6712 = vunpack.c.l.b16 %v5546
        %v6713 = vunpack.c.h.b16 %v5546
        %v6714 = vunpack.c.l.b16 %v5547
        %v6715 = vunpack.c.h.b16 %v5547
        %v6716 = vunpack.c.l.b16 %v5548
        %v6717 = vunpack.c.h.b16 %v5548
        %v6718 = vunpack.c.l.b16 %v5549
        %v6719 = vunpack.c.h.b16 %v5549
        %v6720 = vunpack.c.l.b16 %v5550
        %v6721 = vunpack.c.h.b16 %v5550
        %v6722 = vunpack.c.l.b16 %v5551
        %v6723 = vunpack.c.h.b16 %v5551
        %v6724 = vunpack.c.l.b16 %v5552
        %v6725 = vunpack.c.h.b16 %v5552
        %v6726 = vunpack.c.l.b16 %v5553
        %v6727 = vunpack.c.h.b16 %v5553
        %v6728 = vunpack.c.l.b16 %v5554
        %v6729 = vunpack.c.h.b16 %v5554
        %v6730 = vunpack.c.l.b16 %v5555
        %v6731 = vunpack.c.h.b16 %v5555
        %v6732 = vunpack.c.l.b16 %v5556
        %v6733 = vunpack.c.h.b16 %v5556
        %v6734 = vunpack.c.l.b16 %v5557
        %v6735 = vunpack.c.h.b16 %v5557
        %v6736 = vunpack.c.l.b16 %v5558
        %v6737 = vunpack.c.h.b16 %v5558
        %v6738 = vunpack.c.l.b16 %v5559
        %v6739 = vunpack.c.h.b16 %v5559
        %v6740 = vunpack.c.l.b16 %v5560
        %v6741 = vunpack.c.h.b16 %v5560
        %v6742 = vunpack.c.l.b16 %v5561
        %v6743 = vunpack.c.h.b16 %v5561
        %v6744 = vunpack.c.l.b16 %v5562
        %v6745 = vunpack.c.h.b16 %v5562
        %v6746 = vunpack.c.l.b16 %v5563
        %v6747 = vunpack.c.h.b16 %v5563
        %v6748 = vunpack.c.l.b16 %v5564
        %v6749 = vunpack.c.h.b16 %v5564
        %v6750 = vunpack.c.l.b16 %v5565
        %v6751 = vunpack.c.h.b16 %v5565
        %v6752 = vunpack.c.l.b16 %v5566
        %v6753 = vunpack.c.h.b16 %v5566
        %v6754 = vunpack.c.l.b16 %v5567
        %v6755 = vunpack.c.h.b16 %v5567
        %v6756 = vunpack.c.l.b16 %v5568
        %v6757 = vunpack.c.h.b16 %v5568
        %v6758 = vunpack.c.l.b16 %v5569
        %v6759 = vunpack.c.h.b16 %v5569
        %v6760 = vunpack.c.l.b16 %v5570
        %v6761 = vunpack.c.h.b16 %v5570
        %v6762 = vunpack.c.l.b16 %v5571
        %v6763 = vunpack.c.h.b16 %v5571
        %v6764 = vunpack.c.l.b16 %v5572
        %v6765 = vunpack.c.h.b16 %v5572
        %v6766 = vunpack.c.l.b16 %v5573
        %v6767 = vunpack.c.h.b16 %v5573
        %v6768 = vunpack.c.l.b16 %v5574
        %v6769 = vunpack.c.h.b16 %v5574
        %v6770 = vunpack.c.l.b16 %v5575
        %v6771 = vunpack.c.h.b16 %v5575
        %v6772 = vunpack.c.l.b16 %v5576
        %v6773 = vunpack.c.h.b16 %v5576
        %v6774 = vunpack.c.l.b16 %v5577
        %v6775 = vunpack.c.h.b16 %v5577
        %v6776 = vunpack.c.l.b16 %v5578
        %v6777 = vunpack.c.h.b16 %v5578
        %v6778 = vunpack.c.l.b16 %v5579
        %v6779 = vunpack.c.h.b16 %v5579
        %v6780 = vunpack.c.l.b16 %v5580
        %v6781 = vunpack.c.h.b16 %v5580
        %v6782 = vunpack.c.l.b16 %v5581
        %v6783 = vunpack.c.h.b16 %v5581
        %v6784 = vunpack.c.l.b16 %v5582
        %v6785 = vunpack.c.h.b16 %v5582
        %v6786 = vunpack.c.l.b16 %v5583
        %v6787 = vunpack.c.h.b16 %v5583
        %v6788 = vunpack.c.l.b16 %v5584
        %v6789 = vunpack.c.h.b16 %v5584
        %v6790 = vunpack.c.l.b16 %v5585
        %v6791 = vunpack.c.h.b16 %v5585
        %v6792 = vunpack.c.l.b16 %v5586
        %v6793 = vunpack.c.h.b16 %v5586
        %v6794 = vunpack.c.l.b16 %v5587
        %v6795 = vunpack.c.h.b16 %v5587
        %v6796 = vunpack.c.l.b16 %v5588
        %v6797 = vunpack.c.h.b16 %v5588
        %v6798 = vunpack.c.l.b16 %v5589
        %v6799 = vunpack.c.h.b16 %v5589
        %v6800 = vunpack.c.l.b16 %v5590
        %v6801 = vunpack.c.h.b16 %v5590
        %v6802 = vunpack.c.l.b16 %v5591
        %v6803 = vunpack.c.h.b16 %v5591
        %v6804 = vunpack.c.l.b16 %v5592
        %v6805 = vunpack.c.h.b16 %v5592
        %v6806 = vunpack.c.l.b16 %v5593
        %v6807 = vunpack.c.h.b16 %v5593
        %v6808 = vunpack.c.l.b16 %v5594
        %v6809 = vunpack.c.h.b16 %v5594
        %v6810 = vunpack.c.l.b16 %v5595
        %v6811 = vunpack.c.h.b16 %v5595
        %v6812 = vunpack.c.l.b16 %v5596
        %v6813 = vunpack.c.h.b16 %v5596
        %v6814 = vunpack.c.l.b16 %v5597
        %v6815 = vunpack.c.h.b16 %v5597
        %v6816 = vunpack.c.l.b16 %v5598
        %v6817 = vunpack.c.h.b16 %v5598
        %v6818 = vunpack.c.l.b16 %v5599
        %v6819 = vunpack.c.h.b16 %v5599
        %v6820 = vunpack.c.l.b16 %v5600
        %v6821 = vunpack.c.h.b16 %v5600
        %v6822 = vunpack.c.l.b16 %v5601
        %v6823 = vunpack.c.h.b16 %v5601
        %v6824 = vunpack.c.l.b16 %v5602
        %v6825 = vunpack.c.h.b16 %v5602
        %v6826 = vunpack.c.l.b16 %v5603
        %v6827 = vunpack.c.h.b16 %v5603
        %v6828 = vunpack.c.l.b16 %v5604
        %v6829 = vunpack.c.h.b16 %v5604
        %v6830 = vunpack.c.l.b16 %v5605
        %v6831 = vunpack.c.h.b16 %v5605
        %v6832 = vunpack.c.l.b16 %v5606
        %v6833 = vunpack.c.h.b16 %v5606
        %v6834 = vunpack.c.l.b16 %v5607
        %v6835 = vunpack.c.h.b16 %v5607
        %v6836 = vunpack.c.l.b16 %v5608
        %v6837 = vunpack.c.h.b16 %v5608
        %v6838 = vunpack.c.l.b16 %v5609
        %v6839 = vunpack.c.h.b16 %v5609
        %v6840 = vunpack.c.l.b16 %v5610
        %v6841 = vunpack.c.h.b16 %v5610
        %v6842 = vunpack.c.l.b16 %v5611
        %v6843 = vunpack.c.h.b16 %v5611
        %v6844 = vunpack.c.l.b16 %v5612
        %v6845 = vunpack.c.h.b16 %v5612
        %v6846 = vunpack.c.l.b16 %v5613
        %v6847 = vunpack.c.h.b16 %v5613
        %v6848 = vunpack.c.l.b16 %v5614
        %v6849 = vunpack.c.h.b16 %v5614
        %v6850 = vunpack.c.l.b16 %v5615
        %v6851 = vunpack.c.h.b16 %v5615
        %v6852 = vunpack.c.l.b16 %v5616
        %v6853 = vunpack.c.h.b16 %v5616
        %v6854 = vunpack.c.l.b16 %v5617
        %v6855 = vunpack.c.h.b16 %v5617
        %v6856 = vunpack.c.l.b16 %v5618
        %v6857 = vunpack.c.h.b16 %v5618
        %v6858 = vunpack.c.l.b16 %v5619
        %v6859 = vunpack.c.h.b16 %v5619
        %v6860 = vunpack.c.l.b16 %v5620
        %v6861 = vunpack.c.h.b16 %v5620
        %v6862 = vunpack.c.l.b16 %v5621
        %v6863 = vunpack.c.h.b16 %v5621
        %v6864 = vunpack.c.l.b16 %v5622
        %v6865 = vunpack.c.h.b16 %v5622
        %v6866 = vunpack.c.l.b16 %v5623
        %v6867 = vunpack.c.h.b16 %v5623
        %v6868 = vunpack.c.l.b16 %v5624
        %v6869 = vunpack.c.h.b16 %v5624
        %v6870 = vunpack.c.l.b16 %v5625
        %v6871 = vunpack.c.h.b16 %v5625
        %v6872 = vunpack.c.l.b16 %v5626
        %v6873 = vunpack.c.h.b16 %v5626
        %v6874 = vunpack.c.l.b16 %v5627
        %v6875 = vunpack.c.h.b16 %v5627
        %v6876 = vunpack.c.l.b16 %v5628
        %v6877 = vunpack.c.h.b16 %v5628
        %v6878 = vunpack.c.l.b16 %v5629
        %v6879 = vunpack.c.h.b16 %v5629
        %v6880 = vunpack.c.l.b16 %v5630
        %v6881 = vunpack.c.h.b16 %v5630
        %v6882 = vunpack.c.l.b16 %v5631
        %v6883 = vunpack.c.h.b16 %v5631
        %v6884 = vunpack.c.l.b16 %v5632
        %v6885 = vunpack.c.h.b16 %v5632
        %v6886 = vunpack.c.l.b16 %v5633
        %v6887 = vunpack.c.h.b16 %v5633
        %v6888 = vunpack.c.l.b16 %v5634
        %v6889 = vunpack.c.h.b16 %v5634
        %v6890 = vunpack.c.l.b16 %v5635
        %v6891 = vunpack.c.h.b16 %v5635
        %v6892 = vunpack.c.l.b16 %v5636
        %v6893 = vunpack.c.h.b16 %v5636
        %v6894 = vunpack.c.l.b16 %v5637
        %v6895 = vunpack.c.h.b16 %v5637
        %v6896 = vunpack.c.l.b16 %v5638
        %v6897 = vunpack.c.h.b16 %v5638
        %v6898 = vunpack.c.l.b16 %v5639
        %v6899 = vunpack.c.h.b16 %v5639
        %v6900 = vunpack.c.l.b16 %v5640
        %v6901 = vunpack.c.h.b16 %v5640
        %v6902 = vunpack.c.l.b16 %v5641
        %v6903 = vunpack.c.h.b16 %v5641
        %v6904 = vunpack.c.l.b16 %v5642
        %v6905 = vunpack.c.h.b16 %v5642
        %v6906 = vunpack.c.l.b16 %v5643
        %v6907 = vunpack.c.h.b16 %v5643
        %v6908 = vunpack.c.l.b16 %v5644
        %v6909 = vunpack.c.h.b16 %v5644
        %v6910 = vunpack.c.l.b16 %v5645
        %v6911 = vunpack.c.h.b16 %v5645
        %v6912 = vunpack.c.l.b16 %v5646
        %v6913 = vunpack.c.h.b16 %v5646
        %v6914 = vunpack.c.l.b16 %v5647
        %v6915 = vunpack.c.h.b16 %v5647
        %v6916 = vunpack.c.l.b16 %v5648
        %v6917 = vunpack.c.h.b16 %v5648
        %v6918 = vunpack.c.l.b16 %v5649
        %v6919 = vunpack.c.h.b16 %v5649
        %v6920 = vunpack.c.l.b16 %v5650
        %v6921 = vunpack.c.h.b16 %v5650
        %v6922 = vunpack.c.l.b16 %v5651
        %v6923 = vunpack.c.h.b16 %v5651
        %v6924 = vunpack.c.l.b16 %v5652
        %v6925 = vunpack.c.h.b16 %v5652
        %v6926 = vunpack.c.l.b16 %v5653
        %v6927 = vunpack.c.h.b16 %v5653
        %v6928 = vunpack.c.l.b16 %v5654
        %v6929 = vunpack.c.h.b16 %v5654
        %v6930 = vunpack.c.l.b16 %v5655
        %v6931 = vunpack.c.h.b16 %v5655
        %v6932 = vunpack.c.l.b16 %v5656
        %v6933 = vunpack.c.h.b16 %v5656
        %v6934 = vunpack.c.l.b16 %v5657
        %v6935 = vunpack.c.h.b16 %v5657
        %v6936 = vunpack.c.l.b16 %v5658
        %v6937 = vunpack.c.h.b16 %v5658
        %v6938 = vunpack.c.l.b16 %v5659
        %v6939 = vunpack.c.h.b16 %v5659
        %v6940 = vunpack.c.l.b16 %v5660
        %v6941 = vunpack.c.h.b16 %v5660
        %v6942 = vunpack.c.l.b16 %v5661
        %v6943 = vunpack.c.h.b16 %v5661
        %v6944 = vunpack.c.l.b16 %v5662
        %v6945 = vunpack.c.h.b16 %v5662
        %v6946 = vunpack.c.l.b16 %v5663
        %v6947 = vunpack.c.h.b16 %v5663
        %v6948 = vunpack.c.l.b16 %v5664
        %v6949 = vunpack.c.h.b16 %v5664
        %v6950 = vunpack.c.l.b16 %v5665
        %v6951 = vunpack.c.h.b16 %v5665
        %v6952 = vunpack.c.l.b16 %v5666
        %v6953 = vunpack.c.h.b16 %v5666
        %v6954 = vunpack.c.l.b16 %v5667
        %v6955 = vunpack.c.h.b16 %v5667
        %v6956 = vunpack.c.l.b16 %v5668
        %v6957 = vunpack.c.h.b16 %v5668
        %v6958 = vunpack.c.l.b16 %v5669
        %v6959 = vunpack.c.h.b16 %v5669
        %v6960 = vunpack.c.l.b16 %v5670
        %v6961 = vunpack.c.h.b16 %v5670
        %v6962 = vunpack.c.l.b16 %v5671
        %v6963 = vunpack.c.h.b16 %v5671
        %v6964 = vunpack.c.l.b16 %v5672
        %v6965 = vunpack.c.h.b16 %v5672
        %v6966 = vunpack.c.l.b16 %v5673
        %v6967 = vunpack.c.h.b16 %v5673
        %v6968 = vunpack.c.l.b16 %v5674
        %v6969 = vunpack.c.h.b16 %v5674
        %v6970 = vunpack.c.l.b16 %v5675
        %v6971 = vunpack.c.h.b16 %v5675
        %v6972 = vunpack.c.l.b16 %v5676
        %v6973 = vunpack.c.h.b16 %v5676
        %v6974 = vunpack.c.l.b16 %v5677
        %v6975 = vunpack.c.h.b16 %v5677
        %v6976 = vunpack.c.l.b16 %v5678
        %v6977 = vunpack.c.h.b16 %v5678
        %v6978 = vunpack.c.l.b16 %v5679
        %v6979 = vunpack.c.h.b16 %v5679
        %v6980 = vunpack.c.l.b16 %v5680
        %v6981 = vunpack.c.h.b16 %v5680
        %v6982 = vunpack.c.l.b16 %v5681
        %v6983 = vunpack.c.h.b16 %v5681
        %v6984 = vunpack.c.l.b16 %v5682
        %v6985 = vunpack.c.h.b16 %v5682
        %v6986 = vunpack.c.l.b16 %v5683
        %v6987 = vunpack.c.h.b16 %v5683
        %v6988 = vunpack.c.l.b16 %v5684
        %v6989 = vunpack.c.h.b16 %v5684
        %v6990 = vunpack.c.l.b16 %v5685
        %v6991 = vunpack.c.h.b16 %v5685
        %v6992 = vunpack.c.l.b16 %v5686
        %v6993 = vunpack.c.h.b16 %v5686
        %v6994 = vunpack.c.l.b16 %v5687
        %v6995 = vunpack.c.h.b16 %v5687
        %v6996 = vunpack.c.l.b16 %v5688
        %v6997 = vunpack.c.h.b16 %v5688
        %v6998 = vunpack.c.l.b16 %v5689
        %v6999 = vunpack.c.h.b16 %v5689
        %v7000 = vunpack.c.l.b16 %v5690
        %v7001 = vunpack.c.h.b16 %v5690
        %v7002 = vunpack.c.l.b16 %v5691
        %v7003 = vunpack.c.h.b16 %v5691
        %v7004 = vunpack.c.l.b16 %v5692
        %v7005 = vunpack.c.h.b16 %v5692
        %v7006 = vunpack.c.l.b16 %v5693
        %v7007 = vunpack.c.h.b16 %v5693
        %v7008 = vunpack.c.l.b16 %v5694
        %v7009 = vunpack.c.h.b16 %v5694
        %v7010 = vunpack.c.l.b16 %v5695
        %v7011 = vunpack.c.h.b16 %v5695
        %v7012 = vunpack.c.l.b16 %v5696
        %v7013 = vunpack.c.h.b16 %v5696
        %v7014 = vunpack.c.l.b16 %v5697
        %v7015 = vunpack.c.h.b16 %v5697
        %v7016 = vunpack.c.l.b16 %v5698
        %v7017 = vunpack.c.h.b16 %v5698
        %v7018 = vunpack.c.l.b16 %v5699
        %v7019 = vunpack.c.h.b16 %v5699
        %v7020 = vunpack.c.l.b16 %v5700
        %v7021 = vunpack.c.h.b16 %v5700
        %v7022 = vunpack.c.l.b16 %v5701
        %v7023 = vunpack.c.h.b16 %v5701
        %v7024 = vunpack.c.l.b16 %v5702
        %v7025 = vunpack.c.h.b16 %v5702
        %v7026 = vunpack.c.l.b16 %v5703
        %v7027 = vunpack.c.h.b16 %v5703
        %v7028 = vunpack.c.l.b16 %v5704
        %v7029 = vunpack.c.h.b16 %v5704
        %v7030 = vunpack.c.l.b16 %v5705
        %v7031 = vunpack.c.h.b16 %v5705
        %v7032 = vunpack.c.l.b16 %v5706
        %v7033 = vunpack.c.h.b16 %v5706
        %v7034 = vunpack.c.l.b16 %v5707
        %v7035 = vunpack.c.h.b16 %v5707
        %v7036 = vunpack.c.l.b16 %v5708
        %v7037 = vunpack.c.h.b16 %v5708
        %v7038 = vunpack.c.l.b16 %v5709
        %v7039 = vunpack.c.h.b16 %v5709
        %v7040 = vunpack.c.l.b16 %v5710
        %v7041 = vunpack.c.h.b16 %v5710
        %v7042 = vunpack.c.l.b16 %v5711
        %v7043 = vunpack.c.h.b16 %v5711
        %v7044 = vunpack.c.l.b16 %v5712
        %v7045 = vunpack.c.h.b16 %v5712
        %v7046 = vunpack.c.l.b16 %v5713
        %v7047 = vunpack.c.h.b16 %v5713
        %v7048 = vunpack.c.l.b16 %v5714
        %v7049 = vunpack.c.h.b16 %v5714
        %v7050 = vunpack.c.l.b16 %v5715
        %v7051 = vunpack.c.h.b16 %v5715
        %v7052 = vunpack.c.l.b16 %v5716
        %v7053 = vunpack.c.h.b16 %v5716
        %v7054 = vunpack.c.l.b16 %v5717
        %v7055 = vunpack.c.h.b16 %v5717
        %v7056 = vunpack.c.l.b16 %v5718
        %v7057 = vunpack.c.h.b16 %v5718
        %v7058 = vunpack.c.l.b16 %v5719
        %v7059 = vunpack.c.h.b16 %v5719
        %v7060 = vunpack.c.l.b16 %v5720
        %v7061 = vunpack.c.h.b16 %v5720
        %v7062 = vunpack.c.l.b16 %v5721
        %v7063 = vunpack.c.h.b16 %v5721
        %v7064 = vunpack.c.l.b16 %v5722
        %v7065 = vunpack.c.h.b16 %v5722
        %v7066 = vunpack.c.l.b16 %v5723
        %v7067 = vunpack.c.h.b16 %v5723
        %v7068 = vunpack.c.l.b16 %v5724
        %v7069 = vunpack.c.h.b16 %v5724
        %v7070 = vunpack.c.l.b16 %v5725
        %v7071 = vunpack.c.h.b16 %v5725
        %v7072 = vunpack.c.l.b16 %v5726
        %v7073 = vunpack.c.h.b16 %v5726
        %v7074 = vunpack.c.l.b16 %v5727
        %v7075 = vunpack.c.h.b16 %v5727
        %v7076 = vunpack.c.l.b16 %v5728
        %v7077 = vunpack.c.h.b16 %v5728
        %v7078 = vunpack.c.l.b16 %v5729
        %v7079 = vunpack.c.h.b16 %v5729
        %v7080 = vunpack.c.l.b16 %v5730
        %v7081 = vunpack.c.h.b16 %v5730
        %v7082 = vunpack.c.l.b16 %v5731
        %v7083 = vunpack.c.h.b16 %v5731
        %v7084 = vunpack.c.l.b16 %v5732
        %v7085 = vunpack.c.h.b16 %v5732
        %v7086 = vunpack.c.l.b16 %v5733
        %v7087 = vunpack.c.h.b16 %v5733
        %v7088 = vunpack.c.l.b16 %v5734
        %v7089 = vunpack.c.h.b16 %v5734
        %v7090 = vunpack.c.l.b16 %v5735
        %v7091 = vunpack.c.h.b16 %v5735
        %v7092 = vunpack.c.l.b16 %v5736
        %v7093 = vunpack.c.h.b16 %v5736
        %v7094 = vunpack.c.l.b16 %v5737
        %v7095 = vunpack.c.h.b16 %v5737
        %v7096 = vunpack.c.l.b16 %v5738
        %v7097 = vunpack.c.h.b16 %v5738
        %v7098 = vunpack.c.l.b16 %v5739
        %v7099 = vunpack.c.h.b16 %v5739
        %v7100 = vunpack.c.l.b16 %v5740
        %v7101 = vunpack.c.h.b16 %v5740
        %v7102 = vunpack.c.l.b16 %v5741
        %v7103 = vunpack.c.h.b16 %v5741
        %v7104 = vunpack.c.l.b16 %v5742
        %v7105 = vunpack.c.h.b16 %v5742
        %v7106 = vunpack.c.l.b16 %v5743
        %v7107 = vunpack.c.h.b16 %v5743
        %v7108 = vunpack.c.l.b16 %v5744
        %v7109 = vunpack.c.h.b16 %v5744
        %v7110 = vunpack.c.l.b16 %v5745
        %v7111 = vunpack.c.h.b16 %v5745
        %v7112 = vunpack.c.l.b16 %v5746
        %v7113 = vunpack.c.h.b16 %v5746
        %v7114 = vunpack.c.l.b16 %v5747
        %v7115 = vunpack.c.h.b16 %v5747
        %v7116 = vunpack.c.l.b16 %v5748
        %v7117 = vunpack.c.h.b16 %v5748
        %v7118 = vunpack.c.l.b16 %v5749
        %v7119 = vunpack.c.h.b16 %v5749
        %v7120 = vunpack.c.l.b16 %v5750
        %v7121 = vunpack.c.h.b16 %v5750
        %v7122 = vunpack.c.l.b16 %v5751
        %v7123 = vunpack.c.h.b16 %v5751
        %v7124 = vunpack.c.l.b16 %v5752
        %v7125 = vunpack.c.h.b16 %v5752
        %v7126 = vunpack.c.l.b16 %v5753
        %v7127 = vunpack.c.h.b16 %v5753
        %v7128 = vunpack.c.l.b16 %v5754
        %v7129 = vunpack.c.h.b16 %v5754
        %v7130 = vunpack.c.l.b16 %v5755
        %v7131 = vunpack.c.h.b16 %v5755
        %v7132 = vunpack.c.l.b16 %v5756
        %v7133 = vunpack.c.h.b16 %v5756
        %v7134 = vunpack.c.l.b16 %v5757
        %v7135 = vunpack.c.h.b16 %v5757
        %v7136 = vunpack.c.l.b16 %v5758
        %v7137 = vunpack.c.h.b16 %v5758
        %v7138 = vunpack.c.l.b16 %v5759
        %v7139 = vunpack.c.h.b16 %v5759
        %v7140 = vunpack.c.l.b16 %v5760
        %v7141 = vunpack.c.h.b16 %v5760
        %v7142 = vunpack.c.l.b16 %v5761
        %v7143 = vunpack.c.h.b16 %v5761
        %v7144 = vunpack.c.l.b16 %v5762
        %v7145 = vunpack.c.h.b16 %v5762
        %v7146 = vunpack.c.l.b16 %v5763
        %v7147 = vunpack.c.h.b16 %v5763
        %v7148 = vunpack.c.l.b16 %v5764
        %v7149 = vunpack.c.h.b16 %v5764
        %v7150 = vunpack.c.l.b16 %v5765
        %v7151 = vunpack.c.h.b16 %v5765
        %v7152 = vunpack.c.l.b16 %v5766
        %v7153 = vunpack.c.h.b16 %v5766
        %v7154 = vunpack.c.l.b16 %v5767
        %v7155 = vunpack.c.h.b16 %v5767
        %v7156 = vunpack.c.l.b16 %v5768
        %v7157 = vunpack.c.h.b16 %v5768
        %v7158 = vunpack.c.l.b16 %v5769
        %v7159 = vunpack.c.h.b16 %v5769
        %v7160 = vunpack.c.l.b16 %v5770
        %v7161 = vunpack.c.h.b16 %v5770
        %v7162 = vunpack.c.l.b16 %v5771
        %v7163 = vunpack.c.h.b16 %v5771
        %v7164 = vunpack.c.l.b16 %v5772
        %v7165 = vunpack.c.h.b16 %v5772
        %v7166 = vunpack.c.l.b16 %v5773
        %v7167 = vunpack.c.h.b16 %v5773
        %v7168 = vunpack.c.l.b16 %v5774
        %v7169 = vunpack.c.h.b16 %v5774
        %v7170 = vunpack.c.l.b16 %v5775
        %v7171 = vunpack.c.h.b16 %v5775
        %v7172 = vunpack.c.l.b16 %v5776
        %v7173 = vunpack.c.h.b16 %v5776
        %v7174 = vunpack.c.l.b16 %v5777
        %v7175 = vunpack.c.h.b16 %v5777
        %v7176 = vunpack.c.l.b16 %v5778
        %v7177 = vunpack.c.h.b16 %v5778
        %v7178 = vunpack.c.l.b16 %v5779
        %v7179 = vunpack.c.h.b16 %v5779
        %v7180 = vunpack.c.l.b16 %v5780
        %v7181 = vunpack.c.h.b16 %v5780
        %v7182 = vunpack.c.l.b16 %v5781
        %v7183 = vunpack.c.h.b16 %v5781
        %v7184 = vunpack.c.l.b16 %v5782
        %v7185 = vunpack.c.h.b16 %v5782
        %v7186 = vunpack.c.l.b16 %v5783
        %v7187 = vunpack.c.h.b16 %v5783
        %v7188 = vunpack.c.l.b16 %v5784
        %v7189 = vunpack.c.h.b16 %v5784
        %v7190 = vunpack.c.l.b16 %v5785
        %v7191 = vunpack.c.h.b16 %v5785
        %v7192 = vunpack.c.l.b16 %v5786
        %v7193 = vunpack.c.h.b16 %v5786
        %v7194 = vunpack.c.l.b16 %v5787
        %v7195 = vunpack.c.h.b16 %v5787
        %v7196 = vunpack.c.l.b16 %v5788
        %v7197 = vunpack.c.h.b16 %v5788
        %v7198 = vunpack.c.l.b16 %v5789
        %v7199 = vunpack.c.h.b16 %v5789
        %v7200 = vunpack.c.l.b16 %v5790
        %v7201 = vunpack.c.h.b16 %v5790
        %v7202 = vunpack.c.l.b16 %v5791
        %v7203 = vunpack.c.h.b16 %v5791
        %v7204 = vunpack.c.l.b16 %v5792
        %v7205 = vunpack.c.h.b16 %v5792
        %v7206 = vunpack.c.l.b16 %v5793
        %v7207 = vunpack.c.h.b16 %v5793
        %v7208 = vunpack.c.l.b16 %v5794
        %v7209 = vunpack.c.h.b16 %v5794
        %v7210 = vunpack.c.l.b16 %v5795
        %v7211 = vunpack.c.h.b16 %v5795
        %v7212 = vunpack.c.l.b16 %v5796
        %v7213 = vunpack.c.h.b16 %v5796
        %v7214 = vunpack.c.l.b16 %v5797
        %v7215 = vunpack.c.h.b16 %v5797
        %v7216 = vunpack.c.l.b16 %v5798
        %v7217 = vunpack.c.h.b16 %v5798
        %v7218 = vunpack.c.l.b16 %v5799
        %v7219 = vunpack.c.h.b16 %v5799
        %v7220 = vunpack.c.l.b16 %v5800
        %v7221 = vunpack.c.h.b16 %v5800
        %v7222 = vunpack.c.l.b16 %v5801
        %v7223 = vunpack.c.h.b16 %v5801
        %v7224 = vunpack.c.l.b16 %v5802
        %v7225 = vunpack.c.h.b16 %v5802
        %v7226 = vunpack.c.l.b16 %v5803
        %v7227 = vunpack.c.h.b16 %v5803
        %v7228 = vunpack.c.l.b16 %v5804
        %v7229 = vunpack.c.h.b16 %v5804
        %v7230 = vunpack.c.l.b16 %v5805
        %v7231 = vunpack.c.h.b16 %v5805
        %v7232 = vunpack.c.l.b16 %v5806
        %v7233 = vunpack.c.h.b16 %v5806
        %v7234 = vunpack.c.l.b16 %v5807
        %v7235 = vunpack.c.h.b16 %v5807
        %v7236 = vunpack.c.l.b16 %v5808
        %v7237 = vunpack.c.h.b16 %v5808
        %v7238 = vunpack.c.l.b16 %v5809
        %v7239 = vunpack.c.h.b16 %v5809
        %v7240 = vunpack.c.l.b16 %v5810
        %v7241 = vunpack.c.h.b16 %v5810
        %v7242 = vunpack.c.l.b16 %v5811
        %v7243 = vunpack.c.h.b16 %v5811
        %v7244 = vunpack.c.l.b16 %v5812
        %v7245 = vunpack.c.h.b16 %v5812
        %v7246 = vunpack.c.l.b16 %v5813
        %v7247 = vunpack.c.h.b16 %v5813
        %v7248 = vunpack.c.l.b16 %v5814
        %v7249 = vunpack.c.h.b16 %v5814
        %v7250 = vunpack.c.l.b16 %v5815
        %v7251 = vunpack.c.h.b16 %v5815
        %v7252 = vunpack.c.l.b16 %v5816
        %v7253 = vunpack.c.h.b16 %v5816
        %v7254 = vunpack.c.l.b16 %v5817
        %v7255 = vunpack.c.h.b16 %v5817
        %v7256 = vunpack.c.l.b16 %v5818
        %v7257 = vunpack.c.h.b16 %v5818
        %v7258 = vunpack.c.l.b16 %v5819
        %v7259 = vunpack.c.h.b16 %v5819
        %v7260 = vunpack.c.l.b16 %v5820
        %v7261 = vunpack.c.h.b16 %v5820
        %v7262 = vunpack.c.l.b16 %v5821
        %v7263 = vunpack.c.h.b16 %v5821
        %v7264 = vunpack.c.l.b16 %v5822
        %v7265 = vunpack.c.h.b16 %v5822
        %v7266 = vunpack.c.l.b16 %v5823
        %v7267 = vunpack.c.h.b16 %v5823
        %v7268 = vunpack.c.l.b16 %v5824
        %v7269 = vunpack.c.h.b16 %v5824
        %v7270 = vunpack.c.l.b16 %v5825
        %v7271 = vunpack.c.h.b16 %v5825
        %v7272 = vunpack.c.l.b16 %v5826
        %v7273 = vunpack.c.h.b16 %v5826
        %v7274 = vunpack.c.l.b16 %v5827
        %v7275 = vunpack.c.h.b16 %v5827
        %v7276 = vunpack.c.l.b16 %v5828
        %v7277 = vunpack.c.h.b16 %v5828
        %v7278 = vunpack.c.l.b16 %v5829
        %v7279 = vunpack.c.h.b16 %v5829
        %v7280 = vunpack.c.l.b16 %v5830
        %v7281 = vunpack.c.h.b16 %v5830
        %v7282 = vunpack.c.l.b16 %v5831
        %v7283 = vunpack.c.h.b16 %v5831
        %v7284 = vunpack.c.l.b16 %v5832
        %v7285 = vunpack.c.h.b16 %v5832
        %v7286 = vunpack.c.l.b16 %v5833
        %v7287 = vunpack.c.h.b16 %v5833
        %v7288 = vunpack.c.l.b16 %v5834
        %v7289 = vunpack.c.h.b16 %v5834
        %v7290 = vunpack.c.l.b16 %v5835
        %v7291 = vunpack.c.h.b16 %v5835
        %v7292 = vunpack.c.l.b16 %v5836
        %v7293 = vunpack.c.h.b16 %v5836
        %v7294 = vunpack.c.l.b16 %v5837
        %v7295 = vunpack.c.h.b16 %v5837
        %v7296 = vunpack.c.l.b16 %v5838
        %v7297 = vunpack.c.h.b16 %v5838
        %v7298 = vunpack.c.l.b16 %v5839
        %v7299 = vunpack.c.h.b16 %v5839
        %v7300 = vunpack.c.l.b16 %v5840
        %v7301 = vunpack.c.h.b16 %v5840
        %v7302 = vunpack.c.l.b16 %v5841
        %v7303 = vunpack.c.h.b16 %v5841
        %v7304 = vunpack.c.l.b16 %v5842
        %v7305 = vunpack.c.h.b16 %v5842
        %v7306 = vunpack.c.l.b16 %v5843
        %v7307 = vunpack.c.h.b16 %v5843
        %v7308 = vunpack.c.l.b16 %v5844
        %v7309 = vunpack.c.h.b16 %v5844
        %v7310 = vunpack.c.l.b16 %v5845
        %v7311 = vunpack.c.h.b16 %v5845
        %v7312 = vunpack.c.l.b16 %v5846
        %v7313 = vunpack.c.h.b16 %v5846
        %v7314 = vunpack.c.l.b16 %v5847
        %v7315 = vunpack.c.h.b16 %v5847
        %v7316 = vunpack.c.l.b16 %v5848
        %v7317 = vunpack.c.h.b16 %v5848
        %v7318 = vunpack.c.l.b16 %v5849
        %v7319 = vunpack.c.h.b16 %v5849
        %v7320 = vunpack.c.l.b16 %v5850
        %v7321 = vunpack.c.h.b16 %v5850
        %v7322 = vunpack.c.l.b16 %v5851
        %v7323 = vunpack.c.h.b16 %v5851
        %v7324 = vunpack.c.l.b16 %v5852
        %v7325 = vunpack.c.h.b16 %v5852
        %v7326 = vunpack.c.l.b16 %v5853
        %v7327 = vunpack.c.h.b16 %v5853
        %v7328 = vunpack.c.l.b16 %v5854
        %v7329 = vunpack.c.h.b16 %v5854
        %v7330 = vunpack.c.l.b16 %v5855
        %v7331 = vunpack.c.h.b16 %v5855
        %v7332 = vunpack.c.l.b16 %v5856
        %v7333 = vunpack.c.h.b16 %v5856
        %v7334 = vunpack.c.l.b16 %v5857
        %v7335 = vunpack.c.h.b16 %v5857
        %v7336 = vunpack.c.l.b16 %v5858
        %v7337 = vunpack.c.h.b16 %v5858
        %v7338 = vunpack.c.l.b16 %v5859
        %v7339 = vunpack.c.h.b16 %v5859
        %v7340 = vunpack.c.l.b16 %v5860
        %v7341 = vunpack.c.h.b16 %v5860
        %v7342 = vunpack.c.l.b16 %v5861
        %v7343 = vunpack.c.h.b16 %v5861
        %v7344 = vunpack.c.l.b16 %v5862
        %v7345 = vunpack.c.h.b16 %v5862
        %v7346 = vunpack.c.l.b16 %v5863
        %v7347 = vunpack.c.h.b16 %v5863
        %v7348 = vunpack.c.l.b16 %v5864
        %v7349 = vunpack.c.h.b16 %v5864
        %v7350 = vunpack.c.l.b16 %v5865
        %v7351 = vunpack.c.h.b16 %v5865
        %v7352 = vunpack.c.l.b16 %v5866
        %v7353 = vunpack.c.h.b16 %v5866
        %v7354 = vunpack.c.l.b16 %v5867
        %v7355 = vunpack.c.h.b16 %v5867
        %v7356 = vunpack.c.l.b16 %v5868
        %v7357 = vunpack.c.h.b16 %v5868
        %v7358 = vunpack.c.l.b16 %v5869
        %v7359 = vunpack.c.h.b16 %v5869
        %v7360 = vunpack.c.l.b16 %v5870
        %v7361 = vunpack.c.h.b16 %v5870
        %v7362 = vunpack.c.l.b16 %v5871
        %v7363 = vunpack.c.h.b16 %v5871
        %v7364 = vunpack.c.l.b16 %v5872
        %v7365 = vunpack.c.h.b16 %v5872
        %v7366 = vunpack.c.l.b16 %v5873
        %v7367 = vunpack.c.h.b16 %v5873
        %v7368 = vunpack.c.l.b16 %v5874
        %v7369 = vunpack.c.h.b16 %v5874
        %v7370 = vunpack.c.l.b16 %v5875
        %v7371 = vunpack.c.h.b16 %v5875
        %v7372 = vunpack.c.l.b16 %v5876
        %v7373 = vunpack.c.h.b16 %v5876
        %v7374 = vunpack.c.l.b16 %v5877
        %v7375 = vunpack.c.h.b16 %v5877
        %v7376 = vunpack.c.l.b16 %v5878
        %v7377 = vunpack.c.h.b16 %v5878
        %v7378 = vunpack.c.l.b16 %v5879
        %v7379 = vunpack.c.h.b16 %v5879
        %v7380 = vunpack.c.l.b16 %v5880
        %v7381 = vunpack.c.h.b16 %v5880
        %v7382 = vunpack.c.l.b16 %v5881
        %v7383 = vunpack.c.h.b16 %v5881
        %v7384 = vunpack.c.l.b16 %v5882
        %v7385 = vunpack.c.h.b16 %v5882
        %v7386 = vunpack.c.l.b16 %v5883
        %v7387 = vunpack.c.h.b16 %v5883
        %v7388 = vunpack.c.l.b16 %v5884
        %v7389 = vunpack.c.h.b16 %v5884
        %v7390 = vunpack.c.l.b16 %v5885
        %v7391 = vunpack.c.h.b16 %v5885
        %v7392 = vunpack.c.l.b16 %v5886
        %v7393 = vunpack.c.h.b16 %v5886
        %v7394 = vunpack.c.l.b16 %v5887
        %v7395 = vunpack.c.h.b16 %v5887
        %v7396 = vunpack.c.l.b16 %v5888
        %v7397 = vunpack.c.h.b16 %v5888
        %v7398 = vunpack.c.l.b16 %v5889
        %v7399 = vunpack.c.h.b16 %v5889
        %v7400 = vunpack.c.l.b16 %v5890
        %v7401 = vunpack.c.h.b16 %v5890
        %v7402 = vunpack.c.l.b16 %v5891
        %v7403 = vunpack.c.h.b16 %v5891
        %v7404 = vunpack.c.l.b16 %v5892
        %v7405 = vunpack.c.h.b16 %v5892
        %v7406 = vunpack.c.l.b16 %v5893
        %v7407 = vunpack.c.h.b16 %v5893
        %v7408 = vunpack.c.l.b16 %v5894
        %v7409 = vunpack.c.h.b16 %v5894
        %v7410 = vunpack.c.l.b16 %v5895
        %v7411 = vunpack.c.h.b16 %v5895
        %v7412 = vunpack.c.l.b16 %v5896
        %v7413 = vunpack.c.h.b16 %v5896
        %v7414 = vunpack.c.l.b16 %v5897
        %v7415 = vunpack.c.h.b16 %v5897
        %v7416 = vunpack.c.l.b16 %v5898
        %v7417 = vunpack.c.h.b16 %v5898
        %v7418 = vunpack.c.l.b16 %v5899
        %v7419 = vunpack.c.h.b16 %v5899
        %v7420 = vunpack.c.l.b16 %v5900
        %v7421 = vunpack.c.h.b16 %v5900
        %v7422 = vunpack.c.l.b16 %v5901
        %v7423 = vunpack.c.h.b16 %v5901
        %v7424 = vunpack.c.l.b16 %v5902
        %v7425 = vunpack.c.h.b16 %v5902
        %v7426 = vunpack.c.l.b16 %v5903
        %v7427 = vunpack.c.h.b16 %v5903
        %v7428 = vunpack.c.l.b16 %v5904
        %v7429 = vunpack.c.h.b16 %v5904
        %v7430 = vunpack.c.l.b16 %v5905
        %v7431 = vunpack.c.h.b16 %v5905
        %v7432 = vunpack.c.l.b16 %v5906
        %v7433 = vunpack.c.h.b16 %v5906
        %v7434 = vunpack.c.l.b16 %v5907
        %v7435 = vunpack.c.h.b16 %v5907
        %v7436 = vunpack.c.l.b16 %v5908
        %v7437 = vunpack.c.h.b16 %v5908
        %v7438 = vunpack.c.l.b16 %v5909
        %v7439 = vunpack.c.h.b16 %v5909
        %v7440 = vunpack.c.l.b16 %v5910
        %v7441 = vunpack.c.h.b16 %v5910
        %v7442 = vunpack.c.l.b16 %v5911
        %v7443 = vunpack.c.h.b16 %v5911
        %v7444 = vunpack.c.l.b16 %v5912
        %v7445 = vunpack.c.h.b16 %v5912
        %v7446 = vunpack.c.l.b16 %v5913
        %v7447 = vunpack.c.h.b16 %v5913
        %v7448 = vunpack.c.l.b16 %v5914
        %v7449 = vunpack.c.h.b16 %v5914
        %v7450 = vunpack.c.l.b16 %v5915
        %v7451 = vunpack.c.h.b16 %v5915
        %v7452 = vunpack.c.l.b16 %v5916
        %v7453 = vunpack.c.h.b16 %v5916
        %v7454 = vunpack.c.l.b16 %v5917
        %v7455 = vunpack.c.h.b16 %v5917
        %v7456 = vunpack.c.l.b16 %v5918
        %v7457 = vunpack.c.h.b16 %v5918
        %v7458 = vunpack.c.l.b16 %v5919
        %v7459 = vunpack.c.h.b16 %v5919
        %v7460 = vunpack.c.l.b16 %v5920
        %v7461 = vunpack.c.h.b16 %v5920
        %v7462 = vunpack.c.l.b16 %v5921
        %v7463 = vunpack.c.h.b16 %v5921
        %v7464 = vunpack.c.l.b16 %v5922
        %v7465 = vunpack.c.h.b16 %v5922
        %v7466 = vunpack.c.l.b16 %v5923
        %v7467 = vunpack.c.h.b16 %v5923
        %v7468 = vunpack.c.l.b16 %v5924
        %v7469 = vunpack.c.h.b16 %v5924
        %v7470 = vunpack.c.l.b16 %v5925
        %v7471 = vunpack.c.h.b16 %v5925
        %v7472 = vunpack.c.l.b16 %v5926
        %v7473 = vunpack.c.h.b16 %v5926
        %v7474 = vunpack.c.l.b16 %v5927
        %v7475 = vunpack.c.h.b16 %v5927
        %v7476 = vunpack.c.l.b16 %v5928
        %v7477 = vunpack.c.h.b16 %v5928
        %v7478 = vunpack.c.l.b16 %v5929
        %v7479 = vunpack.c.h.b16 %v5929
        %v7480 = vunpack.c.l.b16 %v5930
        %v7481 = vunpack.c.h.b16 %v5930
        %v7482 = vunpack.c.l.b16 %v5931
        %v7483 = vunpack.c.h.b16 %v5931
        %v7484 = vunpack.c.l.b16 %v5932
        %v7485 = vunpack.c.h.b16 %v5932
        %v7486 = vunpack.c.l.b16 %v5933
        %v7487 = vunpack.c.h.b16 %v5933
        %v7488 = vunpack.c.l.b16 %v5934
        %v7489 = vunpack.c.h.b16 %v5934
        %v7490 = vunpack.c.l.b16 %v5935
        %v7491 = vunpack.c.h.b16 %v5935
        %v7492 = vunpack.c.l.b16 %v5936
        %v7493 = vunpack.c.h.b16 %v5936
        %v7494 = vunpack.c.l.b16 %v5937
        %v7495 = vunpack.c.h.b16 %v5937
        %v7496 = vunpack.c.l.b16 %v5938
        %v7497 = vunpack.c.h.b16 %v5938
        %v7498 = vunpack.c.l.b16 %v5939
        %v7499 = vunpack.c.h.b16 %v5939
        %v7500 = vunpack.c.l.b16 %v5940
        %v7501 = vunpack.c.h.b16 %v5940
        %v7502 = vunpack.c.l.b16 %v5941
        %v7503 = vunpack.c.h.b16 %v5941
        %v7504 = vunpack.c.l.b16 %v5942
        %v7505 = vunpack.c.h.b16 %v5942
        %v7506 = vunpack.c.l.b16 %v5943
        %v7507 = vunpack.c.h.b16 %v5943
        %v7508 = vunpack.c.l.b16 %v5944
        %v7509 = vunpack.c.h.b16 %v5944
        %v7510 = vunpack.c.l.b16 %v5945
        %v7511 = vunpack.c.h.b16 %v5945
        %v7512 = vunpack.c.l.b16 %v5946
        %v7513 = vunpack.c.h.b16 %v5946
        %v7514 = vunpack.c.l.b16 %v5947
        %v7515 = vunpack.c.h.b16 %v5947
        %v7516 = vunpack.c.l.b16 %v5948
        %v7517 = vunpack.c.h.b16 %v5948
        %v7518 = vunpack.c.l.b16 %v5949
        %v7519 = vunpack.c.h.b16 %v5949
        %v7520 = vunpack.c.l.b16 %v5950
        %v7521 = vunpack.c.h.b16 %v5950
        %v7522 = vunpack.c.l.b16 %v5951
        %v7523 = vunpack.c.h.b16 %v5951
        %v7524 = vunpack.c.l.b16 %v5952
        %v7525 = vunpack.c.h.b16 %v5952
        %v7526 = vunpack.c.l.b16 %v5953
        %v7527 = vunpack.c.h.b16 %v5953
        %v7528 = vunpack.c.l.b16 %v5954
        %v7529 = vunpack.c.h.b16 %v5954
        %v7530 = vunpack.c.l.b16 %v5955
        %v7531 = vunpack.c.h.b16 %v5955
        %v7532 = vunpack.c.l.b16 %v5956
        %v7533 = vunpack.c.h.b16 %v5956
        %v7534 = vunpack.c.l.b16 %v5957
        %v7535 = vunpack.c.h.b16 %v5957
        %v7536 = vunpack.c.l.b16 %v5958
        %v7537 = vunpack.c.h.b16 %v5958
        %v7538 = vunpack.c.l.b16 %v5959
        %v7539 = vunpack.c.h.b16 %v5959
        %v7540 = vunpack.c.l.b16 %v5960
        %v7541 = vunpack.c.h.b16 %v5960
        %v7542 = vunpack.c.l.b16 %v5961
        %v7543 = vunpack.c.h.b16 %v5961
        %v7544 = vunpack.c.l.b16 %v5962
        %v7545 = vunpack.c.h.b16 %v5962
        %v7546 = vunpack.c.l.b16 %v5963
        %v7547 = vunpack.c.h.b16 %v5963
        %v7548 = vpack.c.b16 %v6498, %v6492
        %v7549 = vpack.c.b16 %v6499, %v6493
        %v7550 = vpack.c.b16 %v6500, %v6494
        %v7551 = vpack.c.b16 %v6501, %v6495
        %v7552 = vpack.c.b16 %v6502, %v6496
        %v7553 = vpack.c.b16 %v6503, %v6497
        %v7554 = vpack.c.b16 %v6510, %v6504
        %v7555 = vpack.c.b16 %v6511, %v6505
        %v7556 = vpack.c.b16 %v6512, %v6506
        %v7557 = vpack.c.b16 %v6513, %v6507
        %v7558 = vpack.c.b16 %v6514, %v6508
        %v7559 = vpack.c.b16 %v6515, %v6509
        %v7560 = vpack.c.b16 %v6522, %v6516
        %v7561 = vpack.c.b16 %v6523, %v6517
        %v7562 = vpack.c.b16 %v6524, %v6518
        %v7563 = vpack.c.b16 %v6525, %v6519
        %v7564 = vpack.c.b16 %v6526, %v6520
        %v7565 = vpack.c.b16 %v6527, %v6521
        %v7566 = vpack.c.b16 %v6534, %v6528
        %v7567 = vpack.c.b16 %v6535, %v6529
        %v7568 = vpack.c.b16 %v6536, %v6530
        %v7569 = vpack.c.b16 %v6537, %v6531
        %v7570 = vpack.c.b16 %v6538, %v6532
        %v7571 = vpack.c.b16 %v6539, %v6533
        %v7572 = vpack.c.b16 %v6546, %v6540
        %v7573 = vpack.c.b16 %v6547, %v6541
        %v7574 = vpack.c.b16 %v6548, %v6542
        %v7575 = vpack.c.b16 %v6549, %v6543
        %v7576 = vpack.c.b16 %v6550, %v6544
        %v7577 = vpack.c.b16 %v6551, %v6545
        %v7578 = vpack.c.b16 %v6558, %v6552
        %v7579 = vpack.c.b16 %v6559, %v6553
        %v7580 = vpack.c.b16 %v6560, %v6554
        %v7581 = vpack.c.b16 %v6561, %v6555
        %v7582 = vpack.c.b16 %v6562, %v6556
        %v7583 = vpack.c.b16 %v6563, %v6557
        %v7584 = vpack.c.b16 %v6570, %v6564
        %v7585 = vpack.c.b16 %v6571, %v6565
        %v7586 = vpack.c.b16 %v6572, %v6566
        %v7587 = vpack.c.b16 %v6573, %v6567
        %v7588 = vpack.c.b16 %v6574, %v6568
        %v7589 = vpack.c.b16 %v6575, %v6569
        %v7590 = vpack.c.b16 %v6582, %v6576
        %v7591 = vpack.c.b16 %v6583, %v6577
        %v7592 = vpack.c.b16 %v6584, %v6578
        %v7593 = vpack.c.b16 %v6585, %v6579
        %v7594 = vpack.c.b16 %v6586, %v6580
        %v7595 = vpack.c.b16 %v6587, %v6581
        %v7596 = vpack.c.b16 %v6594, %v6588
        %v7597 = vpack.c.b16 %v6595, %v6589
        %v7598 = vpack.c.b16 %v6596, %v6590
        %v7599 = vpack.c.b16 %v6597, %v6591
        %v7600 = vpack.c.b16 %v6598, %v6592
        %v7601 = vpack.c.b16 %v6599, %v6593
        %v7602 = vpack.c.b16 %v6606, %v6600
        %v7603 = vpack.c.b16 %v6607, %v6601
        %v7604 = vpack.c.b16 %v6608, %v6602
        %v7605 = vpack.c.b16 %v6609, %v6603
        %v7606 = vpack.c.b16 %v6610, %v6604
        %v7607 = vpack.c.b16 %v6611, %v6605
        %v7608 = vpack.c.b16 %v6618, %v6612
        %v7609 = vpack.c.b16 %v6619, %v6613
        %v7610 = vpack.c.b16 %v6620, %v6614
        %v7611 = vpack.c.b16 %v6621, %v6615
        %v7612 = vpack.c.b16 %v6622, %v6616
        %v7613 = vpack.c.b16 %v6623, %v6617
        %v7614 = vpack.c.b16 %v6630, %v6624
        %v7615 = vpack.c.b16 %v6631, %v6625
        %v7616 = vpack.c.b16 %v6632, %v6626
        %v7617 = vpack.c.b16 %v6633, %v6627
        %v7618 = vpack.c.b16 %v6634, %v6628
        %v7619 = vpack.c.b16 %v6635, %v6629
        %v7620 = vpack.c.b16 %v6642, %v6636
        %v7621 = vpack.c.b16 %v6643, %v6637
        %v7622 = vpack.c.b16 %v6644, %v6638
        %v7623 = vpack.c.b16 %v6645, %v6639
        %v7624 = vpack.c.b16 %v6646, %v6640
        %v7625 = vpack.c.b16 %v6647, %v6641
        %v7626 = vpack.c.b16 %v6654, %v6648
        %v7627 = vpack.c.b16 %v6655, %v6649
        %v7628 = vpack.c.b16 %v6656, %v6650
        %v7629 = vpack.c.b16 %v6657, %v6651
        %v7630 = vpack.c.b16 %v6658, %v6652
        %v7631 = vpack.c.b16 %v6659, %v6653
        %v7632 = vpack.c.b16 %v6666, %v6660
        %v7633 = vpack.c.b16 %v6667, %v6661
        %v7634 = vpack.c.b16 %v6668, %v6662
        %v7635 = vpack.c.b16 %v6669, %v6663
        %v7636 = vpack.c.b16 %v6670, %v6664
        %v7637 = vpack.c.b16 %v6671, %v6665
        %v7638 = vpack.c.b16 %v6678, %v6672
        %v7639 = vpack.c.b16 %v6679, %v6673
        %v7640 = vpack.c.b16 %v6680, %v6674
        %v7641 = vpack.c.b16 %v6681, %v6675
        %v7642 = vpack.c.b16 %v6682, %v6676
        %v7643 = vpack.c.b16 %v6683, %v6677
        %v7644 = vpack.c.b16 %v6690, %v6684
        %v7645 = vpack.c.b16 %v6691, %v6685
        %v7646 = vpack.c.b16 %v6692, %v6686
        %v7647 = vpack.c.b16 %v6693, %v6687
        %v7648 = vpack.c.b16 %v6694, %v6688
        %v7649 = vpack.c.b16 %v6695, %v6689
        %v7650 = vpack.c.b16 %v6702, %v6696
        %v7651 = vpack.c.b16 %v6703, %v6697
        %v7652 = vpack.c.b16 %v6704, %v6698
        %v7653 = vpack.c.b16 %v6705, %v6699
        %v7654 = vpack.c.b16 %v6706, %v6700
        %v7655 = vpack.c.b16 %v6707, %v6701
        %v7656 = vpack.c.b16 %v6714, %v6708
        %v7657 = vpack.c.b16 %v6715, %v6709
        %v7658 = vpack.c.b16 %v6716, %v6710
        %v7659 = vpack.c.b16 %v6717, %v6711
        %v7660 = vpack.c.b16 %v6718, %v6712
        %v7661 = vpack.c.b16 %v6719, %v6713
        %v7662 = vpack.c.b16 %v6726, %v6720
        %v7663 = vpack.c.b16 %v6727, %v6721
        %v7664 = vpack.c.b16 %v6728, %v6722
        %v7665 = vpack.c.b16 %v6729, %v6723
        %v7666 = vpack.c.b16 %v6730, %v6724
        %v7667 = vpack.c.b16 %v6731, %v6725
        %v7668 = vpack.c.b16 %v6738, %v6732
        %v7669 = vpack.c.b16 %v6739, %v6733
        %v7670 = vpack.c.b16 %v6740, %v6734
        %v7671 = vpack.c.b16 %v6741, %v6735
        %v7672 = vpack.c.b16 %v6742, %v6736
        %v7673 = vpack.c.b16 %v6743, %v6737
        %v7674 = vpack.c.b16 %v6750, %v6744
        %v7675 = vpack.c.b16 %v6751, %v6745
        %v7676 = vpack.c.b16 %v6752, %v6746
        %v7677 = vpack.c.b16 %v6753, %v6747
        %v7678 = vpack.c.b16 %v6754, %v6748
        %v7679 = vpack.c.b16 %v6755, %v6749
        %v7680 = vpack.c.b16 %v6762, %v6756
        %v7681 = vpack.c.b16 %v6763, %v6757
        %v7682 = vpack.c.b16 %v6764, %v6758
        %v7683 = vpack.c.b16 %v6765, %v6759
        %v7684 = vpack.c.b16 %v6766, %v6760
        %v7685 = vpack.c.b16 %v6767, %v6761
        %v7686 = vpack.c.b16 %v6774, %v6768
        %v7687 = vpack.c.b16 %v6775, %v6769
        %v7688 = vpack.c.b16 %v6776, %v6770
        %v7689 = vpack.c.b16 %v6777, %v6771
        %v7690 = vpack.c.b16 %v6778, %v6772
        %v7691 = vpack.c.b16 %v6779, %v6773
        %v7692 = vpack.c.b16 %v6786, %v6780
        %v7693 = vpack.c.b16 %v6787, %v6781
        %v7694 = vpack.c.b16 %v6788, %v6782
        %v7695 = vpack.c.b16 %v6789, %v6783
        %v7696 = vpack.c.b16 %v6790, %v6784
        %v7697 = vpack.c.b16 %v6791, %v6785
        %v7698 = vpack.c.b16 %v6798, %v6792
        %v7699 = vpack.c.b16 %v6799, %v6793
        %v7700 = vpack.c.b16 %v6800, %v6794
        %v7701 = vpack.c.b16 %v6801, %v6795
        %v7702 = vpack.c.b16 %v6802, %v6796
        %v7703 = vpack.c.b16 %v6803, %v6797
        %v7704 = vpack.c.b16 %v6810, %v6804
        %v7705 = vpack.c.b16 %v6811, %v6805
        %v7706 = vpack.c.b16 %v6812, %v6806
        %v7707 = vpack.c.b16 %v6813, %v6807
        %v7708 = vpack.c.b16 %v6814, %v6808
        %v7709 = vpack.c.b16 %v6815, %v6809
        %v7710 = vpack.c.b16 %v6822, %v6816
        %v7711 = vpack.c.b16 %v6823, %v6817
        %v7712 = vpack.c.b16 %v6824, %v6818
        %v7713 = vpack.c.b16 %v6825, %v6819
        %v7714 = vpack.c.b16 %v6826, %v6820
        %v7715 = vpack.c.b16 %v6827, %v6821
        %v7716 = vpack.c.b16 %v6834, %v6828
        %v7717 = vpack.c.b16 %v6835, %v6829
        %v7718 = vpack.c.b16 %v6836, %v6830
        %v7719 = vpack.c.b16 %v6837, %v6831
        %v7720 = vpack.c.b16 %v6838, %v6832
        %v7721 = vpack.c.b16 %v6839, %v6833
        %v7722 = vpack.c.b16 %v6846, %v6840
        %v7723 = vpack.c.b16 %v6847, %v6841
        %v7724 = vpack.c.b16 %v6848, %v6842
        %v7725 = vpack.c.b16 %v6849, %v6843
        %v7726 = vpack.c.b16 %v6850, %v6844
        %v7727 = vpack.c.b16 %v6851, %v6845
        %v7728 = vpack.c.b16 %v6858, %v6852
        %v7729 = vpack.c.b16 %v6859, %v6853
        %v7730 = vpack.c.b16 %v6860, %v6854
        %v7731 = vpack.c.b16 %v6861, %v6855
        %v7732 = vpack.c.b16 %v6862, %v6856
        %v7733 = vpack.c.b16 %v6863, %v6857
        %v7734 = vpack.c.b16 %v6870, %v6864
        %v7735 = vpack.c.b16 %v6871, %v6865
        %v7736 = vpack.c.b16 %v6872, %v6866
        %v7737 = vpack.c.b16 %v6873, %v6867
        %v7738 = vpack.c.b16 %v6874, %v6868
        %v7739 = vpack.c.b16 %v6875, %v6869
        %v7740 = vpack.c.b16 %v6882, %v6876
        %v7741 = vpack.c.b16 %v6883, %v6877
        %v7742 = vpack.c.b16 %v6884, %v6878
        %v7743 = vpack.c.b16 %v6885, %v6879
        %v7744 = vpack.c.b16 %v6886, %v6880
        %v7745 = vpack.c.b16 %v6887, %v6881
        %v7746 = vpack.c.b16 %v6894, %v6888
        %v7747 = vpack.c.b16 %v6895, %v6889
        %v7748 = vpack.c.b16 %v6896, %v6890
        %v7749 = vpack.c.b16 %v6897, %v6891
        %v7750 = vpack.c.b16 %v6898, %v6892
        %v7751 = vpack.c.b16 %v6899, %v6893
        %v7752 = vpack.c.b16 %v6906, %v6900
        %v7753 = vpack.c.b16 %v6907, %v6901
        %v7754 = vpack.c.b16 %v6908, %v6902
        %v7755 = vpack.c.b16 %v6909, %v6903
        %v7756 = vpack.c.b16 %v6910, %v6904
        %v7757 = vpack.c.b16 %v6911, %v6905
        %v7758 = vpack.c.b16 %v6918, %v6912
        %v7759 = vpack.c.b16 %v6919, %v6913
        %v7760 = vpack.c.b16 %v6920, %v6914
        %v7761 = vpack.c.b16 %v6921, %v6915
        %v7762 = vpack.c.b16 %v6922, %v6916
        %v7763 = vpack.c.b16 %v6923, %v6917
        %v7764 = vpack.c.b16 %v6930, %v6924
        %v7765 = vpack.c.b16 %v6931, %v6925
        %v7766 = vpack.c.b16 %v6932, %v6926
        %v7767 = vpack.c.b16 %v6933, %v6927
        %v7768 = vpack.c.b16 %v6934, %v6928
        %v7769 = vpack.c.b16 %v6935, %v6929
        %v7770 = vpack.c.b16 %v6942, %v6936
        %v7771 = vpack.c.b16 %v6943, %v6937
        %v7772 = vpack.c.b16 %v6944, %v6938
        %v7773 = vpack.c.b16 %v6945, %v6939
        %v7774 = vpack.c.b16 %v6946, %v6940
        %v7775 = vpack.c.b16 %v6947, %v6941
        %v7776 = vpack.c.b16 %v6954, %v6948
        %v7777 = vpack.c.b16 %v6955, %v6949
        %v7778 = vpack.c.b16 %v6956, %v6950
        %v7779 = vpack.c.b16 %v6957, %v6951
        %v7780 = vpack.c.b16 %v6958, %v6952
        %v7781 = vpack.c.b16 %v6959, %v6953
        %v7782 = vpack.c.b16 %v6966, %v6960
        %v7783 = vpack.c.b16 %v6967, %v6961
        %v7784 = vpack.c.b16 %v6968, %v6962
        %v7785 = vpack.c.b16 %v6969, %v6963
        %v7786 = vpack.c.b16 %v6970, %v6964
        %v7787 = vpack.c.b16 %v6971, %v6965
        %v7788 = vpack.c.b16 %v6978, %v6972
        %v7789 = vpack.c.b16 %v6979, %v6973
        %v7790 = vpack.c.b16 %v6980, %v6974
        %v7791 = vpack.c.b16 %v6981, %v6975
        %v7792 = vpack.c.b16 %v6982, %v6976
        %v7793 = vpack.c.b16 %v6983, %v6977
        %v7794 = vpack.c.b16 %v6990, %v6984
        %v7795 = vpack.c.b16 %v6991, %v6985
        %v7796 = vpack.c.b16 %v6992, %v6986
        %v7797 = vpack.c.b16 %v6993, %v6987
        %v7798 = vpack.c.b16 %v6994, %v6988
        %v7799 = vpack.c.b16 %v6995, %v6989
        %v7800 = vpack.c.b16 %v7002, %v6996
        %v7801 = vpack.c.b16 %v7003, %v6997
        %v7802 = vpack.c.b16 %v7004, %v6998
        %v7803 = vpack.c.b16 %v7005, %v6999
        %v7804 = vpack.c.b16 %v7006, %v7000
        %v7805 = vpack.c.b16 %v7007, %v7001
        %v7806 = vpack.c.b16 %v7014, %v7008
        %v7807 = vpack.c.b16 %v7015, %v7009
        %v7808 = vpack.c.b16 %v7016, %v7010
        %v7809 = vpack.c.b16 %v7017, %v7011
        %v7810 = vpack.c.b16 %v7018, %v7012
        %v7811 = vpack.c.b16 %v7019, %v7013
        %v7812 = vpack.c.b16 %v7026, %v7020
        %v7813 = vpack.c.b16 %v7027, %v7021
        %v7814 = vpack.c.b16 %v7028, %v7022
        %v7815 = vpack.c.b16 %v7029, %v7023
        %v7816 = vpack.c.b16 %v7030, %v7024
        %v7817 = vpack.c.b16 %v7031, %v7025
        %v7818 = vpack.c.b16 %v7038, %v7032
        %v7819 = vpack.c.b16 %v7039, %v7033
        %v7820 = vpack.c.b16 %v7040, %v7034
        %v7821 = vpack.c.b16 %v7041, %v7035
        %v7822 = vpack.c.b16 %v7042, %v7036
        %v7823 = vpack.c.b16 %v7043, %v7037
        %v7824 = vpack.c.b16 %v7050, %v7044
        %v7825 = vpack.c.b16 %v7051, %v7045
        %v7826 = vpack.c.b16 %v7052, %v7046
        %v7827 = vpack.c.b16 %v7053, %v7047
        %v7828 = vpack.c.b16 %v7054, %v7048
        %v7829 = vpack.c.b16 %v7055, %v7049
        %v7830 = vpack.c.b16 %v7062, %v7056
        %v7831 = vpack.c.b16 %v7063, %v7057
        %v7832 = vpack.c.b16 %v7064, %v7058
        %v7833 = vpack.c.b16 %v7065, %v7059
        %v7834 = vpack.c.b16 %v7066, %v7060
        %v7835 = vpack.c.b16 %v7067, %v7061
        %v7836 = vpack.c.b16 %v7074, %v7068
        %v7837 = vpack.c.b16 %v7075, %v7069
        %v7838 = vpack.c.b16 %v7076, %v7070
        %v7839 = vpack.c.b16 %v7077, %v7071
        %v7840 = vpack.c.b16 %v7078, %v7072
        %v7841 = vpack.c.b16 %v7079, %v7073
        %v7842 = vpack.c.b16 %v7086, %v7080
        %v7843 = vpack.c.b16 %v7087, %v7081
        %v7844 = vpack.c.b16 %v7088, %v7082
        %v7845 = vpack.c.b16 %v7089, %v7083
        %v7846 = vpack.c.b16 %v7090, %v7084
        %v7847 = vpack.c.b16 %v7091, %v7085
        %v7848 = vpack.c.b16 %v7098, %v7092
        %v7849 = vpack.c.b16 %v7099, %v7093
        %v7850 = vpack.c.b16 %v7100, %v7094
        %v7851 = vpack.c.b16 %v7101, %v7095
        %v7852 = vpack.c.b16 %v7102, %v7096
        %v7853 = vpack.c.b16 %v7103, %v7097
        %v7854 = vpack.c.b16 %v7110, %v7104
        %v7855 = vpack.c.b16 %v7111, %v7105
        %v7856 = vpack.c.b16 %v7112, %v7106
        %v7857 = vpack.c.b16 %v7113, %v7107
        %v7858 = vpack.c.b16 %v7114, %v7108
        %v7859 = vpack.c.b16 %v7115, %v7109
        %v7860 = vpack.c.b16 %v7122, %v7116
        %v7861 = vpack.c.b16 %v7123, %v7117
        %v7862 = vpack.c.b16 %v7124, %v7118
        %v7863 = vpack.c.b16 %v7125, %v7119
        %v7864 = vpack.c.b16 %v7126, %v7120
        %v7865 = vpack.c.b16 %v7127, %v7121
        %v7866 = vpack.c.b16 %v7134, %v7128
        %v7867 = vpack.c.b16 %v7135, %v7129
        %v7868 = vpack.c.b16 %v7136, %v7130
        %v7869 = vpack.c.b16 %v7137, %v7131
        %v7870 = vpack.c.b16 %v7138, %v7132
        %v7871 = vpack.c.b16 %v7139, %v7133
        %v7872 = vpack.c.b16 %v7146, %v7140
        %v7873 = vpack.c.b16 %v7147, %v7141
        %v7874 = vpack.c.b16 %v7148, %v7142
        %v7875 = vpack.c.b16 %v7149, %v7143
        %v7876 = vpack.c.b16 %v7150, %v7144
        %v7877 = vpack.c.b16 %v7151, %v7145
        %v7878 = vpack.c.b16 %v7158, %v7152
        %v7879 = vpack.c.b16 %v7159, %v7153
        %v7880 = vpack.c.b16 %v7160, %v7154
        %v7881 = vpack.c.b16 %v7161, %v7155
        %v7882 = vpack.c.b16 %v7162, %v7156
        %v7883 = vpack.c.b16 %v7163, %v7157
        %v7884 = vpack.c.b16 %v7170, %v7164
        %v7885 = vpack.c.b16 %v7171, %v7165
        %v7886 = vpack.c.b16 %v7172, %v7166
        %v7887 = vpack.c.b16 %v7173, %v7167
        %v7888 = vpack.c.b16 %v7174, %v7168
        %v7889 = vpack.c.b16 %v7175, %v7169
        %v7890 = vpack.c.b16 %v7182, %v7176
        %v7891 = vpack.c.b16 %v7183, %v7177
        %v7892 = vpack.c.b16 %v7184, %v7178
        %v7893 = vpack.c.b16 %v7185, %v7179
        %v7894 = vpack.c.b16 %v7186, %v7180
        %v7895 = vpack.c.b16 %v7187, %v7181
        %v7896 = vpack.c.b16 %v7194, %v7188
        %v7897 = vpack.c.b16 %v7195, %v7189
        %v7898 = vpack.c.b16 %v7196, %v7190
        %v7899 = vpack.c.b16 %v7197, %v7191
        %v7900 = vpack.c.b16 %v7198, %v7192
        %v7901 = vpack.c.b16 %v7199, %v7193
        %v7902 = vpack.c.b16 %v7206, %v7200
        %v7903 = vpack.c.b16 %v7207, %v7201
        %v7904 = vpack.c.b16 %v7208, %v7202
        %v7905 = vpack.c.b16 %v7209, %v7203
        %v7906 = vpack.c.b16 %v7210, %v7204
        %v7907 = vpack.c.b16 %v7211, %v7205
        %v7908 = vpack.c.b16 %v7218, %v7212
        %v7909 = vpack.c.b16 %v7219, %v7213
        %v7910 = vpack.c.b16 %v7220, %v7214
        %v7911 = vpack.c.b16 %v7221, %v7215
        %v7912 = vpack.c.b16 %v7222, %v7216
        %v7913 = vpack.c.b16 %v7223, %v7217
        %v7914 = vpack.c.b16 %v7230, %v7224
        %v7915 = vpack.c.b16 %v7231, %v7225
        %v7916 = vpack.c.b16 %v7232, %v7226
        %v7917 = vpack.c.b16 %v7233, %v7227
        %v7918 = vpack.c.b16 %v7234, %v7228
        %v7919 = vpack.c.b16 %v7235, %v7229
        %v7920 = vpack.c.b16 %v7242, %v7236
        %v7921 = vpack.c.b16 %v7243, %v7237
        %v7922 = vpack.c.b16 %v7244, %v7238
        %v7923 = vpack.c.b16 %v7245, %v7239
        %v7924 = vpack.c.b16 %v7246, %v7240
        %v7925 = vpack.c.b16 %v7247, %v7241
        %v7926 = vpack.c.b16 %v7254, %v7248
        %v7927 = vpack.c.b16 %v7255, %v7249
        %v7928 = vpack.c.b16 %v7256, %v7250
        %v7929 = vpack.c.b16 %v7257, %v7251
        %v7930 = vpack.c.b16 %v7258, %v7252
        %v7931 = vpack.c.b16 %v7259, %v7253
        %v7932 = vpack.c.b16 %v7266, %v7260
        %v7933 = vpack.c.b16 %v7267, %v7261
        %v7934 = vpack.c.b16 %v7268, %v7262
        %v7935 = vpack.c.b16 %v7269, %v7263
        %v7936 = vpack.c.b16 %v7270, %v7264
        %v7937 = vpack.c.b16 %v7271, %v7265
        %v7938 = vpack.c.b16 %v7278, %v7272
        %v7939 = vpack.c.b16 %v7279, %v7273
        %v7940 = vpack.c.b16 %v7280, %v7274
        %v7941 = vpack.c.b16 %v7281, %v7275
        %v7942 = vpack.c.b16 %v7282, %v7276
        %v7943 = vpack.c.b16 %v7283, %v7277
        %v7944 = vpack.c.b16 %v7290, %v7284
        %v7945 = vpack.c.b16 %v7291, %v7285
        %v7946 = vpack.c.b16 %v7292, %v7286
        %v7947 = vpack.c.b16 %v7293, %v7287
        %v7948 = vpack.c.b16 %v7294, %v7288
        %v7949 = vpack.c.b16 %v7295, %v7289
        %v7950 = vpack.c.b16 %v7302, %v7296
        %v7951 = vpack.c.b16 %v7303, %v7297
        %v7952 = vpack.c.b16 %v7304, %v7298
        %v7953 = vpack.c.b16 %v7305, %v7299
        %v7954 = vpack.c.b16 %v7306, %v7300
        %v7955 = vpack.c.b16 %v7307, %v7301
        %v7956 = vpack.c.b16 %v7314, %v7308
        %v7957 = vpack.c.b16 %v7315, %v7309
        %v7958 = vpack.c.b16 %v7316, %v7310
        %v7959 = vpack.c.b16 %v7317, %v7311
        %v7960 = vpack.c.b16 %v7318, %v7312
        %v7961 = vpack.c.b16 %v7319, %v7313
        %v7962 = vpack.c.b16 %v7326, %v7320
        %v7963 = vpack.c.b16 %v7327, %v7321
        %v7964 = vpack.c.b16 %v7328, %v7322
        %v7965 = vpack.c.b16 %v7329, %v7323
        %v7966 = vpack.c.b16 %v7330, %v7324
        %v7967 = vpack.c.b16 %v7331, %v7325
        %v7968 = vpack.c.b16 %v7338, %v7332
        %v7969 = vpack.c.b16 %v7339, %v7333
        %v7970 = vpack.c.b16 %v7340, %v7334
        %v7971 = vpack.c.b16 %v7341, %v7335
        %v7972 = vpack.c.b16 %v7342, %v7336
        %v7973 = vpack.c.b16 %v7343, %v7337
        %v7974 = vpack.c.b16 %v7350, %v7344
        %v7975 = vpack.c.b16 %v7351, %v7345
        %v7976 = vpack.c.b16 %v7352, %v7346
        %v7977 = vpack.c.b16 %v7353, %v7347
        %v7978 = vpack.c.b16 %v7354, %v7348
        %v7979 = vpack.c.b16 %v7355, %v7349
        %v7980 = vpack.c.b16 %v7362, %v7356
        %v7981 = vpack.c.b16 %v7363, %v7357
        %v7982 = vpack.c.b16 %v7364, %v7358
        %v7983 = vpack.c.b16 %v7365, %v7359
        %v7984 = vpack.c.b16 %v7366, %v7360
        %v7985 = vpack.c.b16 %v7367, %v7361
        %v7986 = vpack.c.b16 %v7374, %v7368
        %v7987 = vpack.c.b16 %v7375, %v7369
        %v7988 = vpack.c.b16 %v7376, %v7370
        %v7989 = vpack.c.b16 %v7377, %v7371
        %v7990 = vpack.c.b16 %v7378, %v7372
        %v7991 = vpack.c.b16 %v7379, %v7373
        %v7992 = vpack.c.b16 %v7386, %v7380
        %v7993 = vpack.c.b16 %v7387, %v7381
        %v7994 = vpack.c.b16 %v7388, %v7382
        %v7995 = vpack.c.b16 %v7389, %v7383
        %v7996 = vpack.c.b16 %v7390, %v7384
        %v7997 = vpack.c.b16 %v7391, %v7385
        %v7998 = vpack.c.b16 %v7398, %v7392
        %v7999 = vpack.c.b16 %v7399, %v7393
        %v8000 = vpack.c.b16 %v7400, %v7394
        %v8001 = vpack.c.b16 %v7401, %v7395
        %v8002 = vpack.c.b16 %v7402, %v7396
        %v8003 = vpack.c.b16 %v7403, %v7397
        %v8004 = vpack.c.b16 %v7410, %v7404
        %v8005 = vpack.c.b16 %v7411, %v7405
        %v8006 = vpack.c.b16 %v7412, %v7406
        %v8007 = vpack.c.b16 %v7413, %v7407
        %v8008 = vpack.c.b16 %v7414, %v7408
        %v8009 = vpack.c.b16 %v7415, %v7409
        %v8010 = vpack.c.b16 %v7422, %v7416
        %v8011 = vpack.c.b16 %v7423, %v7417
        %v8012 = vpack.c.b16 %v7424, %v7418
        %v8013 = vpack.c.b16 %v7425, %v7419
        %v8014 = vpack.c.b16 %v7426, %v7420
        %v8015 = vpack.c.b16 %v7427, %v7421
        %v8016 = vpack.c.b16 %v7434, %v7428
        %v8017 = vpack.c.b16 %v7435, %v7429
        %v8018 = vpack.c.b16 %v7436, %v7430
        %v8019 = vpack.c.b16 %v7437, %v7431
        %v8020 = vpack.c.b16 %v7438, %v7432
        %v8021 = vpack.c.b16 %v7439, %v7433
        %v8022 = vpack.c.b16 %v7446, %v7440
        %v8023 = vpack.c.b16 %v7447, %v7441
        %v8024 = vpack.c.b16 %v7448, %v7442
        %v8025 = vpack.c.b16 %v7449, %v7443
        %v8026 = vpack.c.b16 %v7450, %v7444
        %v8027 = vpack.c.b16 %v7451, %v7445
        %v8028 = vpack.c.b16 %v7458, %v7452
        %v8029 = vpack.c.b16 %v7459, %v7453
        %v8030 = vpack.c.b16 %v7460, %v7454
        %v8031 = vpack.c.b16 %v7461, %v7455
        %v8032 = vpack.c.b16 %v7462, %v7456
        %v8033 = vpack.c.b16 %v7463, %v7457
        %v8034 = vpack.c.b16 %v7470, %v7464
        %v8035 = vpack.c.b16 %v7471, %v7465
        %v8036 = vpack.c.b16 %v7472, %v7466
        %v8037 = vpack.c.b16 %v7473, %v7467
        %v8038 = vpack.c.b16 %v7474, %v7468
        %v8039 = vpack.c.b16 %v7475, %v7469
        %v8040 = vpack.c.b16 %v7482, %v7476
        %v8041 = vpack.c.b16 %v7483, %v7477
        %v8042 = vpack.c.b16 %v7484, %v7478
        %v8043 = vpack.c.b16 %v7485, %v7479
        %v8044 = vpack.c.b16 %v7486, %v7480
        %v8045 = vpack.c.b16 %v7487, %v7481
        %v8046 = vpack.c.b16 %v7494, %v7488
        %v8047 = vpack.c.b16 %v7495, %v7489
        %v8048 = vpack.c.b16 %v7496, %v7490
        %v8049 = vpack.c.b16 %v7497, %v7491
        %v8050 = vpack.c.b16 %v7498, %v7492
        %v8051 = vpack.c.b16 %v7499, %v7493
        %v8052 = vpack.c.b16 %v7506, %v7500
        %v8053 = vpack.c.b16 %v7507, %v7501
        %v8054 = vpack.c.b16 %v7508, %v7502
        %v8055 = vpack.c.b16 %v7509, %v7503
        %v8056 = vpack.c.b16 %v7510, %v7504
        %v8057 = vpack.c.b16 %v7511, %v7505
        %v8058 = vpack.c.b16 %v7518, %v7512
        %v8059 = vpack.c.b16 %v7519, %v7513
        %v8060 = vpack.c.b16 %v7520, %v7514
        %v8061 = vpack.c.b16 %v7521, %v7515
        %v8062 = vpack.c.b16 %v7522, %v7516
        %v8063 = vpack.c.b16 %v7523, %v7517
        %v8064 = vpack.c.b16 %v7530, %v7524
        %v8065 = vpack.c.b16 %v7531, %v7525
        %v8066 = vpack.c.b16 %v7532, %v7526
        %v8067 = vpack.c.b16 %v7533, %v7527
        %v8068 = vpack.c.b16 %v7534, %v7528
        %v8069 = vpack.c.b16 %v7535, %v7529
        %v8070 = vpack.c.b16 %v7542, %v7536
        %v8071 = vpack.c.b16 %v7543, %v7537
        %v8072 = vpack.c.b16 %v7544, %v7538
        %v8073 = vpack.c.b16 %v7545, %v7539
        %v8074 = vpack.c.b16 %v7546, %v7540
        %v8075 = vpack.c.b16 %v7547, %v7541
        %8604 = vmatprep.subr.bf16.mxu0 %v7591
        %8605 = vmatpush1.bf16.msra.mxu0 %v7590
        %8606 = vmatprep.subr.bf16.mxu0 %v7585
        %8607 = vmatpush1.bf16.msra.mxu0 %v7584
        %8608 = vmatprep.subr.bf16.mxu0 %v7579
        %8609 = vmatpush1.bf16.msra.mxu0 %v7578
        %8610 = vmatprep.subr.bf16.mxu0 %v7573
        %8611 = vmatpush1.bf16.msra.mxu0 %v7572
        %8612 = vmatprep.subr.bf16.mxu0 %v7567
        %8613 = vmatpush1.bf16.msra.mxu0 %v7566
        %8614 = vmatprep.subr.bf16.mxu0 %v7561
        %8615 = vmatpush1.bf16.msra.mxu0 %v7560
        %8616 = vmatprep.subr.bf16.mxu0 %v7555
        %8617 = vmatpush1.bf16.msra.mxu0 %v7554
        %8618 = vmatprep.subr.bf16.mxu0 %v7549
        %8619 = vmatpush1.bf16.msra.mxu0 %v7548
        %8620 = vmatprep.subr.bf16.mxu0 %v7639
        %8621 = vmatpush2.bf16.msra.mxu0 %v7638
        %8622 = vmatprep.subr.bf16.mxu0 %v7633
        %8623 = vmatpush2.bf16.msra.mxu0 %v7632
        %8624 = vmatprep.subr.bf16.mxu0 %v7627
        %8625 = vmatpush2.bf16.msra.mxu0 %v7626
        %8626 = vmatprep.subr.bf16.mxu0 %v7621
        %8627 = vmatpush2.bf16.msra.mxu0 %v7620
        %8628 = vmatprep.subr.bf16.mxu0 %v7615
        %8629 = vmatpush2.bf16.msra.mxu0 %v7614
        %8630 = vmatprep.subr.bf16.mxu0 %v7609
        %8631 = vmatpush2.bf16.msra.mxu0 %v7608
        %8632 = vmatprep.subr.bf16.mxu0 %v7603
        %8633 = vmatpush2.bf16.msra.mxu0 %v7602
        %8634 = vmatprep.subr.bf16.mxu0 %v7597
        %8635 = vmatpush2.bf16.msra.mxu0 %v7596
        %8636 = vmatprep.mubr.bf16.mxu0 %v5414
        %8637 = vmatmul.mubr.bf16.gmra.mxu0 %v5413
        %v8638 = vpop.f32.mrf.mxu0
        %v8639 = vadd.f32 0.0, %v8638
        %v8640 = vpop.f32.mrf.mxu0
        %v8641 = vadd.f32 0.0, %v8640
        %v8642 = vpop.f32.mrf.mxu0
        %v8643 = vadd.f32 0.0, %v8642
        %v8644 = vpop.f32.mrf.mxu0
        %v8645 = vadd.f32 0.0, %v8644
        %8646 = vmatprep.mubr.bf16.mxu0 %v5425
        %8647 = vmatmul.mubr.bf16.gmra.mxu0 %v5424
        %v8648 = vpop.f32.mrf.mxu0
        %v8649 = vadd.f32 0.0, %v8648
        %v8650 = vpop.f32.mrf.mxu0
        %v8651 = vadd.f32 0.0, %v8650
        %v8652 = vpop.f32.mrf.mxu0
        %v8653 = vpop.f32.mrf.mxu0
        %8654 = vdwg.mxu0
        %8655 = vmatprep.subr.bf16.mxu0 %v7687
        %8656 = vmatpush1.bf16.msra.mxu0 %v7686
        %8657 = vmatprep.subr.bf16.mxu0 %v7681
        %8658 = vmatpush1.bf16.msra.mxu0 %v7680
        %8659 = vmatprep.subr.bf16.mxu0 %v7675
        %8660 = vmatpush1.bf16.msra.mxu0 %v7674
        %8661 = vmatprep.subr.bf16.mxu0 %v7669
        %8662 = vmatpush1.bf16.msra.mxu0 %v7668
        %8663 = vmatprep.subr.bf16.mxu0 %v7663
        %8664 = vmatpush1.bf16.msra.mxu0 %v7662
        %8665 = vmatprep.subr.bf16.mxu0 %v7657
        %8666 = vmatpush1.bf16.msra.mxu0 %v7656
        %8667 = vmatprep.subr.bf16.mxu0 %v7651
        %8668 = vmatpush1.bf16.msra.mxu0 %v7650
        %8669 = vmatprep.subr.bf16.mxu0 %v7645
        %8670 = vmatpush1.bf16.msra.mxu0 %v7644
        %8671 = vmatprep.subr.bf16.mxu0 %v7735
        %8672 = vmatpush2.bf16.msra.mxu0 %v7734
        %8673 = vmatprep.subr.bf16.mxu0 %v7729
        %8674 = vmatpush2.bf16.msra.mxu0 %v7728
        %8675 = vmatprep.subr.bf16.mxu0 %v7723
        %8676 = vmatpush2.bf16.msra.mxu0 %v7722
        %8677 = vmatprep.subr.bf16.mxu0 %v7717
        %8678 = vmatpush2.bf16.msra.mxu0 %v7716
        %8679 = vmatprep.subr.bf16.mxu0 %v7711
        %8680 = vmatpush2.bf16.msra.mxu0 %v7710
        %8681 = vmatprep.subr.bf16.mxu0 %v7705
        %8682 = vmatpush2.bf16.msra.mxu0 %v7704
        %8683 = vmatprep.subr.bf16.mxu0 %v7699
        %8684 = vmatpush2.bf16.msra.mxu0 %v7698
        %8685 = vmatprep.subr.bf16.mxu0 %v7693
        %8686 = vmatpush2.bf16.msra.mxu0 %v7692
        %8687 = vmatprep.mubr.bf16.mxu0 %v5416
        %8688 = vmatmul.mubr.bf16.gmra.mxu0 %v5415
        %v8689 = vpop.f32.mrf.mxu0
        %v8690 = vadd.f32 %v8639, %v8689
        %v8691 = vpop.f32.mrf.mxu0
        %v8692 = vadd.f32 %v8641, %v8691
        %v8693 = vpop.f32.mrf.mxu0
        %v8694 = vadd.f32 %v8643, %v8693
        %v8695 = vpop.f32.mrf.mxu0
        %v8696 = vadd.f32 %v8645, %v8695
        %8697 = vmatprep.mubr.bf16.mxu0 %v5427
        %8698 = vmatmul.mubr.bf16.gmra.mxu0 %v5426
        %v8699 = vpop.f32.mrf.mxu0
        %v8700 = vadd.f32 %v8649, %v8699
        %v8701 = vpop.f32.mrf.mxu0
        %v8702 = vadd.f32 %v8651, %v8701
        %v8703 = vpop.f32.mrf.mxu0
        %v8704 = vpop.f32.mrf.mxu0
        %8705 = vdwg.mxu0
        %8706 = vmatprep.subr.bf16.mxu0 %v7783
        %8707 = vmatpush1.bf16.msra.mxu0 %v7782
        %8708 = vmatprep.subr.bf16.mxu0 %v7777
        %8709 = vmatpush1.bf16.msra.mxu0 %v7776
        %8710 = vmatprep.subr.bf16.mxu0 %v7771
        %8711 = vmatpush1.bf16.msra.mxu0 %v7770
        %8712 = vmatprep.subr.bf16.mxu0 %v7765
        %8713 = vmatpush1.bf16.msra.mxu0 %v7764
        %8714 = vmatprep.subr.bf16.mxu0 %v7759
        %8715 = vmatpush1.bf16.msra.mxu0 %v7758
        %8716 = vmatprep.subr.bf16.mxu0 %v7753
        %8717 = vmatpush1.bf16.msra.mxu0 %v7752
        %8718 = vmatprep.subr.bf16.mxu0 %v7747
        %8719 = vmatpush1.bf16.msra.mxu0 %v7746
        %8720 = vmatprep.subr.bf16.mxu0 %v7741
        %8721 = vmatpush1.bf16.msra.mxu0 %v7740
        %8722 = vmatprep.subr.bf16.mxu0 %v7831
        %8723 = vmatpush2.bf16.msra.mxu0 %v7830
        %8724 = vmatprep.subr.bf16.mxu0 %v7825
        %8725 = vmatpush2.bf16.msra.mxu0 %v7824
        %8726 = vmatprep.subr.bf16.mxu0 %v7819
        %8727 = vmatpush2.bf16.msra.mxu0 %v7818
        %8728 = vmatprep.subr.bf16.mxu0 %v7813
        %8729 = vmatpush2.bf16.msra.mxu0 %v7812
        %8730 = vmatprep.subr.bf16.mxu0 %v7807
        %8731 = vmatpush2.bf16.msra.mxu0 %v7806
        %8732 = vmatprep.subr.bf16.mxu0 %v7801
        %8733 = vmatpush2.bf16.msra.mxu0 %v7800
        %8734 = vmatprep.subr.bf16.mxu0 %v7795
        %8735 = vmatpush2.bf16.msra.mxu0 %v7794
        %8736 = vmatprep.subr.bf16.mxu0 %v7789
        %8737 = vmatpush2.bf16.msra.mxu0 %v7788
        %8738 = vmatprep.mubr.bf16.mxu0 %v5418
        %8739 = vmatmul.mubr.bf16.gmra.mxu0 %v5417
        %v8740 = vpop.f32.mrf.mxu0
        %v8741 = vadd.f32 %v8690, %v8740
        %v8742 = vpop.f32.mrf.mxu0
        %v8743 = vadd.f32 %v8692, %v8742
        %v8744 = vpop.f32.mrf.mxu0
        %v8745 = vadd.f32 %v8694, %v8744
        %v8746 = vpop.f32.mrf.mxu0
        %v8747 = vadd.f32 %v8696, %v8746
        %8748 = vmatprep.mubr.bf16.mxu0 %v5429
        %8749 = vmatmul.mubr.bf16.gmra.mxu0 %v5428
        %v8750 = vpop.f32.mrf.mxu0
        %v8751 = vadd.f32 %v8700, %v8750
        %v8752 = vpop.f32.mrf.mxu0
        %v8753 = vadd.f32 %v8702, %v8752
        %v8754 = vpop.f32.mrf.mxu0
        %v8755 = vpop.f32.mrf.mxu0
        %8756 = vdwg.mxu0
        %8757 = vmatprep.subr.bf16.mxu0 %v7879
        %8758 = vmatpush1.bf16.msra.mxu0 %v7878
        %8759 = vmatprep.subr.bf16.mxu0 %v7873
        %8760 = vmatpush1.bf16.msra.mxu0 %v7872
        %8761 = vmatprep.subr.bf16.mxu0 %v7867
        %8762 = vmatpush1.bf16.msra.mxu0 %v7866
        %8763 = vmatprep.subr.bf16.mxu0 %v7861
        %8764 = vmatpush1.bf16.msra.mxu0 %v7860
        %8765 = vmatprep.subr.bf16.mxu0 %v7855
        %8766 = vmatpush1.bf16.msra.mxu0 %v7854
        %8767 = vmatprep.subr.bf16.mxu0 %v7849
        %8768 = vmatpush1.bf16.msra.mxu0 %v7848
        %8769 = vmatprep.subr.bf16.mxu0 %v7843
        %8770 = vmatpush1.bf16.msra.mxu0 %v7842
        %8771 = vmatprep.subr.bf16.mxu0 %v7837
        %8772 = vmatpush1.bf16.msra.mxu0 %v7836
        %8773 = vmatprep.subr.bf16.mxu0 %v7927
        %8774 = vmatpush2.bf16.msra.mxu0 %v7926
        %8775 = vmatprep.subr.bf16.mxu0 %v7921
        %8776 = vmatpush2.bf16.msra.mxu0 %v7920
        %8777 = vmatprep.subr.bf16.mxu0 %v7915
        %8778 = vmatpush2.bf16.msra.mxu0 %v7914
        %8779 = vmatprep.subr.bf16.mxu0 %v7909
        %8780 = vmatpush2.bf16.msra.mxu0 %v7908
        %8781 = vmatprep.subr.bf16.mxu0 %v7903
        %8782 = vmatpush2.bf16.msra.mxu0 %v7902
        %8783 = vmatprep.subr.bf16.mxu0 %v7897
        %8784 = vmatpush2.bf16.msra.mxu0 %v7896
        %8785 = vmatprep.subr.bf16.mxu0 %v7891
        %8786 = vmatpush2.bf16.msra.mxu0 %v7890
        %8787 = vmatprep.subr.bf16.mxu0 %v7885
        %8788 = vmatpush2.bf16.msra.mxu0 %v7884
        %8789 = vmatprep.mubr.bf16.mxu0 %v5420
        %8790 = vmatmul.mubr.bf16.gmra.mxu0 %v5419
        %v8791 = vpop.f32.mrf.mxu0
        %v8792 = vadd.f32 %v8741, %v8791
        %v8793 = vpop.f32.mrf.mxu0
        %v8794 = vadd.f32 %v8743, %v8793
        %v8795 = vpop.f32.mrf.mxu0
        %v8796 = vadd.f32 %v8745, %v8795
        %v8797 = vpop.f32.mrf.mxu0
        %v8798 = vadd.f32 %v8747, %v8797
        %8799 = vmatprep.mubr.bf16.mxu0 %v5431
        %8800 = vmatmul.mubr.bf16.gmra.mxu0 %v5430
        %v8801 = vpop.f32.mrf.mxu0
        %v8802 = vadd.f32 %v8751, %v8801
        %v8803 = vpop.f32.mrf.mxu0
        %v8804 = vadd.f32 %v8753, %v8803
        %v8805 = vpop.f32.mrf.mxu0
        %v8806 = vpop.f32.mrf.mxu0
        %8807 = vdwg.mxu0
        %8808 = vmatprep.subr.bf16.mxu0 %v7975
        %8809 = vmatpush1.bf16.msra.mxu0 %v7974
        %8810 = vmatprep.subr.bf16.mxu0 %v7969
        %8811 = vmatpush1.bf16.msra.mxu0 %v7968
        %8812 = vmatprep.subr.bf16.mxu0 %v7963
        %8813 = vmatpush1.bf16.msra.mxu0 %v7962
        %8814 = vmatprep.subr.bf16.mxu0 %v7957
        %8815 = vmatpush1.bf16.msra.mxu0 %v7956
        %8816 = vmatprep.subr.bf16.mxu0 %v7951
        %8817 = vmatpush1.bf16.msra.mxu0 %v7950
        %8818 = vmatprep.subr.bf16.mxu0 %v7945
        %8819 = vmatpush1.bf16.msra.mxu0 %v7944
        %8820 = vmatprep.subr.bf16.mxu0 %v7939
        %8821 = vmatpush1.bf16.msra.mxu0 %v7938
        %8822 = vmatprep.subr.bf16.mxu0 %v7933
        %8823 = vmatpush1.bf16.msra.mxu0 %v7932
        %8824 = vmatprep.subr.bf16.mxu0 %v8023
        %8825 = vmatpush2.bf16.msra.mxu0 %v8022
        %8826 = vmatprep.subr.bf16.mxu0 %v8017
        %8827 = vmatpush2.bf16.msra.mxu0 %v8016
        %8828 = vmatprep.subr.bf16.mxu0 %v8011
        %8829 = vmatpush2.bf16.msra.mxu0 %v8010
        %8830 = vmatprep.subr.bf16.mxu0 %v8005
        %8831 = vmatpush2.bf16.msra.mxu0 %v8004
        %8832 = vmatprep.subr.bf16.mxu0 %v7999
        %8833 = vmatpush2.bf16.msra.mxu0 %v7998
        %8834 = vmatprep.subr.bf16.mxu0 %v7993
        %8835 = vmatpush2.bf16.msra.mxu0 %v7992
        %8836 = vmatprep.subr.bf16.mxu0 %v7987
        %8837 = vmatpush2.bf16.msra.mxu0 %v7986
        %8838 = vmatprep.subr.bf16.mxu0 %v7981
        %8839 = vmatpush2.bf16.msra.mxu0 %v7980
        %8840 = vmatprep.mubr.bf16.mxu0 %v5422
        %8841 = vmatmul.mubr.bf16.gmra.mxu0 %v5421
        %v8842 = vpop.f32.mrf.mxu0
        %v8843 = vadd.f32 %v8792, %v8842
        %v8844 = vpop.f32.mrf.mxu0
        %v8845 = vadd.f32 %v8794, %v8844
        %v8846 = vpop.f32.mrf.mxu0
        %v8847 = vadd.f32 %v8796, %v8846
        %v8848 = vpop.f32.mrf.mxu0
        %v8849 = vadd.f32 %v8798, %v8848
        %8850 = vmatprep.mubr.bf16.mxu0 %v5433
        %8851 = vmatmul.mubr.bf16.gmra.mxu0 %v5432
        %v8852 = vpop.f32.mrf.mxu0
        %v8853 = vadd.f32 %v8802, %v8852
        %v8854 = vpop.f32.mrf.mxu0
        %v8855 = vadd.f32 %v8804, %v8854
        %v8856 = vpop.f32.mrf.mxu0
        %v8857 = vpop.f32.mrf.mxu0
        %8858 = vdwg.mxu0
        %8859 = vmatprep.subr.bf16.mxu0 %v8071
        %8860 = vmatpush1.bf16.msra.mxu0 %v8070
        %8861 = vmatprep.subr.bf16.mxu0 %v8065
        %8862 = vmatpush1.bf16.msra.mxu0 %v8064
        %8863 = vmatprep.subr.bf16.mxu0 %v8059
        %8864 = vmatpush1.bf16.msra.mxu0 %v8058
        %8865 = vmatprep.subr.bf16.mxu0 %v8053
        %8866 = vmatpush1.bf16.msra.mxu0 %v8052
        %8867 = vmatprep.subr.bf16.mxu0 %v8047
        %8868 = vmatpush1.bf16.msra.mxu0 %v8046
        %8869 = vmatprep.subr.bf16.mxu0 %v8041
        %8870 = vmatpush1.bf16.msra.mxu0 %v8040
        %8871 = vmatprep.subr.bf16.mxu0 %v8035
        %8872 = vmatpush1.bf16.msra.mxu0 %v8034
        %8873 = vmatprep.subr.bf16.mxu0 %v8029
        %8874 = vmatpush1.bf16.msra.mxu0 %v8028
        %8875 = vmatprep.subr.bf16.mxu0 0
        %8876 = vmatpush2.bf16.msra.mxu0 0
        %8877 = vmatprep.subr.bf16.mxu0 0
        %8878 = vmatpush2.bf16.msra.mxu0 0
        %8879 = vmatprep.subr.bf16.mxu0 0
        %8880 = vmatpush2.bf16.msra.mxu0 0
        %8881 = vmatprep.subr.bf16.mxu0 0
        %8882 = vmatpush2.bf16.msra.mxu0 0
        %8883 = vmatprep.subr.bf16.mxu0 0
        %8884 = vmatpush2.bf16.msra.mxu0 0
        %8885 = vmatprep.subr.bf16.mxu0 0
        %8886 = vmatpush2.bf16.msra.mxu0 0
        %8887 = vmatprep.subr.bf16.mxu0 0
        %8888 = vmatpush2.bf16.msra.mxu0 0
        %8889 = vmatprep.subr.bf16.mxu0 0
        %8890 = vmatpush2.bf16.msra.mxu0 0
        %8891 = vmatprep.mubr.bf16.mxu0 0
        %8892 = vmatmul.mubr.bf16.gmra.mxu0 %v5423
        %v8893 = vpop.f32.mrf.mxu0
        %v8894 = vadd.f32 %v8843, %v8893
        %v8895 = vpop.f32.mrf.mxu0
        %v8896 = vadd.f32 %v8845, %v8895
        %v8897 = vpop.f32.mrf.mxu0
        %v8898 = vadd.f32 %v8847, %v8897
        %v8899 = vpop.f32.mrf.mxu0
        %v8900 = vadd.f32 %v8849, %v8899
        %8901 = vmatprep.mubr.bf16.mxu0 0
        %8902 = vmatmul.mubr.bf16.gmra.mxu0 %v5434
        %v8903 = vpop.f32.mrf.mxu0
        %v8904 = vadd.f32 %v8853, %v8903
        %v8905 = vpop.f32.mrf.mxu0
        %v8906 = vadd.f32 %v8855, %v8905
        %v8907 = vpop.f32.mrf.mxu0
        %v8908 = vpop.f32.mrf.mxu0
        %8909 = vdwg.mxu0
        %8910 = vmatprep.subr.bf16.mxu0 %v7593
        %8911 = vmatpush1.bf16.msra.mxu0 %v7592
        %8912 = vmatprep.subr.bf16.mxu0 %v7587
        %8913 = vmatpush1.bf16.msra.mxu0 %v7586
        %8914 = vmatprep.subr.bf16.mxu0 %v7581
        %8915 = vmatpush1.bf16.msra.mxu0 %v7580
        %8916 = vmatprep.subr.bf16.mxu0 %v7575
        %8917 = vmatpush1.bf16.msra.mxu0 %v7574
        %8918 = vmatprep.subr.bf16.mxu0 %v7569
        %8919 = vmatpush1.bf16.msra.mxu0 %v7568
        %8920 = vmatprep.subr.bf16.mxu0 %v7563
        %8921 = vmatpush1.bf16.msra.mxu0 %v7562
        %8922 = vmatprep.subr.bf16.mxu0 %v7557
        %8923 = vmatpush1.bf16.msra.mxu0 %v7556
        %8924 = vmatprep.subr.bf16.mxu0 %v7551
        %8925 = vmatpush1.bf16.msra.mxu0 %v7550
        %8926 = vmatprep.subr.bf16.mxu0 %v7641
        %8927 = vmatpush2.bf16.msra.mxu0 %v7640
        %8928 = vmatprep.subr.bf16.mxu0 %v7635
        %8929 = vmatpush2.bf16.msra.mxu0 %v7634
        %8930 = vmatprep.subr.bf16.mxu0 %v7629
        %8931 = vmatpush2.bf16.msra.mxu0 %v7628
        %8932 = vmatprep.subr.bf16.mxu0 %v7623
        %8933 = vmatpush2.bf16.msra.mxu0 %v7622
        %8934 = vmatprep.subr.bf16.mxu0 %v7617
        %8935 = vmatpush2.bf16.msra.mxu0 %v7616
        %8936 = vmatprep.subr.bf16.mxu0 %v7611
        %8937 = vmatpush2.bf16.msra.mxu0 %v7610
        %8938 = vmatprep.subr.bf16.mxu0 %v7605
        %8939 = vmatpush2.bf16.msra.mxu0 %v7604
        %8940 = vmatprep.subr.bf16.mxu0 %v7599
        %8941 = vmatpush2.bf16.msra.mxu0 %v7598
        %8942 = vmatprep.mubr.bf16.mxu0 %v5414
        %8943 = vmatmul.mubr.bf16.gmra.mxu0 %v5413
        %v8944 = vpop.f32.mrf.mxu0
        %v8945 = vadd.f32 0.0, %v8944
        %v8946 = vpop.f32.mrf.mxu0
        %v8947 = vadd.f32 0.0, %v8946
        %v8948 = vpop.f32.mrf.mxu0
        %v8949 = vadd.f32 0.0, %v8948
        %v8950 = vpop.f32.mrf.mxu0
        %v8951 = vadd.f32 0.0, %v8950
        %8952 = vmatprep.mubr.bf16.mxu0 %v5425
        %8953 = vmatmul.mubr.bf16.gmra.mxu0 %v5424
        %v8954 = vpop.f32.mrf.mxu0
        %v8955 = vadd.f32 0.0, %v8954
        %v8956 = vpop.f32.mrf.mxu0
        %v8957 = vadd.f32 0.0, %v8956
        %v8958 = vpop.f32.mrf.mxu0
        %v8959 = vpop.f32.mrf.mxu0
        %8960 = vdwg.mxu0
        %8961 = vmatprep.subr.bf16.mxu0 %v7689
        %8962 = vmatpush1.bf16.msra.mxu0 %v7688
        %8963 = vmatprep.subr.bf16.mxu0 %v7683
        %8964 = vmatpush1.bf16.msra.mxu0 %v7682
        %8965 = vmatprep.subr.bf16.mxu0 %v7677
        %8966 = vmatpush1.bf16.msra.mxu0 %v7676
        %8967 = vmatprep.subr.bf16.mxu0 %v7671
        %8968 = vmatpush1.bf16.msra.mxu0 %v7670
        %8969 = vmatprep.subr.bf16.mxu0 %v7665
        %8970 = vmatpush1.bf16.msra.mxu0 %v7664
        %8971 = vmatprep.subr.bf16.mxu0 %v7659
        %8972 = vmatpush1.bf16.msra.mxu0 %v7658
        %8973 = vmatprep.subr.bf16.mxu0 %v7653
        %8974 = vmatpush1.bf16.msra.mxu0 %v7652
        %8975 = vmatprep.subr.bf16.mxu0 %v7647
        %8976 = vmatpush1.bf16.msra.mxu0 %v7646
        %8977 = vmatprep.subr.bf16.mxu0 %v7737
        %8978 = vmatpush2.bf16.msra.mxu0 %v7736
        %8979 = vmatprep.subr.bf16.mxu0 %v7731
        %8980 = vmatpush2.bf16.msra.mxu0 %v7730
        %8981 = vmatprep.subr.bf16.mxu0 %v7725
        %8982 = vmatpush2.bf16.msra.mxu0 %v7724
        %8983 = vmatprep.subr.bf16.mxu0 %v7719
        %8984 = vmatpush2.bf16.msra.mxu0 %v7718
        %8985 = vmatprep.subr.bf16.mxu0 %v7713
        %8986 = vmatpush2.bf16.msra.mxu0 %v7712
        %8987 = vmatprep.subr.bf16.mxu0 %v7707
        %8988 = vmatpush2.bf16.msra.mxu0 %v7706
        %8989 = vmatprep.subr.bf16.mxu0 %v7701
        %8990 = vmatpush2.bf16.msra.mxu0 %v7700
        %8991 = vmatprep.subr.bf16.mxu0 %v7695
        %8992 = vmatpush2.bf16.msra.mxu0 %v7694
        %8993 = vmatprep.mubr.bf16.mxu0 %v5416
        %8994 = vmatmul.mubr.bf16.gmra.mxu0 %v5415
        %v8995 = vpop.f32.mrf.mxu0
        %v8996 = vadd.f32 %v8945, %v8995
        %v8997 = vpop.f32.mrf.mxu0
        %v8998 = vadd.f32 %v8947, %v8997
        %v8999 = vpop.f32.mrf.mxu0
        %v9000 = vadd.f32 %v8949, %v8999
        %v9001 = vpop.f32.mrf.mxu0
        %v9002 = vadd.f32 %v8951, %v9001
        %9003 = vmatprep.mubr.bf16.mxu0 %v5427
        %9004 = vmatmul.mubr.bf16.gmra.mxu0 %v5426
        %v9005 = vpop.f32.mrf.mxu0
        %v9006 = vadd.f32 %v8955, %v9005
        %v9007 = vpop.f32.mrf.mxu0
        %v9008 = vadd.f32 %v8957, %v9007
        %v9009 = vpop.f32.mrf.mxu0
        %v9010 = vpop.f32.mrf.mxu0
        %9011 = vdwg.mxu0
        %9012 = vmatprep.subr.bf16.mxu0 %v7785
        %9013 = vmatpush1.bf16.msra.mxu0 %v7784
        %9014 = vmatprep.subr.bf16.mxu0 %v7779
        %9015 = vmatpush1.bf16.msra.mxu0 %v7778
        %9016 = vmatprep.subr.bf16.mxu0 %v7773
        %9017 = vmatpush1.bf16.msra.mxu0 %v7772
        %9018 = vmatprep.subr.bf16.mxu0 %v7767
        %9019 = vmatpush1.bf16.msra.mxu0 %v7766
        %9020 = vmatprep.subr.bf16.mxu0 %v7761
        %9021 = vmatpush1.bf16.msra.mxu0 %v7760
        %9022 = vmatprep.subr.bf16.mxu0 %v7755
        %9023 = vmatpush1.bf16.msra.mxu0 %v7754
        %9024 = vmatprep.subr.bf16.mxu0 %v7749
        %9025 = vmatpush1.bf16.msra.mxu0 %v7748
        %9026 = vmatprep.subr.bf16.mxu0 %v7743
        %9027 = vmatpush1.bf16.msra.mxu0 %v7742
        %9028 = vmatprep.subr.bf16.mxu0 %v7833
        %9029 = vmatpush2.bf16.msra.mxu0 %v7832
        %9030 = vmatprep.subr.bf16.mxu0 %v7827
        %9031 = vmatpush2.bf16.msra.mxu0 %v7826
        %9032 = vmatprep.subr.bf16.mxu0 %v7821
        %9033 = vmatpush2.bf16.msra.mxu0 %v7820
        %9034 = vmatprep.subr.bf16.mxu0 %v7815
        %9035 = vmatpush2.bf16.msra.mxu0 %v7814
        %9036 = vmatprep.subr.bf16.mxu0 %v7809
        %9037 = vmatpush2.bf16.msra.mxu0 %v7808
        %9038 = vmatprep.subr.bf16.mxu0 %v7803
        %9039 = vmatpush2.bf16.msra.mxu0 %v7802
        %9040 = vmatprep.subr.bf16.mxu0 %v7797
        %9041 = vmatpush2.bf16.msra.mxu0 %v7796
        %9042 = vmatprep.subr.bf16.mxu0 %v7791
        %9043 = vmatpush2.bf16.msra.mxu0 %v7790
        %9044 = vmatprep.mubr.bf16.mxu0 %v5418
        %9045 = vmatmul.mubr.bf16.gmra.mxu0 %v5417
        %v9046 = vpop.f32.mrf.mxu0
        %v9047 = vadd.f32 %v8996, %v9046
        %v9048 = vpop.f32.mrf.mxu0
        %v9049 = vadd.f32 %v8998, %v9048
        %v9050 = vpop.f32.mrf.mxu0
        %v9051 = vadd.f32 %v9000, %v9050
        %v9052 = vpop.f32.mrf.mxu0
        %v9053 = vadd.f32 %v9002, %v9052
        %9054 = vmatprep.mubr.bf16.mxu0 %v5429
        %9055 = vmatmul.mubr.bf16.gmra.mxu0 %v5428
        %v9056 = vpop.f32.mrf.mxu0
        %v9057 = vadd.f32 %v9006, %v9056
        %v9058 = vpop.f32.mrf.mxu0
        %v9059 = vadd.f32 %v9008, %v9058
        %v9060 = vpop.f32.mrf.mxu0
        %v9061 = vpop.f32.mrf.mxu0
        %9062 = vdwg.mxu0
        %9063 = vmatprep.subr.bf16.mxu0 %v7881
        %9064 = vmatpush1.bf16.msra.mxu0 %v7880
        %9065 = vmatprep.subr.bf16.mxu0 %v7875
        %9066 = vmatpush1.bf16.msra.mxu0 %v7874
        %9067 = vmatprep.subr.bf16.mxu0 %v7869
        %9068 = vmatpush1.bf16.msra.mxu0 %v7868
        %9069 = vmatprep.subr.bf16.mxu0 %v7863
        %9070 = vmatpush1.bf16.msra.mxu0 %v7862
        %9071 = vmatprep.subr.bf16.mxu0 %v7857
        %9072 = vmatpush1.bf16.msra.mxu0 %v7856
        %9073 = vmatprep.subr.bf16.mxu0 %v7851
        %9074 = vmatpush1.bf16.msra.mxu0 %v7850
        %9075 = vmatprep.subr.bf16.mxu0 %v7845
        %9076 = vmatpush1.bf16.msra.mxu0 %v7844
        %9077 = vmatprep.subr.bf16.mxu0 %v7839
        %9078 = vmatpush1.bf16.msra.mxu0 %v7838
        %9079 = vmatprep.subr.bf16.mxu0 %v7929
        %9080 = vmatpush2.bf16.msra.mxu0 %v7928
        %9081 = vmatprep.subr.bf16.mxu0 %v7923
        %9082 = vmatpush2.bf16.msra.mxu0 %v7922
        %9083 = vmatprep.subr.bf16.mxu0 %v7917
        %9084 = vmatpush2.bf16.msra.mxu0 %v7916
        %9085 = vmatprep.subr.bf16.mxu0 %v7911
        %9086 = vmatpush2.bf16.msra.mxu0 %v7910
        %9087 = vmatprep.subr.bf16.mxu0 %v7905
        %9088 = vmatpush2.bf16.msra.mxu0 %v7904
        %9089 = vmatprep.subr.bf16.mxu0 %v7899
        %9090 = vmatpush2.bf16.msra.mxu0 %v7898
        %9091 = vmatprep.subr.bf16.mxu0 %v7893
        %9092 = vmatpush2.bf16.msra.mxu0 %v7892
        %9093 = vmatprep.subr.bf16.mxu0 %v7887
        %9094 = vmatpush2.bf16.msra.mxu0 %v7886
        %9095 = vmatprep.mubr.bf16.mxu0 %v5420
        %9096 = vmatmul.mubr.bf16.gmra.mxu0 %v5419
        %v9097 = vpop.f32.mrf.mxu0
        %v9098 = vadd.f32 %v9047, %v9097
        %v9099 = vpop.f32.mrf.mxu0
        %v9100 = vadd.f32 %v9049, %v9099
        %v9101 = vpop.f32.mrf.mxu0
        %v9102 = vadd.f32 %v9051, %v9101
        %v9103 = vpop.f32.mrf.mxu0
        %v9104 = vadd.f32 %v9053, %v9103
        %9105 = vmatprep.mubr.bf16.mxu0 %v5431
        %9106 = vmatmul.mubr.bf16.gmra.mxu0 %v5430
        %v9107 = vpop.f32.mrf.mxu0
        %v9108 = vadd.f32 %v9057, %v9107
        %v9109 = vpop.f32.mrf.mxu0
        %v9110 = vadd.f32 %v9059, %v9109
        %v9111 = vpop.f32.mrf.mxu0
        %v9112 = vpop.f32.mrf.mxu0
        %9113 = vdwg.mxu0
        %9114 = vmatprep.subr.bf16.mxu0 %v7977
        %9115 = vmatpush1.bf16.msra.mxu0 %v7976
        %9116 = vmatprep.subr.bf16.mxu0 %v7971
        %9117 = vmatpush1.bf16.msra.mxu0 %v7970
        %9118 = vmatprep.subr.bf16.mxu0 %v7965
        %9119 = vmatpush1.bf16.msra.mxu0 %v7964
        %9120 = vmatprep.subr.bf16.mxu0 %v7959
        %9121 = vmatpush1.bf16.msra.mxu0 %v7958
        %9122 = vmatprep.subr.bf16.mxu0 %v7953
        %9123 = vmatpush1.bf16.msra.mxu0 %v7952
        %9124 = vmatprep.subr.bf16.mxu0 %v7947
        %9125 = vmatpush1.bf16.msra.mxu0 %v7946
        %9126 = vmatprep.subr.bf16.mxu0 %v7941
        %9127 = vmatpush1.bf16.msra.mxu0 %v7940
        %9128 = vmatprep.subr.bf16.mxu0 %v7935
        %9129 = vmatpush1.bf16.msra.mxu0 %v7934
        %9130 = vmatprep.subr.bf16.mxu0 %v8025
        %9131 = vmatpush2.bf16.msra.mxu0 %v8024
        %9132 = vmatprep.subr.bf16.mxu0 %v8019
        %9133 = vmatpush2.bf16.msra.mxu0 %v8018
        %9134 = vmatprep.subr.bf16.mxu0 %v8013
        %9135 = vmatpush2.bf16.msra.mxu0 %v8012
        %9136 = vmatprep.subr.bf16.mxu0 %v8007
        %9137 = vmatpush2.bf16.msra.mxu0 %v8006
        %9138 = vmatprep.subr.bf16.mxu0 %v8001
        %9139 = vmatpush2.bf16.msra.mxu0 %v8000
        %9140 = vmatprep.subr.bf16.mxu0 %v7995
        %9141 = vmatpush2.bf16.msra.mxu0 %v7994
        %9142 = vmatprep.subr.bf16.mxu0 %v7989
        %9143 = vmatpush2.bf16.msra.mxu0 %v7988
        %9144 = vmatprep.subr.bf16.mxu0 %v7983
        %9145 = vmatpush2.bf16.msra.mxu0 %v7982
        %9146 = vmatprep.mubr.bf16.mxu0 %v5422
        %9147 = vmatmul.mubr.bf16.gmra.mxu0 %v5421
        %v9148 = vpop.f32.mrf.mxu0
        %v9149 = vadd.f32 %v9098, %v9148
        %v9150 = vpop.f32.mrf.mxu0
        %v9151 = vadd.f32 %v9100, %v9150
        %v9152 = vpop.f32.mrf.mxu0
        %v9153 = vadd.f32 %v9102, %v9152
        %v9154 = vpop.f32.mrf.mxu0
        %v9155 = vadd.f32 %v9104, %v9154
        %9156 = vmatprep.mubr.bf16.mxu0 %v5433
        %9157 = vmatmul.mubr.bf16.gmra.mxu0 %v5432
        %v9158 = vpop.f32.mrf.mxu0
        %v9159 = vadd.f32 %v9108, %v9158
        %v9160 = vpop.f32.mrf.mxu0
        %v9161 = vadd.f32 %v9110, %v9160
        %v9162 = vpop.f32.mrf.mxu0
        %v9163 = vpop.f32.mrf.mxu0
        %9164 = vdwg.mxu0
        %9165 = vmatprep.subr.bf16.mxu0 %v8073
        %9166 = vmatpush1.bf16.msra.mxu0 %v8072
        %9167 = vmatprep.subr.bf16.mxu0 %v8067
        %9168 = vmatpush1.bf16.msra.mxu0 %v8066
        %9169 = vmatprep.subr.bf16.mxu0 %v8061
        %9170 = vmatpush1.bf16.msra.mxu0 %v8060
        %9171 = vmatprep.subr.bf16.mxu0 %v8055
        %9172 = vmatpush1.bf16.msra.mxu0 %v8054
        %9173 = vmatprep.subr.bf16.mxu0 %v8049
        %9174 = vmatpush1.bf16.msra.mxu0 %v8048
        %9175 = vmatprep.subr.bf16.mxu0 %v8043
        %9176 = vmatpush1.bf16.msra.mxu0 %v8042
        %9177 = vmatprep.subr.bf16.mxu0 %v8037
        %9178 = vmatpush1.bf16.msra.mxu0 %v8036
        %9179 = vmatprep.subr.bf16.mxu0 %v8031
        %9180 = vmatpush1.bf16.msra.mxu0 %v8030
        %9181 = vmatprep.subr.bf16.mxu0 0
        %9182 = vmatpush2.bf16.msra.mxu0 0
        %9183 = vmatprep.subr.bf16.mxu0 0
        %9184 = vmatpush2.bf16.msra.mxu0 0
        %9185 = vmatprep.subr.bf16.mxu0 0
        %9186 = vmatpush2.bf16.msra.mxu0 0
        %9187 = vmatprep.subr.bf16.mxu0 0
        %9188 = vmatpush2.bf16.msra.mxu0 0
        %9189 = vmatprep.subr.bf16.mxu0 0
        %9190 = vmatpush2.bf16.msra.mxu0 0
        %9191 = vmatprep.subr.bf16.mxu0 0
        %9192 = vmatpush2.bf16.msra.mxu0 0
        %9193 = vmatprep.subr.bf16.mxu0 0
        %9194 = vmatpush2.bf16.msra.mxu0 0
        %9195 = vmatprep.subr.bf16.mxu0 0
        %9196 = vmatpush2.bf16.msra.mxu0 0
        %9197 = vmatprep.mubr.bf16.mxu0 0
        %9198 = vmatmul.mubr.bf16.gmra.mxu0 %v5423
        %v9199 = vpop.f32.mrf.mxu0
        %v9200 = vadd.f32 %v9149, %v9199
        %v9201 = vpop.f32.mrf.mxu0
        %v9202 = vadd.f32 %v9151, %v9201
        %v9203 = vpop.f32.mrf.mxu0
        %v9204 = vadd.f32 %v9153, %v9203
        %v9205 = vpop.f32.mrf.mxu0
        %v9206 = vadd.f32 %v9155, %v9205
        %9207 = vmatprep.mubr.bf16.mxu0 0
        %9208 = vmatmul.mubr.bf16.gmra.mxu0 %v5434
        %v9209 = vpop.f32.mrf.mxu0
        %v9210 = vadd.f32 %v9159, %v9209
        %v9211 = vpop.f32.mrf.mxu0
        %v9212 = vadd.f32 %v9161, %v9211
        %v9213 = vpop.f32.mrf.mxu0
        %v9214 = vpop.f32.mrf.mxu0
        %9215 = vdwg.mxu0
        %9216 = vmatprep.subr.bf16.mxu0 %v7595
        %9217 = vmatpush1.bf16.msra.mxu0 %v7594
        %9218 = vmatprep.subr.bf16.mxu0 %v7589
        %9219 = vmatpush1.bf16.msra.mxu0 %v7588
        %9220 = vmatprep.subr.bf16.mxu0 %v7583
        %9221 = vmatpush1.bf16.msra.mxu0 %v7582
        %9222 = vmatprep.subr.bf16.mxu0 %v7577
        %9223 = vmatpush1.bf16.msra.mxu0 %v7576
        %9224 = vmatprep.subr.bf16.mxu0 %v7571
        %9225 = vmatpush1.bf16.msra.mxu0 %v7570
        %9226 = vmatprep.subr.bf16.mxu0 %v7565
        %9227 = vmatpush1.bf16.msra.mxu0 %v7564
        %9228 = vmatprep.subr.bf16.mxu0 %v7559
        %9229 = vmatpush1.bf16.msra.mxu0 %v7558
        %9230 = vmatprep.subr.bf16.mxu0 %v7553
        %9231 = vmatpush1.bf16.msra.mxu0 %v7552
        %9232 = vmatprep.subr.bf16.mxu0 %v7643
        %9233 = vmatpush2.bf16.msra.mxu0 %v7642
        %9234 = vmatprep.subr.bf16.mxu0 %v7637
        %9235 = vmatpush2.bf16.msra.mxu0 %v7636
        %9236 = vmatprep.subr.bf16.mxu0 %v7631
        %9237 = vmatpush2.bf16.msra.mxu0 %v7630
        %9238 = vmatprep.subr.bf16.mxu0 %v7625
        %9239 = vmatpush2.bf16.msra.mxu0 %v7624
        %9240 = vmatprep.subr.bf16.mxu0 %v7619
        %9241 = vmatpush2.bf16.msra.mxu0 %v7618
        %9242 = vmatprep.subr.bf16.mxu0 %v7613
        %9243 = vmatpush2.bf16.msra.mxu0 %v7612
        %9244 = vmatprep.subr.bf16.mxu0 %v7607
        %9245 = vmatpush2.bf16.msra.mxu0 %v7606
        %9246 = vmatprep.subr.bf16.mxu0 %v7601
        %9247 = vmatpush2.bf16.msra.mxu0 %v7600
        %9248 = vmatprep.mubr.bf16.mxu0 %v5414
        %9249 = vmatmul.mubr.bf16.gmra.mxu0 %v5413
        %v9250 = vpop.f32.mrf.mxu0
        %v9251 = vadd.f32 0.0, %v9250
        %v9252 = vpop.f32.mrf.mxu0
        %v9253 = vadd.f32 0.0, %v9252
        %v9254 = vpop.f32.mrf.mxu0
        %v9255 = vadd.f32 0.0, %v9254
        %v9256 = vpop.f32.mrf.mxu0
        %v9257 = vadd.f32 0.0, %v9256
        %9258 = vmatprep.mubr.bf16.mxu0 %v5425
        %9259 = vmatmul.mubr.bf16.gmra.mxu0 %v5424
        %v9260 = vpop.f32.mrf.mxu0
        %v9261 = vadd.f32 0.0, %v9260
        %v9262 = vpop.f32.mrf.mxu0
        %v9263 = vadd.f32 0.0, %v9262
        %v9264 = vpop.f32.mrf.mxu0
        %v9265 = vpop.f32.mrf.mxu0
        %9266 = vdwg.mxu0
        %9267 = vmatprep.subr.bf16.mxu0 %v7691
        %9268 = vmatpush1.bf16.msra.mxu0 %v7690
        %9269 = vmatprep.subr.bf16.mxu0 %v7685
        %9270 = vmatpush1.bf16.msra.mxu0 %v7684
        %9271 = vmatprep.subr.bf16.mxu0 %v7679
        %9272 = vmatpush1.bf16.msra.mxu0 %v7678
        %9273 = vmatprep.subr.bf16.mxu0 %v7673
        %9274 = vmatpush1.bf16.msra.mxu0 %v7672
        %9275 = vmatprep.subr.bf16.mxu0 %v7667
        %9276 = vmatpush1.bf16.msra.mxu0 %v7666
        %9277 = vmatprep.subr.bf16.mxu0 %v7661
        %9278 = vmatpush1.bf16.msra.mxu0 %v7660
        %9279 = vmatprep.subr.bf16.mxu0 %v7655
        %9280 = vmatpush1.bf16.msra.mxu0 %v7654
        %9281 = vmatprep.subr.bf16.mxu0 %v7649
        %9282 = vmatpush1.bf16.msra.mxu0 %v7648
        %9283 = vmatprep.subr.bf16.mxu0 %v7739
        %9284 = vmatpush2.bf16.msra.mxu0 %v7738
        %9285 = vmatprep.subr.bf16.mxu0 %v7733
        %9286 = vmatpush2.bf16.msra.mxu0 %v7732
        %9287 = vmatprep.subr.bf16.mxu0 %v7727
        %9288 = vmatpush2.bf16.msra.mxu0 %v7726
        %9289 = vmatprep.subr.bf16.mxu0 %v7721
        %9290 = vmatpush2.bf16.msra.mxu0 %v7720
        %9291 = vmatprep.subr.bf16.mxu0 %v7715
        %9292 = vmatpush2.bf16.msra.mxu0 %v7714
        %9293 = vmatprep.subr.bf16.mxu0 %v7709
        %9294 = vmatpush2.bf16.msra.mxu0 %v7708
        %9295 = vmatprep.subr.bf16.mxu0 %v7703
        %9296 = vmatpush2.bf16.msra.mxu0 %v7702
        %9297 = vmatprep.subr.bf16.mxu0 %v7697
        %9298 = vmatpush2.bf16.msra.mxu0 %v7696
        %9299 = vmatprep.mubr.bf16.mxu0 %v5416
        %9300 = vmatmul.mubr.bf16.gmra.mxu0 %v5415
        %v9301 = vpop.f32.mrf.mxu0
        %v9302 = vadd.f32 %v9251, %v9301
        %v9303 = vpop.f32.mrf.mxu0
        %v9304 = vadd.f32 %v9253, %v9303
        %v9305 = vpop.f32.mrf.mxu0
        %v9306 = vadd.f32 %v9255, %v9305
        %v9307 = vpop.f32.mrf.mxu0
        %v9308 = vadd.f32 %v9257, %v9307
        %9309 = vmatprep.mubr.bf16.mxu0 %v5427
        %9310 = vmatmul.mubr.bf16.gmra.mxu0 %v5426
        %v9311 = vpop.f32.mrf.mxu0
        %v9312 = vadd.f32 %v9261, %v9311
        %v9313 = vpop.f32.mrf.mxu0
        %v9314 = vadd.f32 %v9263, %v9313
        %v9315 = vpop.f32.mrf.mxu0
        %v9316 = vpop.f32.mrf.mxu0
        %9317 = vdwg.mxu0
        %9318 = vmatprep.subr.bf16.mxu0 %v7787
        %9319 = vmatpush1.bf16.msra.mxu0 %v7786
        %9320 = vmatprep.subr.bf16.mxu0 %v7781
        %9321 = vmatpush1.bf16.msra.mxu0 %v7780
        %9322 = vmatprep.subr.bf16.mxu0 %v7775
        %9323 = vmatpush1.bf16.msra.mxu0 %v7774
        %9324 = vmatprep.subr.bf16.mxu0 %v7769
        %9325 = vmatpush1.bf16.msra.mxu0 %v7768
        %9326 = vmatprep.subr.bf16.mxu0 %v7763
        %9327 = vmatpush1.bf16.msra.mxu0 %v7762
        %9328 = vmatprep.subr.bf16.mxu0 %v7757
        %9329 = vmatpush1.bf16.msra.mxu0 %v7756
        %9330 = vmatprep.subr.bf16.mxu0 %v7751
        %9331 = vmatpush1.bf16.msra.mxu0 %v7750
        %9332 = vmatprep.subr.bf16.mxu0 %v7745
        %9333 = vmatpush1.bf16.msra.mxu0 %v7744
        %9334 = vmatprep.subr.bf16.mxu0 %v7835
        %9335 = vmatpush2.bf16.msra.mxu0 %v7834
        %9336 = vmatprep.subr.bf16.mxu0 %v7829
        %9337 = vmatpush2.bf16.msra.mxu0 %v7828
        %9338 = vmatprep.subr.bf16.mxu0 %v7823
        %9339 = vmatpush2.bf16.msra.mxu0 %v7822
        %9340 = vmatprep.subr.bf16.mxu0 %v7817
        %9341 = vmatpush2.bf16.msra.mxu0 %v7816
        %9342 = vmatprep.subr.bf16.mxu0 %v7811
        %9343 = vmatpush2.bf16.msra.mxu0 %v7810
        %9344 = vmatprep.subr.bf16.mxu0 %v7805
        %9345 = vmatpush2.bf16.msra.mxu0 %v7804
        %9346 = vmatprep.subr.bf16.mxu0 %v7799
        %9347 = vmatpush2.bf16.msra.mxu0 %v7798
        %9348 = vmatprep.subr.bf16.mxu0 %v7793
        %9349 = vmatpush2.bf16.msra.mxu0 %v7792
        %9350 = vmatprep.mubr.bf16.mxu0 %v5418
        %9351 = vmatmul.mubr.bf16.gmra.mxu0 %v5417
        %v9352 = vpop.f32.mrf.mxu0
        %v9353 = vadd.f32 %v9302, %v9352
        %v9354 = vpop.f32.mrf.mxu0
        %v9355 = vadd.f32 %v9304, %v9354
        %v9356 = vpop.f32.mrf.mxu0
        %v9357 = vadd.f32 %v9306, %v9356
        %v9358 = vpop.f32.mrf.mxu0
        %v9359 = vadd.f32 %v9308, %v9358
        %9360 = vmatprep.mubr.bf16.mxu0 %v5429
        %9361 = vmatmul.mubr.bf16.gmra.mxu0 %v5428
        %v9362 = vpop.f32.mrf.mxu0
        %v9363 = vadd.f32 %v9312, %v9362
        %v9364 = vpop.f32.mrf.mxu0
        %v9365 = vadd.f32 %v9314, %v9364
        %v9366 = vpop.f32.mrf.mxu0
        %v9367 = vpop.f32.mrf.mxu0
        %9368 = vdwg.mxu0
        %9369 = vmatprep.subr.bf16.mxu0 %v7883
        %9370 = vmatpush1.bf16.msra.mxu0 %v7882
        %9371 = vmatprep.subr.bf16.mxu0 %v7877
        %9372 = vmatpush1.bf16.msra.mxu0 %v7876
        %9373 = vmatprep.subr.bf16.mxu0 %v7871
        %9374 = vmatpush1.bf16.msra.mxu0 %v7870
        %9375 = vmatprep.subr.bf16.mxu0 %v7865
        %9376 = vmatpush1.bf16.msra.mxu0 %v7864
        %9377 = vmatprep.subr.bf16.mxu0 %v7859
        %9378 = vmatpush1.bf16.msra.mxu0 %v7858
        %9379 = vmatprep.subr.bf16.mxu0 %v7853
        %9380 = vmatpush1.bf16.msra.mxu0 %v7852
        %9381 = vmatprep.subr.bf16.mxu0 %v7847
        %9382 = vmatpush1.bf16.msra.mxu0 %v7846
        %9383 = vmatprep.subr.bf16.mxu0 %v7841
        %9384 = vmatpush1.bf16.msra.mxu0 %v7840
        %9385 = vmatprep.subr.bf16.mxu0 %v7931
        %9386 = vmatpush2.bf16.msra.mxu0 %v7930
        %9387 = vmatprep.subr.bf16.mxu0 %v7925
        %9388 = vmatpush2.bf16.msra.mxu0 %v7924
        %9389 = vmatprep.subr.bf16.mxu0 %v7919
        %9390 = vmatpush2.bf16.msra.mxu0 %v7918
        %9391 = vmatprep.subr.bf16.mxu0 %v7913
        %9392 = vmatpush2.bf16.msra.mxu0 %v7912
        %9393 = vmatprep.subr.bf16.mxu0 %v7907
        %9394 = vmatpush2.bf16.msra.mxu0 %v7906
        %9395 = vmatprep.subr.bf16.mxu0 %v7901
        %9396 = vmatpush2.bf16.msra.mxu0 %v7900
        %9397 = vmatprep.subr.bf16.mxu0 %v7895
        %9398 = vmatpush2.bf16.msra.mxu0 %v7894
        %9399 = vmatprep.subr.bf16.mxu0 %v7889
        %9400 = vmatpush2.bf16.msra.mxu0 %v7888
        %9401 = vmatprep.mubr.bf16.mxu0 %v5420
        %9402 = vmatmul.mubr.bf16.gmra.mxu0 %v5419
        %v9403 = vpop.f32.mrf.mxu0
        %v9404 = vadd.f32 %v9353, %v9403
        %v9405 = vpop.f32.mrf.mxu0
        %v9406 = vadd.f32 %v9355, %v9405
        %v9407 = vpop.f32.mrf.mxu0
        %v9408 = vadd.f32 %v9357, %v9407
        %v9409 = vpop.f32.mrf.mxu0
        %v9410 = vadd.f32 %v9359, %v9409
        %9411 = vmatprep.mubr.bf16.mxu0 %v5431
        %9412 = vmatmul.mubr.bf16.gmra.mxu0 %v5430
        %v9413 = vpop.f32.mrf.mxu0
        %v9414 = vadd.f32 %v9363, %v9413
        %v9415 = vpop.f32.mrf.mxu0
        %v9416 = vadd.f32 %v9365, %v9415
        %v9417 = vpop.f32.mrf.mxu0
        %v9418 = vpop.f32.mrf.mxu0
        %9419 = vdwg.mxu0
        %9420 = vmatprep.subr.bf16.mxu0 %v7979
        %9421 = vmatpush1.bf16.msra.mxu0 %v7978
        %9422 = vmatprep.subr.bf16.mxu0 %v7973
        %9423 = vmatpush1.bf16.msra.mxu0 %v7972
        %9424 = vmatprep.subr.bf16.mxu0 %v7967
        %9425 = vmatpush1.bf16.msra.mxu0 %v7966
        %9426 = vmatprep.subr.bf16.mxu0 %v7961
        %9427 = vmatpush1.bf16.msra.mxu0 %v7960
        %9428 = vmatprep.subr.bf16.mxu0 %v7955
        %9429 = vmatpush1.bf16.msra.mxu0 %v7954
        %9430 = vmatprep.subr.bf16.mxu0 %v7949
        %9431 = vmatpush1.bf16.msra.mxu0 %v7948
        %9432 = vmatprep.subr.bf16.mxu0 %v7943
        %9433 = vmatpush1.bf16.msra.mxu0 %v7942
        %9434 = vmatprep.subr.bf16.mxu0 %v7937
        %9435 = vmatpush1.bf16.msra.mxu0 %v7936
        %9436 = vmatprep.subr.bf16.mxu0 %v8027
        %9437 = vmatpush2.bf16.msra.mxu0 %v8026
        %9438 = vmatprep.subr.bf16.mxu0 %v8021
        %9439 = vmatpush2.bf16.msra.mxu0 %v8020
        %9440 = vmatprep.subr.bf16.mxu0 %v8015
        %9441 = vmatpush2.bf16.msra.mxu0 %v8014
        %9442 = vmatprep.subr.bf16.mxu0 %v8009
        %9443 = vmatpush2.bf16.msra.mxu0 %v8008
        %9444 = vmatprep.subr.bf16.mxu0 %v8003
        %9445 = vmatpush2.bf16.msra.mxu0 %v8002
        %9446 = vmatprep.subr.bf16.mxu0 %v7997
        %9447 = vmatpush2.bf16.msra.mxu0 %v7996
        %9448 = vmatprep.subr.bf16.mxu0 %v7991
        %9449 = vmatpush2.bf16.msra.mxu0 %v7990
        %9450 = vmatprep.subr.bf16.mxu0 %v7985
        %9451 = vmatpush2.bf16.msra.mxu0 %v7984
        %9452 = vmatprep.mubr.bf16.mxu0 %v5422
        %9453 = vmatmul.mubr.bf16.gmra.mxu0 %v5421
        %v9454 = vpop.f32.mrf.mxu0
        %v9455 = vadd.f32 %v9404, %v9454
        %v9456 = vpop.f32.mrf.mxu0
        %v9457 = vadd.f32 %v9406, %v9456
        %v9458 = vpop.f32.mrf.mxu0
        %v9459 = vadd.f32 %v9408, %v9458
        %v9460 = vpop.f32.mrf.mxu0
        %v9461 = vadd.f32 %v9410, %v9460
        %9462 = vmatprep.mubr.bf16.mxu0 %v5433
        %9463 = vmatmul.mubr.bf16.gmra.mxu0 %v5432
        %v9464 = vpop.f32.mrf.mxu0
        %v9465 = vadd.f32 %v9414, %v9464
        %v9466 = vpop.f32.mrf.mxu0
        %v9467 = vadd.f32 %v9416, %v9466
        %v9468 = vpop.f32.mrf.mxu0
        %v9469 = vpop.f32.mrf.mxu0
        %9470 = vdwg.mxu0
        %9471 = vmatprep.subr.bf16.mxu0 %v8075
        %9472 = vmatpush1.bf16.msra.mxu0 %v8074
        %9473 = vmatprep.subr.bf16.mxu0 %v8069
        %9474 = vmatpush1.bf16.msra.mxu0 %v8068
        %9475 = vmatprep.subr.bf16.mxu0 %v8063
        %9476 = vmatpush1.bf16.msra.mxu0 %v8062
        %9477 = vmatprep.subr.bf16.mxu0 %v8057
        %9478 = vmatpush1.bf16.msra.mxu0 %v8056
        %9479 = vmatprep.subr.bf16.mxu0 %v8051
        %9480 = vmatpush1.bf16.msra.mxu0 %v8050
        %9481 = vmatprep.subr.bf16.mxu0 %v8045
        %9482 = vmatpush1.bf16.msra.mxu0 %v8044
        %9483 = vmatprep.subr.bf16.mxu0 %v8039
        %9484 = vmatpush1.bf16.msra.mxu0 %v8038
        %9485 = vmatprep.subr.bf16.mxu0 %v8033
        %9486 = vmatpush1.bf16.msra.mxu0 %v8032
        %9487 = vmatprep.subr.bf16.mxu0 0
        %9488 = vmatpush2.bf16.msra.mxu0 0
        %9489 = vmatprep.subr.bf16.mxu0 0
        %9490 = vmatpush2.bf16.msra.mxu0 0
        %9491 = vmatprep.subr.bf16.mxu0 0
        %9492 = vmatpush2.bf16.msra.mxu0 0
        %9493 = vmatprep.subr.bf16.mxu0 0
        %9494 = vmatpush2.bf16.msra.mxu0 0
        %9495 = vmatprep.subr.bf16.mxu0 0
        %9496 = vmatpush2.bf16.msra.mxu0 0
        %9497 = vmatprep.subr.bf16.mxu0 0
        %9498 = vmatpush2.bf16.msra.mxu0 0
        %9499 = vmatprep.subr.bf16.mxu0 0
        %9500 = vmatpush2.bf16.msra.mxu0 0
        %9501 = vmatprep.subr.bf16.mxu0 0
        %9502 = vmatpush2.bf16.msra.mxu0 0
        %9503 = vmatprep.mubr.bf16.mxu0 0
        %9504 = vmatmul.mubr.bf16.gmra.mxu0 %v5423
        %v9505 = vpop.f32.mrf.mxu0
        %v9506 = vadd.f32 %v9455, %v9505
        %v9507 = vpop.f32.mrf.mxu0
        %v9508 = vadd.f32 %v9457, %v9507
        %v9509 = vpop.f32.mrf.mxu0
        %v9510 = vadd.f32 %v9459, %v9509
        %v9511 = vpop.f32.mrf.mxu0
        %v9512 = vadd.f32 %v9461, %v9511
        %9513 = vmatprep.mubr.bf16.mxu0 0
        %9514 = vmatmul.mubr.bf16.gmra.mxu0 %v5434
        %v9515 = vpop.f32.mrf.mxu0
        %v9516 = vadd.f32 %v9465, %v9515
        %v9517 = vpop.f32.mrf.mxu0
        %v9518 = vadd.f32 %v9467, %v9517
        %v9519 = vpop.f32.mrf.mxu0
        %v9520 = vpop.f32.mrf.mxu0
        %9521 = vdwg.mxu0
        %v9522 = vadd.f32 %v5395, %v8894
        %v9523 = vadd.f32 %v5396, %v8896
        %v9524 = vadd.f32 %v5397, %v9200
        %v9525 = vadd.f32 %v5398, %v9202
        %v9526 = vadd.f32 %v5399, %v9506
        %v9527 = vadd.f32 %v5400, %v9508
        %v9528 = vadd.f32 %v5401, %v8898
        %v9529 = vadd.f32 %v5402, %v8900
        %v9530 = vadd.f32 %v5403, %v9204
        %v9531 = vadd.f32 %v5404, %v9206
        %v9532 = vadd.f32 %v5405, %v9510
        %v9533 = vadd.f32 %v5406, %v9512
        %v9534 = vadd.f32 %v5407, %v8904
        %v9535 = vadd.f32 %v5408, %v8906
        %v9536 = vadd.f32 %v5409, %v9210
        %v9537 = vadd.f32 %v5410, %v9212
        %v9538 = vadd.f32 %v5411, %v9516
        %v9539 = vadd.f32 %v5412, %v9518
        %9540 = vst [vmem:[#allocation2] sm:$0xff] %v9522
        %9541 = vst [vmem:[#allocation2 + $0x8] sm:$0xff] %v9523
        %9542 = vst [vmem:[#allocation2 + $0x10] sm:$0xff] %v9524
        %9543 = vst [vmem:[#allocation2 + $0x18] sm:$0xff] %v9525
        %9544 = vst [vmem:[#allocation2 + $0x20] sm:$0xff] %v9526
        %9545 = vst.msk [vmem:[#allocation2 + $0x28] sm:$0xff] %vm5060, %v9527
        %9546 = vst [vmem:[#allocation2 + $0x30] sm:$0xff] %v9528
        %9547 = vst [vmem:[#allocation2 + $0x38] sm:$0xff] %v9529
        %9548 = vst [vmem:[#allocation2 + $0x40] sm:$0xff] %v9530
        %9549 = vst [vmem:[#allocation2 + $0x48] sm:$0xff] %v9531
        %9550 = vst [vmem:[#allocation2 + $0x50] sm:$0xff] %v9532
        %9551 = vst.msk [vmem:[#allocation2 + $0x58] sm:$0xff] %vm5060, %v9533
        %9552 = vst [vmem:[#allocation2 + $0x60] sm:$0xff] %v9534
        %9553 = vst [vmem:[#allocation2 + $0x68] sm:$0xff] %v9535
        %9554 = vst [vmem:[#allocation2 + $0x70] sm:$0xff] %v9536
        %9555 = vst [vmem:[#allocation2 + $0x78] sm:$0xff] %v9537
        %9556 = vst [vmem:[#allocation2 + $0x80] sm:$0xff] %v9538
        %9557 = vst.msk [vmem:[#allocation2 + $0x88] sm:$0xff] %vm5060, %v9539
        %p9558 = scmp.eq.s32.totalorder %s25, 1
        // Predicated region
        $region61: #{classifier_cnn_effnet_forward.3} parent=51 // pred_check
          %p9559 = pneg %p9558
        $region62: #{classifier_cnn_effnet_forward.3} parent=51 // pred_check_branch
          %9561 = sbr.rel (%p9559) target = $region64
        $region63: #{classifier_cnn_effnet_forward.3} parent=51 // pred_region
          %s9562 = sld [smem:[#allocation3 + %s24]]
          %v9563 = vld [vmem:[#allocation2] sm:$0xff]
          %v9564 = vld [vmem:[#allocation2 + $0x8] sm:$0xff]
          %v9565 = vld [vmem:[#allocation2 + $0x10] sm:$0xff]
          %v9566 = vld [vmem:[#allocation2 + $0x18] sm:$0xff]
          %v9567 = vld [vmem:[#allocation2 + $0x20] sm:$0xff]
          %v9568 = vld [vmem:[#allocation2 + $0x28] sm:$0xff]
          %v9569 = vld [vmem:[#allocation2 + $0x30] sm:$0xff]
          %v9570 = vld [vmem:[#allocation2 + $0x38] sm:$0xff]
          %v9571 = vld [vmem:[#allocation2 + $0x40] sm:$0xff]
          %v9572 = vld [vmem:[#allocation2 + $0x48] sm:$0xff]
          %v9573 = vld [vmem:[#allocation2 + $0x50] sm:$0xff]
          %v9574 = vld [vmem:[#allocation2 + $0x58] sm:$0xff]
          %v9575 = vld [vmem:[#allocation2 + $0x60] sm:$0xff]
          %v9576 = vld [vmem:[#allocation2 + $0x68] sm:$0xff]
          %v9577 = vld [vmem:[#allocation2 + $0x70] sm:$0xff]
          %v9578 = vld [vmem:[#allocation2 + $0x78] sm:$0xff]
          %v9579 = vld [vmem:[#allocation2 + $0x80] sm:$0xff]
          %v9580 = vld [vmem:[#allocation2 + $0x88] sm:$0xff]
          %v9581 = vld [vmem:[%s415] sm:$0x3f]
          %v9583 = vlaneseq
          %v9584 = vshrl.u32 %v9583, 7
          %v9585 = vsub.s32 0, %v9584
          %v9586 = vrot.slane %v9581, %v9585
          %v9587 = vlaneseq
          %v9588 = vshrl.u32 %v9587, 7
          %v9589 = vsub.s32 1, %v9588
          %v9590 = vrot.slane %v9581, %v9589
          %v9591 = vlaneseq
          %v9592 = vshrl.u32 %v9591, 7
          %v9593 = vsub.s32 2, %v9592
          %v9594 = vrot.slane %v9581, %v9593
          %v9595 = vlaneseq
          %v9596 = vshrl.u32 %v9595, 7
          %v9597 = vsub.s32 3, %v9596
          %v9598 = vrot.slane %v9581, %v9597
          %v9599 = vlaneseq
          %v9600 = vshrl.u32 %v9599, 7
          %v9601 = vsub.s32 4, %v9600
          %v9602 = vrot.slane %v9581, %v9601
          %v9603 = vlaneseq
          %v9604 = vshrl.u32 %v9603, 7
          %v9605 = vsub.s32 5, %v9604
          %v9606 = vrot.slane %v9581, %v9605
          %v9613 = vadd.f32 %v9563, %v9586
          %v9614 = vadd.f32 %v9564, %v9590
          %v9615 = vadd.f32 %v9565, %v9594
          %v9616 = vadd.f32 %v9566, %v9598
          %v9617 = vadd.f32 %v9567, %v9602
          %v9618 = vadd.f32 %v9568, %v9606
          %v9619 = vadd.f32 %v9569, %v9586
          %v9620 = vadd.f32 %v9570, %v9590
          %v9621 = vadd.f32 %v9571, %v9594
          %v9622 = vadd.f32 %v9572, %v9598
          %v9623 = vadd.f32 %v9573, %v9602
          %v9624 = vadd.f32 %v9574, %v9606
          %v9625 = vadd.f32 %v9575, %v9586
          %v9626 = vadd.f32 %v9576, %v9590
          %v9627 = vadd.f32 %v9577, %v9594
          %v9628 = vadd.f32 %v9578, %v9598
          %v9629 = vadd.f32 %v9579, %v9602
          %v9630 = vadd.f32 %v9580, %v9606
          %v9631 = vmax.f32 %v9613, 1e-06
          %v9632 = vmax.f32 %v9614, 1e-06
          %v9633 = vmax.f32 %v9615, 1e-06
          %v9634 = vmax.f32 %v9616, 1e-06
          %v9635 = vmax.f32 %v9617, 1e-06
          %v9636 = vmax.f32 %v9618, 1e-06
          %v9637 = vmax.f32 %v9619, 1e-06
          %v9638 = vmax.f32 %v9620, 1e-06
          %v9639 = vmax.f32 %v9621, 1e-06
          %v9640 = vmax.f32 %v9622, 1e-06
          %v9641 = vmax.f32 %v9623, 1e-06
          %v9642 = vmax.f32 %v9624, 1e-06
          %v9643 = vmax.f32 %v9625, 1e-06
          %v9644 = vmax.f32 %v9626, 1e-06
          %v9645 = vmax.f32 %v9627, 1e-06
          %v9646 = vmax.f32 %v9628, 1e-06
          %v9647 = vmax.f32 %v9629, 1e-06
          %v9648 = vmax.f32 %v9630, 1e-06
          %v9649 = vlog2.pop %v9631
          %v9650 = vmul.f32 %v9649, 0.6931472
          %v9651 = vlog2.pop %v9632
          %v9652 = vmul.f32 %v9651, 0.6931472
          %v9653 = vlog2.pop %v9633
          %v9654 = vmul.f32 %v9653, 0.6931472
          %v9655 = vlog2.pop %v9634
          %v9656 = vmul.f32 %v9655, 0.6931472
          %v9657 = vlog2.pop %v9635
          %v9658 = vmul.f32 %v9657, 0.6931472
          %v9659 = vlog2.pop %v9636
          %v9660 = vmul.f32 %v9659, 0.6931472
          %v9661 = vlog2.pop %v9637
          %v9662 = vmul.f32 %v9661, 0.6931472
          %v9663 = vlog2.pop %v9638
          %v9664 = vmul.f32 %v9663, 0.6931472
          %v9665 = vlog2.pop %v9639
          %v9666 = vmul.f32 %v9665, 0.6931472
          %v9667 = vlog2.pop %v9640
          %v9668 = vmul.f32 %v9667, 0.6931472
          %v9669 = vlog2.pop %v9641
          %v9670 = vmul.f32 %v9669, 0.6931472
          %v9671 = vlog2.pop %v9642
          %v9672 = vmul.f32 %v9671, 0.6931472
          %v9673 = vlog2.pop %v9643
          %v9674 = vmul.f32 %v9673, 0.6931472
          %v9675 = vlog2.pop %v9644
          %v9676 = vmul.f32 %v9675, 0.6931472
          %v9677 = vlog2.pop %v9645
          %v9678 = vmul.f32 %v9677, 0.6931472
          %v9679 = vlog2.pop %v9646
          %v9680 = vmul.f32 %v9679, 0.6931472
          %v9681 = vlog2.pop %v9647
          %v9682 = vmul.f32 %v9681, 0.6931472
          %v9683 = vlog2.pop %v9648
          %v9684 = vmul.f32 %v9683, 0.6931472
          %v9685 = vstv %s9562
          %v9686 = vmul.f32 %v9685, %v9650
          %v9687 = vmul.f32 %v9685, %v9652
          %v9688 = vmul.f32 %v9685, %v9654
          %v9689 = vmul.f32 %v9685, %v9656
          %v9690 = vmul.f32 %v9685, %v9658
          %v9691 = vmul.f32 %v9685, %v9660
          %v9692 = vmul.f32 %v9685, %v9662
          %v9693 = vmul.f32 %v9685, %v9664
          %v9694 = vmul.f32 %v9685, %v9666
          %v9695 = vmul.f32 %v9685, %v9668
          %v9696 = vmul.f32 %v9685, %v9670
          %v9697 = vmul.f32 %v9685, %v9672
          %v9698 = vmul.f32 %v9685, %v9674
          %v9699 = vmul.f32 %v9685, %v9676
          %v9700 = vmul.f32 %v9685, %v9678
          %v9701 = vmul.f32 %v9685, %v9680
          %v9702 = vmul.f32 %v9685, %v9682
          %v9703 = vmul.f32 %v9685, %v9684
          %v9704 = vmul.f32 %v9686, 1.442695
          %v9705 = vpow.pop %v9704
          %v9706 = vmul.f32 %v9687, 1.442695
          %v9707 = vpow.pop %v9706
          %v9708 = vmul.f32 %v9688, 1.442695
          %v9709 = vpow.pop %v9708
          %v9710 = vmul.f32 %v9689, 1.442695
          %v9711 = vpow.pop %v9710
          %v9712 = vmul.f32 %v9690, 1.442695
          %v9713 = vpow.pop %v9712
          %v9714 = vmul.f32 %v9691, 1.442695
          %v9715 = vpow.pop %v9714
          %v9716 = vmul.f32 %v9692, 1.442695
          %v9717 = vpow.pop %v9716
          %v9718 = vmul.f32 %v9693, 1.442695
          %v9719 = vpow.pop %v9718
          %v9720 = vmul.f32 %v9694, 1.442695
          %v9721 = vpow.pop %v9720
          %v9722 = vmul.f32 %v9695, 1.442695
          %v9723 = vpow.pop %v9722
          %v9724 = vmul.f32 %v9696, 1.442695
          %v9725 = vpow.pop %v9724
          %v9726 = vmul.f32 %v9697, 1.442695
          %v9727 = vpow.pop %v9726
          %v9728 = vmul.f32 %v9698, 1.442695
          %v9729 = vpow.pop %v9728
          %v9730 = vmul.f32 %v9699, 1.442695
          %v9731 = vpow.pop %v9730
          %v9732 = vmul.f32 %v9700, 1.442695
          %v9733 = vpow.pop %v9732
          %v9734 = vmul.f32 %v9701, 1.442695
          %v9735 = vpow.pop %v9734
          %v9736 = vmul.f32 %v9702, 1.442695
          %v9737 = vpow.pop %v9736
          %v9738 = vmul.f32 %v9703, 1.442695
          %v9739 = vpow.pop %v9738
          %v9740 = vld [vmem:[%s3] sm:$0x3]
          %vm9741 = vcmask 195584
          %v9743 = vsel %vm9741, %v9740, 0
          %9745 = vmatprep.subr.mxu0 0.0
          %9746 = vmatpush1.msra.mxu0 0.0
          %9747 = vmatprep.subr.mxu0 0.0
          %9748 = vmatpush1.msra.mxu0 0.0
          %9749 = vmatprep.subr.mxu0 0.0
          %9750 = vmatpush1.msra.mxu0 0.0
          %9751 = vmatprep.subr.mxu0 0.0
          %9752 = vmatpush1.msra.mxu0 0.0
          %9753 = vmatprep.subr.mxu0 0.0
          %9754 = vmatpush1.msra.mxu0 0.0
          %9755 = vmatprep.subr.mxu0 0.0
          %9756 = vmatpush1.msra.mxu0 0.0
          %9757 = vmatprep.subr.mxu0 0.0
          %9758 = vmatpush1.msra.mxu0 0.0
          %9759 = vmatprep.subr.mxu0 0.0
          %9760 = vmatpush1.msra.mxu0 0.0
          %9761 = vmatprep.subr.mxu0 0.0
          %9762 = vmatpush1.msra.mxu0 0.0
          %9763 = vmatprep.subr.mxu0 0.0
          %9764 = vmatpush1.msra.mxu0 0.0
          %9765 = vmatprep.subr.mxu0 0.0
          %9766 = vmatpush1.msra.mxu0 0.0
          %9767 = vmatprep.subr.mxu0 0.0
          %9768 = vmatpush1.msra.mxu0 0.0
          %9769 = vmatprep.subr.mxu0 0.0
          %9770 = vmatpush1.msra.mxu0 0.0
          %9771 = vmatprep.subr.mxu0 %v9731
          %9772 = vmatpush1.msra.mxu0 %v9729
          %9773 = vmatprep.subr.mxu0 %v9719
          %9774 = vmatpush1.msra.mxu0 %v9717
          %9775 = vmatprep.subr.mxu0 %v9707
          %9776 = vmatpush1.msra.mxu0 %v9705
          %9777 = vmatprep.subr.mxu0 0.0
          %9778 = vmatpush2.msra.mxu0 0.0
          %9779 = vmatprep.subr.mxu0 0.0
          %9780 = vmatpush2.msra.mxu0 0.0
          %9781 = vmatprep.subr.mxu0 0.0
          %9782 = vmatpush2.msra.mxu0 0.0
          %9783 = vmatprep.subr.mxu0 0.0
          %9784 = vmatpush2.msra.mxu0 0.0
          %9785 = vmatprep.subr.mxu0 0.0
          %9786 = vmatpush2.msra.mxu0 0.0
          %9787 = vmatprep.subr.mxu0 0.0
          %9788 = vmatpush2.msra.mxu0 0.0
          %9789 = vmatprep.subr.mxu0 0.0
          %9790 = vmatpush2.msra.mxu0 0.0
          %9791 = vmatprep.subr.mxu0 0.0
          %9792 = vmatpush2.msra.mxu0 0.0
          %9793 = vmatprep.subr.mxu0 0.0
          %9794 = vmatpush2.msra.mxu0 0.0
          %9795 = vmatprep.subr.mxu0 0.0
          %9796 = vmatpush2.msra.mxu0 0.0
          %9797 = vmatprep.subr.mxu0 0.0
          %9798 = vmatpush2.msra.mxu0 0.0
          %9799 = vmatprep.subr.mxu0 0.0
          %9800 = vmatpush2.msra.mxu0 0.0
          %9801 = vmatprep.subr.mxu0 0.0
          %9802 = vmatpush2.msra.mxu0 0.0
          %9803 = vmatprep.subr.mxu0 0.0
          %9804 = vmatpush2.msra.mxu0 0.0
          %9805 = vmatprep.subr.mxu0 0.0
          %9806 = vmatpush2.msra.mxu0 0.0
          %9807 = vmatprep.subr.mxu0 0.0
          %9808 = vmatpush2.msra.mxu0 0.0
          %9809 = vmatprep.mubr.f32.mxu0 0.0
          %9810 = vmatmul.mubr.f32.gmra.mxu0 %v9743
          %v9811 = vpop.f32.mrf.mxu0
          %v9812 = vadd.f32 0.0, %v9811
          %v9813 = vpop.f32.mrf.mxu0
          %v9814 = vadd.f32 0.0, %v9813
          %9815 = vdwg.mxu0
          %9816 = vmatprep.subr.mxu0 0.0
          %9817 = vmatpush1.msra.mxu0 0.0
          %9818 = vmatprep.subr.mxu0 0.0
          %9819 = vmatpush1.msra.mxu0 0.0
          %9820 = vmatprep.subr.mxu0 0.0
          %9821 = vmatpush1.msra.mxu0 0.0
          %9822 = vmatprep.subr.mxu0 0.0
          %9823 = vmatpush1.msra.mxu0 0.0
          %9824 = vmatprep.subr.mxu0 0.0
          %9825 = vmatpush1.msra.mxu0 0.0
          %9826 = vmatprep.subr.mxu0 0.0
          %9827 = vmatpush1.msra.mxu0 0.0
          %9828 = vmatprep.subr.mxu0 0.0
          %9829 = vmatpush1.msra.mxu0 0.0
          %9830 = vmatprep.subr.mxu0 0.0
          %9831 = vmatpush1.msra.mxu0 0.0
          %9832 = vmatprep.subr.mxu0 0.0
          %9833 = vmatpush1.msra.mxu0 0.0
          %9834 = vmatprep.subr.mxu0 0.0
          %9835 = vmatpush1.msra.mxu0 0.0
          %9836 = vmatprep.subr.mxu0 0.0
          %9837 = vmatpush1.msra.mxu0 0.0
          %9838 = vmatprep.subr.mxu0 0.0
          %9839 = vmatpush1.msra.mxu0 0.0
          %9840 = vmatprep.subr.mxu0 0.0
          %9841 = vmatpush1.msra.mxu0 0.0
          %9842 = vmatprep.subr.mxu0 %v9735
          %9843 = vmatpush1.msra.mxu0 %v9733
          %9844 = vmatprep.subr.mxu0 %v9723
          %9845 = vmatpush1.msra.mxu0 %v9721
          %9846 = vmatprep.subr.mxu0 %v9711
          %9847 = vmatpush1.msra.mxu0 %v9709
          %9848 = vmatprep.subr.mxu0 0.0
          %9849 = vmatpush2.msra.mxu0 0.0
          %9850 = vmatprep.subr.mxu0 0.0
          %9851 = vmatpush2.msra.mxu0 0.0
          %9852 = vmatprep.subr.mxu0 0.0
          %9853 = vmatpush2.msra.mxu0 0.0
          %9854 = vmatprep.subr.mxu0 0.0
          %9855 = vmatpush2.msra.mxu0 0.0
          %9856 = vmatprep.subr.mxu0 0.0
          %9857 = vmatpush2.msra.mxu0 0.0
          %9858 = vmatprep.subr.mxu0 0.0
          %9859 = vmatpush2.msra.mxu0 0.0
          %9860 = vmatprep.subr.mxu0 0.0
          %9861 = vmatpush2.msra.mxu0 0.0
          %9862 = vmatprep.subr.mxu0 0.0
          %9863 = vmatpush2.msra.mxu0 0.0
          %9864 = vmatprep.subr.mxu0 0.0
          %9865 = vmatpush2.msra.mxu0 0.0
          %9866 = vmatprep.subr.mxu0 0.0
          %9867 = vmatpush2.msra.mxu0 0.0
          %9868 = vmatprep.subr.mxu0 0.0
          %9869 = vmatpush2.msra.mxu0 0.0
          %9870 = vmatprep.subr.mxu0 0.0
          %9871 = vmatpush2.msra.mxu0 0.0
          %9872 = vmatprep.subr.mxu0 0.0
          %9873 = vmatpush2.msra.mxu0 0.0
          %9874 = vmatprep.subr.mxu0 0.0
          %9875 = vmatpush2.msra.mxu0 0.0
          %9876 = vmatprep.subr.mxu0 0.0
          %9877 = vmatpush2.msra.mxu0 0.0
          %9878 = vmatprep.subr.mxu0 0.0
          %9879 = vmatpush2.msra.mxu0 0.0
          %9880 = vmatprep.mubr.f32.mxu0 0.0
          %9881 = vmatmul.mubr.f32.gmra.mxu0 %v9743
          %v9882 = vpop.f32.mrf.mxu0
          %v9883 = vadd.f32 0.0, %v9882
          %v9884 = vpop.f32.mrf.mxu0
          %v9885 = vadd.f32 0.0, %v9884
          %9886 = vdwg.mxu0
          %9887 = vmatprep.subr.mxu0 0.0
          %9888 = vmatpush1.msra.mxu0 0.0
          %9889 = vmatprep.subr.mxu0 0.0
          %9890 = vmatpush1.msra.mxu0 0.0
          %9891 = vmatprep.subr.mxu0 0.0
          %9892 = vmatpush1.msra.mxu0 0.0
          %9893 = vmatprep.subr.mxu0 0.0
          %9894 = vmatpush1.msra.mxu0 0.0
          %9895 = vmatprep.subr.mxu0 0.0
          %9896 = vmatpush1.msra.mxu0 0.0
          %9897 = vmatprep.subr.mxu0 0.0
          %9898 = vmatpush1.msra.mxu0 0.0
          %9899 = vmatprep.subr.mxu0 0.0
          %9900 = vmatpush1.msra.mxu0 0.0
          %9901 = vmatprep.subr.mxu0 0.0
          %9902 = vmatpush1.msra.mxu0 0.0
          %9903 = vmatprep.subr.mxu0 0.0
          %9904 = vmatpush1.msra.mxu0 0.0
          %9905 = vmatprep.subr.mxu0 0.0
          %9906 = vmatpush1.msra.mxu0 0.0
          %9907 = vmatprep.subr.mxu0 0.0
          %9908 = vmatpush1.msra.mxu0 0.0
          %9909 = vmatprep.subr.mxu0 0.0
          %9910 = vmatpush1.msra.mxu0 0.0
          %9911 = vmatprep.subr.mxu0 0.0
          %9912 = vmatpush1.msra.mxu0 0.0
          %9913 = vmatprep.subr.mxu0 %v9739
          %9914 = vmatpush1.msra.mxu0 %v9737
          %9915 = vmatprep.subr.mxu0 %v9727
          %9916 = vmatpush1.msra.mxu0 %v9725
          %9917 = vmatprep.subr.mxu0 %v9715
          %9918 = vmatpush1.msra.mxu0 %v9713
          %9919 = vmatprep.subr.mxu0 0.0
          %9920 = vmatpush2.msra.mxu0 0.0
          %9921 = vmatprep.subr.mxu0 0.0
          %9922 = vmatpush2.msra.mxu0 0.0
          %9923 = vmatprep.subr.mxu0 0.0
          %9924 = vmatpush2.msra.mxu0 0.0
          %9925 = vmatprep.subr.mxu0 0.0
          %9926 = vmatpush2.msra.mxu0 0.0
          %9927 = vmatprep.subr.mxu0 0.0
          %9928 = vmatpush2.msra.mxu0 0.0
          %9929 = vmatprep.subr.mxu0 0.0
          %9930 = vmatpush2.msra.mxu0 0.0
          %9931 = vmatprep.subr.mxu0 0.0
          %9932 = vmatpush2.msra.mxu0 0.0
          %9933 = vmatprep.subr.mxu0 0.0
          %9934 = vmatpush2.msra.mxu0 0.0
          %9935 = vmatprep.subr.mxu0 0.0
          %9936 = vmatpush2.msra.mxu0 0.0
          %9937 = vmatprep.subr.mxu0 0.0
          %9938 = vmatpush2.msra.mxu0 0.0
          %9939 = vmatprep.subr.mxu0 0.0
          %9940 = vmatpush2.msra.mxu0 0.0
          %9941 = vmatprep.subr.mxu0 0.0
          %9942 = vmatpush2.msra.mxu0 0.0
          %9943 = vmatprep.subr.mxu0 0.0
          %9944 = vmatpush2.msra.mxu0 0.0
          %9945 = vmatprep.subr.mxu0 0.0
          %9946 = vmatpush2.msra.mxu0 0.0
          %9947 = vmatprep.subr.mxu0 0.0
          %9948 = vmatpush2.msra.mxu0 0.0
          %9949 = vmatprep.subr.mxu0 0.0
          %9950 = vmatpush2.msra.mxu0 0.0
          %9951 = vmatprep.mubr.f32.mxu0 0.0
          %9952 = vmatmul.mubr.f32.gmra.mxu0 %v9743
          %v9953 = vpop.f32.mrf.mxu0
          %v9954 = vadd.f32 0.0, %v9953
          %v9955 = vpop.f32.mrf.mxu0
          %v9956 = vadd.f32 0.0, %v9955
          %9957 = vdwg.mxu0
          %v9958 = vmax.f32 %v9812, 1e-30
          %v9959 = vmax.f32 %v9814, 1e-30
          %v9960 = vmax.f32 %v9883, 1e-30
          %v9961 = vmax.f32 %v9885, 1e-30
          %v9962 = vmax.f32 %v9954, 1e-30
          %v9963 = vmax.f32 %v9956, 1e-30
          %v9964 = vlog2.pop %v9958
          %v9965 = vmul.f32 %v9964, 0.6931472
          %v9966 = vlog2.pop %v9959
          %v9967 = vmul.f32 %v9966, 0.6931472
          %v9968 = vlog2.pop %v9960
          %v9969 = vmul.f32 %v9968, 0.6931472
          %v9970 = vlog2.pop %v9961
          %v9971 = vmul.f32 %v9970, 0.6931472
          %v9972 = vlog2.pop %v9962
          %v9973 = vmul.f32 %v9972, 0.6931472
          %v9974 = vlog2.pop %v9963
          %v9975 = vmul.f32 %v9974, 0.6931472
          %v9976 = vrcp.pop %v9685
          %v9977 = vmul.f32 %v9965, %v9976
          %v9978 = vmul.f32 %v9967, %v9976
          %v9979 = vmul.f32 %v9969, %v9976
          %v9980 = vmul.f32 %v9971, %v9976
          %v9981 = vmul.f32 %v9973, %v9976
          %v9982 = vmul.f32 %v9975, %v9976
          %v9983 = vmul.f32 %v9977, 1.442695
          %v9984 = vpow.pop %v9983
          %v9985 = vmul.f32 %v9978, 1.442695
          %v9986 = vpow.pop %v9985
          %v9987 = vmul.f32 %v9979, 1.442695
          %v9988 = vpow.pop %v9987
          %v9989 = vmul.f32 %v9980, 1.442695
          %v9990 = vpow.pop %v9989
          %v9991 = vmul.f32 %v9981, 1.442695
          %v9992 = vpow.pop %v9991
          %v9993 = vmul.f32 %v9982, 1.442695
          %v9994 = vpow.pop %v9993
          %v9995 = vmax.f32 %v9984, 0.0
          %v9996 = vmax.f32 %v9986, 0.0
          %v9997 = vmax.f32 %v9988, 0.0
          %v9998 = vmax.f32 %v9990, 0.0
          %v9999 = vmax.f32 %v9992, 0.0
          %v10000 = vmax.f32 %v9994, 0.0
          %v10001 = vld [vmem:[%s420] sm:$0xff]
          %v10002 = vld [vmem:[%s420 + $0x8] sm:$0xff]
          %v10003 = vld [vmem:[%s420 + $0x10] sm:$0xff]
          %v10004 = vld [vmem:[%s420 + $0x18] sm:$0xff]
          %v10005 = vld [vmem:[%s420 + $0x20] sm:$0xff]
          %v10006 = vld [vmem:[%s420 + $0x28] sm:$0xff]
          %v10007 = vld [vmem:[%s420 + $0x30] sm:$0xff]
          %v10008 = vld [vmem:[%s420 + $0x38] sm:$0xff]
          %v10009 = vld [vmem:[%s420 + $0x40] sm:$0xff]
          %v10010 = vld [vmem:[%s420 + $0x48] sm:$0xff]
          %v10011 = vld [vmem:[%s420 + $0x50] sm:$0xff]
          %v10012 = vld [vmem:[%s420 + $0x58] sm:$0xff]
          %v10013 = vld [vmem:[%s420 + $0x60] sm:$0xff]
          %v10014 = vld [vmem:[%s420 + $0x68] sm:$0xff]
          %v10015 = vld [vmem:[%s420 + $0x70] sm:$0xff]
          %v10016 = vld [vmem:[%s420 + $0x78] sm:$0xff]
          %v10017 = vld [vmem:[%s420 + $0x80] sm:$0xff]
          %v10018 = vld [vmem:[%s420 + $0x88] sm:$0xff]
          %v10019 = vld [vmem:[%s420 + $0x90] sm:$0xff]
          %v10020 = vld [vmem:[%s420 + $0x98] sm:$0xff]
          %v10021 = vld [vmem:[%s420 + $0xa0] sm:$0xff]
          %v10022 = vld [vmem:[%s420 + $0xa8] sm:$0xff]
          %v10023 = vld [vmem:[%s420 + $0xb0] sm:$0xff]
          %v10024 = vld [vmem:[%s420 + $0xb8] sm:$0xff]
          %v10025 = vld [vmem:[%s420 + $0xc0] sm:$0xff]
          %v10026 = vld [vmem:[%s420 + $0xc8] sm:$0xff]
          %v10027 = vld [vmem:[%s420 + $0xd0] sm:$0xff]
          %v10028 = vld [vmem:[%s420 + $0xd8] sm:$0xff]
          %v10029 = vld [vmem:[%s420 + $0xe0] sm:$0xff]
          %v10030 = vld [vmem:[%s420 + $0xe8] sm:$0xff]
          %v10031 = vld [vmem:[%s420 + $0xf0] sm:$0xff]
          %v10032 = vld [vmem:[%s420 + $0xf8] sm:$0xff]
          %v10033 = vld [vmem:[%s420 + $0x100] sm:$0xff]
          %v10034 = vld [vmem:[%s420 + $0x108] sm:$0xff]
          %v10035 = vld [vmem:[%s420 + $0x110] sm:$0xff]
          %v10036 = vld [vmem:[%s420 + $0x118] sm:$0xff]
          %v10037 = vld [vmem:[%s420 + $0x120] sm:$0xff]
          %v10038 = vld [vmem:[%s420 + $0x128] sm:$0xff]
          %v10039 = vld [vmem:[%s420 + $0x130] sm:$0xff]
          %v10040 = vld [vmem:[%s420 + $0x138] sm:$0xff]
          %v10041 = vld [vmem:[%s420 + $0x140] sm:$0xff]
          %v10042 = vld [vmem:[%s420 + $0x148] sm:$0xff]
          %v10043 = vld [vmem:[%s420 + $0x150] sm:$0xff]
          %v10044 = vld [vmem:[%s420 + $0x158] sm:$0xff]
          %v10045 = vld [vmem:[%s420 + $0x160] sm:$0xff]
          %v10046 = vld [vmem:[%s420 + $0x168] sm:$0xff]
          %v10047 = vld [vmem:[%s420 + $0x170] sm:$0xff]
          %v10048 = vld [vmem:[%s420 + $0x178] sm:$0xff]
          %v10049 = vld [vmem:[%s420 + $0x180] sm:$0xff]
          %v10050 = vld [vmem:[%s420 + $0x188] sm:$0xff]
          %v10051 = vld [vmem:[%s420 + $0x190] sm:$0xff]
          %v10052 = vld [vmem:[%s420 + $0x198] sm:$0xff]
          %v10053 = vld [vmem:[%s420 + $0x1a0] sm:$0xff]
          %v10054 = vld [vmem:[%s420 + $0x1a8] sm:$0xff]
          %v10055 = vld [vmem:[%s420 + $0x1b0] sm:$0xff]
          %v10056 = vld [vmem:[%s420 + $0x1b8] sm:$0xff]
          %v10057 = vld [vmem:[%s420 + $0x1c0] sm:$0xff]
          %v10058 = vld [vmem:[%s420 + $0x1c8] sm:$0xff]
          %v10059 = vld [vmem:[%s420 + $0x1d0] sm:$0xff]
          %v10060 = vld [vmem:[%s420 + $0x1d8] sm:$0xff]
          %v10061 = vld [vmem:[%s420 + $0x1e0] sm:$0xff]
          %v10062 = vld [vmem:[%s420 + $0x1e8] sm:$0xff]
          %v10063 = vld [vmem:[%s420 + $0x1f0] sm:$0xff]
          %v10064 = vld [vmem:[%s420 + $0x1f8] sm:$0xff]
          %v10065 = vld [vmem:[%s420 + $0x200] sm:$0xff]
          %v10066 = vld [vmem:[%s420 + $0x208] sm:$0xff]
          %v10067 = vld [vmem:[%s420 + $0x210] sm:$0xff]
          %v10068 = vld [vmem:[%s420 + $0x218] sm:$0xff]
          %v10069 = vld [vmem:[%s420 + $0x220] sm:$0xff]
          %v10070 = vld [vmem:[%s420 + $0x228] sm:$0xff]
          %v10071 = vld [vmem:[%s420 + $0x230] sm:$0xff]
          %v10072 = vld [vmem:[%s420 + $0x238] sm:$0xff]
          %v10073 = vld [vmem:[%s420 + $0x240] sm:$0xff]
          %v10074 = vld [vmem:[%s420 + $0x248] sm:$0xff]
          %v10075 = vld [vmem:[%s420 + $0x250] sm:$0xff]
          %v10076 = vld [vmem:[%s420 + $0x258] sm:$0xff]
          %v10077 = vld [vmem:[%s420 + $0x260] sm:$0xff]
          %v10078 = vld [vmem:[%s420 + $0x268] sm:$0xff]
          %v10079 = vld [vmem:[%s420 + $0x270] sm:$0xff]
          %v10080 = vld [vmem:[%s420 + $0x278] sm:$0xff]
          %v10081 = vld [vmem:[%s420 + $0x280] sm:$0xff]
          %v10082 = vld [vmem:[%s420 + $0x288] sm:$0xff]
          %v10083 = vld [vmem:[%s420 + $0x290] sm:$0xff]
          %v10084 = vld [vmem:[%s420 + $0x298] sm:$0xff]
          %v10085 = vld [vmem:[%s420 + $0x2a0] sm:$0xff]
          %v10086 = vld [vmem:[%s420 + $0x2a8] sm:$0xff]
          %v10087 = vld [vmem:[%s420 + $0x2b0] sm:$0xff]
          %v10088 = vld [vmem:[%s420 + $0x2b8] sm:$0xff]
          %v10089 = vunpack.c.l.bf16 %v10001
          %v10090 = vunpack.c.h.bf16 %v10001
          %v10091 = vunpack.c.l.bf16 %v10002
          %v10092 = vunpack.c.h.bf16 %v10002
          %v10093 = vunpack.c.l.bf16 %v10003
          %v10094 = vunpack.c.h.bf16 %v10003
          %v10095 = vunpack.c.l.bf16 %v10004
          %v10096 = vunpack.c.h.bf16 %v10004
          %v10097 = vunpack.c.l.bf16 %v10005
          %v10098 = vunpack.c.h.bf16 %v10005
          %v10099 = vunpack.c.l.bf16 %v10006
          %v10100 = vunpack.c.h.bf16 %v10006
          %v10101 = vunpack.c.l.bf16 %v10007
          %v10102 = vunpack.c.h.bf16 %v10007
          %v10103 = vunpack.c.l.bf16 %v10008
          %v10104 = vunpack.c.h.bf16 %v10008
          %v10105 = vunpack.c.l.bf16 %v10009
          %v10106 = vunpack.c.h.bf16 %v10009
          %v10107 = vunpack.c.l.bf16 %v10010
          %v10108 = vunpack.c.h.bf16 %v10010
          %v10109 = vunpack.c.l.bf16 %v10011
          %v10110 = vunpack.c.h.bf16 %v10011
          %v10111 = vunpack.c.l.bf16 %v10012
          %v10112 = vunpack.c.h.bf16 %v10012
          %v10113 = vunpack.c.l.bf16 %v10013
          %v10114 = vunpack.c.h.bf16 %v10013
          %v10115 = vunpack.c.l.bf16 %v10014
          %v10116 = vunpack.c.h.bf16 %v10014
          %v10117 = vunpack.c.l.bf16 %v10015
          %v10118 = vunpack.c.h.bf16 %v10015
          %v10119 = vunpack.c.l.bf16 %v10016
          %v10120 = vunpack.c.h.bf16 %v10016
          %v10121 = vunpack.c.l.bf16 %v10017
          %v10122 = vunpack.c.h.bf16 %v10017
          %v10123 = vunpack.c.l.bf16 %v10018
          %v10124 = vunpack.c.h.bf16 %v10018
          %v10125 = vunpack.c.l.bf16 %v10019
          %v10126 = vunpack.c.h.bf16 %v10019
          %v10127 = vunpack.c.l.bf16 %v10020
          %v10128 = vunpack.c.h.bf16 %v10020
          %v10129 = vunpack.c.l.bf16 %v10021
          %v10130 = vunpack.c.h.bf16 %v10021
          %v10131 = vunpack.c.l.bf16 %v10022
          %v10132 = vunpack.c.h.bf16 %v10022
          %v10133 = vunpack.c.l.bf16 %v10023
          %v10134 = vunpack.c.h.bf16 %v10023
          %v10135 = vunpack.c.l.bf16 %v10024
          %v10136 = vunpack.c.h.bf16 %v10024
          %v10137 = vunpack.c.l.bf16 %v10025
          %v10138 = vunpack.c.h.bf16 %v10025
          %v10139 = vunpack.c.l.bf16 %v10026
          %v10140 = vunpack.c.h.bf16 %v10026
          %v10141 = vunpack.c.l.bf16 %v10027
          %v10142 = vunpack.c.h.bf16 %v10027
          %v10143 = vunpack.c.l.bf16 %v10028
          %v10144 = vunpack.c.h.bf16 %v10028
          %v10145 = vunpack.c.l.bf16 %v10029
          %v10146 = vunpack.c.h.bf16 %v10029
          %v10147 = vunpack.c.l.bf16 %v10030
          %v10148 = vunpack.c.h.bf16 %v10030
          %v10149 = vunpack.c.l.bf16 %v10031
          %v10150 = vunpack.c.h.bf16 %v10031
          %v10151 = vunpack.c.l.bf16 %v10032
          %v10152 = vunpack.c.h.bf16 %v10032
          %v10153 = vunpack.c.l.bf16 %v10033
          %v10154 = vunpack.c.h.bf16 %v10033
          %v10155 = vunpack.c.l.bf16 %v10034
          %v10156 = vunpack.c.h.bf16 %v10034
          %v10157 = vunpack.c.l.bf16 %v10035
          %v10158 = vunpack.c.h.bf16 %v10035
          %v10159 = vunpack.c.l.bf16 %v10036
          %v10160 = vunpack.c.h.bf16 %v10036
          %v10161 = vunpack.c.l.bf16 %v10037
          %v10162 = vunpack.c.h.bf16 %v10037
          %v10163 = vunpack.c.l.bf16 %v10038
          %v10164 = vunpack.c.h.bf16 %v10038
          %v10165 = vunpack.c.l.bf16 %v10039
          %v10166 = vunpack.c.h.bf16 %v10039
          %v10167 = vunpack.c.l.bf16 %v10040
          %v10168 = vunpack.c.h.bf16 %v10040
          %v10169 = vunpack.c.l.bf16 %v10041
          %v10170 = vunpack.c.h.bf16 %v10041
          %v10171 = vunpack.c.l.bf16 %v10042
          %v10172 = vunpack.c.h.bf16 %v10042
          %v10173 = vunpack.c.l.bf16 %v10043
          %v10174 = vunpack.c.h.bf16 %v10043
          %v10175 = vunpack.c.l.bf16 %v10044
          %v10176 = vunpack.c.h.bf16 %v10044
          %v10177 = vunpack.c.l.bf16 %v10045
          %v10178 = vunpack.c.h.bf16 %v10045
          %v10179 = vunpack.c.l.bf16 %v10046
          %v10180 = vunpack.c.h.bf16 %v10046
          %v10181 = vunpack.c.l.bf16 %v10047
          %v10182 = vunpack.c.h.bf16 %v10047
          %v10183 = vunpack.c.l.bf16 %v10048
          %v10184 = vunpack.c.h.bf16 %v10048
          %v10185 = vunpack.c.l.bf16 %v10049
          %v10186 = vunpack.c.h.bf16 %v10049
          %v10187 = vunpack.c.l.bf16 %v10050
          %v10188 = vunpack.c.h.bf16 %v10050
          %v10189 = vunpack.c.l.bf16 %v10051
          %v10190 = vunpack.c.h.bf16 %v10051
          %v10191 = vunpack.c.l.bf16 %v10052
          %v10192 = vunpack.c.h.bf16 %v10052
          %v10193 = vunpack.c.l.bf16 %v10053
          %v10194 = vunpack.c.h.bf16 %v10053
          %v10195 = vunpack.c.l.bf16 %v10054
          %v10196 = vunpack.c.h.bf16 %v10054
          %v10197 = vunpack.c.l.bf16 %v10055
          %v10198 = vunpack.c.h.bf16 %v10055
          %v10199 = vunpack.c.l.bf16 %v10056
          %v10200 = vunpack.c.h.bf16 %v10056
          %v10201 = vunpack.c.l.bf16 %v10057
          %v10202 = vunpack.c.h.bf16 %v10057
          %v10203 = vunpack.c.l.bf16 %v10058
          %v10204 = vunpack.c.h.bf16 %v10058
          %v10205 = vunpack.c.l.bf16 %v10059
          %v10206 = vunpack.c.h.bf16 %v10059
          %v10207 = vunpack.c.l.bf16 %v10060
          %v10208 = vunpack.c.h.bf16 %v10060
          %v10209 = vunpack.c.l.bf16 %v10061
          %v10210 = vunpack.c.h.bf16 %v10061
          %v10211 = vunpack.c.l.bf16 %v10062
          %v10212 = vunpack.c.h.bf16 %v10062
          %v10213 = vunpack.c.l.bf16 %v10063
          %v10214 = vunpack.c.h.bf16 %v10063
          %v10215 = vunpack.c.l.bf16 %v10064
          %v10216 = vunpack.c.h.bf16 %v10064
          %v10217 = vunpack.c.l.bf16 %v10065
          %v10218 = vunpack.c.h.bf16 %v10065
          %v10219 = vunpack.c.l.bf16 %v10066
          %v10220 = vunpack.c.h.bf16 %v10066
          %v10221 = vunpack.c.l.bf16 %v10067
          %v10222 = vunpack.c.h.bf16 %v10067
          %v10223 = vunpack.c.l.bf16 %v10068
          %v10224 = vunpack.c.h.bf16 %v10068
          %v10225 = vunpack.c.l.bf16 %v10069
          %v10226 = vunpack.c.h.bf16 %v10069
          %v10227 = vunpack.c.l.bf16 %v10070
          %v10228 = vunpack.c.h.bf16 %v10070
          %v10229 = vunpack.c.l.bf16 %v10071
          %v10230 = vunpack.c.h.bf16 %v10071
          %v10231 = vunpack.c.l.bf16 %v10072
          %v10232 = vunpack.c.h.bf16 %v10072
          %v10233 = vunpack.c.l.bf16 %v10073
          %v10234 = vunpack.c.h.bf16 %v10073
          %v10235 = vunpack.c.l.bf16 %v10074
          %v10236 = vunpack.c.h.bf16 %v10074
          %v10237 = vunpack.c.l.bf16 %v10075
          %v10238 = vunpack.c.h.bf16 %v10075
          %v10239 = vunpack.c.l.bf16 %v10076
          %v10240 = vunpack.c.h.bf16 %v10076
          %v10241 = vunpack.c.l.bf16 %v10077
          %v10242 = vunpack.c.h.bf16 %v10077
          %v10243 = vunpack.c.l.bf16 %v10078
          %v10244 = vunpack.c.h.bf16 %v10078
          %v10245 = vunpack.c.l.bf16 %v10079
          %v10246 = vunpack.c.h.bf16 %v10079
          %v10247 = vunpack.c.l.bf16 %v10080
          %v10248 = vunpack.c.h.bf16 %v10080
          %v10249 = vunpack.c.l.bf16 %v10081
          %v10250 = vunpack.c.h.bf16 %v10081
          %v10251 = vunpack.c.l.bf16 %v10082
          %v10252 = vunpack.c.h.bf16 %v10082
          %v10253 = vunpack.c.l.bf16 %v10083
          %v10254 = vunpack.c.h.bf16 %v10083
          %v10255 = vunpack.c.l.bf16 %v10084
          %v10256 = vunpack.c.h.bf16 %v10084
          %v10257 = vunpack.c.l.bf16 %v10085
          %v10258 = vunpack.c.h.bf16 %v10085
          %v10259 = vunpack.c.l.bf16 %v10086
          %v10260 = vunpack.c.h.bf16 %v10086
          %v10261 = vunpack.c.l.bf16 %v10087
          %v10262 = vunpack.c.h.bf16 %v10087
          %v10263 = vunpack.c.l.bf16 %v10088
          %v10264 = vunpack.c.h.bf16 %v10088
          %v10265 = vld [vmem:[%s424] sm:$0x3]
          %v10267 = vlaneseq
          %v10268 = vshrl.u32 %v10267, 7
          %v10269 = vsub.s32 0, %v10268
          %v10270 = vrot.slane %v10265, %v10269
          %v10271 = vlaneseq
          %v10272 = vshrl.u32 %v10271, 7
          %v10273 = vsub.s32 1, %v10272
          %v10274 = vrot.slane %v10265, %v10273
          %v10278 = vsel %vm5060, %v10000, 0
          %10280 = vmatprep.subr.mxu0 %v10120
          %10281 = vmatpush1.msra.mxu0 %v10119
          %10282 = vmatprep.subr.mxu0 %v10118
          %10283 = vmatpush1.msra.mxu0 %v10117
          %10284 = vmatprep.subr.mxu0 %v10116
          %10285 = vmatpush1.msra.mxu0 %v10115
          %10286 = vmatprep.subr.mxu0 %v10114
          %10287 = vmatpush1.msra.mxu0 %v10113
          %10288 = vmatprep.subr.mxu0 %v10112
          %10289 = vmatpush1.msra.mxu0 %v10111
          %10290 = vmatprep.subr.mxu0 %v10110
          %10291 = vmatpush1.msra.mxu0 %v10109
          %10292 = vmatprep.subr.mxu0 %v10108
          %10293 = vmatpush1.msra.mxu0 %v10107
          %10294 = vmatprep.subr.mxu0 %v10106
          %10295 = vmatpush1.msra.mxu0 %v10105
          %10296 = vmatprep.subr.mxu0 %v10104
          %10297 = vmatpush1.msra.mxu0 %v10103
          %10298 = vmatprep.subr.mxu0 %v10102
          %10299 = vmatpush1.msra.mxu0 %v10101
          %10300 = vmatprep.subr.mxu0 %v10100
          %10301 = vmatpush1.msra.mxu0 %v10099
          %10302 = vmatprep.subr.mxu0 %v10098
          %10303 = vmatpush1.msra.mxu0 %v10097
          %10304 = vmatprep.subr.mxu0 %v10096
          %10305 = vmatpush1.msra.mxu0 %v10095
          %10306 = vmatprep.subr.mxu0 %v10094
          %10307 = vmatpush1.msra.mxu0 %v10093
          %10308 = vmatprep.subr.mxu0 %v10092
          %10309 = vmatpush1.msra.mxu0 %v10091
          %10310 = vmatprep.subr.mxu0 %v10090
          %10311 = vmatpush1.msra.mxu0 %v10089
          %10312 = vmatprep.subr.mxu0 %v10152
          %10313 = vmatpush2.msra.mxu0 %v10151
          %10314 = vmatprep.subr.mxu0 %v10150
          %10315 = vmatpush2.msra.mxu0 %v10149
          %10316 = vmatprep.subr.mxu0 %v10148
          %10317 = vmatpush2.msra.mxu0 %v10147
          %10318 = vmatprep.subr.mxu0 %v10146
          %10319 = vmatpush2.msra.mxu0 %v10145
          %10320 = vmatprep.subr.mxu0 %v10144
          %10321 = vmatpush2.msra.mxu0 %v10143
          %10322 = vmatprep.subr.mxu0 %v10142
          %10323 = vmatpush2.msra.mxu0 %v10141
          %10324 = vmatprep.subr.mxu0 %v10140
          %10325 = vmatpush2.msra.mxu0 %v10139
          %10326 = vmatprep.subr.mxu0 %v10138
          %10327 = vmatpush2.msra.mxu0 %v10137
          %10328 = vmatprep.subr.mxu0 %v10136
          %10329 = vmatpush2.msra.mxu0 %v10135
          %10330 = vmatprep.subr.mxu0 %v10134
          %10331 = vmatpush2.msra.mxu0 %v10133
          %10332 = vmatprep.subr.mxu0 %v10132
          %10333 = vmatpush2.msra.mxu0 %v10131
          %10334 = vmatprep.subr.mxu0 %v10130
          %10335 = vmatpush2.msra.mxu0 %v10129
          %10336 = vmatprep.subr.mxu0 %v10128
          %10337 = vmatpush2.msra.mxu0 %v10127
          %10338 = vmatprep.subr.mxu0 %v10126
          %10339 = vmatpush2.msra.mxu0 %v10125
          %10340 = vmatprep.subr.mxu0 %v10124
          %10341 = vmatpush2.msra.mxu0 %v10123
          %10342 = vmatprep.subr.mxu0 %v10122
          %10343 = vmatpush2.msra.mxu0 %v10121
          %10344 = vmatprep.mubr.f32.mxu0 %v9996
          %10345 = vmatmul.mubr.f32.gmra.mxu0 %v9995
          %v10346 = vpop.f32.mrf.mxu0
          %v10347 = vadd.f32 %v10270, %v10346
          %v10348 = vpop.f32.mrf.mxu0
          %v10349 = vadd.f32 %v10274, %v10348
          %10350 = vdwg.mxu0
          %10351 = vmatprep.subr.mxu0 %v10184
          %10352 = vmatpush1.msra.mxu0 %v10183
          %10353 = vmatprep.subr.mxu0 %v10182
          %10354 = vmatpush1.msra.mxu0 %v10181
          %10355 = vmatprep.subr.mxu0 %v10180
          %10356 = vmatpush1.msra.mxu0 %v10179
          %10357 = vmatprep.subr.mxu0 %v10178
          %10358 = vmatpush1.msra.mxu0 %v10177
          %10359 = vmatprep.subr.mxu0 %v10176
          %10360 = vmatpush1.msra.mxu0 %v10175
          %10361 = vmatprep.subr.mxu0 %v10174
          %10362 = vmatpush1.msra.mxu0 %v10173
          %10363 = vmatprep.subr.mxu0 %v10172
          %10364 = vmatpush1.msra.mxu0 %v10171
          %10365 = vmatprep.subr.mxu0 %v10170
          %10366 = vmatpush1.msra.mxu0 %v10169
          %10367 = vmatprep.subr.mxu0 %v10168
          %10368 = vmatpush1.msra.mxu0 %v10167
          %10369 = vmatprep.subr.mxu0 %v10166
          %10370 = vmatpush1.msra.mxu0 %v10165
          %10371 = vmatprep.subr.mxu0 %v10164
          %10372 = vmatpush1.msra.mxu0 %v10163
          %10373 = vmatprep.subr.mxu0 %v10162
          %10374 = vmatpush1.msra.mxu0 %v10161
          %10375 = vmatprep.subr.mxu0 %v10160
          %10376 = vmatpush1.msra.mxu0 %v10159
          %10377 = vmatprep.subr.mxu0 %v10158
          %10378 = vmatpush1.msra.mxu0 %v10157
          %10379 = vmatprep.subr.mxu0 %v10156
          %10380 = vmatpush1.msra.mxu0 %v10155
          %10381 = vmatprep.subr.mxu0 %v10154
          %10382 = vmatpush1.msra.mxu0 %v10153
          %10383 = vmatprep.subr.mxu0 %v10216
          %10384 = vmatpush2.msra.mxu0 %v10215
          %10385 = vmatprep.subr.mxu0 %v10214
          %10386 = vmatpush2.msra.mxu0 %v10213
          %10387 = vmatprep.subr.mxu0 %v10212
          %10388 = vmatpush2.msra.mxu0 %v10211
          %10389 = vmatprep.subr.mxu0 %v10210
          %10390 = vmatpush2.msra.mxu0 %v10209
          %10391 = vmatprep.subr.mxu0 %v10208
          %10392 = vmatpush2.msra.mxu0 %v10207
          %10393 = vmatprep.subr.mxu0 %v10206
          %10394 = vmatpush2.msra.mxu0 %v10205
          %10395 = vmatprep.subr.mxu0 %v10204
          %10396 = vmatpush2.msra.mxu0 %v10203
          %10397 = vmatprep.subr.mxu0 %v10202
          %10398 = vmatpush2.msra.mxu0 %v10201
          %10399 = vmatprep.subr.mxu0 %v10200
          %10400 = vmatpush2.msra.mxu0 %v10199
          %10401 = vmatprep.subr.mxu0 %v10198
          %10402 = vmatpush2.msra.mxu0 %v10197
          %10403 = vmatprep.subr.mxu0 %v10196
          %10404 = vmatpush2.msra.mxu0 %v10195
          %10405 = vmatprep.subr.mxu0 %v10194
          %10406 = vmatpush2.msra.mxu0 %v10193
          %10407 = vmatprep.subr.mxu0 %v10192
          %10408 = vmatpush2.msra.mxu0 %v10191
          %10409 = vmatprep.subr.mxu0 %v10190
          %10410 = vmatpush2.msra.mxu0 %v10189
          %10411 = vmatprep.subr.mxu0 %v10188
          %10412 = vmatpush2.msra.mxu0 %v10187
          %10413 = vmatprep.subr.mxu0 %v10186
          %10414 = vmatpush2.msra.mxu0 %v10185
          %10415 = vmatprep.mubr.f32.mxu0 %v9998
          %10416 = vmatmul.mubr.f32.gmra.mxu0 %v9997
          %v10417 = vpop.f32.mrf.mxu0
          %v10418 = vadd.f32 %v10347, %v10417
          %v10419 = vpop.f32.mrf.mxu0
          %v10420 = vadd.f32 %v10349, %v10419
          %10421 = vdwg.mxu0
          %10422 = vmatprep.subr.mxu0 %v10248
          %10423 = vmatpush1.msra.mxu0 %v10247
          %10424 = vmatprep.subr.mxu0 %v10246
          %10425 = vmatpush1.msra.mxu0 %v10245
          %10426 = vmatprep.subr.mxu0 %v10244
          %10427 = vmatpush1.msra.mxu0 %v10243
          %10428 = vmatprep.subr.mxu0 %v10242
          %10429 = vmatpush1.msra.mxu0 %v10241
          %10430 = vmatprep.subr.mxu0 %v10240
          %10431 = vmatpush1.msra.mxu0 %v10239
          %10432 = vmatprep.subr.mxu0 %v10238
          %10433 = vmatpush1.msra.mxu0 %v10237
          %10434 = vmatprep.subr.mxu0 %v10236
          %10435 = vmatpush1.msra.mxu0 %v10235
          %10436 = vmatprep.subr.mxu0 %v10234
          %10437 = vmatpush1.msra.mxu0 %v10233
          %10438 = vmatprep.subr.mxu0 %v10232
          %10439 = vmatpush1.msra.mxu0 %v10231
          %10440 = vmatprep.subr.mxu0 %v10230
          %10441 = vmatpush1.msra.mxu0 %v10229
          %10442 = vmatprep.subr.mxu0 %v10228
          %10443 = vmatpush1.msra.mxu0 %v10227
          %10444 = vmatprep.subr.mxu0 %v10226
          %10445 = vmatpush1.msra.mxu0 %v10225
          %10446 = vmatprep.subr.mxu0 %v10224
          %10447 = vmatpush1.msra.mxu0 %v10223
          %10448 = vmatprep.subr.mxu0 %v10222
          %10449 = vmatpush1.msra.mxu0 %v10221
          %10450 = vmatprep.subr.mxu0 %v10220
          %10451 = vmatpush1.msra.mxu0 %v10219
          %10452 = vmatprep.subr.mxu0 %v10218
          %10453 = vmatpush1.msra.mxu0 %v10217
          %10454 = vmatprep.subr.mxu0 0.0
          %10455 = vmatpush2.msra.mxu0 0.0
          %10456 = vmatprep.subr.mxu0 0.0
          %10457 = vmatpush2.msra.mxu0 0.0
          %10458 = vmatprep.subr.mxu0 0.0
          %10459 = vmatpush2.msra.mxu0 0.0
          %10460 = vmatprep.subr.mxu0 0.0
          %10461 = vmatpush2.msra.mxu0 0.0
          %10462 = vmatprep.subr.mxu0 0.0
          %10463 = vmatpush2.msra.mxu0 0.0
          %10464 = vmatprep.subr.mxu0 0.0
          %10465 = vmatpush2.msra.mxu0 0.0
          %10466 = vmatprep.subr.mxu0 0.0
          %10467 = vmatpush2.msra.mxu0 0.0
          %10468 = vmatprep.subr.mxu0 0.0
          %10469 = vmatpush2.msra.mxu0 0.0
          %10470 = vmatprep.subr.mxu0 %v10264
          %10471 = vmatpush2.msra.mxu0 %v10263
          %10472 = vmatprep.subr.mxu0 %v10262
          %10473 = vmatpush2.msra.mxu0 %v10261
          %10474 = vmatprep.subr.mxu0 %v10260
          %10475 = vmatpush2.msra.mxu0 %v10259
          %10476 = vmatprep.subr.mxu0 %v10258
          %10477 = vmatpush2.msra.mxu0 %v10257
          %10478 = vmatprep.subr.mxu0 %v10256
          %10479 = vmatpush2.msra.mxu0 %v10255
          %10480 = vmatprep.subr.mxu0 %v10254
          %10481 = vmatpush2.msra.mxu0 %v10253
          %10482 = vmatprep.subr.mxu0 %v10252
          %10483 = vmatpush2.msra.mxu0 %v10251
          %10484 = vmatprep.subr.mxu0 %v10250
          %10485 = vmatpush2.msra.mxu0 %v10249
          %10486 = vmatprep.mubr.f32.mxu0 %v10278
          %10487 = vmatmul.mubr.f32.gmra.mxu0 %v9999
          %v10488 = vpop.f32.mrf.mxu0
          %v10489 = vadd.f32 %v10418, %v10488
          %v10490 = vpop.f32.mrf.mxu0
          %v10491 = vadd.f32 %v10420, %v10490
          %10492 = vdwg.mxu0
          %v10495 = vcombine.low %v10489, %v10491
          %v10497 = vunpack.c.l.s4 1983009808
          %v10498 = vunpack.c.0.s8 %v10497
          %v10499 = vlaneseq
          %v10500 = vshrl.u32 %v10499, 7
          %v10501 = vsub.s32 %v10498, %v10500
          %v10502 = vrot.slane %v10495, %v10501
          %10504 = vst [vmem:[%s429] sm:$0xf] %v10502
        $region64: #{classifier_cnn_effnet_forward.3} parent=51 // pred_fallthru
          _
        %p10505 = scmp.lt.s32.totalorder %s24, 2
        %s10506 = scalar_select %p10505, %s24, 2
        %s10507 = smul.addr %s10506, 2
        %s10508 = smul.addr %s10507, 2
        %s10509 = scalar_lea.vmem %s8, %s10508
        // Predicated region
        $region65: #{classifier_cnn_effnet_forward.3} parent=51 // pred_check
          %p10510 = pneg %p245
        $region66: #{classifier_cnn_effnet_forward.3} parent=51 // pred_check_branch
          %10512 = sbr.rel (%p10510) target = $region68
        $region67: #{classifier_cnn_effnet_forward.3} parent=51 // pred_region
          _
        $region68: #{classifier_cnn_effnet_forward.3} parent=51 // pred_fallthru
          _
      $region52: #{classifier_cnn_effnet_forward.3} parent=5 // pred_fallthru
        _
      %p10513 = scmp.le.s32.totalorder 2, %s15
      // Predicated region
      $region69: #{classifier_cnn_effnet_forward.3} parent=5 // pred_check
        %p10514 = pneg %p10513
      $region70: #{classifier_cnn_effnet_forward.3} parent=5 // pred_check_branch
        %10516 = sbr.rel (%p10514) target = $region72
      $region71: #{classifier_cnn_effnet_forward.3} parent=5 // pred_region
        %s10517 = ssub.s32 %s15, 2
        // Predicated region
        $region73: #{classifier_cnn_effnet_forward.3} parent=71 // pred_check
          %p10518 = pneg %p251
        $region74: #{classifier_cnn_effnet_forward.3} parent=71 // pred_check_branch
          %10520 = sbr.rel (%p10518) target = $region76
        $region75: #{classifier_cnn_effnet_forward.3} parent=71 // pred_region
          %p10521 = scmp.lt.s32.totalorder %s26, 2
          %s10522 = scalar_select %p10521, %s26, 2
          %s10523 = smul.addr %s10522, 2
          %s10524 = smul.addr %s10523, 2
          %s10525 = scalar_lea.vmem %s8, %s10524
        $region76: #{classifier_cnn_effnet_forward.3} parent=71 // pred_fallthru
          _
      $region72: #{classifier_cnn_effnet_forward.3} parent=5 // pred_fallthru
        _
    $region6: #{classifier_cnn_effnet_forward.3} parent=1 // loop_footer
      %s19 = sadd.s32 1, %s15
    $region7: #{classifier_cnn_effnet_forward.3} parent=1 // loop_footer_branch
      %14 = sbr.rel target = $region3
    $region8: #{classifier_cnn_effnet_forward.3} parent=1 // loop_exit
      _
    %10526 = vsyncpa [#allocation4], 1
    %s10527 = scalar_lea.sflag [#allocation4], 1
    %10528 = vsyncpa %s10527, 1

</llo_original>
